<compile_context>
chip_gen: v5e
topology: v5e:2x2
jax: 0.10.0
libtpu: 0.0.40
codegen_flags: <defaults>
</compile_context>

<pallas_src>
import functools

import jax
import jax.numpy as jnp
from jax.experimental import pallas as pl
from jax.experimental.pallas import tpu as pltpu


# ----------------------------------------------------------------------------- helpers
def _gelu(x):
    # tanh-form GELU: transcendental lands on the EUP slot instead of ~12 VALU ops / element.
    c = 0.7978845608028654  # sqrt(2/pi)
    return 0.5 * x * (1.0 + jnp.tanh(c * (x + 0.044715 * x * x * x)))


def _sigmoid(x):
    return 1.0 / (1.0 + jnp.exp(-x))


def bn_fold(g, b, m, v, eps=1e-5):
    """Fold inference-mode BatchNorm into per-channel (scale, shift)."""
    s = g / jnp.sqrt(v + eps)
    return s, b - m * s


def _row_tile(n, cap=256):
    """Largest power-of-two divisor of n that is <= cap (keeps >= 2 grid steps for pipelining /
    dual-TensorCore splits while avoiding remainder masking)."""
    for t in (1024, 512, 256, 128, 64, 32, 16, 8):
        if t <= cap and n % t == 0:
            return t
    return n  # TODO(synk): add remainder masking for n not divisible by 8.


# ---------------------- dim_upscale (1x1 conv + BN + ReLU) fused with AvgPool2d(2,2)
def _upscale_pool_kernel(x_ref, w_ref, b_ref, o_ref):
    w = w_ref[...]                       # (Cin, Cd) bf16
    b = b_ref[...]                       # (1, Cd)  f32
    acc = None
    for k in range(4):                   # 4 pre-strided 2x2-window positions
        y = jnp.dot(x_ref[0, k], w, preferred_element_type=jnp.float32) + b
        y = jnp.maximum(y, 0.0)          # bias + folded BN + ReLU (before pooling)
        acc = y if acc is None else acc + y
    o_ref[0] = (0.25 * acc).astype(o_ref.dtype)


def upscale_pool(patches, w_du, b_du, out_dtype):
    B, _, HW, Cin = patches.shape
    Cd = w_du.shape[1]
    tm = _row_tile(HW, cap=512)
    return pl.pallas_call(
        _upscale_pool_kernel,
        out_shape=jax.ShapeDtypeStruct((B, HW, Cd), out_dtype),
        grid_spec=pltpu.PrefetchScalarGridSpec(
            num_scalar_prefetch=0,
            grid=(B, HW // tm),
            in_specs=[
                pl.BlockSpec((1, 4, tm, Cin), lambda b, i: (b, 0, i, 0)),
                pl.BlockSpec((Cin, Cd), lambda b, i: (0, 0)),
                pl.BlockSpec((1, Cd), lambda b, i: (0, 0)),
            ],
            out_specs=pl.BlockSpec((1, tm, Cd), lambda b, i: (b, i, 0)),
        ),
        compiler_params=pltpu.CompilerParams(dimension_semantics=("parallel", "parallel")),
    )(patches, w_du, b_du)


# -------------- local/global 1x1 transforms + concat + LN1 + weight_transform1 + GELU
def _fuse_mid_kernel(loc_ref, glb_ref, pool_ref, wl_ref, bl_ref, wg_ref, bg_ref,
                     g_ref, be_ref, w1_ref, b1_ref, o_ref, *, eps):
    a = pool_ref[...].astype(jnp.float32)                                     # pooled transformer
    b = jnp.dot(loc_ref[...], wl_ref[...], preferred_element_type=jnp.float32) + bl_ref[...]
    c = jnp.dot(glb_ref[...], wg_ref[...], preferred_element_type=jnp.float32) + bg_ref[...]
    # torch.cat([pooled, local, global], dim=1) -> lane concat (never leaves vregs)
    x = jnp.concatenate([a, b, c], axis=-1)                                   # (tm, 3*Cd) f32
    mu = jnp.mean(x, axis=-1, keepdims=True)                                  # LayerNorm1
    xm = x - mu
    var = jnp.mean(xm * xm, axis=-1, keepdims=True)
    xn = xm * jax.lax.rsqrt(var + eps) * g_ref[...] + be_ref[...]
    # weight_transform1 (+BN folded) + GELU; bf16 MXU inputs, f32 accumulation.
    y = jnp.dot(xn.astype(jnp.bfloat16), w1_ref[...],
                preferred_element_type=jnp.float32) + b1_ref[...]
    o_ref[...] = _gelu(y).astype(o_ref.dtype)


def fuse_mid(loc2d, glb2d, pool2d, w_l, b_l, w_g, b_g, g1, be1, w1, b1, out_dtype, eps=1e-6):
    n, Ci = loc2d.shape
    Cm = glb2d.shape[1]
    Cd = w_l.shape[1]
    tm = _row_tile(n, cap=256)
    return pl.pallas_call(
        functools.partial(_fuse_mid_kernel, eps=eps),
        out_shape=jax.ShapeDtypeStruct((n, Cd), out_dtype),
        grid_spec=pltpu.PrefetchScalarGridSpec(
            num_scalar_prefetch=0,
            grid=(n // tm,),
            in_specs=[
                pl.BlockSpec((tm, Ci), lambda i: (i, 0)),
                pl.BlockSpec((tm, Cm), lambda i: (i, 0)),
                pl.BlockSpec((tm, Cd), lambda i: (i, 0)),
                pl.BlockSpec((Ci, Cd), lambda i: (0, 0)),
                pl.BlockSpec((1, Cd), lambda i: (0, 0)),
                pl.BlockSpec((Cm, Cd), lambda i: (0, 0)),
                pl.BlockSpec((1, Cd), lambda i: (0, 0)),
                pl.BlockSpec((1, 3 * Cd), lambda i: (0, 0)),
                pl.BlockSpec((1, 3 * Cd), lambda i: (0, 0)),
                pl.BlockSpec((3 * Cd, Cd), lambda i: (0, 0)),
                pl.BlockSpec((1, Cd), lambda i: (0, 0)),
            ],
            out_specs=pl.BlockSpec((tm, Cd), lambda i: (i, 0)),
        ),
        compiler_params=pltpu.CompilerParams(dimension_semantics=("parallel",)),
    )(loc2d, glb2d, pool2d, w_l, b_l, w_g, b_g, g1, be1, w1, b1)


# --------------------------------- spatial attention: 7x7 conv (2->1) as TWO MXU matmuls
def _spatial_attn_kernel(x_ref, c_ref, s_ref, t_ref, o_ref, *, H, W):
    x = x_ref[0].astype(jnp.float32)                       # (H, W, Ci)
    mx = jnp.max(x, axis=-1)                               # torch.max over channels
    av = jnp.mean(x, axis=-1)                              # torch.mean over channels
    ma = jnp.concatenate([mx, av], axis=1).astype(jnp.bfloat16)          # (H, 2W)
    # column direction of the 7x7 conv: one matmul against the stacked conv matrices
    inner = jnp.dot(ma, c_ref[...], preferred_element_type=jnp.float32)  # (H, 7W)
    # regroup the 7 ky column blocks into row blocks, then one matmul against the row-shift
    # selector does the row direction + the sum over ky in a single MXU pass.
    inner_r = jnp.concatenate([inner[:, k * W:(k + 1) * W] for k in range(7)], axis=0)
    logit = jnp.dot(s_ref[...], inner_r.astype(jnp.bfloat16),
                    preferred_element_type=jnp.float32)                  # (H, W)
    att = _sigmoid(logit + t_ref[0])                       # BN scale folded into c_ref; shift here
    o_ref[0] = (x * att[:, :, None]).astype(o_ref.dtype)


def spatial_attention(local_nhwc, cstack, systack, bn_shift, out_dtype):
    B, H, W, C = local_nhwc.shape
    return pl.pallas_call(
        functools.partial(_spatial_attn_kernel, H=H, W=W),
        out_shape=jax.ShapeDtypeStruct((B, H, W, C), out_dtype),
        grid_spec=pltpu.PrefetchScalarGridSpec(
            num_scalar_prefetch=0,
            grid=(B,),
            in_specs=[
                pl.BlockSpec((1, H, W, C), lambda b: (b, 0, 0, 0)),
                pl.BlockSpec((2 * W, 7 * W), lambda b: (0, 0)),
                pl.BlockSpec((H, 7 * H), lambda b: (0, 0)),
                pl.BlockSpec(memory_space=pltpu.MemorySpace.SMEM),
            ],
            out_specs=pl.BlockSpec((1, H, W, C), lambda b: (b, 0, 0, 0)),
        ),
        compiler_params=pltpu.CompilerParams(dimension_semantics=("parallel",)),
    )(local_nhwc, cstack, systack, bn_shift)


# --------- fused tail: SE channel attention + concat + LN3 + IRMLP + shortcut residual
def _fusion_tail_kernel(glob_ref, spat_ref, ff_ref, sc_ref, se1_ref, se2_ref,
                        g_ref, be_ref, dw_ref, s1_ref, t1_ref,
                        w2_ref, w3_ref, b3_ref, o_ref, pad, *, H, W, Cm, Ct, eps):
    xg = glob_ref[0].astype(jnp.float32)                        # (H, W, Cm)

    # squeeze-excite channel attention (fused: no extra kernel, no second HBM read of glob)
    g2 = xg.reshape(H * W, Cm)
    mx = jnp.max(g2, axis=0, keepdims=True).astype(jnp.bfloat16)       # AdaptiveMaxPool2d(1)
    av = jnp.mean(g2, axis=0, keepdims=True).astype(jnp.bfloat16)      # AdaptiveAvgPool2d(1)
    se1 = se1_ref[...]
    se2 = se2_ref[...]
    h_mx = jnp.maximum(jnp.dot(mx, se1, preferred_element_type=jnp.float32), 0.0)
    h_av = jnp.maximum(jnp.dot(av, se1, preferred_element_type=jnp.float32), 0.0)
    logit = (jnp.dot(h_mx.astype(jnp.bfloat16), se2, preferred_element_type=jnp.float32)
             + jnp.dot(h_av.astype(jnp.bfloat16), se2, preferred_element_type=jnp.float32))
    ch_att = _sigmoid(logit).reshape(1, 1, Cm)                  # (1, 1, Cm) f32

    # torch.cat([channel_attention, spatial_attention, fused_features], dim=1) + LayerNorm3
    x = jnp.concatenate([xg * ch_att,
                         spat_ref[0].astype(jnp.float32),
                         ff_ref[0].astype(jnp.float32)], axis=-1)       # (H, W, Ct)
    mu = jnp.mean(x, axis=-1, keepdims=True)
    xm = x - mu
    var = jnp.mean(xm * xm, axis=-1, keepdims=True)
    xn = (xm * jax.lax.rsqrt(var + eps) * g_ref[...].reshape(1, 1, Ct)
          + be_ref[...].reshape(1, 1, Ct))

    # IRMLP depthwise 3x3 (zero pad 1) via ONE concatenated padded scratch.  Only the border
    # strips are (re)zeroed each step -- cheap, and correct regardless of which TensorCore runs
    # which batch step when the parallel axis is split across cores.
    pad[0:1, :, :] = jnp.zeros((1, W + 2, Ct), jnp.float32)
    pad[H + 1:H + 2, :, :] = jnp.zeros((1, W + 2, Ct), jnp.float32)
    pad[1:1 + H, 0:1, :] = jnp.zeros((H, 1, Ct), jnp.float32)
    pad[1:1 + H, W + 1:W + 2, :] = jnp.zeros((H, 1, Ct), jnp.float32)
    pad[1:1 + H, 1:1 + W, :] = xn

    dwv = dw_ref[...]                                           # (9, Ct) f32
    acc = jnp.zeros((H, W, Ct), jnp.float32)
    for ky in range(3):
        for kx in range(3):
            i = 3 * ky + kx
            wk = dwv[i:i + 1, :].reshape(1, 1, Ct)
            acc = acc + pad[ky:ky + H, kx:kx + W, :] * wk
    # GELU + residual + BN1 affine (folded)
    h = (_gelu(acc) + xn) * s1_ref[...].reshape(1, 1, Ct) + t1_ref[...].reshape(1, 1, Ct)

    # IRMLP tail: conv2 (Ct -> 4Ct) + GELU, conv3 (4Ct -> Co, BN folded).  bf16 MXU operands;
    # the (HW, 4Ct) intermediate never leaves VMEM/vregs.
    hb = h.reshape(H * W, Ct).astype(jnp.bfloat16)
    u = _gelu(jnp.dot(hb, w2_ref[...], preferred_element_type=jnp.float32))
    out = (jnp.dot(u.astype(jnp.bfloat16), w3_ref[...], preferred_element_type=jnp.float32)
           + b3_ref[...])
    out = out + sc_ref[0].astype(jnp.float32)                   # shortcut; DropPath(0.0) == id
    o_ref[0] = out.astype(o_ref.dtype)


def fusion_tail(glob_nhwc, spat, ff, shortcut, se1, se2, g3, be3, dw, s1, t1, w2, w3, b3,
                eps=1e-6):
    B, H, W, Cm = glob_nhwc.shape
    Ci = spat.shape[-1]
    Cd = ff.shape[-1]
    Ct = Cm + Ci + Cd
    Cr = se1.shape[1]
    Co = w3.shape[1]
    HW = H * W
    kernel = functools.partial(_fusion_tail_kernel, H=H, W=W, Cm=Cm, Ct=Ct, eps=eps)
    # TODO(synk): at large H*W (real HiFuse resolutions) tile this grid over HW row blocks with
    #             a 1-row halo for the 3x3 dwconv and hoist the SE pooling to its own pass.
    return pl.pallas_call(
        kernel,
        out_shape=jax.ShapeDtypeStruct((B, HW, Co), jnp.float32),
        grid_spec=pltpu.PrefetchScalarGridSpec(
            num_scalar_prefetch=0,
            grid=(B,),
            in_specs=[
                pl.BlockSpec((1, H, W, Cm), lambda b: (b, 0, 0, 0)),
                pl.BlockSpec((1, H, W, Ci), lambda b: (b, 0, 0, 0)),
                pl.BlockSpec((1, H, W, Cd), lambda b: (b, 0, 0, 0)),
                pl.BlockSpec((1, HW, Cd), lambda b: (b, 0, 0)),
                pl.BlockSpec((Cm, Cr), lambda b: (0, 0)),
                pl.BlockSpec((Cr, Cm), lambda b: (0, 0)),
                pl.BlockSpec((1, Ct), lambda b: (0, 0)),
                pl.BlockSpec((1, Ct), lambda b: (0, 0)),
                pl.BlockSpec((9, Ct), lambda b: (0, 0)),
                pl.BlockSpec((1, Ct), lambda b: (0, 0)),
                pl.BlockSpec((1, Ct), lambda b: (0, 0)),
                pl.BlockSpec((Ct, 4 * Ct), lambda b: (0, 0)),
                pl.BlockSpec((4 * Ct, Co), lambda b: (0, 0)),
                pl.BlockSpec((1, Co), lambda b: (0, 0)),
            ],
            out_specs=pl.BlockSpec((1, HW, Co), lambda b: (b, 0, 0)),
            scratch_shapes=[pltpu.VMEM((H + 2, W + 2, Ct), jnp.float32)],
        ),
        compiler_params=pltpu.CompilerParams(
            dimension_semantics=("parallel",),
            vmem_limit_bytes=64 * 1024 * 1024),
    )(glob_nhwc, spat, ff, shortcut, se1, se2, g3, be3, dw, s1, t1, w2, w3, b3)


# ------------------------------------------------------------------------ parameters
def init_params(key, Ci, Cm, r, Cd, Co):
    keys = iter(jax.random.split(key, 64))

    def nrm(shape, scale=0.1):
        return scale * jax.random.normal(next(keys), shape, dtype=jnp.float32)

    def bn(c):
        return dict(
            g=1.0 + 0.1 * jax.random.normal(next(keys), (c,), dtype=jnp.float32),
            b=0.1 * jax.random.normal(next(keys), (c,), dtype=jnp.float32),
            m=0.1 * jax.random.normal(next(keys), (c,), dtype=jnp.float32),
            v=1.0 + 0.1 * jax.random.uniform(next(keys), (c,), dtype=jnp.float32),
        )

    Ct = Ci + Cm + Cd
    return dict(
        lt_w=nrm((Ci, Cd)), lt_b=nrm((Cd,)), lt_bn=bn(Cd),
        gt_w=nrm((Cm, Cd)), gt_b=nrm((Cd,)), gt_bn=bn(Cd),
        du_w=nrm((Cd // 2, Cd)), du_b=nrm((Cd,)), du_bn=bn(Cd),
        wt1_w=nrm((3 * Cd, Cd)), wt1_b=nrm((Cd,)), wt1_bn=bn(Cd),
        ln1_g=1.0 + 0.1 * jax.random.normal(next(keys), (3 * Cd,), dtype=jnp.float32),
        ln1_b=0.1 * jax.random.normal(next(keys), (3 * Cd,), dtype=jnp.float32),
        ln3_g=1.0 + 0.1 * jax.random.normal(next(keys), (Ct,), dtype=jnp.float32),
        ln3_b=0.1 * jax.random.normal(next(keys), (Ct,), dtype=jnp.float32),
        sp_w=nrm((2, 7, 7)), sp_bn=bn(1),
        se1_w=nrm((Cm, Cm // r)), se2_w=nrm((Cm // r, Cm)),
        dw_w=nrm((3, 3, Ct)), bn1=bn(Ct),
        c2_w=nrm((Ct, 4 * Ct)),
        c3_w=nrm((4 * Ct, Co)), c3_bn=bn(Co),
    )


def prepare_params(p, H, W):
    """Fold BatchNorms, cast MXU weights to bf16, and build the 7x7-conv selector matrices.
    Called once at init time (not per forward)."""
    bf16 = jnp.bfloat16
    Cd = p["lt_w"].shape[1]
    Ci = p["lt_w"].shape[0]
    Cm = p["gt_w"].shape[0]
    Ct = Ci + Cm + Cd
    Co = p["c3_w"].shape[1]

    def fold(w, b, bn):
        s, t = bn_fold(**bn)
        return (w * s[None, :]).astype(bf16), (b * s + t).reshape(1, -1)

    du_w, du_b = fold(p["du_w"], p["du_b"], p["du_bn"])
    lt_w, lt_b = fold(p["lt_w"], p["lt_b"], p["lt_bn"])
    gt_w, gt_b = fold(p["gt_w"], p["gt_b"], p["gt_bn"])
    wt1_w, wt1_b = fold(p["wt1_w"], p["wt1_b"], p["wt1_bn"])

    # spatial 7x7 conv (2 -> 1, pad 3, no bias) with BN scale folded, as 2 MXU matmuls:
    s_sp, t_sp = bn_fold(**p["sp_bn"])
    wsp = p["sp_w"] * s_sp[0]                               # (2, 7, 7)
    ix = jnp.arange(W)
    kidx = ix[:, None] - ix[None, :] + 3                    # column offset -> kx
    valid = (kidx >= 0) & (kidx <= 6)
    cmat = jnp.where(valid[None, None], jnp.take(wsp, jnp.clip(kidx, 0, 6), axis=2), 0.0)
    cstack = jnp.concatenate(
        [jnp.concatenate([cmat[0, ky], cmat[1, ky]], axis=0) for ky in range(7)], axis=1)
    iy = jnp.arange(H)
    systack = jnp.concatenate(
        [(iy[None, :] == (iy[:, None] + (ky - 3))).astype(jnp.float32) for ky in range(7)],
        axis=1)                                             # (H, 7H) row-shift selectors

    s1, t1 = bn_fold(**p["bn1"])
    s3, t3 = bn_fold(**p["c3_bn"])

    return dict(
        du_w=du_w, du_b=du_b,
        lt_w=lt_w, lt_b=lt_b, gt_w=gt_w, gt_b=gt_b,
        wt1_w=wt1_w, wt1_b=wt1_b,
        ln1_g=p["ln1_g"].reshape(1, 3 * Cd), ln1_b=p["ln1_b"].reshape(1, 3 * Cd),
        ln3_g=p["ln3_g"].reshape(1, Ct), ln3_b=p["ln3_b"].reshape(1, Ct),
        sp_cstack=cstack.astype(bf16), sp_systack=systack.astype(bf16),
        sp_shift=t_sp.astype(jnp.float32),                  # (1,) scalar shift, lives in SMEM
        se1_w=p["se1_w"].astype(bf16), se2_w=p["se2_w"].astype(bf16),
        dw_w=p["dw_w"].reshape(9, Ct),
        bn1_s=s1.reshape(1, Ct), bn1_t=t1.reshape(1, Ct),
        c2_w=p["c2_w"].astype(bf16),
        c3_w=(p["c3_w"] * s3[None, :]).astype(bf16), c3_b=t3.reshape(1, Co),
    )


# ------------------------------------------------------------------------ forward pass
def hifuse_block_forward(fp, local_nchw, global_nchw, transformer_nchw):
    B, Ci, H, W = local_nchw.shape
    Cm = global_nchw.shape[1]
    Cd = fp["lt_w"].shape[1]
    Co = fp["c3_w"].shape[1]
    n = B * H * W
    act = jnp.bfloat16  # bf16 inter-kernel activations; f32 accumulation inside kernels

    local = jnp.transpose(local_nchw, (0, 2, 3, 1)).astype(act)        # (B, H, W, Ci)
    glob = jnp.transpose(global_nchw, (0, 2, 3, 1)).astype(act)        # (B, H, W, Cm)
    trans = jnp.transpose(transformer_nchw, (0, 2, 3, 1)).astype(act)  # (B, Ht, Wt, Cd//2)
    Ht, Wt = trans.shape[1], trans.shape[2]
    assert Ht == 2 * H and Wt == 2 * W
    assert Co == Cd, "shortcut + out requires output_channels == intermediate_channels"
    Cin = trans.shape[-1]

    # Pre-strided 2x2 window patches so AvgPool2d(2,2) becomes a 4-term add inside the kernel
    # (no (HW x Ht*Wt) pool matrix, no in-kernel strided slices).
    patches = jnp.stack([trans[:, 0::2, 0::2], trans[:, 0::2, 1::2],
                         trans[:, 1::2, 0::2], trans[:, 1::2, 1::2]], axis=1)
    patches = patches.reshape(B, 4, H * W, Cin)

    # transformer branch: dim_upscale (1x1 conv + bias + BN + ReLU) fused with AvgPool2d(2,2)
    pooled = upscale_pool(patches, fp["du_w"], fp["du_b"], act)        # (B, H*W, Cd)
    shortcut = pooled

    # fused: local/global 1x1 transforms -> concat -> LayerNorm1 -> weight_transform1 -> GELU
    fused = fuse_mid(local.reshape(n, Ci), glob.reshape(n, Cm), pooled.reshape(n, Cd),
                     fp["lt_w"], fp["lt_b"], fp["gt_w"], fp["gt_b"],
                     fp["ln1_g"], fp["ln1_b"], fp["wt1_w"], fp["wt1_b"], act)    # (n, Cd)
    ff = fused.reshape(B, H, W, Cd)

    # spatial attention over local features (7x7 conv as two MXU matmuls; BN folded)
    spat = spatial_attention(local, fp["sp_cstack"], fp["sp_systack"], fp["sp_shift"], act)

    # fused tail: SE channel attention + concat + LN3 + IRMLP + shortcut residual
    out = fusion_tail(glob, spat, ff, shortcut,
                      fp["se1_w"], fp["se2_w"], fp["ln3_g"], fp["ln3_b"],
                      fp["dw_w"], fp["bn1_s"], fp["bn1_t"],
                      fp["c2_w"], fp["c3_w"], fp["c3_b"])              # (B, H*W, Co) f32

    out = out.reshape(B, H, W, Co)
    return jnp.transpose(out, (0, 3, 1, 2))  # back to NCHW


# --------------------------------------------------------------------------------- main
if __name__ == "__main__":
    B, Ci, Cm, r, Cd, Co = 2, 4, 8, 2, 8, 8      # output_channels == intermediate_channels
    H = W = 16

    key = jax.random.PRNGKey(0)
    k_local, k_global, k_trans, k_params = jax.random.split(key, 4)
    local_features = jax.random.normal(k_local, (B, Ci, H, W), dtype=jnp.float32)
    global_features = jax.random.normal(k_global, (B, Cm, H, W), dtype=jnp.float32)
    transformer_features = jax.random.normal(k_trans, (B, Cd // 2, 2 * H, 2 * W),
                                             dtype=jnp.float32)

    params = init_params(k_params, Ci, Cm, r, Cd, Co)
    folded = prepare_params(params, H, W)

    out = jax.jit(hifuse_block_forward)(folded, local_features, global_features,
                                        transformer_features)
    out = jax.block_until_ready(out)

    assert out.shape == (B, Co, H, W), out.shape
    assert bool(jnp.all(jnp.isfinite(out)))
    print("KERNEL_OK")
</pallas_src>

<mosaic_0001>
module attributes {stable_mosaic.version = 11 : i64} {
  func.func @_upscale_pool_kernel(%arg0: i32, %arg1: i32, %arg2: memref<1x4x256x4xbf16, #tpu.memory_space<vmem>>, %arg3: memref<4x8xbf16, #tpu.memory_space<vmem>>, %arg4: memref<1x8xf32, #tpu.memory_space<vmem>>, %arg5: memref<1x256x8xbf16, #tpu.memory_space<vmem>>) attributes {dimension_semantics = [#tpu.dimension_semantics<parallel>, #tpu.dimension_semantics<parallel>], iteration_bounds = array<i64: 2, 1>, scalar_prefetch = 0 : i64, scratch_operands = 0 : i64, tpu.core_type = #tpu.core_type<tc>, window_params = [{transform_indices = @transform_0, window_bounds = array<i64: 1, 4, 256, 4>}, {pipeline_mode = #tpu.pipeline_mode<synchronous>, transform_indices = @transform_1, window_bounds = array<i64: 4, 8>}, {pipeline_mode = #tpu.pipeline_mode<synchronous>, transform_indices = @transform_2, window_bounds = array<i64: 1, 8>}, {transform_indices = @transform_3, window_bounds = array<i64: 1, 256, 8>}]} {
    %c0 = arith.constant 0 : index
    %c0_0 = arith.constant 0 : index
    %0 = vector.load %arg3[%c0, %c0_0] : memref<4x8xbf16, #tpu.memory_space<vmem>>, vector<4x8xbf16>
    %c0_1 = arith.constant 0 : index
    %c0_2 = arith.constant 0 : index
    %1 = vector.load %arg4[%c0_1, %c0_2] : memref<1x8xf32, #tpu.memory_space<vmem>>, vector<1x8xf32>
    %c0_3 = arith.constant 0 : index
    %c0_4 = arith.constant 0 : index
    %c0_5 = arith.constant 0 : index
    %c0_6 = arith.constant 0 : index
    %2 = vector.load %arg2[%c0_3, %c0_4, %c0_5, %c0_6] : memref<1x4x256x4xbf16, #tpu.memory_space<vmem>>, vector<1x1x256x4xbf16>
    %3 = vector.shape_cast %2 : vector<1x1x256x4xbf16> to vector<256x4xbf16>
    %cst = arith.constant dense<0.000000e+00> : vector<256x8xf32>
    %4 = tpu.matmul %3, %0, %cst {dimension_numbers = #tpu.dot_dimension_numbers<[1], [0], [0], [1], [0, 0, 1, 1], [], []>} : vector<256x4xbf16>, vector<4x8xbf16>, vector<256x8xf32> -> vector<256x8xf32>
    %5 = vector.broadcast %1 : vector<1x8xf32> to vector<256x8xf32>
    %6 = arith.addf %4, %5 : vector<256x8xf32>
    %cst_7 = arith.constant 0.000000e+00 : f32
    %7 = vector.broadcast %cst_7 : f32 to vector<256x8xf32>
    %8 = arith.maximumf %6, %7 : vector<256x8xf32>
    %c0_8 = arith.constant 0 : index
    %c1 = arith.constant 1 : index
    %c0_9 = arith.constant 0 : index
    %c0_10 = arith.constant 0 : index
    %9 = vector.load %arg2[%c0_8, %c1, %c0_9, %c0_10] : memref<1x4x256x4xbf16, #tpu.memory_space<vmem>>, vector<1x1x256x4xbf16>
    %10 = vector.shape_cast %9 : vector<1x1x256x4xbf16> to vector<256x4xbf16>
    %cst_11 = arith.constant dense<0.000000e+00> : vector<256x8xf32>
    %11 = tpu.matmul %10, %0, %cst_11 {dimension_numbers = #tpu.dot_dimension_numbers<[1], [0], [0], [1], [0, 0, 1, 1], [], []>} : vector<256x4xbf16>, vector<4x8xbf16>, vector<256x8xf32> -> vector<256x8xf32>
    %12 = vector.broadcast %1 : vector<1x8xf32> to vector<256x8xf32>
    %13 = arith.addf %11, %12 : vector<256x8xf32>
    %cst_12 = arith.constant 0.000000e+00 : f32
    %14 = vector.broadcast %cst_12 : f32 to vector<256x8xf32>
    %15 = arith.maximumf %13, %14 : vector<256x8xf32>
    %16 = arith.addf %8, %15 : vector<256x8xf32>
    %c0_13 = arith.constant 0 : index
    %c2 = arith.constant 2 : index
    %c0_14 = arith.constant 0 : index
    %c0_15 = arith.constant 0 : index
    %17 = vector.load %arg2[%c0_13, %c2, %c0_14, %c0_15] : memref<1x4x256x4xbf16, #tpu.memory_space<vmem>>, vector<1x1x256x4xbf16>
    %18 = vector.shape_cast %17 : vector<1x1x256x4xbf16> to vector<256x4xbf16>
    %cst_16 = arith.constant dense<0.000000e+00> : vector<256x8xf32>
    %19 = tpu.matmul %18, %0, %cst_16 {dimension_numbers = #tpu.dot_dimension_numbers<[1], [0], [0], [1], [0, 0, 1, 1], [], []>} : vector<256x4xbf16>, vector<4x8xbf16>, vector<256x8xf32> -> vector<256x8xf32>
    %20 = vector.broadcast %1 : vector<1x8xf32> to vector<256x8xf32>
    %21 = arith.addf %19, %20 : vector<256x8xf32>
    %cst_17 = arith.constant 0.000000e+00 : f32
    %22 = vector.broadcast %cst_17 : f32 to vector<256x8xf32>
    %23 = arith.maximumf %21, %22 : vector<256x8xf32>
    %24 = arith.addf %16, %23 : vector<256x8xf32>
    %c0_18 = arith.constant 0 : index
    %c3 = arith.constant 3 : index
    %c0_19 = arith.constant 0 : index
    %c0_20 = arith.constant 0 : index
    %25 = vector.load %arg2[%c0_18, %c3, %c0_19, %c0_20] : memref<1x4x256x4xbf16, #tpu.memory_space<vmem>>, vector<1x1x256x4xbf16>
    %26 = vector.shape_cast %25 : vector<1x1x256x4xbf16> to vector<256x4xbf16>
    %cst_21 = arith.constant dense<0.000000e+00> : vector<256x8xf32>
    %27 = tpu.matmul %26, %0, %cst_21 {dimension_numbers = #tpu.dot_dimension_numbers<[1], [0], [0], [1], [0, 0, 1, 1], [], []>} : vector<256x4xbf16>, vector<4x8xbf16>, vector<256x8xf32> -> vector<256x8xf32>
    %28 = vector.broadcast %1 : vector<1x8xf32> to vector<256x8xf32>
    %29 = arith.addf %27, %28 : vector<256x8xf32>
    %cst_22 = arith.constant 0.000000e+00 : f32
    %30 = vector.broadcast %cst_22 : f32 to vector<256x8xf32>
    %31 = arith.maximumf %29, %30 : vector<256x8xf32>
    %32 = arith.addf %24, %31 : vector<256x8xf32>
    %cst_23 = arith.constant 2.500000e-01 : f32
    %33 = vector.broadcast %cst_23 : f32 to vector<256x8xf32>
    %34 = arith.mulf %33, %32 : vector<256x8xf32>
    %35 = arith.truncf %34 : vector<256x8xf32> to vector<256x8xbf16>
    %c0_24 = arith.constant 0 : index
    %c0_25 = arith.constant 0 : index
    %c0_26 = arith.constant 0 : index
    %36 = vector.load %arg5[%c0_24, %c0_25, %c0_26] : memref<1x256x8xbf16, #tpu.memory_space<vmem>>, vector<1x256x8xbf16>
    %37 = vector.shape_cast %36 : vector<1x256x8xbf16> to vector<256x8xbf16>
    %38 = vector.shape_cast %35 : vector<256x8xbf16> to vector<1x256x8xbf16>
    tpu.vector_store %arg5[%c0_24, %c0_25, %c0_26], %38 {strides = array<i32>} : memref<1x256x8xbf16, #tpu.memory_space<vmem>>, vector<1x256x8xbf16>,
    return
  }
  func.func @transform_0(%arg0: i32, %arg1: i32) -> (i32, i32, i32, i32) {
    %c0_i32 = arith.constant 0 : i32
    %c0_i32_0 = arith.constant 0 : i32
    %c0_i32_1 = arith.constant 0 : i32
    return %arg0, %c0_i32, %arg1, %c0_i32_0 : i32, i32, i32, i32
  }
  func.func @transform_1(%arg0: i32, %arg1: i32) -> (i32, i32) {
    %c0_i32 = arith.constant 0 : i32
    %c0_i32_0 = arith.constant 0 : i32
    %c0_i32_1 = arith.constant 0 : i32
    return %c0_i32, %c0_i32_0 : i32, i32
  }
  func.func @transform_2(%arg0: i32, %arg1: i32) -> (i32, i32) {
    %c0_i32 = arith.constant 0 : i32
    %c0_i32_0 = arith.constant 0 : i32
    %c0_i32_1 = arith.constant 0 : i32
    return %c0_i32, %c0_i32_0 : i32, i32
  }
  func.func @transform_3(%arg0: i32, %arg1: i32) -> (i32, i32, i32) {
    %c0_i32 = arith.constant 0 : i32
    %c0_i32_0 = arith.constant 0 : i32
    return %arg0, %arg1, %c0_i32 : i32, i32, i32
  }
}

module attributes {stable_mosaic.version = 11 : i64} {
  func.func @_fuse_mid_kernel(%arg0: i32, %arg1: memref<256x4xbf16, #tpu.memory_space<vmem>>, %arg2: memref<256x8xbf16, #tpu.memory_space<vmem>>, %arg3: memref<256x8xbf16, #tpu.memory_space<vmem>>, %arg4: memref<4x8xbf16, #tpu.memory_space<vmem>>, %arg5: memref<1x8xf32, #tpu.memory_space<vmem>>, %arg6: memref<8x8xbf16, #tpu.memory_space<vmem>>, %arg7: memref<1x8xf32, #tpu.memory_space<vmem>>, %arg8: memref<1x24xf32, #tpu.memory_space<vmem>>, %arg9: memref<1x24xf32, #tpu.memory_space<vmem>>, %arg10: memref<24x8xbf16, #tpu.memory_space<vmem>>, %arg11: memref<1x8xf32, #tpu.memory_space<vmem>>, %arg12: memref<256x8xbf16, #tpu.memory_space<vmem>>) attributes {dimension_semantics = [#tpu.dimension_semantics<parallel>], iteration_bounds = array<i64: 2>, scalar_prefetch = 0 : i64, scratch_operands = 0 : i64, tpu.core_type = #tpu.core_type<tc>, window_params = [{transform_indices = @transform_0, window_bounds = array<i64: 256, 4>}, {transform_indices = @transform_1, window_bounds = array<i64: 256, 8>}, {transform_indices = @transform_2, window_bounds = array<i64: 256, 8>}, {pipeline_mode = #tpu.pipeline_mode<synchronous>, transform_indices = @transform_3, window_bounds = array<i64: 4, 8>}, {pipeline_mode = #tpu.pipeline_mode<synchronous>, transform_indices = @transform_4, window_bounds = array<i64: 1, 8>}, {pipeline_mode = #tpu.pipeline_mode<synchronous>, transform_indices = @transform_5, window_bounds = array<i64: 8, 8>}, {pipeline_mode = #tpu.pipeline_mode<synchronous>, transform_indices = @transform_6, window_bounds = array<i64: 1, 8>}, {pipeline_mode = #tpu.pipeline_mode<synchronous>, transform_indices = @transform_7, window_bounds = array<i64: 1, 24>}, {pipeline_mode = #tpu.pipeline_mode<synchronous>, transform_indices = @transform_8, window_bounds = array<i64: 1, 24>}, {pipeline_mode = #tpu.pipeline_mode<synchronous>, transform_indices = @transform_9, window_bounds = array<i64: 24, 8>}, {pipeline_mode = #tpu.pipeline_mode<synchronous>, transform_indices = @transform_10, window_bounds = array<i64: 1, 8>}, {transform_indices = @transform_11, window_bounds = array<i64: 256, 8>}]} {
    %c0 = arith.constant 0 : index
    %c0_0 = arith.constant 0 : index
    %0 = vector.load %arg3[%c0, %c0_0] : memref<256x8xbf16, #tpu.memory_space<vmem>>, vector<256x8xbf16>
    %1 = arith.extf %0 : vector<256x8xbf16> to vector<256x8xf32>
    %c0_1 = arith.constant 0 : index
    %c0_2 = arith.constant 0 : index
    %2 = vector.load %arg1[%c0_1, %c0_2] : memref<256x4xbf16, #tpu.memory_space<vmem>>, vector<256x4xbf16>
    %c0_3 = arith.constant 0 : index
    %c0_4 = arith.constant 0 : index
    %3 = vector.load %arg4[%c0_3, %c0_4] : memref<4x8xbf16, #tpu.memory_space<vmem>>, vector<4x8xbf16>
    %cst = arith.constant dense<0.000000e+00> : vector<256x8xf32>
    %4 = tpu.matmul %2, %3, %cst {dimension_numbers = #tpu.dot_dimension_numbers<[1], [0], [0], [1], [0, 0, 1, 1], [], []>} : vector<256x4xbf16>, vector<4x8xbf16>, vector<256x8xf32> -> vector<256x8xf32>
    %c0_5 = arith.constant 0 : index
    %c0_6 = arith.constant 0 : index
    %5 = vector.load %arg5[%c0_5, %c0_6] : memref<1x8xf32, #tpu.memory_space<vmem>>, vector<1x8xf32>
    %6 = vector.broadcast %5 : vector<1x8xf32> to vector<256x8xf32>
    %7 = arith.addf %4, %6 : vector<256x8xf32>
    %c0_7 = arith.constant 0 : index
    %c0_8 = arith.constant 0 : index
    %8 = vector.load %arg2[%c0_7, %c0_8] : memref<256x8xbf16, #tpu.memory_space<vmem>>, vector<256x8xbf16>
    %c0_9 = arith.constant 0 : index
    %c0_10 = arith.constant 0 : index
    %9 = vector.load %arg6[%c0_9, %c0_10] : memref<8x8xbf16, #tpu.memory_space<vmem>>, vector<8x8xbf16>
    %cst_11 = arith.constant dense<0.000000e+00> : vector<256x8xf32>
    %10 = tpu.matmul %8, %9, %cst_11 {dimension_numbers = #tpu.dot_dimension_numbers<[1], [0], [0], [1], [0, 0, 1, 1], [], []>} : vector<256x8xbf16>, vector<8x8xbf16>, vector<256x8xf32> -> vector<256x8xf32>
    %c0_12 = arith.constant 0 : index
    %c0_13 = arith.constant 0 : index
    %11 = vector.load %arg7[%c0_12, %c0_13] : memref<1x8xf32, #tpu.memory_space<vmem>>, vector<1x8xf32>
    %12 = vector.broadcast %11 : vector<1x8xf32> to vector<256x8xf32>
    %13 = arith.addf %10, %12 : vector<256x8xf32>
    %14 = tpu.concatenate %1, %7, %13 in 1 : vector<256x8xf32>, vector<256x8xf32>, vector<256x8xf32> -> vector<256x24xf32>
    %cst_14 = arith.constant dense<0.000000e+00> : vector<256xf32>
    %15 = vector.multi_reduction <add>, %14, %cst_14 [1] : vector<256x24xf32> to vector<256xf32>
    %16 = vector.shape_cast %15 : vector<256xf32> to vector<256x1xf32>
    %cst_15 = arith.constant 2.400000e+01 : f32
    %17 = vector.broadcast %cst_15 : f32 to vector<256x1xf32>
    %18 = arith.divf %16, %17 : vector<256x1xf32>
    %19 = vector.broadcast %18 : vector<256x1xf32> to vector<256x24xf32>
    %20 = arith.subf %14, %19 : vector<256x24xf32>
    %21 = arith.mulf %20, %20 : vector<256x24xf32>
    %cst_16 = arith.constant dense<0.000000e+00> : vector<256xf32>
    %22 = vector.multi_reduction <add>, %21, %cst_16 [1] : vector<256x24xf32> to vector<256xf32>
    %23 = vector.shape_cast %22 : vector<256xf32> to vector<256x1xf32>
    %cst_17 = arith.constant 2.400000e+01 : f32
    %24 = vector.broadcast %cst_17 : f32 to vector<256x1xf32>
    %25 = arith.divf %23, %24 : vector<256x1xf32>
    %cst_18 = arith.constant 9.99999997E-7 : f32
    %26 = vector.broadcast %cst_18 : f32 to vector<256x1xf32>
    %27 = arith.addf %25, %26 : vector<256x1xf32>
    %28 = math.rsqrt %27 : vector<256x1xf32>
    %29 = vector.broadcast %28 : vector<256x1xf32> to vector<256x24xf32>
    %30 = arith.mulf %20, %29 : vector<256x24xf32>
    %c0_19 = arith.constant 0 : index
    %c0_20 = arith.constant 0 : index
    %31 = vector.load %arg8[%c0_19, %c0_20] : memref<1x24xf32, #tpu.memory_space<vmem>>, vector<1x24xf32>
    %32 = vector.broadcast %31 : vector<1x24xf32> to vector<256x24xf32>
    %33 = arith.mulf %30, %32 : vector<256x24xf32>
    %c0_21 = arith.constant 0 : index
    %c0_22 = arith.constant 0 : index
    %34 = vector.load %arg9[%c0_21, %c0_22] : memref<1x24xf32, #tpu.memory_space<vmem>>, vector<1x24xf32>
    %35 = vector.broadcast %34 : vector<1x24xf32> to vector<256x24xf32>
    %36 = arith.addf %33, %35 : vector<256x24xf32>
    %37 = arith.truncf %36 : vector<256x24xf32> to vector<256x24xbf16>
    %c0_23 = arith.constant 0 : index
    %c0_24 = arith.constant 0 : index
    %38 = vector.load %arg10[%c0_23, %c0_24] : memref<24x8xbf16, #tpu.memory_space<vmem>>, vector<24x8xbf16>
    %cst_25 = arith.constant dense<0.000000e+00> : vector<256x8xf32>
    %39 = tpu.matmul %37, %38, %cst_25 {dimension_numbers = #tpu.dot_dimension_numbers<[1], [0], [0], [1], [0, 0, 1, 1], [], []>} : vector<256x24xbf16>, vector<24x8xbf16>, vector<256x8xf32> -> vector<256x8xf32>
    %c0_26 = arith.constant 0 : index
    %c0_27 = arith.constant 0 : index
    %40 = vector.load %arg11[%c0_26, %c0_27] : memref<1x8xf32, #tpu.memory_space<vmem>>, vector<1x8xf32>
    %41 = vector.broadcast %40 : vector<1x8xf32> to vector<256x8xf32>
    %42 = arith.addf %39, %41 : vector<256x8xf32>
    %cst_28 = arith.constant 5.000000e-01 : f32
    %43 = vector.broadcast %cst_28 : f32 to vector<256x8xf32>
    %44 = arith.mulf %43, %42 : vector<256x8xf32>
    %cst_29 = arith.constant 4.471500e-02 : f32
    %45 = vector.broadcast %cst_29 : f32 to vector<256x8xf32>
    %46 = arith.mulf %45, %42 : vector<256x8xf32>
    %47 = arith.mulf %46, %42 : vector<256x8xf32>
    %48 = arith.mulf %47, %42 : vector<256x8xf32>
    %49 = arith.addf %42, %48 : vector<256x8xf32>
    %cst_30 = arith.constant 0.797884583 : f32
    %50 = vector.broadcast %cst_30 : f32 to vector<256x8xf32>
    %51 = arith.mulf %50, %49 : vector<256x8xf32>
    %52 = math.tanh %51 : vector<256x8xf32>
    %cst_31 = arith.constant 1.000000e+00 : f32
    %53 = vector.broadcast %cst_31 : f32 to vector<256x8xf32>
    %54 = arith.addf %53, %52 : vector<256x8xf32>
    %55 = arith.mulf %44, %54 : vector<256x8xf32>
    %56 = arith.truncf %55 : vector<256x8xf32> to vector<256x8xbf16>
    %c0_32 = arith.constant 0 : index
    %c0_33 = arith.constant 0 : index
    %57 = vector.load %arg12[%c0_32, %c0_33] : memref<256x8xbf16, #tpu.memory_space<vmem>>, vector<256x8xbf16>
    tpu.vector_store %arg12[%c0_32, %c0_33], %56 {strides = array<i32>} : memref<256x8xbf16, #tpu.memory_space<vmem>>, vector<256x8xbf16>,
    return
  }
  func.func @transform_0(%arg0: i32) -> (i32, i32) {
    %c0_i32 = arith.constant 0 : i32
    %c0_i32_0 = arith.constant 0 : i32
    return %arg0, %c0_i32 : i32, i32
  }
  func.func @transform_1(%arg0: i32) -> (i32, i32) {
    %c0_i32 = arith.constant 0 : i32
    %c0_i32_0 = arith.constant 0 : i32
    return %arg0, %c0_i32 : i32, i32
  }
  func.func @transform_2(%arg0: i32) -> (i32, i32) {
    %c0_i32 = arith.constant 0 : i32
    %c0_i32_0 = arith.constant 0 : i32
    return %arg0, %c0_i32 : i32, i32
  }
  func.func @transform_3(%arg0: i32) -> (i32, i32) {
    %c0_i32 = arith.constant 0 : i32
    %c0_i32_0 = arith.constant 0 : i32
    %c0_i32_1 = arith.constant 0 : i32
    return %c0_i32, %c0_i32_0 : i32, i32
  }
  func.func @transform_4(%arg0: i32) -> (i32, i32) {
    %c0_i32 = arith.constant 0 : i32
    %c0_i32_0 = arith.constant 0 : i32
    %c0_i32_1 = arith.constant 0 : i32
    return %c0_i32, %c0_i32_0 : i32, i32
  }
  func.func @transform_5(%arg0: i32) -> (i32, i32) {
    %c0_i32 = arith.constant 0 : i32
    %c0_i32_0 = arith.constant 0 : i32
    %c0_i32_1 = arith.constant 0 : i32
    return %c0_i32, %c0_i32_0 : i32, i32
  }
  func.func @transform_6(%arg0: i32) -> (i32, i32) {
    %c0_i32 = arith.constant 0 : i32
    %c0_i32_0 = arith.constant 0 : i32
    %c0_i32_1 = arith.constant 0 : i32
    return %c0_i32, %c0_i32_0 : i32, i32
  }
  func.func @transform_7(%arg0: i32) -> (i32, i32) {
    %c0_i32 = arith.constant 0 : i32
    %c0_i32_0 = arith.constant 0 : i32
    %c0_i32_1 = arith.constant 0 : i32
    return %c0_i32, %c0_i32_0 : i32, i32
  }
  func.func @transform_8(%arg0: i32) -> (i32, i32) {
    %c0_i32 = arith.constant 0 : i32
    %c0_i32_0 = arith.constant 0 : i32
    %c0_i32_1 = arith.constant 0 : i32
    return %c0_i32, %c0_i32_0 : i32, i32
  }
  func.func @transform_9(%arg0: i32) -> (i32, i32) {
    %c0_i32 = arith.constant 0 : i32
    %c0_i32_0 = arith.constant 0 : i32
    %c0_i32_1 = arith.constant 0 : i32
    return %c0_i32, %c0_i32_0 : i32, i32
  }
  func.func @transform_10(%arg0: i32) -> (i32, i32) {
    %c0_i32 = arith.constant 0 : i32
    %c0_i32_0 = arith.constant 0 : i32
    %c0_i32_1 = arith.constant 0 : i32
    return %c0_i32, %c0_i32_0 : i32, i32
  }
  func.func @transform_11(%arg0: i32) -> (i32, i32) {
    %c0_i32 = arith.constant 0 : i32
    %c0_i32_0 = arith.constant 0 : i32
    return %arg0, %c0_i32 : i32, i32
  }
}

module attributes {stable_mosaic.version = 11 : i64} {
  func.func @_spatial_attn_kernel(%arg0: i32, %arg1: memref<1x16x16x4xbf16, #tpu.memory_space<vmem>>, %arg2: memref<32x112xbf16, #tpu.memory_space<vmem>>, %arg3: memref<16x112xbf16, #tpu.memory_space<vmem>>, %arg4: memref<1xf32, #tpu.memory_space<smem>>, %arg5: memref<1x16x16x4xbf16, #tpu.memory_space<vmem>>) attributes {dimension_semantics = [#tpu.dimension_semantics<parallel>], iteration_bounds = array<i64: 2>, scalar_prefetch = 0 : i64, scratch_operands = 0 : i64, tpu.core_type = #tpu.core_type<tc>, window_params = [{transform_indices = @transform_0, window_bounds = array<i64: 1, 16, 16, 4>}, {pipeline_mode = #tpu.pipeline_mode<synchronous>, transform_indices = @transform_1, window_bounds = array<i64: 32, 112>}, {pipeline_mode = #tpu.pipeline_mode<synchronous>, transform_indices = @transform_2, window_bounds = array<i64: 16, 112>}, {transform_indices = @transform_3, window_bounds = array<i64: 1>}, {transform_indices = @transform_4, window_bounds = array<i64: 1, 16, 16, 4>}]} {
    %c0 = arith.constant 0 : index
    %c0_0 = arith.constant 0 : index
    %c0_1 = arith.constant 0 : index
    %c0_2 = arith.constant 0 : index
    %0 = vector.load %arg1[%c0, %c0_0, %c0_1, %c0_2] : memref<1x16x16x4xbf16, #tpu.memory_space<vmem>>, vector<1x16x16x4xbf16>
    %1 = vector.shape_cast %0 : vector<1x16x16x4xbf16> to vector<16x16x4xbf16>
    %2 = arith.extf %1 : vector<16x16x4xbf16> to vector<16x16x4xf32>
    %cst = arith.constant dense<0xFF800000> : vector<16x16xf32>
    %3 = vector.multi_reduction <maximumf>, %2, %cst [2] : vector<16x16x4xf32> to vector<16x16xf32>
    %cst_3 = arith.constant dense<0.000000e+00> : vector<16x16xf32>
    %4 = vector.multi_reduction <add>, %2, %cst_3 [2] : vector<16x16x4xf32> to vector<16x16xf32>
    %cst_4 = arith.constant 4.000000e+00 : f32
    %5 = vector.broadcast %cst_4 : f32 to vector<16x16xf32>
    %6 = arith.divf %4, %5 : vector<16x16xf32>
    %7 = tpu.concatenate %3, %6 in 1 : vector<16x16xf32>, vector<16x16xf32> -> vector<16x32xf32>
    %8 = arith.truncf %7 : vector<16x32xf32> to vector<16x32xbf16>
    %c0_5 = arith.constant 0 : index
    %c0_6 = arith.constant 0 : index
    %9 = vector.load %arg2[%c0_5, %c0_6] : memref<32x112xbf16, #tpu.memory_space<vmem>>, vector<32x112xbf16>
    %cst_7 = arith.constant dense<0.000000e+00> : vector<16x112xf32>
    %10 = tpu.matmul %8, %9, %cst_7 {dimension_numbers = #tpu.dot_dimension_numbers<[1], [0], [0], [1], [0, 0, 1, 1], [], []>} : vector<16x32xbf16>, vector<32x112xbf16>, vector<16x112xf32> -> vector<16x112xf32>
    %11 = vector.extract_strided_slice %10 {offsets = [0, 0], sizes = [16, 16], strides = [1, 1]} : vector<16x112xf32> to vector<16x16xf32>
    %12 = vector.extract_strided_slice %10 {offsets = [0, 16], sizes = [16, 16], strides = [1, 1]} : vector<16x112xf32> to vector<16x16xf32>
    %13 = vector.extract_strided_slice %10 {offsets = [0, 32], sizes = [16, 16], strides = [1, 1]} : vector<16x112xf32> to vector<16x16xf32>
    %14 = vector.extract_strided_slice %10 {offsets = [0, 48], sizes = [16, 16], strides = [1, 1]} : vector<16x112xf32> to vector<16x16xf32>
    %15 = vector.extract_strided_slice %10 {offsets = [0, 64], sizes = [16, 16], strides = [1, 1]} : vector<16x112xf32> to vector<16x16xf32>
    %16 = vector.extract_strided_slice %10 {offsets = [0, 80], sizes = [16, 16], strides = [1, 1]} : vector<16x112xf32> to vector<16x16xf32>
    %17 = vector.extract_strided_slice %10 {offsets = [0, 96], sizes = [16, 16], strides = [1, 1]} : vector<16x112xf32> to vector<16x16xf32>
    %18 = tpu.concatenate %11, %12, %13, %14, %15, %16, %17 in 0 : vector<16x16xf32>, vector<16x16xf32>, vector<16x16xf32>, vector<16x16xf32>, vector<16x16xf32>, vector<16x16xf32>, vector<16x16xf32> -> vector<112x16xf32>
    %c0_8 = arith.constant 0 : index
    %c0_9 = arith.constant 0 : index
    %19 = vector.load %arg3[%c0_8, %c0_9] : memref<16x112xbf16, #tpu.memory_space<vmem>>, vector<16x112xbf16>
    %20 = arith.truncf %18 : vector<112x16xf32> to vector<112x16xbf16>
    %cst_10 = arith.constant dense<0.000000e+00> : vector<16x16xf32>
    %21 = tpu.matmul %19, %20, %cst_10 {dimension_numbers = #tpu.dot_dimension_numbers<[1], [0], [0], [1], [0, 0, 1, 1], [], []>} : vector<16x112xbf16>, vector<112x16xbf16>, vector<16x16xf32> -> vector<16x16xf32>
    %c0_11 = arith.constant 0 : index
    %22 = memref.load %arg4[%c0_11] : memref<1xf32, #tpu.memory_space<smem>>
    %23 = vector.broadcast %22 : f32 to vector<16x16xf32>
    %24 = arith.addf %21, %23 : vector<16x16xf32>
    %cst_12 = arith.constant 0.000000e+00 : f32
    %25 = vector.broadcast %cst_12 : f32 to vector<16x16xf32>
    %26 = arith.subf %25, %24 : vector<16x16xf32>
    %27 = math.exp %26 : vector<16x16xf32>
    %cst_13 = arith.constant 1.000000e+00 : f32
    %28 = vector.broadcast %cst_13 : f32 to vector<16x16xf32>
    %29 = arith.addf %28, %27 : vector<16x16xf32>
    %cst_14 = arith.constant 1.000000e+00 : f32
    %30 = vector.broadcast %cst_14 : f32 to vector<16x16xf32>
    %31 = arith.divf %30, %29 : vector<16x16xf32>
    %32 = vector.shape_cast %31 : vector<16x16xf32> to vector<16x16x1xf32>
    %33 = vector.broadcast %32 : vector<16x16x1xf32> to vector<16x16x4xf32>
    %34 = arith.mulf %2, %33 : vector<16x16x4xf32>
    %35 = arith.truncf %34 : vector<16x16x4xf32> to vector<16x16x4xbf16>
    %c0_15 = arith.constant 0 : index
    %c0_16 = arith.constant 0 : index
    %c0_17 = arith.constant 0 : index
    %c0_18 = arith.constant 0 : index
    %36 = vector.load %arg5[%c0_15, %c0_16, %c0_17, %c0_18] : memref<1x16x16x4xbf16, #tpu.memory_space<vmem>>, vector<1x16x16x4xbf16>
    %37 = vector.shape_cast %36 : vector<1x16x16x4xbf16> to vector<16x16x4xbf16>
    %38 = vector.shape_cast %35 : vector<16x16x4xbf16> to vector<1x16x16x4xbf16>
    tpu.vector_store %arg5[%c0_15, %c0_16, %c0_17, %c0_18], %38 {strides = array<i32>} : memref<1x16x16x4xbf16, #tpu.memory_space<vmem>>, vector<1x16x16x4xbf16>,
    return
  }
  func.func @transform_0(%arg0: i32) -> (i32, i32, i32, i32) {
    %c0_i32 = arith.constant 0 : i32
    %c0_i32_0 = arith.constant 0 : i32
    %c0_i32_1 = arith.constant 0 : i32
    %c0_i32_2 = arith.constant 0 : i32
    return %arg0, %c0_i32, %c0_i32_0, %c0_i32_1 : i32, i32, i32, i32
  }
  func.func @transform_1(%arg0: i32) -> (i32, i32) {
    %c0_i32 = arith.constant 0 : i32
    %c0_i32_0 = arith.constant 0 : i32
    %c0_i32_1 = arith.constant 0 : i32
    return %c0_i32, %c0_i32_0 : i32, i32
  }
  func.func @transform_2(%arg0: i32) -> (i32, i32) {
    %c0_i32 = arith.constant 0 : i32
    %c0_i32_0 = arith.constant 0 : i32
    %c0_i32_1 = arith.constant 0 : i32
    return %c0_i32, %c0_i32_0 : i32, i32
  }
  func.func @transform_3(%arg0: i32) -> i32 {
    %c0_i32 = arith.constant 0 : i32
    %c0_i32_0 = arith.constant 0 : i32
    return %c0_i32 : i32
  }
  func.func @transform_4(%arg0: i32) -> (i32, i32, i32, i32) {
    %c0_i32 = arith.constant 0 : i32
    %c0_i32_0 = arith.constant 0 : i32
    %c0_i32_1 = arith.constant 0 : i32
    %c0_i32_2 = arith.constant 0 : i32
    return %arg0, %c0_i32, %c0_i32_0, %c0_i32_1 : i32, i32, i32, i32
  }
}

module attributes {stable_mosaic.version = 11 : i64} {
  func.func @_fusion_tail_kernel(%arg0: i32, %arg1: memref<1x16x16x8xbf16, #tpu.memory_space<vmem>>, %arg2: memref<1x16x16x4xbf16, #tpu.memory_space<vmem>>, %arg3: memref<1x16x16x8xbf16, #tpu.memory_space<vmem>>, %arg4: memref<1x256x8xbf16, #tpu.memory_space<vmem>>, %arg5: memref<8x4xbf16, #tpu.memory_space<vmem>>, %arg6: memref<4x8xbf16, #tpu.memory_space<vmem>>, %arg7: memref<1x20xf32, #tpu.memory_space<vmem>>, %arg8: memref<1x20xf32, #tpu.memory_space<vmem>>, %arg9: memref<9x20xf32, #tpu.memory_space<vmem>>, %arg10: memref<1x20xf32, #tpu.memory_space<vmem>>, %arg11: memref<1x20xf32, #tpu.memory_space<vmem>>, %arg12: memref<20x80xbf16, #tpu.memory_space<vmem>>, %arg13: memref<80x8xbf16, #tpu.memory_space<vmem>>, %arg14: memref<1x8xf32, #tpu.memory_space<vmem>>, %arg15: memref<1x256x8xf32, #tpu.memory_space<vmem>>, %arg16: memref<18x18x20xf32, #tpu.memory_space<vmem>>) attributes {dimension_semantics = [#tpu.dimension_semantics<parallel>], iteration_bounds = array<i64: 2>, scalar_prefetch = 0 : i64, scratch_operands = 1 : i64, tpu.core_type = #tpu.core_type<tc>, window_params = [{transform_indices = @transform_0, window_bounds = array<i64: 1, 16, 16, 8>}, {transform_indices = @transform_1, window_bounds = array<i64: 1, 16, 16, 4>}, {transform_indices = @transform_2, window_bounds = array<i64: 1, 16, 16, 8>}, {transform_indices = @transform_3, window_bounds = array<i64: 1, 256, 8>}, {pipeline_mode = #tpu.pipeline_mode<synchronous>, transform_indices = @transform_4, window_bounds = array<i64: 8, 4>}, {pipeline_mode = #tpu.pipeline_mode<synchronous>, transform_indices = @transform_5, window_bounds = array<i64: 4, 8>}, {pipeline_mode = #tpu.pipeline_mode<synchronous>, transform_indices = @transform_6, window_bounds = array<i64: 1, 20>}, {pipeline_mode = #tpu.pipeline_mode<synchronous>, transform_indices = @transform_7, window_bounds = array<i64: 1, 20>}, {pipeline_mode = #tpu.pipeline_mode<synchronous>, transform_indices = @transform_8, window_bounds = array<i64: 9, 20>}, {pipeline_mode = #tpu.pipeline_mode<synchronous>, transform_indices = @transform_9, window_bounds = array<i64: 1, 20>}, {pipeline_mode = #tpu.pipeline_mode<synchronous>, transform_indices = @transform_10, window_bounds = array<i64: 1, 20>}, {pipeline_mode = #tpu.pipeline_mode<synchronous>, transform_indices = @transform_11, window_bounds = array<i64: 20, 80>}, {pipeline_mode = #tpu.pipeline_mode<synchronous>, transform_indices = @transform_12, window_bounds = array<i64: 80, 8>}, {pipeline_mode = #tpu.pipeline_mode<synchronous>, transform_indices = @transform_13, window_bounds = array<i64: 1, 8>}, {transform_indices = @transform_14, window_bounds = array<i64: 1, 256, 8>}]} {
    %c0 = arith.constant 0 : index
    %c0_0 = arith.constant 0 : index
    %c0_1 = arith.constant 0 : index
    %c0_2 = arith.constant 0 : index
    %0 = vector.load %arg1[%c0, %c0_0, %c0_1, %c0_2] : memref<1x16x16x8xbf16, #tpu.memory_space<vmem>>, vector<1x16x16x8xbf16>
    %1 = vector.shape_cast %0 : vector<1x16x16x8xbf16> to vector<16x16x8xbf16>
    %2 = arith.extf %1 : vector<16x16x8xbf16> to vector<16x16x8xf32>
    %3 = vector.shape_cast %2 : vector<16x16x8xf32> to vector<256x8xf32>
    %cst = arith.constant dense<0xFF800000> : vector<8xf32>
    %4 = vector.multi_reduction <maximumf>, %3, %cst [0] : vector<256x8xf32> to vector<8xf32>
    %5 = vector.shape_cast %4 : vector<8xf32> to vector<1x8xf32>
    %6 = arith.truncf %5 : vector<1x8xf32> to vector<1x8xbf16>
    %cst_3 = arith.constant dense<0.000000e+00> : vector<8xf32>
    %7 = vector.multi_reduction <add>, %3, %cst_3 [0] : vector<256x8xf32> to vector<8xf32>
    %8 = vector.shape_cast %7 : vector<8xf32> to vector<1x8xf32>
    %cst_4 = arith.constant 2.560000e+02 : f32
    %9 = vector.broadcast %cst_4 : f32 to vector<1x8xf32>
    %10 = arith.divf %8, %9 : vector<1x8xf32>
    %11 = arith.truncf %10 : vector<1x8xf32> to vector<1x8xbf16>
    %c0_5 = arith.constant 0 : index
    %c0_6 = arith.constant 0 : index
    %12 = vector.load %arg5[%c0_5, %c0_6] : memref<8x4xbf16, #tpu.memory_space<vmem>>, vector<8x4xbf16>
    %c0_7 = arith.constant 0 : index
    %c0_8 = arith.constant 0 : index
    %13 = vector.load %arg6[%c0_7, %c0_8] : memref<4x8xbf16, #tpu.memory_space<vmem>>, vector<4x8xbf16>
    %cst_9 = arith.constant dense<0.000000e+00> : vector<1x4xf32>
    %14 = tpu.matmul %6, %12, %cst_9 {dimension_numbers = #tpu.dot_dimension_numbers<[1], [0], [0], [1], [0, 0, 1, 1], [], []>} : vector<1x8xbf16>, vector<8x4xbf16>, vector<1x4xf32> -> vector<1x4xf32>
    %cst_10 = arith.constant 0.000000e+00 : f32
    %15 = vector.broadcast %cst_10 : f32 to vector<1x4xf32>
    %16 = arith.maximumf %14, %15 : vector<1x4xf32>
    %cst_11 = arith.constant dense<0.000000e+00> : vector<1x4xf32>
    %17 = tpu.matmul %11, %12, %cst_11 {dimension_numbers = #tpu.dot_dimension_numbers<[1], [0], [0], [1], [0, 0, 1, 1], [], []>} : vector<1x8xbf16>, vector<8x4xbf16>, vector<1x4xf32> -> vector<1x4xf32>
    %cst_12 = arith.constant 0.000000e+00 : f32
    %18 = vector.broadcast %cst_12 : f32 to vector<1x4xf32>
    %19 = arith.maximumf %17, %18 : vector<1x4xf32>
    %20 = arith.truncf %16 : vector<1x4xf32> to vector<1x4xbf16>
    %cst_13 = arith.constant dense<0.000000e+00> : vector<1x8xf32>
    %21 = tpu.matmul %20, %13, %cst_13 {dimension_numbers = #tpu.dot_dimension_numbers<[1], [0], [0], [1], [0, 0, 1, 1], [], []>} : vector<1x4xbf16>, vector<4x8xbf16>, vector<1x8xf32> -> vector<1x8xf32>
    %22 = arith.truncf %19 : vector<1x4xf32> to vector<1x4xbf16>
    %cst_14 = arith.constant dense<0.000000e+00> : vector<1x8xf32>
    %23 = tpu.matmul %22, %13, %cst_14 {dimension_numbers = #tpu.dot_dimension_numbers<[1], [0], [0], [1], [0, 0, 1, 1], [], []>} : vector<1x4xbf16>, vector<4x8xbf16>, vector<1x8xf32> -> vector<1x8xf32>
    %24 = arith.addf %21, %23 : vector<1x8xf32>
    %cst_15 = arith.constant 0.000000e+00 : f32
    %25 = vector.broadcast %cst_15 : f32 to vector<1x8xf32>
    %26 = arith.subf %25, %24 : vector<1x8xf32>
    %27 = math.exp %26 : vector<1x8xf32>
    %cst_16 = arith.constant 1.000000e+00 : f32
    %28 = vector.broadcast %cst_16 : f32 to vector<1x8xf32>
    %29 = arith.addf %28, %27 : vector<1x8xf32>
    %cst_17 = arith.constant 1.000000e+00 : f32
    %30 = vector.broadcast %cst_17 : f32 to vector<1x8xf32>
    %31 = arith.divf %30, %29 : vector<1x8xf32>
    %32 = vector.shape_cast %31 : vector<1x8xf32> to vector<1x1x8xf32>
    %33 = vector.broadcast %32 : vector<1x1x8xf32> to vector<16x16x8xf32>
    %34 = arith.mulf %2, %33 : vector<16x16x8xf32>
    %c0_18 = arith.constant 0 : index
    %c0_19 = arith.constant 0 : index
    %c0_20 = arith.constant 0 : index
    %c0_21 = arith.constant 0 : index
    %35 = vector.load %arg2[%c0_18, %c0_19, %c0_20, %c0_21] : memref<1x16x16x4xbf16, #tpu.memory_space<vmem>>, vector<1x16x16x4xbf16>
    %36 = vector.shape_cast %35 : vector<1x16x16x4xbf16> to vector<16x16x4xbf16>
    %37 = arith.extf %36 : vector<16x16x4xbf16> to vector<16x16x4xf32>
    %c0_22 = arith.constant 0 : index
    %c0_23 = arith.constant 0 : index
    %c0_24 = arith.constant 0 : index
    %c0_25 = arith.constant 0 : index
    %38 = vector.load %arg3[%c0_22, %c0_23, %c0_24, %c0_25] : memref<1x16x16x8xbf16, #tpu.memory_space<vmem>>, vector<1x16x16x8xbf16>
    %39 = vector.shape_cast %38 : vector<1x16x16x8xbf16> to vector<16x16x8xbf16>
    %40 = arith.extf %39 : vector<16x16x8xbf16> to vector<16x16x8xf32>
    %41 = tpu.concatenate %34, %37, %40 in 2 : vector<16x16x8xf32>, vector<16x16x4xf32>, vector<16x16x8xf32> -> vector<16x16x20xf32>
    %cst_26 = arith.constant dense<0.000000e+00> : vector<16x16xf32>
    %42 = vector.multi_reduction <add>, %41, %cst_26 [2] : vector<16x16x20xf32> to vector<16x16xf32>
    %43 = vector.shape_cast %42 : vector<16x16xf32> to vector<16x16x1xf32>
    %cst_27 = arith.constant 2.000000e+01 : f32
    %44 = vector.broadcast %cst_27 : f32 to vector<16x16x1xf32>
    %45 = arith.divf %43, %44 : vector<16x16x1xf32>
    %46 = vector.broadcast %45 : vector<16x16x1xf32> to vector<16x16x20xf32>
    %47 = arith.subf %41, %46 : vector<16x16x20xf32>
    %48 = arith.mulf %47, %47 : vector<16x16x20xf32>
    %cst_28 = arith.constant dense<0.000000e+00> : vector<16x16xf32>
    %49 = vector.multi_reduction <add>, %48, %cst_28 [2] : vector<16x16x20xf32> to vector<16x16xf32>
    %50 = vector.shape_cast %49 : vector<16x16xf32> to vector<16x16x1xf32>
    %cst_29 = arith.constant 2.000000e+01 : f32
    %51 = vector.broadcast %cst_29 : f32 to vector<16x16x1xf32>
    %52 = arith.divf %50, %51 : vector<16x16x1xf32>
    %cst_30 = arith.constant 9.99999997E-7 : f32
    %53 = vector.broadcast %cst_30 : f32 to vector<16x16x1xf32>
    %54 = arith.addf %52, %53 : vector<16x16x1xf32>
    %55 = math.rsqrt %54 : vector<16x16x1xf32>
    %56 = vector.broadcast %55 : vector<16x16x1xf32> to vector<16x16x20xf32>
    %57 = arith.mulf %47, %56 : vector<16x16x20xf32>
    %c0_31 = arith.constant 0 : index
    %c0_32 = arith.constant 0 : index
    %58 = vector.load %arg7[%c0_31, %c0_32] : memref<1x20xf32, #tpu.memory_space<vmem>>, vector<1x20xf32>
    %59 = vector.shape_cast %58 : vector<1x20xf32> to vector<1x1x20xf32>
    %60 = vector.broadcast %59 : vector<1x1x20xf32> to vector<16x16x20xf32>
    %61 = arith.mulf %57, %60 : vector<16x16x20xf32>
    %c0_33 = arith.constant 0 : index
    %c0_34 = arith.constant 0 : index
    %62 = vector.load %arg8[%c0_33, %c0_34] : memref<1x20xf32, #tpu.memory_space<vmem>>, vector<1x20xf32>
    %63 = vector.shape_cast %62 : vector<1x20xf32> to vector<1x1x20xf32>
    %64 = vector.broadcast %63 : vector<1x1x20xf32> to vector<16x16x20xf32>
    %65 = arith.addf %61, %64 : vector<16x16x20xf32>
    %cst_35 = arith.constant 0.000000e+00 : f32
    %66 = vector.broadcast %cst_35 : f32 to vector<1x18x20xf32>
    %c0_36 = arith.constant 0 : index
    %c0_37 = arith.constant 0 : index
    %c0_38 = arith.constant 0 : index
    %67 = vector.load %arg16[%c0_36, %c0_37, %c0_38] : memref<18x18x20xf32, #tpu.memory_space<vmem>>, vector<1x18x20xf32>
    tpu.vector_store %arg16[%c0_36, %c0_37, %c0_38], %66 {strides = array<i32>} : memref<18x18x20xf32, #tpu.memory_space<vmem>>, vector<1x18x20xf32>,
    %cst_39 = arith.constant 0.000000e+00 : f32
    %68 = vector.broadcast %cst_39 : f32 to vector<1x18x20xf32>
    %c17 = arith.constant 17 : index
    %c0_40 = arith.constant 0 : index
    %c0_41 = arith.constant 0 : index
    %69 = vector.load %arg16[%c17, %c0_40, %c0_41] : memref<18x18x20xf32, #tpu.memory_space<vmem>>, vector<1x18x20xf32>
    tpu.vector_store %arg16[%c17, %c0_40, %c0_41], %68 {strides = array<i32>} : memref<18x18x20xf32, #tpu.memory_space<vmem>>, vector<1x18x20xf32>,
    %cst_42 = arith.constant 0.000000e+00 : f32
    %70 = vector.broadcast %cst_42 : f32 to vector<16x1x20xf32>
    %c1 = arith.constant 1 : index
    %c0_43 = arith.constant 0 : index
    %c0_44 = arith.constant 0 : index
    %71 = vector.load %arg16[%c1, %c0_43, %c0_44] : memref<18x18x20xf32, #tpu.memory_space<vmem>>, vector<16x1x20xf32>
    tpu.vector_store %arg16[%c1, %c0_43, %c0_44], %70 {strides = array<i32>} : memref<18x18x20xf32, #tpu.memory_space<vmem>>, vector<16x1x20xf32>,
    %cst_45 = arith.constant 0.000000e+00 : f32
    %72 = vector.broadcast %cst_45 : f32 to vector<16x1x20xf32>
    %c1_46 = arith.constant 1 : index
    %c17_47 = arith.constant 17 : index
    %c0_48 = arith.constant 0 : index
    %73 = vector.load %arg16[%c1_46, %c17_47, %c0_48] : memref<18x18x20xf32, #tpu.memory_space<vmem>>, vector<16x1x20xf32>
    tpu.vector_store %arg16[%c1_46, %c17_47, %c0_48], %72 {strides = array<i32>} : memref<18x18x20xf32, #tpu.memory_space<vmem>>, vector<16x1x20xf32>,
    %c1_49 = arith.constant 1 : index
    %c1_50 = arith.constant 1 : index
    %c0_51 = arith.constant 0 : index
    %74 = vector.load %arg16[%c1_49, %c1_50, %c0_51] : memref<18x18x20xf32, #tpu.memory_space<vmem>>, vector<16x16x20xf32>
    tpu.vector_store %arg16[%c1_49, %c1_50, %c0_51], %65 {strides = array<i32>} : memref<18x18x20xf32, #tpu.memory_space<vmem>>, vector<16x16x20xf32>,
    %c0_52 = arith.constant 0 : index
    %c0_53 = arith.constant 0 : index
    %75 = vector.load %arg9[%c0_52, %c0_53] : memref<9x20xf32, #tpu.memory_space<vmem>>, vector<9x20xf32>
    %cst_54 = arith.constant 0.000000e+00 : f32
    %76 = vector.broadcast %cst_54 : f32 to vector<16x16x20xf32>
    %77 = vector.extract_strided_slice %75 {offsets = [0, 0], sizes = [1, 20], strides = [1, 1]} : vector<9x20xf32> to vector<1x20xf32>
    %78 = vector.shape_cast %77 : vector<1x20xf32> to vector<1x1x20xf32>
    %c0_55 = arith.constant 0 : index
    %c0_56 = arith.constant 0 : index
    %c0_57 = arith.constant 0 : index
    %79 = vector.load %arg16[%c0_55, %c0_56, %c0_57] : memref<18x18x20xf32, #tpu.memory_space<vmem>>, vector<16x16x20xf32>
    %80 = vector.broadcast %78 : vector<1x1x20xf32> to vector<16x16x20xf32>
    %81 = arith.mulf %79, %80 : vector<16x16x20xf32>
    %82 = arith.addf %76, %81 : vector<16x16x20xf32>
    %83 = vector.extract_strided_slice %75 {offsets = [1, 0], sizes = [1, 20], strides = [1, 1]} : vector<9x20xf32> to vector<1x20xf32>
    %84 = vector.shape_cast %83 : vector<1x20xf32> to vector<1x1x20xf32>
    %c0_58 = arith.constant 0 : index
    %c1_59 = arith.constant 1 : index
    %c0_60 = arith.constant 0 : index
    %85 = vector.load %arg16[%c0_58, %c1_59, %c0_60] : memref<18x18x20xf32, #tpu.memory_space<vmem>>, vector<16x16x20xf32>
    %86 = vector.broadcast %84 : vector<1x1x20xf32> to vector<16x16x20xf32>
    %87 = arith.mulf %85, %86 : vector<16x16x20xf32>
    %88 = arith.addf %82, %87 : vector<16x16x20xf32>
    %89 = vector.extract_strided_slice %75 {offsets = [2, 0], sizes = [1, 20], strides = [1, 1]} : vector<9x20xf32> to vector<1x20xf32>
    %90 = vector.shape_cast %89 : vector<1x20xf32> to vector<1x1x20xf32>
    %c0_61 = arith.constant 0 : index
    %c2 = arith.constant 2 : index
    %c0_62 = arith.constant 0 : index
    %91 = vector.load %arg16[%c0_61, %c2, %c0_62] : memref<18x18x20xf32, #tpu.memory_space<vmem>>, vector<16x16x20xf32>
    %92 = vector.broadcast %90 : vector<1x1x20xf32> to vector<16x16x20xf32>
    %93 = arith.mulf %91, %92 : vector<16x16x20xf32>
    %94 = arith.addf %88, %93 : vector<16x16x20xf32>
    %95 = vector.extract_strided_slice %75 {offsets = [3, 0], sizes = [1, 20], strides = [1, 1]} : vector<9x20xf32> to vector<1x20xf32>
    %96 = vector.shape_cast %95 : vector<1x20xf32> to vector<1x1x20xf32>
    %c1_63 = arith.constant 1 : index
    %c0_64 = arith.constant 0 : index
    %c0_65 = arith.constant 0 : index
    %97 = vector.load %arg16[%c1_63, %c0_64, %c0_65] : memref<18x18x20xf32, #tpu.memory_space<vmem>>, vector<16x16x20xf32>
    %98 = vector.broadcast %96 : vector<1x1x20xf32> to vector<16x16x20xf32>
    %99 = arith.mulf %97, %98 : vector<16x16x20xf32>
    %100 = arith.addf %94, %99 : vector<16x16x20xf32>
    %101 = vector.extract_strided_slice %75 {offsets = [4, 0], sizes = [1, 20], strides = [1, 1]} : vector<9x20xf32> to vector<1x20xf32>
    %102 = vector.shape_cast %101 : vector<1x20xf32> to vector<1x1x20xf32>
    %c1_66 = arith.constant 1 : index
    %c1_67 = arith.constant 1 : index
    %c0_68 = arith.constant 0 : index
    %103 = vector.load %arg16[%c1_66, %c1_67, %c0_68] : memref<18x18x20xf32, #tpu.memory_space<vmem>>, vector<16x16x20xf32>
    %104 = vector.broadcast %102 : vector<1x1x20xf32> to vector<16x16x20xf32>
    %105 = arith.mulf %103, %104 : vector<16x16x20xf32>
    %106 = arith.addf %100, %105 : vector<16x16x20xf32>
    %107 = vector.extract_strided_slice %75 {offsets = [5, 0], sizes = [1, 20], strides = [1, 1]} : vector<9x20xf32> to vector<1x20xf32>
    %108 = vector.shape_cast %107 : vector<1x20xf32> to vector<1x1x20xf32>
    %c1_69 = arith.constant 1 : index
    %c2_70 = arith.constant 2 : index
    %c0_71 = arith.constant 0 : index
    %109 = vector.load %arg16[%c1_69, %c2_70, %c0_71] : memref<18x18x20xf32, #tpu.memory_space<vmem>>, vector<16x16x20xf32>
    %110 = vector.broadcast %108 : vector<1x1x20xf32> to vector<16x16x20xf32>
    %111 = arith.mulf %109, %110 : vector<16x16x20xf32>
    %112 = arith.addf %106, %111 : vector<16x16x20xf32>
    %113 = vector.extract_strided_slice %75 {offsets = [6, 0], sizes = [1, 20], strides = [1, 1]} : vector<9x20xf32> to vector<1x20xf32>
    %114 = vector.shape_cast %113 : vector<1x20xf32> to vector<1x1x20xf32>
    %c2_72 = arith.constant 2 : index
    %c0_73 = arith.constant 0 : index
    %c0_74 = arith.constant 0 : index
    %115 = vector.load %arg16[%c2_72, %c0_73, %c0_74] : memref<18x18x20xf32, #tpu.memory_space<vmem>>, vector<16x16x20xf32>
    %116 = vector.broadcast %114 : vector<1x1x20xf32> to vector<16x16x20xf32>
    %117 = arith.mulf %115, %116 : vector<16x16x20xf32>
    %118 = arith.addf %112, %117 : vector<16x16x20xf32>
    %119 = vector.extract_strided_slice %75 {offsets = [7, 0], sizes = [1, 20], strides = [1, 1]} : vector<9x20xf32> to vector<1x20xf32>
    %120 = vector.shape_cast %119 : vector<1x20xf32> to vector<1x1x20xf32>
    %c2_75 = arith.constant 2 : index
    %c1_76 = arith.constant 1 : index
    %c0_77 = arith.constant 0 : index
    %121 = vector.load %arg16[%c2_75, %c1_76, %c0_77] : memref<18x18x20xf32, #tpu.memory_space<vmem>>, vector<16x16x20xf32>
    %122 = vector.broadcast %120 : vector<1x1x20xf32> to vector<16x16x20xf32>
    %123 = arith.mulf %121, %122 : vector<16x16x20xf32>
    %124 = arith.addf %118, %123 : vector<16x16x20xf32>
    %125 = vector.extract_strided_slice %75 {offsets = [8, 0], sizes = [1, 20], strides = [1, 1]} : vector<9x20xf32> to vector<1x20xf32>
    %126 = vector.shape_cast %125 : vector<1x20xf32> to vector<1x1x20xf32>
    %c2_78 = arith.constant 2 : index
    %c2_79 = arith.constant 2 : index
    %c0_80 = arith.constant 0 : index
    %127 = vector.load %arg16[%c2_78, %c2_79, %c0_80] : memref<18x18x20xf32, #tpu.memory_space<vmem>>, vector<16x16x20xf32>
    %128 = vector.broadcast %126 : vector<1x1x20xf32> to vector<16x16x20xf32>
    %129 = arith.mulf %127, %128 : vector<16x16x20xf32>
    %130 = arith.addf %124, %129 : vector<16x16x20xf32>
    %cst_81 = arith.constant 5.000000e-01 : f32
    %131 = vector.broadcast %cst_81 : f32 to vector<16x16x20xf32>
    %132 = arith.mulf %131, %130 : vector<16x16x20xf32>
    %cst_82 = arith.constant 4.471500e-02 : f32
    %133 = vector.broadcast %cst_82 : f32 to vector<16x16x20xf32>
    %134 = arith.mulf %133, %130 : vector<16x16x20xf32>
    %135 = arith.mulf %134, %130 : vector<16x16x20xf32>
    %136 = arith.mulf %135, %130 : vector<16x16x20xf32>
    %137 = arith.addf %130, %136 : vector<16x16x20xf32>
    %cst_83 = arith.constant 0.797884583 : f32
    %138 = vector.broadcast %cst_83 : f32 to vector<16x16x20xf32>
    %139 = arith.mulf %138, %137 : vector<16x16x20xf32>
    %140 = math.tanh %139 : vector<16x16x20xf32>
    %cst_84 = arith.constant 1.000000e+00 : f32
    %141 = vector.broadcast %cst_84 : f32 to vector<16x16x20xf32>
    %142 = arith.addf %141, %140 : vector<16x16x20xf32>
    %143 = arith.mulf %132, %142 : vector<16x16x20xf32>
    %144 = arith.addf %143, %65 : vector<16x16x20xf32>
    %c0_85 = arith.constant 0 : index
    %c0_86 = arith.constant 0 : index
    %145 = vector.load %arg10[%c0_85, %c0_86] : memref<1x20xf32, #tpu.memory_space<vmem>>, vector<1x20xf32>
    %146 = vector.shape_cast %145 : vector<1x20xf32> to vector<1x1x20xf32>
    %147 = vector.broadcast %146 : vector<1x1x20xf32> to vector<16x16x20xf32>
    %148 = arith.mulf %144, %147 : vector<16x16x20xf32>
    %c0_87 = arith.constant 0 : index
    %c0_88 = arith.constant 0 : index
    %149 = vector.load %arg11[%c0_87, %c0_88] : memref<1x20xf32, #tpu.memory_space<vmem>>, vector<1x20xf32>
    %150 = vector.shape_cast %149 : vector<1x20xf32> to vector<1x1x20xf32>
    %151 = vector.broadcast %150 : vector<1x1x20xf32> to vector<16x16x20xf32>
    %152 = arith.addf %148, %151 : vector<16x16x20xf32>
    %153 = vector.shape_cast %152 : vector<16x16x20xf32> to vector<256x20xf32>
    %154 = arith.truncf %153 : vector<256x20xf32> to vector<256x20xbf16>
    %c0_89 = arith.constant 0 : index
    %c0_90 = arith.constant 0 : index
    %155 = vector.load %arg12[%c0_89, %c0_90] : memref<20x80xbf16, #tpu.memory_space<vmem>>, vector<20x80xbf16>
    %cst_91 = arith.constant dense<0.000000e+00> : vector<256x80xf32>
    %156 = tpu.matmul %154, %155, %cst_91 {dimension_numbers = #tpu.dot_dimension_numbers<[1], [0], [0], [1], [0, 0, 1, 1], [], []>} : vector<256x20xbf16>, vector<20x80xbf16>, vector<256x80xf32> -> vector<256x80xf32>
    %cst_92 = arith.constant 5.000000e-01 : f32
    %157 = vector.broadcast %cst_92 : f32 to vector<256x80xf32>
    %158 = arith.mulf %157, %156 : vector<256x80xf32>
    %cst_93 = arith.constant 4.471500e-02 : f32
    %159 = vector.broadcast %cst_93 : f32 to vector<256x80xf32>
    %160 = arith.mulf %159, %156 : vector<256x80xf32>
    %161 = arith.mulf %160, %156 : vector<256x80xf32>
    %162 = arith.mulf %161, %156 : vector<256x80xf32>
    %163 = arith.addf %156, %162 : vector<256x80xf32>
    %cst_94 = arith.constant 0.797884583 : f32
    %164 = vector.broadcast %cst_94 : f32 to vector<256x80xf32>
    %165 = arith.mulf %164, %163 : vector<256x80xf32>
    %166 = math.tanh %165 : vector<256x80xf32>
    %cst_95 = arith.constant 1.000000e+00 : f32
    %167 = vector.broadcast %cst_95 : f32 to vector<256x80xf32>
    %168 = arith.addf %167, %166 : vector<256x80xf32>
    %169 = arith.mulf %158, %168 : vector<256x80xf32>
    %170 = arith.truncf %169 : vector<256x80xf32> to vector<256x80xbf16>
    %c0_96 = arith.constant 0 : index
    %c0_97 = arith.constant 0 : index
    %171 = vector.load %arg13[%c0_96, %c0_97] : memref<80x8xbf16, #tpu.memory_space<vmem>>, vector<80x8xbf16>
    %cst_98 = arith.constant dense<0.000000e+00> : vector<256x8xf32>
    %172 = tpu.matmul %170, %171, %cst_98 {dimension_numbers = #tpu.dot_dimension_numbers<[1], [0], [0], [1], [0, 0, 1, 1], [], []>} : vector<256x80xbf16>, vector<80x8xbf16>, vector<256x8xf32> -> vector<256x8xf32>
    %c0_99 = arith.constant 0 : index
    %c0_100 = arith.constant 0 : index
    %173 = vector.load %arg14[%c0_99, %c0_100] : memref<1x8xf32, #tpu.memory_space<vmem>>, vector<1x8xf32>
    %174 = vector.broadcast %173 : vector<1x8xf32> to vector<256x8xf32>
    %175 = arith.addf %172, %174 : vector<256x8xf32>
    %c0_101 = arith.constant 0 : index
    %c0_102 = arith.constant 0 : index
    %c0_103 = arith.constant 0 : index
    %176 = vector.load %arg4[%c0_101, %c0_102, %c0_103] : memref<1x256x8xbf16, #tpu.memory_space<vmem>>, vector<1x256x8xbf16>
    %177 = vector.shape_cast %176 : vector<1x256x8xbf16> to vector<256x8xbf16>
    %178 = arith.extf %177 : vector<256x8xbf16> to vector<256x8xf32>
    %179 = arith.addf %175, %178 : vector<256x8xf32>
    %c0_104 = arith.constant 0 : index
    %c0_105 = arith.constant 0 : index
    %c0_106 = arith.constant 0 : index
    %180 = vector.load %arg15[%c0_104, %c0_105, %c0_106] : memref<1x256x8xf32, #tpu.memory_space<vmem>>, vector<1x256x8xf32>
    %181 = vector.shape_cast %180 : vector<1x256x8xf32> to vector<256x8xf32>
    %182 = vector.shape_cast %179 : vector<256x8xf32> to vector<1x256x8xf32>
    tpu.vector_store %arg15[%c0_104, %c0_105, %c0_106], %182 {strides = array<i32>} : memref<1x256x8xf32, #tpu.memory_space<vmem>>, vector<1x256x8xf32>,
    return
  }
  func.func @transform_0(%arg0: i32) -> (i32, i32, i32, i32) {
    %c0_i32 = arith.constant 0 : i32
    %c0_i32_0 = arith.constant 0 : i32
    %c0_i32_1 = arith.constant 0 : i32
    %c0_i32_2 = arith.constant 0 : i32
    return %arg0, %c0_i32, %c0_i32_0, %c0_i32_1 : i32, i32, i32, i32
  }
  func.func @transform_1(%arg0: i32) -> (i32, i32, i32, i32) {
    %c0_i32 = arith.constant 0 : i32
    %c0_i32_0 = arith.constant 0 : i32
    %c0_i32_1 = arith.constant 0 : i32
    %c0_i32_2 = arith.constant 0 : i32
    return %arg0, %c0_i32, %c0_i32_0, %c0_i32_1 : i32, i32, i32, i32
  }
  func.func @transform_2(%arg0: i32) -> (i32, i32, i32, i32) {
    %c0_i32 = arith.constant 0 : i32
    %c0_i32_0 = arith.constant 0 : i32
    %c0_i32_1 = arith.constant 0 : i32
    %c0_i32_2 = arith.constant 0 : i32
    return %arg0, %c0_i32, %c0_i32_0, %c0_i32_1 : i32, i32, i32, i32
  }
  func.func @transform_3(%arg0: i32) -> (i32, i32, i32) {
    %c0_i32 = arith.constant 0 : i32
    %c0_i32_0 = arith.constant 0 : i32
    %c0_i32_1 = arith.constant 0 : i32
    return %arg0, %c0_i32, %c0_i32_0 : i32, i32, i32
  }
  func.func @transform_4(%arg0: i32) -> (i32, i32) {
    %c0_i32 = arith.constant 0 : i32
    %c0_i32_0 = arith.constant 0 : i32
    %c0_i32_1 = arith.constant 0 : i32
    return %c0_i32, %c0_i32_0 : i32, i32
  }
  func.func @transform_5(%arg0: i32) -> (i32, i32) {
    %c0_i32 = arith.constant 0 : i32
    %c0_i32_0 = arith.constant 0 : i32
    %c0_i32_1 = arith.constant 0 : i32
    return %c0_i32, %c0_i32_0 : i32, i32
  }
  func.func @transform_6(%arg0: i32) -> (i32, i32) {
    %c0_i32 = arith.constant 0 : i32
    %c0_i32_0 = arith.constant 0 : i32
    %c0_i32_1 = arith.constant 0 : i32
    return %c0_i32, %c0_i32_0 : i32, i32
  }
  func.func @transform_7(%arg0: i32) -> (i32, i32) {
    %c0_i32 = arith.constant 0 : i32
    %c0_i32_0 = arith.constant 0 : i32
    %c0_i32_1 = arith.constant 0 : i32
    return %c0_i32, %c0_i32_0 : i32, i32
  }
  func.func @transform_8(%arg0: i32) -> (i32, i32) {
    %c0_i32 = arith.constant 0 : i32
    %c0_i32_0 = arith.constant 0 : i32
    %c0_i32_1 = arith.constant 0 : i32
    return %c0_i32, %c0_i32_0 : i32, i32
  }
  func.func @transform_9(%arg0: i32) -> (i32, i32) {
    %c0_i32 = arith.constant 0 : i32
    %c0_i32_0 = arith.constant 0 : i32
    %c0_i32_1 = arith.constant 0 : i32
    return %c0_i32, %c0_i32_0 : i32, i32
  }
  func.func @transform_10(%arg0: i32) -> (i32, i32) {
    %c0_i32 = arith.constant 0 : i32
    %c0_i32_0 = arith.constant 0 : i32
    %c0_i32_1 = arith.constant 0 : i32
    return %c0_i32, %c0_i32_0 : i32, i32
  }
  func.func @transform_11(%arg0: i32) -> (i32, i32) {
    %c0_i32 = arith.constant 0 : i32
    %c0_i32_0 = arith.constant 0 : i32
    %c0_i32_1 = arith.constant 0 : i32
    return %c0_i32, %c0_i32_0 : i32, i32
  }
  func.func @transform_12(%arg0: i32) -> (i32, i32) {
    %c0_i32 = arith.constant 0 : i32
    %c0_i32_0 = arith.constant 0 : i32
    %c0_i32_1 = arith.constant 0 : i32
    return %c0_i32, %c0_i32_0 : i32, i32
  }
  func.func @transform_13(%arg0: i32) -> (i32, i32) {
    %c0_i32 = arith.constant 0 : i32
    %c0_i32_0 = arith.constant 0 : i32
    %c0_i32_1 = arith.constant 0 : i32
    return %c0_i32, %c0_i32_0 : i32, i32
  }
  func.func @transform_14(%arg0: i32) -> (i32, i32, i32) {
    %c0_i32 = arith.constant 0 : i32
    %c0_i32_0 = arith.constant 0 : i32
    %c0_i32_1 = arith.constant 0 : i32
    return %arg0, %c0_i32, %c0_i32_0 : i32, i32, i32
  }
}

</mosaic_0001>

<llo_original>
// kernel: hifuse_block_forward.4
$region0: #{hifuse_block_forward.4}
  #allocation0 [shape = 'u32[]', space=smem, size = 0x4, offset = 0x4, fixed_abs, tag = 'smem constant byte address 0x4 - core index']
  #allocation1 [shape = 'u32[72,128]{1,0:T(1,128)}', space=vmem, size = 0x9000, scoped, tag = 'internal scratch']
  %s0 = inlined_call_operand.vmem [shape: bf16[2,4,256,4], index: 0, kind: input, shape index: {}]
  %s1 = inlined_call_operand.vmem [shape: bf16[4,8], index: 1, kind: input, shape index: {}]
  %s2 = inlined_call_operand.vmem [shape: f32[1,8], index: 2, kind: input, shape index: {}]
  %s3 = inlined_call_operand.vmem [shape: bf16[2,256,8], index: 3, kind: output, shape index: {}]
  %s4 = sld [smem:[#allocation0]]
  $region45: #{hifuse_block_forward.4} parent=0
    _
  %s6 = ssub.s32 1, %s4
  %s7 = scalar_select 0, %s6, %s4
  loop: start=0, step=1, limit=4
  $region2: #{hifuse_block_forward.4} parent=0 // loop_pre_header
    _
  $region3: #{hifuse_block_forward.4} parent=0 // loop_header
    %s9 = sphi 0, %s13
    %p10 = scmp.ge.s32.totalorder %s9, 4
    %s16 = sphi 0, %s28
    %s17 = sphi 0, %s24
    %s18 = sphi 0, %s16
    %s19 = sphi 0, %s17
    %s20 = sphi 0, %s18
    %s21 = sphi 0, %s19
    %s33 = sphi 0, %s35
    %s36 = sphi 0, %s33
    %s37 = sphi 0, %s36
    %s53 = sphi 0, %s37
    %s57 = sphi 0, %s57
    %s59 = sphi 0, %s57
    %s60 = sphi 0, %s59
    %s74 = sphi 0, %s60
    %s78 = sphi 0, %s78
    %s80 = sphi 0, %s78
    %s81 = sphi 0, %s80
    %s95 = sphi 0, %s81
    %s103 = sphi 0, %s105
    %s106 = sphi 0, %s103
    %s107 = sphi 0, %s106
    %s123 = sphi 0, %s107
  $region4: #{hifuse_block_forward.4} parent=0 // loop_header_branch
    %12 = sbr.rel (%p10) target = $region8
  $region5: #{hifuse_block_forward.4} parent=0 // loop_body
    %s14 = ssub.s32 %s9, 1
    %s15 = ssub.s32 %s9, 2
    %s22 = sadd.s32 1, %s17
    %p23 = scmp.ge.s32.totalorder %s22, 1
    %s24 = scalar_select %p23, 0, %s22
    %s25 = sadd.s32 1, %s16
    %s26 = scalar_select %p23, %s25, %s16
    %p27 = scmp.ge.s32.totalorder %s26, 2
    %s28 = scalar_select %p27, 0, %s26
    %s29 = ssub.s32 %s16, %s28
    %s30 = ssub.s32 %s17, %s24
    %s31 = sor.u32 %s29, %s30
    %p32 = scmp.eq.s32.totalorder %s31, 0
    %s34 = sadd.s32 %s33, 1
    %s35 = scalar_select %p32, %s33, %s34
    %p38 = pneg %p32
    %p39 = scmp.eq.s32.totalorder %s9, 1
    %p40 = por %p38, %p39
    %p41 = scmp.ne.s32.totalorder %s33, %s36
    %p42 = scmp.eq.s32.totalorder %s9, 0
    %p43 = por %p41, %p42
    %p44 = scmp.ne.s32.totalorder %s33, %s36
    %p45 = scmp.eq.s32.totalorder %s14, 1
    %p46 = por %p44, %p45
    %p47 = scmp.ne.s32.totalorder %s36, %s37
    %p48 = scmp.eq.s32.totalorder %s14, 0
    %p49 = por %p47, %p48
    %p50 = scmp.ne.s32.totalorder %s36, %s37
    %p51 = scmp.eq.s32.totalorder %s15, 1
    %p52 = por %p50, %p51
    %p54 = scmp.ne.s32.totalorder %s37, %s53
    %p55 = scmp.eq.s32.totalorder %s15, 0
    %p56 = por %p54, %p55
    %s58 = sadd.s32 %s57, 1
    %p61 = scmp.eq.s32.totalorder %s9, 1
    %p62 = scmp.ne.s32.totalorder %s57, %s59
    %p63 = scmp.eq.s32.totalorder %s9, 0
    %p64 = por %p62, %p63
    %p65 = scmp.ne.s32.totalorder %s57, %s59
    %p66 = scmp.eq.s32.totalorder %s14, 1
    %p67 = por %p65, %p66
    %p68 = scmp.ne.s32.totalorder %s59, %s60
    %p69 = scmp.eq.s32.totalorder %s14, 0
    %p70 = por %p68, %p69
    %p71 = scmp.ne.s32.totalorder %s59, %s60
    %p72 = scmp.eq.s32.totalorder %s15, 1
    %p73 = por %p71, %p72
    %p75 = scmp.ne.s32.totalorder %s60, %s74
    %p76 = scmp.eq.s32.totalorder %s15, 0
    %p77 = por %p75, %p76
    %s79 = sadd.s32 %s78, 1
    %p82 = scmp.eq.s32.totalorder %s9, 1
    %p83 = scmp.ne.s32.totalorder %s78, %s80
    %p84 = scmp.eq.s32.totalorder %s9, 0
    %p85 = por %p83, %p84
    %p86 = scmp.ne.s32.totalorder %s78, %s80
    %p87 = scmp.eq.s32.totalorder %s14, 1
    %p88 = por %p86, %p87
    %p89 = scmp.ne.s32.totalorder %s80, %s81
    %p90 = scmp.eq.s32.totalorder %s14, 0
    %p91 = por %p89, %p90
    %p92 = scmp.ne.s32.totalorder %s80, %s81
    %p93 = scmp.eq.s32.totalorder %s15, 1
    %p94 = por %p92, %p93
    %p96 = scmp.ne.s32.totalorder %s81, %s95
    %p97 = scmp.eq.s32.totalorder %s15, 0
    %p98 = por %p96, %p97
    %s99 = ssub.s32 %s16, %s28
    %s100 = ssub.s32 %s17, %s24
    %s101 = sor.u32 %s99, %s100
    %p102 = scmp.eq.s32.totalorder %s101, 0
    %s104 = sadd.s32 %s103, 1
    %s105 = scalar_select %p102, %s103, %s104
    %p108 = pneg %p102
    %p109 = scmp.eq.s32.totalorder %s9, 1
    %p110 = por %p108, %p109
    %p111 = scmp.ne.s32.totalorder %s103, %s106
    %p112 = scmp.eq.s32.totalorder %s9, 0
    %p113 = por %p111, %p112
    %p114 = scmp.ne.s32.totalorder %s103, %s106
    %p115 = scmp.eq.s32.totalorder %s14, 1
    %p116 = por %p114, %p115
    %p117 = scmp.ne.s32.totalorder %s106, %s107
    %p118 = scmp.eq.s32.totalorder %s14, 0
    %p119 = por %p117, %p118
    %p120 = scmp.ne.s32.totalorder %s106, %s107
    %p121 = scmp.eq.s32.totalorder %s15, 1
    %p122 = por %p120, %p121
    %p124 = scmp.ne.s32.totalorder %s107, %s123
    %p125 = scmp.eq.s32.totalorder %s15, 0
    %p126 = por %p124, %p125
    %p127 = scmp.le.s32.totalorder 1, %s9
    %p128 = scmp.lt.s32.totalorder %s9, 3
    %p129 = pnand %p127, %p128
    %p130 = pneg %p129
    // Predicated region
    $region9: #{hifuse_block_forward.4} parent=5 // pred_check
      _
    $region10: #{hifuse_block_forward.4} parent=5 // pred_check_branch
      %132 = sbr.rel (%p129) target = $region12
    $region11: #{hifuse_block_forward.4} parent=5 // pred_region
      %s133 = ssub.s32 %s9, 1
      // Predicated region
      $region13: #{hifuse_block_forward.4} parent=11 // pred_check
        %p134 = pneg %p70
      $region14: #{hifuse_block_forward.4} parent=11 // pred_check_branch
        %136 = sbr.rel (%p134) target = $region16
      $region15: #{hifuse_block_forward.4} parent=11 // pred_region
        _
      $region16: #{hifuse_block_forward.4} parent=11 // pred_fallthru
        _
      // Predicated region
      $region17: #{hifuse_block_forward.4} parent=11 // pred_check
        %p137 = pneg %p91
      $region18: #{hifuse_block_forward.4} parent=11 // pred_check_branch
        %139 = sbr.rel (%p137) target = $region20
      $region19: #{hifuse_block_forward.4} parent=11 // pred_region
        _
      $region20: #{hifuse_block_forward.4} parent=11 // pred_fallthru
        _
    $region12: #{hifuse_block_forward.4} parent=5 // pred_fallthru
      _
    %p140 = scmp.lt.s32.totalorder %s9, 2
    // Predicated region
    $region21: #{hifuse_block_forward.4} parent=5 // pred_check
      %p141 = pneg %p140
    $region22: #{hifuse_block_forward.4} parent=5 // pred_check_branch
      %143 = sbr.rel (%p141) target = $region24
    $region23: #{hifuse_block_forward.4} parent=5 // pred_region
      // Predicated region
      $region25: #{hifuse_block_forward.4} parent=23 // pred_check
        %p144 = pneg %p43
      $region26: #{hifuse_block_forward.4} parent=23 // pred_check_branch
        %146 = sbr.rel (%p144) target = $region28
      $region27: #{hifuse_block_forward.4} parent=23 // pred_region
        %s147 = smul.u32 32, %s17
        %p148 = scmp.lt.s32.totalorder %s16, 1
        %s149 = scalar_select %p148, %s16, 1
        %p150 = scmp.lt.s32.totalorder %s147, 31
        %s151 = scalar_select %p150, %s147, 31
        %s152 = smul.addr %s149, 128
        %s153 = sadd.s32 %s151, %s152
        %s154 = smul.addr %s153, 4
        %s155 = scalar_lea.vmem %s0, %s154
        %s156 = smul.u32 32, %s17
      $region28: #{hifuse_block_forward.4} parent=23 // pred_fallthru
        _
    $region24: #{hifuse_block_forward.4} parent=5 // pred_fallthru
      _
    %p157 = scmp.le.s32.totalorder 1, %s9
    %p158 = scmp.lt.s32.totalorder %s9, 3
    %p159 = pnand %p157, %p158
    %p160 = pneg %p159
    // Predicated region
    $region29: #{hifuse_block_forward.4} parent=5 // pred_check
      _
    $region30: #{hifuse_block_forward.4} parent=5 // pred_check_branch
      %162 = sbr.rel (%p159) target = $region32
    $region31: #{hifuse_block_forward.4} parent=5 // pred_region
      %s163 = ssub.s32 %s9, 1
      %s164 = smul.u32 32, %s19
      %p165 = scmp.lt.s32.totalorder %s18, 1
      %s166 = scalar_select %p165, %s18, 1
      %p167 = scmp.lt.s32.totalorder %s164, 31
      %s168 = scalar_select %p167, %s164, 31
      %s169 = smul.addr %s166, 128
      %s170 = sadd.s32 %s168, %s169
      %s171 = smul.addr %s170, 4
      %s172 = scalar_lea.vmem %s0, %s171
      %p173 = pneg %p49
      %p174 = pneg %p46
      %p175 = pneg %p70
      %p176 = pneg %p67
      %p177 = pneg %p91
      %p178 = pneg %p88
      %p179 = pneg %p119
      %p180 = pneg %p116
      %s181 = smul.u32 32, %s19
      %p182 = scmp.lt.s32.totalorder %s18, 1
      %s183 = scalar_select %p182, %s18, 1
      %p184 = scmp.lt.s32.totalorder %s181, 31
      %s185 = scalar_select %p184, %s181, 31
      %s186 = smul.addr %s183, 32
      %s187 = sadd.s32 %s185, %s186
      %s188 = smul.addr %s187, 4
      %s189 = scalar_lea.vmem %s3, %s188
      %s190 = smul.u32 32, %s19
      %p191 = scmp.lt.s32.totalorder %s18, 1
      %s192 = scalar_select %p191, %s18, 1
      %p193 = scmp.lt.s32.totalorder %s190, 31
      %s194 = scalar_select %p193, %s190, 31
      %s195 = smul.addr %s192, 128
      %s196 = sadd.s32 %s194, %s195
      %s197 = smul.addr %s196, 4
      %s198 = scalar_lea.vmem %s0, %s197
      %s199 = smul.u32 32, %s19
      %s200 = smul.u32 32, %s19
      %p201 = scmp.lt.s32.totalorder %s18, 1
      %s202 = scalar_select %p201, %s18, 1
      %p203 = scmp.lt.s32.totalorder %s200, 31
      %s204 = scalar_select %p203, %s200, 31
      %s205 = smul.addr %s202, 32
      %s206 = sadd.s32 %s204, %s205
      %s207 = smul.addr %s206, 4
      %s208 = scalar_lea.vmem %s3, %s207
      %s209 = smul.u32 32, %s19
      %v211 = vld [vmem:[%s1] sm:$0x3]
      %v212 = vld [vmem:[%s2] sm:$0x1]
      %v213 = vld [vmem:[%s198] sm:$0xf]
      %v214 = vld [vmem:[%s198 + $0x4] sm:$0xf]
      %v215 = vld [vmem:[%s198 + $0x8] sm:$0xf]
      %v216 = vld [vmem:[%s198 + $0xc] sm:$0xf]
      %v217 = vld [vmem:[%s198 + $0x10] sm:$0xf]
      %v218 = vld [vmem:[%s198 + $0x14] sm:$0xf]
      %v219 = vld [vmem:[%s198 + $0x18] sm:$0xf]
      %v220 = vld [vmem:[%s198 + $0x1c] sm:$0xf]
      %v221 = vld [vmem:[%s198 + $0x20] sm:$0xf]
      %v222 = vld [vmem:[%s198 + $0x24] sm:$0xf]
      %v223 = vld [vmem:[%s198 + $0x28] sm:$0xf]
      %v224 = vld [vmem:[%s198 + $0x2c] sm:$0xf]
      %v225 = vld [vmem:[%s198 + $0x30] sm:$0xf]
      %v226 = vld [vmem:[%s198 + $0x34] sm:$0xf]
      %v227 = vld [vmem:[%s198 + $0x38] sm:$0xf]
      %v228 = vld [vmem:[%s198 + $0x3c] sm:$0xf]
      %v229 = vld [vmem:[%s198 + $0x40] sm:$0xf]
      %v230 = vld [vmem:[%s198 + $0x44] sm:$0xf]
      %v231 = vld [vmem:[%s198 + $0x48] sm:$0xf]
      %v232 = vld [vmem:[%s198 + $0x4c] sm:$0xf]
      %v233 = vld [vmem:[%s198 + $0x50] sm:$0xf]
      %v234 = vld [vmem:[%s198 + $0x54] sm:$0xf]
      %v235 = vld [vmem:[%s198 + $0x58] sm:$0xf]
      %v236 = vld [vmem:[%s198 + $0x5c] sm:$0xf]
      %v237 = vld [vmem:[%s198 + $0x60] sm:$0xf]
      %v238 = vld [vmem:[%s198 + $0x64] sm:$0xf]
      %v239 = vld [vmem:[%s198 + $0x68] sm:$0xf]
      %v240 = vld [vmem:[%s198 + $0x6c] sm:$0xf]
      %v241 = vld [vmem:[%s198 + $0x70] sm:$0xf]
      %v242 = vld [vmem:[%s198 + $0x74] sm:$0xf]
      %v243 = vld [vmem:[%s198 + $0x78] sm:$0xf]
      %v244 = vld [vmem:[%s198 + $0x7c] sm:$0xf]
      %v246 = vperm.slane %v212, 0
      %v280 = vunpack.c.l.b16 %v213
      %v281 = vunpack.c.l.b16 %v214
      %v282 = vunpack.c.l.b16 %v215
      %v283 = vunpack.c.l.b16 %v216
      %v284 = vunpack.c.l.b16 %v217
      %v285 = vunpack.c.l.b16 %v218
      %v286 = vunpack.c.l.b16 %v219
      %v287 = vunpack.c.l.b16 %v220
      %v288 = vunpack.c.l.b16 %v221
      %v289 = vunpack.c.l.b16 %v222
      %v290 = vunpack.c.l.b16 %v223
      %v291 = vunpack.c.l.b16 %v224
      %v292 = vunpack.c.l.b16 %v225
      %v293 = vunpack.c.l.b16 %v226
      %v294 = vunpack.c.l.b16 %v227
      %v295 = vunpack.c.l.b16 %v228
      %v296 = vunpack.c.l.b16 %v229
      %v297 = vunpack.c.l.b16 %v230
      %v298 = vunpack.c.l.b16 %v231
      %v299 = vunpack.c.l.b16 %v232
      %v300 = vunpack.c.l.b16 %v233
      %v301 = vunpack.c.l.b16 %v234
      %v302 = vunpack.c.l.b16 %v235
      %v303 = vunpack.c.l.b16 %v236
      %v304 = vunpack.c.l.b16 %v237
      %v305 = vunpack.c.l.b16 %v238
      %v306 = vunpack.c.l.b16 %v239
      %v307 = vunpack.c.l.b16 %v240
      %v308 = vunpack.c.l.b16 %v241
      %v309 = vunpack.c.l.b16 %v242
      %v310 = vunpack.c.l.b16 %v243
      %v311 = vunpack.c.l.b16 %v244
      %v312 = vpack.c.b16 %v281, %v280
      %v313 = vpack.c.b16 %v283, %v282
      %v314 = vpack.c.b16 %v285, %v284
      %v315 = vpack.c.b16 %v287, %v286
      %v316 = vpack.c.b16 %v289, %v288
      %v317 = vpack.c.b16 %v291, %v290
      %v318 = vpack.c.b16 %v293, %v292
      %v319 = vpack.c.b16 %v295, %v294
      %v320 = vpack.c.b16 %v297, %v296
      %v321 = vpack.c.b16 %v299, %v298
      %v322 = vpack.c.b16 %v301, %v300
      %v323 = vpack.c.b16 %v303, %v302
      %v324 = vpack.c.b16 %v305, %v304
      %v325 = vpack.c.b16 %v307, %v306
      %v326 = vpack.c.b16 %v309, %v308
      %v327 = vpack.c.b16 %v311, %v310
      %vm328 = vcmask 31744
      %v330 = vsel %vm328, %v312, 0
      %v333 = vsel %vm328, %v313, 0
      %v336 = vsel %vm328, %v314, 0
      %v339 = vsel %vm328, %v315, 0
      %v342 = vsel %vm328, %v316, 0
      %v345 = vsel %vm328, %v317, 0
      %v348 = vsel %vm328, %v318, 0
      %v351 = vsel %vm328, %v319, 0
      %v354 = vsel %vm328, %v320, 0
      %v357 = vsel %vm328, %v321, 0
      %v360 = vsel %vm328, %v322, 0
      %v363 = vsel %vm328, %v323, 0
      %v366 = vsel %vm328, %v324, 0
      %v369 = vsel %vm328, %v325, 0
      %v372 = vsel %vm328, %v326, 0
      %v375 = vsel %vm328, %v327, 0
      %vm377 = vcmask 1041408
      %v379 = vsel %vm377, %v211, 0
      %381 = vmatpush.bf16.msra.mxu0 0
      %382 = vmatpush.bf16.msra.mxu0 0
      %383 = vmatpush.bf16.msra.mxu0 0
      %384 = vmatpush.bf16.msra.mxu0 0
      %385 = vmatpush.bf16.msra.mxu0 0
      %386 = vmatpush.bf16.msra.mxu0 0
      %387 = vmatpush.bf16.msra.mxu0 0
      %388 = vmatpush.bf16.msra.mxu0 %v379
      %389 = vmatmul.bf16.gmra.mxu0 %v330
      %v390 = vpop.f32.mrf.mxu0
      %v391 = vadd.f32 %v246, %v390
      %v392 = vpop.f32.mrf.mxu0
      %v393 = vadd.f32 %v246, %v392
      %394 = vmatmul.bf16.gmra.mxu0 %v333
      %v395 = vpop.f32.mrf.mxu0
      %v396 = vadd.f32 %v246, %v395
      %v397 = vpop.f32.mrf.mxu0
      %v398 = vadd.f32 %v246, %v397
      %399 = vmatmul.bf16.gmra.mxu0 %v336
      %v400 = vpop.f32.mrf.mxu0
      %v401 = vadd.f32 %v246, %v400
      %v402 = vpop.f32.mrf.mxu0
      %v403 = vadd.f32 %v246, %v402
      %404 = vmatmul.bf16.gmra.mxu0 %v339
      %v405 = vpop.f32.mrf.mxu0
      %v406 = vadd.f32 %v246, %v405
      %v407 = vpop.f32.mrf.mxu0
      %v408 = vadd.f32 %v246, %v407
      %409 = vmatmul.bf16.gmra.mxu0 %v342
      %v410 = vpop.f32.mrf.mxu0
      %v411 = vadd.f32 %v246, %v410
      %v412 = vpop.f32.mrf.mxu0
      %v413 = vadd.f32 %v246, %v412
      %414 = vmatmul.bf16.gmra.mxu0 %v345
      %v415 = vpop.f32.mrf.mxu0
      %v416 = vadd.f32 %v246, %v415
      %v417 = vpop.f32.mrf.mxu0
      %v418 = vadd.f32 %v246, %v417
      %419 = vmatmul.bf16.gmra.mxu0 %v348
      %v420 = vpop.f32.mrf.mxu0
      %v421 = vadd.f32 %v246, %v420
      %v422 = vpop.f32.mrf.mxu0
      %v423 = vadd.f32 %v246, %v422
      %424 = vmatmul.bf16.gmra.mxu0 %v351
      %v425 = vpop.f32.mrf.mxu0
      %v426 = vadd.f32 %v246, %v425
      %v427 = vpop.f32.mrf.mxu0
      %v428 = vadd.f32 %v246, %v427
      %429 = vmatmul.bf16.gmra.mxu0 %v354
      %v430 = vpop.f32.mrf.mxu0
      %v431 = vadd.f32 %v246, %v430
      %v432 = vpop.f32.mrf.mxu0
      %v433 = vadd.f32 %v246, %v432
      %434 = vmatmul.bf16.gmra.mxu0 %v357
      %v435 = vpop.f32.mrf.mxu0
      %v436 = vadd.f32 %v246, %v435
      %v437 = vpop.f32.mrf.mxu0
      %v438 = vadd.f32 %v246, %v437
      %439 = vmatmul.bf16.gmra.mxu0 %v360
      %v440 = vpop.f32.mrf.mxu0
      %v441 = vadd.f32 %v246, %v440
      %v442 = vpop.f32.mrf.mxu0
      %v443 = vadd.f32 %v246, %v442
      %444 = vmatmul.bf16.gmra.mxu0 %v363
      %v445 = vpop.f32.mrf.mxu0
      %v446 = vadd.f32 %v246, %v445
      %v447 = vpop.f32.mrf.mxu0
      %v448 = vadd.f32 %v246, %v447
      %449 = vmatmul.bf16.gmra.mxu0 %v366
      %v450 = vpop.f32.mrf.mxu0
      %v451 = vadd.f32 %v246, %v450
      %v452 = vpop.f32.mrf.mxu0
      %v453 = vadd.f32 %v246, %v452
      %454 = vmatmul.bf16.gmra.mxu0 %v369
      %v455 = vpop.f32.mrf.mxu0
      %v456 = vadd.f32 %v246, %v455
      %v457 = vpop.f32.mrf.mxu0
      %v458 = vadd.f32 %v246, %v457
      %459 = vmatmul.bf16.gmra.mxu0 %v372
      %v460 = vpop.f32.mrf.mxu0
      %v461 = vadd.f32 %v246, %v460
      %v462 = vpop.f32.mrf.mxu0
      %v463 = vadd.f32 %v246, %v462
      %464 = vmatmul.bf16.gmra.mxu0 %v375
      %v465 = vpop.f32.mrf.mxu0
      %v466 = vadd.f32 %v246, %v465
      %v467 = vpop.f32.mrf.mxu0
      %v468 = vadd.f32 %v246, %v467
      %469 = vdwg.mxu0
      %v470 = vmax.f32 %v391, 0.0
      %v471 = vmax.f32 %v393, 0.0
      %v472 = vmax.f32 %v396, 0.0
      %v473 = vmax.f32 %v398, 0.0
      %v474 = vmax.f32 %v401, 0.0
      %v475 = vmax.f32 %v403, 0.0
      %v476 = vmax.f32 %v406, 0.0
      %v477 = vmax.f32 %v408, 0.0
      %v478 = vmax.f32 %v411, 0.0
      %v479 = vmax.f32 %v413, 0.0
      %v480 = vmax.f32 %v416, 0.0
      %v481 = vmax.f32 %v418, 0.0
      %v482 = vmax.f32 %v421, 0.0
      %v483 = vmax.f32 %v423, 0.0
      %v484 = vmax.f32 %v426, 0.0
      %v485 = vmax.f32 %v428, 0.0
      %v486 = vmax.f32 %v431, 0.0
      %v487 = vmax.f32 %v433, 0.0
      %v488 = vmax.f32 %v436, 0.0
      %v489 = vmax.f32 %v438, 0.0
      %v490 = vmax.f32 %v441, 0.0
      %v491 = vmax.f32 %v443, 0.0
      %v492 = vmax.f32 %v446, 0.0
      %v493 = vmax.f32 %v448, 0.0
      %v494 = vmax.f32 %v451, 0.0
      %v495 = vmax.f32 %v453, 0.0
      %v496 = vmax.f32 %v456, 0.0
      %v497 = vmax.f32 %v458, 0.0
      %v498 = vmax.f32 %v461, 0.0
      %v499 = vmax.f32 %v463, 0.0
      %v500 = vmax.f32 %v466, 0.0
      %v501 = vmax.f32 %v468, 0.0
      %s502 = scalar_lea.vmem %s198, 128
      %v503 = vld [vmem:[%s502] sm:$0xf]
      %v504 = vld [vmem:[%s502 + $0x4] sm:$0xf]
      %v505 = vld [vmem:[%s502 + $0x8] sm:$0xf]
      %v506 = vld [vmem:[%s502 + $0xc] sm:$0xf]
      %v507 = vld [vmem:[%s502 + $0x10] sm:$0xf]
      %v508 = vld [vmem:[%s502 + $0x14] sm:$0xf]
      %v509 = vld [vmem:[%s502 + $0x18] sm:$0xf]
      %v510 = vld [vmem:[%s502 + $0x1c] sm:$0xf]
      %v511 = vld [vmem:[%s502 + $0x20] sm:$0xf]
      %v512 = vld [vmem:[%s502 + $0x24] sm:$0xf]
      %v513 = vld [vmem:[%s502 + $0x28] sm:$0xf]
      %v514 = vld [vmem:[%s502 + $0x2c] sm:$0xf]
      %v515 = vld [vmem:[%s502 + $0x30] sm:$0xf]
      %v516 = vld [vmem:[%s502 + $0x34] sm:$0xf]
      %v517 = vld [vmem:[%s502 + $0x38] sm:$0xf]
      %v518 = vld [vmem:[%s502 + $0x3c] sm:$0xf]
      %v519 = vld [vmem:[%s502 + $0x40] sm:$0xf]
      %v520 = vld [vmem:[%s502 + $0x44] sm:$0xf]
      %v521 = vld [vmem:[%s502 + $0x48] sm:$0xf]
      %v522 = vld [vmem:[%s502 + $0x4c] sm:$0xf]
      %v523 = vld [vmem:[%s502 + $0x50] sm:$0xf]
      %v524 = vld [vmem:[%s502 + $0x54] sm:$0xf]
      %v525 = vld [vmem:[%s502 + $0x58] sm:$0xf]
      %v526 = vld [vmem:[%s502 + $0x5c] sm:$0xf]
      %v527 = vld [vmem:[%s502 + $0x60] sm:$0xf]
      %v528 = vld [vmem:[%s502 + $0x64] sm:$0xf]
      %v529 = vld [vmem:[%s502 + $0x68] sm:$0xf]
      %v530 = vld [vmem:[%s502 + $0x6c] sm:$0xf]
      %v531 = vld [vmem:[%s502 + $0x70] sm:$0xf]
      %v532 = vld [vmem:[%s502 + $0x74] sm:$0xf]
      %v533 = vld [vmem:[%s502 + $0x78] sm:$0xf]
      %v534 = vld [vmem:[%s502 + $0x7c] sm:$0xf]
      %v567 = vunpack.c.l.b16 %v503
      %v568 = vunpack.c.l.b16 %v504
      %v569 = vunpack.c.l.b16 %v505
      %v570 = vunpack.c.l.b16 %v506
      %v571 = vunpack.c.l.b16 %v507
      %v572 = vunpack.c.l.b16 %v508
      %v573 = vunpack.c.l.b16 %v509
      %v574 = vunpack.c.l.b16 %v510
      %v575 = vunpack.c.l.b16 %v511
      %v576 = vunpack.c.l.b16 %v512
      %v577 = vunpack.c.l.b16 %v513
      %v578 = vunpack.c.l.b16 %v514
      %v579 = vunpack.c.l.b16 %v515
      %v580 = vunpack.c.l.b16 %v516
      %v581 = vunpack.c.l.b16 %v517
      %v582 = vunpack.c.l.b16 %v518
      %v583 = vunpack.c.l.b16 %v519
      %v584 = vunpack.c.l.b16 %v520
      %v585 = vunpack.c.l.b16 %v521
      %v586 = vunpack.c.l.b16 %v522
      %v587 = vunpack.c.l.b16 %v523
      %v588 = vunpack.c.l.b16 %v524
      %v589 = vunpack.c.l.b16 %v525
      %v590 = vunpack.c.l.b16 %v526
      %v591 = vunpack.c.l.b16 %v527
      %v592 = vunpack.c.l.b16 %v528
      %v593 = vunpack.c.l.b16 %v529
      %v594 = vunpack.c.l.b16 %v530
      %v595 = vunpack.c.l.b16 %v531
      %v596 = vunpack.c.l.b16 %v532
      %v597 = vunpack.c.l.b16 %v533
      %v598 = vunpack.c.l.b16 %v534
      %v599 = vpack.c.b16 %v568, %v567
      %v600 = vpack.c.b16 %v570, %v569
      %v601 = vpack.c.b16 %v572, %v571
      %v602 = vpack.c.b16 %v574, %v573
      %v603 = vpack.c.b16 %v576, %v575
      %v604 = vpack.c.b16 %v578, %v577
      %v605 = vpack.c.b16 %v580, %v579
      %v606 = vpack.c.b16 %v582, %v581
      %v607 = vpack.c.b16 %v584, %v583
      %v608 = vpack.c.b16 %v586, %v585
      %v609 = vpack.c.b16 %v588, %v587
      %v610 = vpack.c.b16 %v590, %v589
      %v611 = vpack.c.b16 %v592, %v591
      %v612 = vpack.c.b16 %v594, %v593
      %v613 = vpack.c.b16 %v596, %v595
      %v614 = vpack.c.b16 %v598, %v597
      %v616 = vsel %vm328, %v599, 0
      %v619 = vsel %vm328, %v600, 0
      %v622 = vsel %vm328, %v601, 0
      %v625 = vsel %vm328, %v602, 0
      %v628 = vsel %vm328, %v603, 0
      %v631 = vsel %vm328, %v604, 0
      %v634 = vsel %vm328, %v605, 0
      %v637 = vsel %vm328, %v606, 0
      %v640 = vsel %vm328, %v607, 0
      %v643 = vsel %vm328, %v608, 0
      %v646 = vsel %vm328, %v609, 0
      %v649 = vsel %vm328, %v610, 0
      %v652 = vsel %vm328, %v611, 0
      %v655 = vsel %vm328, %v612, 0
      %v658 = vsel %vm328, %v613, 0
      %v661 = vsel %vm328, %v614, 0
      %663 = vmatpush.bf16.msra.mxu0 0
      %664 = vmatpush.bf16.msra.mxu0 0
      %665 = vmatpush.bf16.msra.mxu0 0
      %666 = vmatpush.bf16.msra.mxu0 0
      %667 = vmatpush.bf16.msra.mxu0 0
      %668 = vmatpush.bf16.msra.mxu0 0
      %669 = vmatpush.bf16.msra.mxu0 0
      %670 = vmatpush.bf16.msra.mxu0 %v379
      %671 = vmatmul.bf16.gmra.mxu0 %v616
      %v672 = vpop.f32.mrf.mxu0
      %v673 = vadd.f32 %v246, %v672
      %v674 = vpop.f32.mrf.mxu0
      %v675 = vadd.f32 %v246, %v674
      %676 = vmatmul.bf16.gmra.mxu0 %v619
      %v677 = vpop.f32.mrf.mxu0
      %v678 = vadd.f32 %v246, %v677
      %v679 = vpop.f32.mrf.mxu0
      %v680 = vadd.f32 %v246, %v679
      %681 = vmatmul.bf16.gmra.mxu0 %v622
      %v682 = vpop.f32.mrf.mxu0
      %v683 = vadd.f32 %v246, %v682
      %v684 = vpop.f32.mrf.mxu0
      %v685 = vadd.f32 %v246, %v684
      %686 = vmatmul.bf16.gmra.mxu0 %v625
      %v687 = vpop.f32.mrf.mxu0
      %v688 = vadd.f32 %v246, %v687
      %v689 = vpop.f32.mrf.mxu0
      %v690 = vadd.f32 %v246, %v689
      %691 = vmatmul.bf16.gmra.mxu0 %v628
      %v692 = vpop.f32.mrf.mxu0
      %v693 = vadd.f32 %v246, %v692
      %v694 = vpop.f32.mrf.mxu0
      %v695 = vadd.f32 %v246, %v694
      %696 = vmatmul.bf16.gmra.mxu0 %v631
      %v697 = vpop.f32.mrf.mxu0
      %v698 = vadd.f32 %v246, %v697
      %v699 = vpop.f32.mrf.mxu0
      %v700 = vadd.f32 %v246, %v699
      %701 = vmatmul.bf16.gmra.mxu0 %v634
      %v702 = vpop.f32.mrf.mxu0
      %v703 = vadd.f32 %v246, %v702
      %v704 = vpop.f32.mrf.mxu0
      %v705 = vadd.f32 %v246, %v704
      %706 = vmatmul.bf16.gmra.mxu0 %v637
      %v707 = vpop.f32.mrf.mxu0
      %v708 = vadd.f32 %v246, %v707
      %v709 = vpop.f32.mrf.mxu0
      %v710 = vadd.f32 %v246, %v709
      %711 = vmatmul.bf16.gmra.mxu0 %v640
      %v712 = vpop.f32.mrf.mxu0
      %v713 = vadd.f32 %v246, %v712
      %v714 = vpop.f32.mrf.mxu0
      %v715 = vadd.f32 %v246, %v714
      %716 = vmatmul.bf16.gmra.mxu0 %v643
      %v717 = vpop.f32.mrf.mxu0
      %v718 = vadd.f32 %v246, %v717
      %v719 = vpop.f32.mrf.mxu0
      %v720 = vadd.f32 %v246, %v719
      %721 = vmatmul.bf16.gmra.mxu0 %v646
      %v722 = vpop.f32.mrf.mxu0
      %v723 = vadd.f32 %v246, %v722
      %v724 = vpop.f32.mrf.mxu0
      %v725 = vadd.f32 %v246, %v724
      %726 = vmatmul.bf16.gmra.mxu0 %v649
      %v727 = vpop.f32.mrf.mxu0
      %v728 = vadd.f32 %v246, %v727
      %v729 = vpop.f32.mrf.mxu0
      %v730 = vadd.f32 %v246, %v729
      %731 = vmatmul.bf16.gmra.mxu0 %v652
      %v732 = vpop.f32.mrf.mxu0
      %v733 = vadd.f32 %v246, %v732
      %v734 = vpop.f32.mrf.mxu0
      %v735 = vadd.f32 %v246, %v734
      %736 = vmatmul.bf16.gmra.mxu0 %v655
      %v737 = vpop.f32.mrf.mxu0
      %v738 = vadd.f32 %v246, %v737
      %v739 = vpop.f32.mrf.mxu0
      %v740 = vadd.f32 %v246, %v739
      %741 = vmatmul.bf16.gmra.mxu0 %v658
      %v742 = vpop.f32.mrf.mxu0
      %v743 = vadd.f32 %v246, %v742
      %v744 = vpop.f32.mrf.mxu0
      %v745 = vadd.f32 %v246, %v744
      %746 = vmatmul.bf16.gmra.mxu0 %v661
      %v747 = vpop.f32.mrf.mxu0
      %v748 = vadd.f32 %v246, %v747
      %v749 = vpop.f32.mrf.mxu0
      %v750 = vadd.f32 %v246, %v749
      %751 = vdwg.mxu0
      %v752 = vmax.f32 %v673, 0.0
      %v753 = vmax.f32 %v675, 0.0
      %v754 = vmax.f32 %v678, 0.0
      %v755 = vmax.f32 %v680, 0.0
      %v756 = vmax.f32 %v683, 0.0
      %v757 = vmax.f32 %v685, 0.0
      %v758 = vmax.f32 %v688, 0.0
      %v759 = vmax.f32 %v690, 0.0
      %v760 = vmax.f32 %v693, 0.0
      %v761 = vmax.f32 %v695, 0.0
      %v762 = vmax.f32 %v698, 0.0
      %v763 = vmax.f32 %v700, 0.0
      %v764 = vmax.f32 %v703, 0.0
      %v765 = vmax.f32 %v705, 0.0
      %v766 = vmax.f32 %v708, 0.0
      %v767 = vmax.f32 %v710, 0.0
      %v768 = vmax.f32 %v713, 0.0
      %v769 = vmax.f32 %v715, 0.0
      %v770 = vmax.f32 %v718, 0.0
      %v771 = vmax.f32 %v720, 0.0
      %v772 = vmax.f32 %v723, 0.0
      %v773 = vmax.f32 %v725, 0.0
      %v774 = vmax.f32 %v728, 0.0
      %v775 = vmax.f32 %v730, 0.0
      %v776 = vmax.f32 %v733, 0.0
      %v777 = vmax.f32 %v735, 0.0
      %v778 = vmax.f32 %v738, 0.0
      %v779 = vmax.f32 %v740, 0.0
      %v780 = vmax.f32 %v743, 0.0
      %v781 = vmax.f32 %v745, 0.0
      %v782 = vmax.f32 %v748, 0.0
      %v783 = vmax.f32 %v750, 0.0
      %v784 = vadd.f32 %v470, %v752
      %v785 = vadd.f32 %v471, %v753
      %v786 = vadd.f32 %v472, %v754
      %v787 = vadd.f32 %v473, %v755
      %v788 = vadd.f32 %v474, %v756
      %v789 = vadd.f32 %v475, %v757
      %v790 = vadd.f32 %v476, %v758
      %v791 = vadd.f32 %v477, %v759
      %v792 = vadd.f32 %v478, %v760
      %v793 = vadd.f32 %v479, %v761
      %v794 = vadd.f32 %v480, %v762
      %v795 = vadd.f32 %v481, %v763
      %v796 = vadd.f32 %v482, %v764
      %v797 = vadd.f32 %v483, %v765
      %v798 = vadd.f32 %v484, %v766
      %v799 = vadd.f32 %v485, %v767
      %v800 = vadd.f32 %v486, %v768
      %v801 = vadd.f32 %v487, %v769
      %v802 = vadd.f32 %v488, %v770
      %v803 = vadd.f32 %v489, %v771
      %v804 = vadd.f32 %v490, %v772
      %v805 = vadd.f32 %v491, %v773
      %v806 = vadd.f32 %v492, %v774
      %v807 = vadd.f32 %v493, %v775
      %v808 = vadd.f32 %v494, %v776
      %v809 = vadd.f32 %v495, %v777
      %v810 = vadd.f32 %v496, %v778
      %v811 = vadd.f32 %v497, %v779
      %v812 = vadd.f32 %v498, %v780
      %v813 = vadd.f32 %v499, %v781
      %v814 = vadd.f32 %v500, %v782
      %v815 = vadd.f32 %v501, %v783
      %s816 = scalar_lea.vmem %s198, 256
      %v817 = vld [vmem:[%s816] sm:$0xf]
      %v818 = vld [vmem:[%s816 + $0x4] sm:$0xf]
      %v819 = vld [vmem:[%s816 + $0x8] sm:$0xf]
      %v820 = vld [vmem:[%s816 + $0xc] sm:$0xf]
      %v821 = vld [vmem:[%s816 + $0x10] sm:$0xf]
      %v822 = vld [vmem:[%s816 + $0x14] sm:$0xf]
      %v823 = vld [vmem:[%s816 + $0x18] sm:$0xf]
      %v824 = vld [vmem:[%s816 + $0x1c] sm:$0xf]
      %v825 = vld [vmem:[%s816 + $0x20] sm:$0xf]
      %v826 = vld [vmem:[%s816 + $0x24] sm:$0xf]
      %v827 = vld [vmem:[%s816 + $0x28] sm:$0xf]
      %v828 = vld [vmem:[%s816 + $0x2c] sm:$0xf]
      %v829 = vld [vmem:[%s816 + $0x30] sm:$0xf]
      %v830 = vld [vmem:[%s816 + $0x34] sm:$0xf]
      %v831 = vld [vmem:[%s816 + $0x38] sm:$0xf]
      %v832 = vld [vmem:[%s816 + $0x3c] sm:$0xf]
      %v833 = vld [vmem:[%s816 + $0x40] sm:$0xf]
      %v834 = vld [vmem:[%s816 + $0x44] sm:$0xf]
      %v835 = vld [vmem:[%s816 + $0x48] sm:$0xf]
      %v836 = vld [vmem:[%s816 + $0x4c] sm:$0xf]
      %v837 = vld [vmem:[%s816 + $0x50] sm:$0xf]
      %v838 = vld [vmem:[%s816 + $0x54] sm:$0xf]
      %v839 = vld [vmem:[%s816 + $0x58] sm:$0xf]
      %v840 = vld [vmem:[%s816 + $0x5c] sm:$0xf]
      %v841 = vld [vmem:[%s816 + $0x60] sm:$0xf]
      %v842 = vld [vmem:[%s816 + $0x64] sm:$0xf]
      %v843 = vld [vmem:[%s816 + $0x68] sm:$0xf]
      %v844 = vld [vmem:[%s816 + $0x6c] sm:$0xf]
      %v845 = vld [vmem:[%s816 + $0x70] sm:$0xf]
      %v846 = vld [vmem:[%s816 + $0x74] sm:$0xf]
      %v847 = vld [vmem:[%s816 + $0x78] sm:$0xf]
      %v848 = vld [vmem:[%s816 + $0x7c] sm:$0xf]
      %v881 = vunpack.c.l.b16 %v817
      %v882 = vunpack.c.l.b16 %v818
      %v883 = vunpack.c.l.b16 %v819
      %v884 = vunpack.c.l.b16 %v820
      %v885 = vunpack.c.l.b16 %v821
      %v886 = vunpack.c.l.b16 %v822
      %v887 = vunpack.c.l.b16 %v823
      %v888 = vunpack.c.l.b16 %v824
      %v889 = vunpack.c.l.b16 %v825
      %v890 = vunpack.c.l.b16 %v826
      %v891 = vunpack.c.l.b16 %v827
      %v892 = vunpack.c.l.b16 %v828
      %v893 = vunpack.c.l.b16 %v829
      %v894 = vunpack.c.l.b16 %v830
      %v895 = vunpack.c.l.b16 %v831
      %v896 = vunpack.c.l.b16 %v832
      %v897 = vunpack.c.l.b16 %v833
      %v898 = vunpack.c.l.b16 %v834
      %v899 = vunpack.c.l.b16 %v835
      %v900 = vunpack.c.l.b16 %v836
      %v901 = vunpack.c.l.b16 %v837
      %v902 = vunpack.c.l.b16 %v838
      %v903 = vunpack.c.l.b16 %v839
      %v904 = vunpack.c.l.b16 %v840
      %v905 = vunpack.c.l.b16 %v841
      %v906 = vunpack.c.l.b16 %v842
      %v907 = vunpack.c.l.b16 %v843
      %v908 = vunpack.c.l.b16 %v844
      %v909 = vunpack.c.l.b16 %v845
      %v910 = vunpack.c.l.b16 %v846
      %v911 = vunpack.c.l.b16 %v847
      %v912 = vunpack.c.l.b16 %v848
      %v913 = vpack.c.b16 %v882, %v881
      %v914 = vpack.c.b16 %v884, %v883
      %v915 = vpack.c.b16 %v886, %v885
      %v916 = vpack.c.b16 %v888, %v887
      %v917 = vpack.c.b16 %v890, %v889
      %v918 = vpack.c.b16 %v892, %v891
      %v919 = vpack.c.b16 %v894, %v893
      %v920 = vpack.c.b16 %v896, %v895
      %v921 = vpack.c.b16 %v898, %v897
      %v922 = vpack.c.b16 %v900, %v899
      %v923 = vpack.c.b16 %v902, %v901
      %v924 = vpack.c.b16 %v904, %v903
      %v925 = vpack.c.b16 %v906, %v905
      %v926 = vpack.c.b16 %v908, %v907
      %v927 = vpack.c.b16 %v910, %v909
      %v928 = vpack.c.b16 %v912, %v911
      %v930 = vsel %vm328, %v913, 0
      %v933 = vsel %vm328, %v914, 0
      %v936 = vsel %vm328, %v915, 0
      %v939 = vsel %vm328, %v916, 0
      %v942 = vsel %vm328, %v917, 0
      %v945 = vsel %vm328, %v918, 0
      %v948 = vsel %vm328, %v919, 0
      %v951 = vsel %vm328, %v920, 0
      %v954 = vsel %vm328, %v921, 0
      %v957 = vsel %vm328, %v922, 0
      %v960 = vsel %vm328, %v923, 0
      %v963 = vsel %vm328, %v924, 0
      %v966 = vsel %vm328, %v925, 0
      %v969 = vsel %vm328, %v926, 0
      %v972 = vsel %vm328, %v927, 0
      %v975 = vsel %vm328, %v928, 0
      %977 = vmatpush.bf16.msra.mxu0 0
      %978 = vmatpush.bf16.msra.mxu0 0
      %979 = vmatpush.bf16.msra.mxu0 0
      %980 = vmatpush.bf16.msra.mxu0 0
      %981 = vmatpush.bf16.msra.mxu0 0
      %982 = vmatpush.bf16.msra.mxu0 0
      %983 = vmatpush.bf16.msra.mxu0 0
      %984 = vmatpush.bf16.msra.mxu0 %v379
      %985 = vmatmul.bf16.gmra.mxu0 %v930
      %v986 = vpop.f32.mrf.mxu0
      %v987 = vadd.f32 %v246, %v986
      %v988 = vpop.f32.mrf.mxu0
      %v989 = vadd.f32 %v246, %v988
      %990 = vmatmul.bf16.gmra.mxu0 %v933
      %v991 = vpop.f32.mrf.mxu0
      %v992 = vadd.f32 %v246, %v991
      %v993 = vpop.f32.mrf.mxu0
      %v994 = vadd.f32 %v246, %v993
      %995 = vmatmul.bf16.gmra.mxu0 %v936
      %v996 = vpop.f32.mrf.mxu0
      %v997 = vadd.f32 %v246, %v996
      %v998 = vpop.f32.mrf.mxu0
      %v999 = vadd.f32 %v246, %v998
      %1000 = vmatmul.bf16.gmra.mxu0 %v939
      %v1001 = vpop.f32.mrf.mxu0
      %v1002 = vadd.f32 %v246, %v1001
      %v1003 = vpop.f32.mrf.mxu0
      %v1004 = vadd.f32 %v246, %v1003
      %1005 = vmatmul.bf16.gmra.mxu0 %v942
      %v1006 = vpop.f32.mrf.mxu0
      %v1007 = vadd.f32 %v246, %v1006
      %v1008 = vpop.f32.mrf.mxu0
      %v1009 = vadd.f32 %v246, %v1008
      %1010 = vmatmul.bf16.gmra.mxu0 %v945
      %v1011 = vpop.f32.mrf.mxu0
      %v1012 = vadd.f32 %v246, %v1011
      %v1013 = vpop.f32.mrf.mxu0
      %v1014 = vadd.f32 %v246, %v1013
      %1015 = vmatmul.bf16.gmra.mxu0 %v948
      %v1016 = vpop.f32.mrf.mxu0
      %v1017 = vadd.f32 %v246, %v1016
      %v1018 = vpop.f32.mrf.mxu0
      %v1019 = vadd.f32 %v246, %v1018
      %1020 = vmatmul.bf16.gmra.mxu0 %v951
      %v1021 = vpop.f32.mrf.mxu0
      %v1022 = vadd.f32 %v246, %v1021
      %v1023 = vpop.f32.mrf.mxu0
      %v1024 = vadd.f32 %v246, %v1023
      %1025 = vmatmul.bf16.gmra.mxu0 %v954
      %v1026 = vpop.f32.mrf.mxu0
      %v1027 = vadd.f32 %v246, %v1026
      %v1028 = vpop.f32.mrf.mxu0
      %v1029 = vadd.f32 %v246, %v1028
      %1030 = vmatmul.bf16.gmra.mxu0 %v957
      %v1031 = vpop.f32.mrf.mxu0
      %v1032 = vadd.f32 %v246, %v1031
      %v1033 = vpop.f32.mrf.mxu0
      %v1034 = vadd.f32 %v246, %v1033
      %1035 = vmatmul.bf16.gmra.mxu0 %v960
      %v1036 = vpop.f32.mrf.mxu0
      %v1037 = vadd.f32 %v246, %v1036
      %v1038 = vpop.f32.mrf.mxu0
      %v1039 = vadd.f32 %v246, %v1038
      %1040 = vmatmul.bf16.gmra.mxu0 %v963
      %v1041 = vpop.f32.mrf.mxu0
      %v1042 = vadd.f32 %v246, %v1041
      %v1043 = vpop.f32.mrf.mxu0
      %v1044 = vadd.f32 %v246, %v1043
      %1045 = vmatmul.bf16.gmra.mxu0 %v966
      %v1046 = vpop.f32.mrf.mxu0
      %v1047 = vadd.f32 %v246, %v1046
      %v1048 = vpop.f32.mrf.mxu0
      %v1049 = vadd.f32 %v246, %v1048
      %1050 = vmatmul.bf16.gmra.mxu0 %v969
      %v1051 = vpop.f32.mrf.mxu0
      %v1052 = vadd.f32 %v246, %v1051
      %v1053 = vpop.f32.mrf.mxu0
      %v1054 = vadd.f32 %v246, %v1053
      %1055 = vmatmul.bf16.gmra.mxu0 %v972
      %v1056 = vpop.f32.mrf.mxu0
      %v1057 = vadd.f32 %v246, %v1056
      %v1058 = vpop.f32.mrf.mxu0
      %v1059 = vadd.f32 %v246, %v1058
      %1060 = vmatmul.bf16.gmra.mxu0 %v975
      %v1061 = vpop.f32.mrf.mxu0
      %v1062 = vadd.f32 %v246, %v1061
      %v1063 = vpop.f32.mrf.mxu0
      %v1064 = vadd.f32 %v246, %v1063
      %1065 = vdwg.mxu0
      %v1066 = vmax.f32 %v987, 0.0
      %v1067 = vmax.f32 %v989, 0.0
      %v1068 = vmax.f32 %v992, 0.0
      %v1069 = vmax.f32 %v994, 0.0
      %v1070 = vmax.f32 %v997, 0.0
      %v1071 = vmax.f32 %v999, 0.0
      %v1072 = vmax.f32 %v1002, 0.0
      %v1073 = vmax.f32 %v1004, 0.0
      %v1074 = vmax.f32 %v1007, 0.0
      %v1075 = vmax.f32 %v1009, 0.0
      %v1076 = vmax.f32 %v1012, 0.0
      %v1077 = vmax.f32 %v1014, 0.0
      %v1078 = vmax.f32 %v1017, 0.0
      %v1079 = vmax.f32 %v1019, 0.0
      %v1080 = vmax.f32 %v1022, 0.0
      %v1081 = vmax.f32 %v1024, 0.0
      %v1082 = vmax.f32 %v1027, 0.0
      %v1083 = vmax.f32 %v1029, 0.0
      %v1084 = vmax.f32 %v1032, 0.0
      %v1085 = vmax.f32 %v1034, 0.0
      %v1086 = vmax.f32 %v1037, 0.0
      %v1087 = vmax.f32 %v1039, 0.0
      %v1088 = vmax.f32 %v1042, 0.0
      %v1089 = vmax.f32 %v1044, 0.0
      %v1090 = vmax.f32 %v1047, 0.0
      %v1091 = vmax.f32 %v1049, 0.0
      %v1092 = vmax.f32 %v1052, 0.0
      %v1093 = vmax.f32 %v1054, 0.0
      %v1094 = vmax.f32 %v1057, 0.0
      %v1095 = vmax.f32 %v1059, 0.0
      %v1096 = vmax.f32 %v1062, 0.0
      %v1097 = vmax.f32 %v1064, 0.0
      %v1098 = vadd.f32 %v784, %v1066
      %v1099 = vadd.f32 %v785, %v1067
      %v1100 = vadd.f32 %v786, %v1068
      %v1101 = vadd.f32 %v787, %v1069
      %v1102 = vadd.f32 %v788, %v1070
      %v1103 = vadd.f32 %v789, %v1071
      %v1104 = vadd.f32 %v790, %v1072
      %v1105 = vadd.f32 %v791, %v1073
      %v1106 = vadd.f32 %v792, %v1074
      %v1107 = vadd.f32 %v793, %v1075
      %v1108 = vadd.f32 %v794, %v1076
      %v1109 = vadd.f32 %v795, %v1077
      %v1110 = vadd.f32 %v796, %v1078
      %v1111 = vadd.f32 %v797, %v1079
      %v1112 = vadd.f32 %v798, %v1080
      %v1113 = vadd.f32 %v799, %v1081
      %v1114 = vadd.f32 %v800, %v1082
      %v1115 = vadd.f32 %v801, %v1083
      %v1116 = vadd.f32 %v802, %v1084
      %v1117 = vadd.f32 %v803, %v1085
      %v1118 = vadd.f32 %v804, %v1086
      %v1119 = vadd.f32 %v805, %v1087
      %v1120 = vadd.f32 %v806, %v1088
      %v1121 = vadd.f32 %v807, %v1089
      %v1122 = vadd.f32 %v808, %v1090
      %v1123 = vadd.f32 %v809, %v1091
      %v1124 = vadd.f32 %v810, %v1092
      %v1125 = vadd.f32 %v811, %v1093
      %v1126 = vadd.f32 %v812, %v1094
      %v1127 = vadd.f32 %v813, %v1095
      %v1128 = vadd.f32 %v814, %v1096
      %v1129 = vadd.f32 %v815, %v1097
      %s1130 = scalar_lea.vmem %s198, 384
      %v1131 = vld [vmem:[%s1130] sm:$0xf]
      %v1132 = vld [vmem:[%s1130 + $0x4] sm:$0xf]
      %v1133 = vld [vmem:[%s1130 + $0x8] sm:$0xf]
      %v1134 = vld [vmem:[%s1130 + $0xc] sm:$0xf]
      %v1135 = vld [vmem:[%s1130 + $0x10] sm:$0xf]
      %v1136 = vld [vmem:[%s1130 + $0x14] sm:$0xf]
      %v1137 = vld [vmem:[%s1130 + $0x18] sm:$0xf]
      %v1138 = vld [vmem:[%s1130 + $0x1c] sm:$0xf]
      %v1139 = vld [vmem:[%s1130 + $0x20] sm:$0xf]
      %v1140 = vld [vmem:[%s1130 + $0x24] sm:$0xf]
      %v1141 = vld [vmem:[%s1130 + $0x28] sm:$0xf]
      %v1142 = vld [vmem:[%s1130 + $0x2c] sm:$0xf]
      %v1143 = vld [vmem:[%s1130 + $0x30] sm:$0xf]
      %v1144 = vld [vmem:[%s1130 + $0x34] sm:$0xf]
      %v1145 = vld [vmem:[%s1130 + $0x38] sm:$0xf]
      %v1146 = vld [vmem:[%s1130 + $0x3c] sm:$0xf]
      %v1147 = vld [vmem:[%s1130 + $0x40] sm:$0xf]
      %v1148 = vld [vmem:[%s1130 + $0x44] sm:$0xf]
      %v1149 = vld [vmem:[%s1130 + $0x48] sm:$0xf]
      %v1150 = vld [vmem:[%s1130 + $0x4c] sm:$0xf]
      %v1151 = vld [vmem:[%s1130 + $0x50] sm:$0xf]
      %v1152 = vld [vmem:[%s1130 + $0x54] sm:$0xf]
      %v1153 = vld [vmem:[%s1130 + $0x58] sm:$0xf]
      %v1154 = vld [vmem:[%s1130 + $0x5c] sm:$0xf]
      %v1155 = vld [vmem:[%s1130 + $0x60] sm:$0xf]
      %v1156 = vld [vmem:[%s1130 + $0x64] sm:$0xf]
      %v1157 = vld [vmem:[%s1130 + $0x68] sm:$0xf]
      %v1158 = vld [vmem:[%s1130 + $0x6c] sm:$0xf]
      %v1159 = vld [vmem:[%s1130 + $0x70] sm:$0xf]
      %v1160 = vld [vmem:[%s1130 + $0x74] sm:$0xf]
      %v1161 = vld [vmem:[%s1130 + $0x78] sm:$0xf]
      %v1162 = vld [vmem:[%s1130 + $0x7c] sm:$0xf]
      %v1195 = vunpack.c.l.b16 %v1131
      %v1196 = vunpack.c.l.b16 %v1132
      %v1197 = vunpack.c.l.b16 %v1133
      %v1198 = vunpack.c.l.b16 %v1134
      %v1199 = vunpack.c.l.b16 %v1135
      %v1200 = vunpack.c.l.b16 %v1136
      %v1201 = vunpack.c.l.b16 %v1137
      %v1202 = vunpack.c.l.b16 %v1138
      %v1203 = vunpack.c.l.b16 %v1139
      %v1204 = vunpack.c.l.b16 %v1140
      %v1205 = vunpack.c.l.b16 %v1141
      %v1206 = vunpack.c.l.b16 %v1142
      %v1207 = vunpack.c.l.b16 %v1143
      %v1208 = vunpack.c.l.b16 %v1144
      %v1209 = vunpack.c.l.b16 %v1145
      %v1210 = vunpack.c.l.b16 %v1146
      %v1211 = vunpack.c.l.b16 %v1147
      %v1212 = vunpack.c.l.b16 %v1148
      %v1213 = vunpack.c.l.b16 %v1149
      %v1214 = vunpack.c.l.b16 %v1150
      %v1215 = vunpack.c.l.b16 %v1151
      %v1216 = vunpack.c.l.b16 %v1152
      %v1217 = vunpack.c.l.b16 %v1153
      %v1218 = vunpack.c.l.b16 %v1154
      %v1219 = vunpack.c.l.b16 %v1155
      %v1220 = vunpack.c.l.b16 %v1156
      %v1221 = vunpack.c.l.b16 %v1157
      %v1222 = vunpack.c.l.b16 %v1158
      %v1223 = vunpack.c.l.b16 %v1159
      %v1224 = vunpack.c.l.b16 %v1160
      %v1225 = vunpack.c.l.b16 %v1161
      %v1226 = vunpack.c.l.b16 %v1162
      %v1227 = vpack.c.b16 %v1196, %v1195
      %v1228 = vpack.c.b16 %v1198, %v1197
      %v1229 = vpack.c.b16 %v1200, %v1199
      %v1230 = vpack.c.b16 %v1202, %v1201
      %v1231 = vpack.c.b16 %v1204, %v1203
      %v1232 = vpack.c.b16 %v1206, %v1205
      %v1233 = vpack.c.b16 %v1208, %v1207
      %v1234 = vpack.c.b16 %v1210, %v1209
      %v1235 = vpack.c.b16 %v1212, %v1211
      %v1236 = vpack.c.b16 %v1214, %v1213
      %v1237 = vpack.c.b16 %v1216, %v1215
      %v1238 = vpack.c.b16 %v1218, %v1217
      %v1239 = vpack.c.b16 %v1220, %v1219
      %v1240 = vpack.c.b16 %v1222, %v1221
      %v1241 = vpack.c.b16 %v1224, %v1223
      %v1242 = vpack.c.b16 %v1226, %v1225
      %v1244 = vsel %vm328, %v1227, 0
      %v1247 = vsel %vm328, %v1228, 0
      %v1250 = vsel %vm328, %v1229, 0
      %v1253 = vsel %vm328, %v1230, 0
      %v1256 = vsel %vm328, %v1231, 0
      %v1259 = vsel %vm328, %v1232, 0
      %v1262 = vsel %vm328, %v1233, 0
      %v1265 = vsel %vm328, %v1234, 0
      %v1268 = vsel %vm328, %v1235, 0
      %v1271 = vsel %vm328, %v1236, 0
      %v1274 = vsel %vm328, %v1237, 0
      %v1277 = vsel %vm328, %v1238, 0
      %v1280 = vsel %vm328, %v1239, 0
      %v1283 = vsel %vm328, %v1240, 0
      %v1286 = vsel %vm328, %v1241, 0
      %v1289 = vsel %vm328, %v1242, 0
      %1291 = vmatpush.bf16.msra.mxu0 0
      %1292 = vmatpush.bf16.msra.mxu0 0
      %1293 = vmatpush.bf16.msra.mxu0 0
      %1294 = vmatpush.bf16.msra.mxu0 0
      %1295 = vmatpush.bf16.msra.mxu0 0
      %1296 = vmatpush.bf16.msra.mxu0 0
      %1297 = vmatpush.bf16.msra.mxu0 0
      %1298 = vmatpush.bf16.msra.mxu0 %v379
      %1299 = vmatmul.bf16.gmra.mxu0 %v1244
      %v1300 = vpop.f32.mrf.mxu0
      %v1301 = vadd.f32 %v246, %v1300
      %v1302 = vpop.f32.mrf.mxu0
      %v1303 = vadd.f32 %v246, %v1302
      %1304 = vmatmul.bf16.gmra.mxu0 %v1247
      %v1305 = vpop.f32.mrf.mxu0
      %v1306 = vadd.f32 %v246, %v1305
      %v1307 = vpop.f32.mrf.mxu0
      %v1308 = vadd.f32 %v246, %v1307
      %1309 = vmatmul.bf16.gmra.mxu0 %v1250
      %v1310 = vpop.f32.mrf.mxu0
      %v1311 = vadd.f32 %v246, %v1310
      %v1312 = vpop.f32.mrf.mxu0
      %v1313 = vadd.f32 %v246, %v1312
      %1314 = vmatmul.bf16.gmra.mxu0 %v1253
      %v1315 = vpop.f32.mrf.mxu0
      %v1316 = vadd.f32 %v246, %v1315
      %v1317 = vpop.f32.mrf.mxu0
      %v1318 = vadd.f32 %v246, %v1317
      %1319 = vmatmul.bf16.gmra.mxu0 %v1256
      %v1320 = vpop.f32.mrf.mxu0
      %v1321 = vadd.f32 %v246, %v1320
      %v1322 = vpop.f32.mrf.mxu0
      %v1323 = vadd.f32 %v246, %v1322
      %1324 = vmatmul.bf16.gmra.mxu0 %v1259
      %v1325 = vpop.f32.mrf.mxu0
      %v1326 = vadd.f32 %v246, %v1325
      %v1327 = vpop.f32.mrf.mxu0
      %v1328 = vadd.f32 %v246, %v1327
      %1329 = vmatmul.bf16.gmra.mxu0 %v1262
      %v1330 = vpop.f32.mrf.mxu0
      %v1331 = vadd.f32 %v246, %v1330
      %v1332 = vpop.f32.mrf.mxu0
      %v1333 = vadd.f32 %v246, %v1332
      %1334 = vmatmul.bf16.gmra.mxu0 %v1265
      %v1335 = vpop.f32.mrf.mxu0
      %v1336 = vadd.f32 %v246, %v1335
      %v1337 = vpop.f32.mrf.mxu0
      %v1338 = vadd.f32 %v246, %v1337
      %1339 = vmatmul.bf16.gmra.mxu0 %v1268
      %v1340 = vpop.f32.mrf.mxu0
      %v1341 = vadd.f32 %v246, %v1340
      %v1342 = vpop.f32.mrf.mxu0
      %v1343 = vadd.f32 %v246, %v1342
      %1344 = vmatmul.bf16.gmra.mxu0 %v1271
      %v1345 = vpop.f32.mrf.mxu0
      %v1346 = vadd.f32 %v246, %v1345
      %v1347 = vpop.f32.mrf.mxu0
      %v1348 = vadd.f32 %v246, %v1347
      %1349 = vmatmul.bf16.gmra.mxu0 %v1274
      %v1350 = vpop.f32.mrf.mxu0
      %v1351 = vadd.f32 %v246, %v1350
      %v1352 = vpop.f32.mrf.mxu0
      %v1353 = vadd.f32 %v246, %v1352
      %1354 = vmatmul.bf16.gmra.mxu0 %v1277
      %v1355 = vpop.f32.mrf.mxu0
      %v1356 = vadd.f32 %v246, %v1355
      %v1357 = vpop.f32.mrf.mxu0
      %v1358 = vadd.f32 %v246, %v1357
      %1359 = vmatmul.bf16.gmra.mxu0 %v1280
      %v1360 = vpop.f32.mrf.mxu0
      %v1361 = vadd.f32 %v246, %v1360
      %v1362 = vpop.f32.mrf.mxu0
      %v1363 = vadd.f32 %v246, %v1362
      %1364 = vmatmul.bf16.gmra.mxu0 %v1283
      %v1365 = vpop.f32.mrf.mxu0
      %v1366 = vadd.f32 %v246, %v1365
      %v1367 = vpop.f32.mrf.mxu0
      %v1368 = vadd.f32 %v246, %v1367
      %1369 = vmatmul.bf16.gmra.mxu0 %v1286
      %v1370 = vpop.f32.mrf.mxu0
      %v1371 = vadd.f32 %v246, %v1370
      %v1372 = vpop.f32.mrf.mxu0
      %v1373 = vadd.f32 %v246, %v1372
      %1374 = vmatmul.bf16.gmra.mxu0 %v1289
      %v1375 = vpop.f32.mrf.mxu0
      %v1376 = vadd.f32 %v246, %v1375
      %v1377 = vpop.f32.mrf.mxu0
      %v1378 = vadd.f32 %v246, %v1377
      %1379 = vdwg.mxu0
      %v1380 = vmax.f32 %v1301, 0.0
      %v1381 = vmax.f32 %v1303, 0.0
      %v1382 = vmax.f32 %v1306, 0.0
      %v1383 = vmax.f32 %v1308, 0.0
      %v1384 = vmax.f32 %v1311, 0.0
      %v1385 = vmax.f32 %v1313, 0.0
      %v1386 = vmax.f32 %v1316, 0.0
      %v1387 = vmax.f32 %v1318, 0.0
      %v1388 = vmax.f32 %v1321, 0.0
      %v1389 = vmax.f32 %v1323, 0.0
      %v1390 = vmax.f32 %v1326, 0.0
      %v1391 = vmax.f32 %v1328, 0.0
      %v1392 = vmax.f32 %v1331, 0.0
      %v1393 = vmax.f32 %v1333, 0.0
      %v1394 = vmax.f32 %v1336, 0.0
      %v1395 = vmax.f32 %v1338, 0.0
      %v1396 = vmax.f32 %v1341, 0.0
      %v1397 = vmax.f32 %v1343, 0.0
      %v1398 = vmax.f32 %v1346, 0.0
      %v1399 = vmax.f32 %v1348, 0.0
      %v1400 = vmax.f32 %v1351, 0.0
      %v1401 = vmax.f32 %v1353, 0.0
      %v1402 = vmax.f32 %v1356, 0.0
      %v1403 = vmax.f32 %v1358, 0.0
      %v1404 = vmax.f32 %v1361, 0.0
      %v1405 = vmax.f32 %v1363, 0.0
      %v1406 = vmax.f32 %v1366, 0.0
      %v1407 = vmax.f32 %v1368, 0.0
      %v1408 = vmax.f32 %v1371, 0.0
      %v1409 = vmax.f32 %v1373, 0.0
      %v1410 = vmax.f32 %v1376, 0.0
      %v1411 = vmax.f32 %v1378, 0.0
      %v1412 = vadd.f32 %v1098, %v1380
      %v1413 = vadd.f32 %v1099, %v1381
      %v1414 = vadd.f32 %v1100, %v1382
      %v1415 = vadd.f32 %v1101, %v1383
      %v1416 = vadd.f32 %v1102, %v1384
      %v1417 = vadd.f32 %v1103, %v1385
      %v1418 = vadd.f32 %v1104, %v1386
      %v1419 = vadd.f32 %v1105, %v1387
      %v1420 = vadd.f32 %v1106, %v1388
      %v1421 = vadd.f32 %v1107, %v1389
      %v1422 = vadd.f32 %v1108, %v1390
      %v1423 = vadd.f32 %v1109, %v1391
      %v1424 = vadd.f32 %v1110, %v1392
      %v1425 = vadd.f32 %v1111, %v1393
      %v1426 = vadd.f32 %v1112, %v1394
      %v1427 = vadd.f32 %v1113, %v1395
      %v1428 = vadd.f32 %v1114, %v1396
      %v1429 = vadd.f32 %v1115, %v1397
      %v1430 = vadd.f32 %v1116, %v1398
      %v1431 = vadd.f32 %v1117, %v1399
      %v1432 = vadd.f32 %v1118, %v1400
      %v1433 = vadd.f32 %v1119, %v1401
      %v1434 = vadd.f32 %v1120, %v1402
      %v1435 = vadd.f32 %v1121, %v1403
      %v1436 = vadd.f32 %v1122, %v1404
      %v1437 = vadd.f32 %v1123, %v1405
      %v1438 = vadd.f32 %v1124, %v1406
      %v1439 = vadd.f32 %v1125, %v1407
      %v1440 = vadd.f32 %v1126, %v1408
      %v1441 = vadd.f32 %v1127, %v1409
      %v1442 = vadd.f32 %v1128, %v1410
      %v1443 = vadd.f32 %v1129, %v1411
      %v1444 = vmul.f32 %v1412, 0.25
      %v1445 = vmul.f32 %v1413, 0.25
      %v1446 = vmul.f32 %v1414, 0.25
      %v1447 = vmul.f32 %v1415, 0.25
      %v1448 = vmul.f32 %v1416, 0.25
      %v1449 = vmul.f32 %v1417, 0.25
      %v1450 = vmul.f32 %v1418, 0.25
      %v1451 = vmul.f32 %v1419, 0.25
      %v1452 = vmul.f32 %v1420, 0.25
      %v1453 = vmul.f32 %v1421, 0.25
      %v1454 = vmul.f32 %v1422, 0.25
      %v1455 = vmul.f32 %v1423, 0.25
      %v1456 = vmul.f32 %v1424, 0.25
      %v1457 = vmul.f32 %v1425, 0.25
      %v1458 = vmul.f32 %v1426, 0.25
      %v1459 = vmul.f32 %v1427, 0.25
      %v1460 = vmul.f32 %v1428, 0.25
      %v1461 = vmul.f32 %v1429, 0.25
      %v1462 = vmul.f32 %v1430, 0.25
      %v1463 = vmul.f32 %v1431, 0.25
      %v1464 = vmul.f32 %v1432, 0.25
      %v1465 = vmul.f32 %v1433, 0.25
      %v1466 = vmul.f32 %v1434, 0.25
      %v1467 = vmul.f32 %v1435, 0.25
      %v1468 = vmul.f32 %v1436, 0.25
      %v1469 = vmul.f32 %v1437, 0.25
      %v1470 = vmul.f32 %v1438, 0.25
      %v1471 = vmul.f32 %v1439, 0.25
      %v1472 = vmul.f32 %v1440, 0.25
      %v1473 = vmul.f32 %v1441, 0.25
      %v1474 = vmul.f32 %v1442, 0.25
      %v1475 = vmul.f32 %v1443, 0.25
      %v1476 = vpack.c.bf16 %v1444, %v1444
      %v1477 = vpack.c.bf16 %v1445, %v1445
      %v1478 = vpack.c.bf16 %v1446, %v1446
      %v1479 = vpack.c.bf16 %v1447, %v1447
      %v1480 = vpack.c.bf16 %v1448, %v1448
      %v1481 = vpack.c.bf16 %v1449, %v1449
      %v1482 = vpack.c.bf16 %v1450, %v1450
      %v1483 = vpack.c.bf16 %v1451, %v1451
      %v1484 = vpack.c.bf16 %v1452, %v1452
      %v1485 = vpack.c.bf16 %v1453, %v1453
      %v1486 = vpack.c.bf16 %v1454, %v1454
      %v1487 = vpack.c.bf16 %v1455, %v1455
      %v1488 = vpack.c.bf16 %v1456, %v1456
      %v1489 = vpack.c.bf16 %v1457, %v1457
      %v1490 = vpack.c.bf16 %v1458, %v1458
      %v1491 = vpack.c.bf16 %v1459, %v1459
      %v1492 = vpack.c.bf16 %v1460, %v1460
      %v1493 = vpack.c.bf16 %v1461, %v1461
      %v1494 = vpack.c.bf16 %v1462, %v1462
      %v1495 = vpack.c.bf16 %v1463, %v1463
      %v1496 = vpack.c.bf16 %v1464, %v1464
      %v1497 = vpack.c.bf16 %v1465, %v1465
      %v1498 = vpack.c.bf16 %v1466, %v1466
      %v1499 = vpack.c.bf16 %v1467, %v1467
      %v1500 = vpack.c.bf16 %v1468, %v1468
      %v1501 = vpack.c.bf16 %v1469, %v1469
      %v1502 = vpack.c.bf16 %v1470, %v1470
      %v1503 = vpack.c.bf16 %v1471, %v1471
      %v1504 = vpack.c.bf16 %v1472, %v1472
      %v1505 = vpack.c.bf16 %v1473, %v1473
      %v1506 = vpack.c.bf16 %v1474, %v1474
      %v1507 = vpack.c.bf16 %v1475, %v1475
      %vm1508 = vcmask 60416
      %1509 = vst.msk [vmem:[%s208] sm:$0xf] %vm1508, %v1476
      %1510 = vst.msk [vmem:[%s208 + $0x4] sm:$0xf] %vm1508, %v1477
      %1511 = vst.msk [vmem:[%s208 + $0x8] sm:$0xf] %vm1508, %v1478
      %1512 = vst.msk [vmem:[%s208 + $0xc] sm:$0xf] %vm1508, %v1479
      %1513 = vst.msk [vmem:[%s208 + $0x10] sm:$0xf] %vm1508, %v1480
      %1514 = vst.msk [vmem:[%s208 + $0x14] sm:$0xf] %vm1508, %v1481
      %1515 = vst.msk [vmem:[%s208 + $0x18] sm:$0xf] %vm1508, %v1482
      %1516 = vst.msk [vmem:[%s208 + $0x1c] sm:$0xf] %vm1508, %v1483
      %1517 = vst.msk [vmem:[%s208 + $0x20] sm:$0xf] %vm1508, %v1484
      %1518 = vst.msk [vmem:[%s208 + $0x24] sm:$0xf] %vm1508, %v1485
      %1519 = vst.msk [vmem:[%s208 + $0x28] sm:$0xf] %vm1508, %v1486
      %1520 = vst.msk [vmem:[%s208 + $0x2c] sm:$0xf] %vm1508, %v1487
      %1521 = vst.msk [vmem:[%s208 + $0x30] sm:$0xf] %vm1508, %v1488
      %1522 = vst.msk [vmem:[%s208 + $0x34] sm:$0xf] %vm1508, %v1489
      %1523 = vst.msk [vmem:[%s208 + $0x38] sm:$0xf] %vm1508, %v1490
      %1524 = vst.msk [vmem:[%s208 + $0x3c] sm:$0xf] %vm1508, %v1491
      %1525 = vst.msk [vmem:[%s208 + $0x40] sm:$0xf] %vm1508, %v1492
      %1526 = vst.msk [vmem:[%s208 + $0x44] sm:$0xf] %vm1508, %v1493
      %1527 = vst.msk [vmem:[%s208 + $0x48] sm:$0xf] %vm1508, %v1494
      %1528 = vst.msk [vmem:[%s208 + $0x4c] sm:$0xf] %vm1508, %v1495
      %1529 = vst.msk [vmem:[%s208 + $0x50] sm:$0xf] %vm1508, %v1496
      %1530 = vst.msk [vmem:[%s208 + $0x54] sm:$0xf] %vm1508, %v1497
      %1531 = vst.msk [vmem:[%s208 + $0x58] sm:$0xf] %vm1508, %v1498
      %1532 = vst.msk [vmem:[%s208 + $0x5c] sm:$0xf] %vm1508, %v1499
      %1533 = vst.msk [vmem:[%s208 + $0x60] sm:$0xf] %vm1508, %v1500
      %1534 = vst.msk [vmem:[%s208 + $0x64] sm:$0xf] %vm1508, %v1501
      %1535 = vst.msk [vmem:[%s208 + $0x68] sm:$0xf] %vm1508, %v1502
      %1536 = vst.msk [vmem:[%s208 + $0x6c] sm:$0xf] %vm1508, %v1503
      %1537 = vst.msk [vmem:[%s208 + $0x70] sm:$0xf] %vm1508, %v1504
      %1538 = vst.msk [vmem:[%s208 + $0x74] sm:$0xf] %vm1508, %v1505
      %1539 = vst.msk [vmem:[%s208 + $0x78] sm:$0xf] %vm1508, %v1506
      %1540 = vst.msk [vmem:[%s208 + $0x7c] sm:$0xf] %vm1508, %v1507
      %s1541 = smul.u32 32, %s19
      %p1542 = scmp.lt.s32.totalorder %s18, 1
      %s1543 = scalar_select %p1542, %s18, 1
      %p1544 = scmp.lt.s32.totalorder %s1541, 31
      %s1545 = scalar_select %p1544, %s1541, 31
      %s1546 = smul.addr %s1543, 32
      %s1547 = sadd.s32 %s1545, %s1546
      %s1548 = smul.addr %s1547, 4
      %s1549 = scalar_lea.vmem %s3, %s1548
      // Predicated region
      $region33: #{hifuse_block_forward.4} parent=31 // pred_check
        %p1550 = pneg %p116
      $region34: #{hifuse_block_forward.4} parent=31 // pred_check_branch
        %1552 = sbr.rel (%p1550) target = $region36
      $region35: #{hifuse_block_forward.4} parent=31 // pred_region
        %s1553 = smul.u32 32, %s19
      $region36: #{hifuse_block_forward.4} parent=31 // pred_fallthru
        _
    $region32: #{hifuse_block_forward.4} parent=5 // pred_fallthru
      _
    %p1554 = scmp.le.s32.totalorder 2, %s9
    // Predicated region
    $region37: #{hifuse_block_forward.4} parent=5 // pred_check
      %p1555 = pneg %p1554
    $region38: #{hifuse_block_forward.4} parent=5 // pred_check_branch
      %1557 = sbr.rel (%p1555) target = $region40
    $region39: #{hifuse_block_forward.4} parent=5 // pred_region
      %s1558 = ssub.s32 %s9, 2
      // Predicated region
      $region41: #{hifuse_block_forward.4} parent=39 // pred_check
        %p1559 = pneg %p122
      $region42: #{hifuse_block_forward.4} parent=39 // pred_check_branch
        %1561 = sbr.rel (%p1559) target = $region44
      $region43: #{hifuse_block_forward.4} parent=39 // pred_region
        %s1562 = smul.u32 32, %s21
        %p1563 = scmp.lt.s32.totalorder %s20, 1
        %s1564 = scalar_select %p1563, %s20, 1
        %p1565 = scmp.lt.s32.totalorder %s1562, 31
        %s1566 = scalar_select %p1565, %s1562, 31
        %s1567 = smul.addr %s1564, 32
        %s1568 = sadd.s32 %s1566, %s1567
        %s1569 = smul.addr %s1568, 4
        %s1570 = scalar_lea.vmem %s3, %s1569
      $region44: #{hifuse_block_forward.4} parent=39 // pred_fallthru
        _
    $region40: #{hifuse_block_forward.4} parent=5 // pred_fallthru
      _
  $region6: #{hifuse_block_forward.4} parent=0 // loop_footer
    %s13 = sadd.s32 1, %s9
  $region7: #{hifuse_block_forward.4} parent=0 // loop_footer_branch
    %8 = sbr.rel target = $region3
  $region8: #{hifuse_block_forward.4} parent=0 // loop_exit
    _

// kernel: hifuse_block_forward.6
$region0: #{hifuse_block_forward.6}
  #allocation0 [shape = 'u32[]', space=smem, size = 0x4, offset = 0x4, fixed_abs, tag = 'smem constant byte address 0x4 - core index']
  #allocation1 [shape = 'u32[72,128]{1,0:T(1,128)}', space=vmem, size = 0x9000, scoped, tag = 'internal scratch']
  #allocation2 [shape = 'f32[1]{0:T(128)S(6)}', space=smem, size = 0x200, scoped, tag = 'scoped memory for hifuse_block_forward.6']
  %s0 = inlined_call_operand.vmem [shape: bf16[2,16,16,4], index: 0, kind: input, shape index: {}]
  %s1 = inlined_call_operand.vmem [shape: bf16[32,112], index: 1, kind: input, shape index: {}]
  %s2 = inlined_call_operand.vmem [shape: bf16[16,112], index: 2, kind: input, shape index: {}]
  %s3 = inlined_call_operand.<no memory space> [shape: f32[1], index: 3, kind: input, shape index: {}]
  %s4 = inlined_call_operand.vmem [shape: bf16[2,16,16,4], index: 4, kind: output, shape index: {}]
  %s5 = sld [smem:[#allocation0]]
  $region49: #{hifuse_block_forward.6} parent=0
    _
  %s7 = ssub.s32 1, %s5
  %s8 = scalar_select 0, %s7, %s5
  %9 = sst [smem:[#allocation2]] %s3
  loop: start=0, step=1, limit=4
  $region2: #{hifuse_block_forward.6} parent=0 // loop_pre_header
    _
  $region3: #{hifuse_block_forward.6} parent=0 // loop_header
    %s11 = sphi 0, %s15
    %p12 = scmp.ge.s32.totalorder %s11, 4
    %s21 = sphi 0, %s23
    %s24 = sphi 0, %s21
    %s25 = sphi 0, %s24
    %s41 = sphi 0, %s25
    %s45 = sphi 0, %s45
    %s47 = sphi 0, %s45
    %s48 = sphi 0, %s47
    %s62 = sphi 0, %s48
    %s66 = sphi 0, %s66
    %s68 = sphi 0, %s66
    %s69 = sphi 0, %s68
    %s83 = sphi 0, %s69
    %s87 = sphi 0, %s87
    %s89 = sphi 0, %s87
    %s90 = sphi 0, %s89
    %s104 = sphi 0, %s90
    %s110 = sphi 0, %s112
    %s113 = sphi 0, %s110
    %s114 = sphi 0, %s113
    %s130 = sphi 0, %s114
  $region4: #{hifuse_block_forward.6} parent=0 // loop_header_branch
    %14 = sbr.rel (%p12) target = $region8
  $region5: #{hifuse_block_forward.6} parent=0 // loop_body
    %s16 = ssub.s32 %s11, 1
    %s17 = ssub.s32 %s11, 2
    %s18 = sadd.s32 %s11, 1
    %s19 = ssub.s32 %s11, %s18
    %p20 = scmp.eq.s32.totalorder %s19, 0
    %s22 = sadd.s32 %s21, 1
    %s23 = scalar_select %p20, %s21, %s22
    %p26 = pneg %p20
    %p27 = scmp.eq.s32.totalorder %s11, 1
    %p28 = por %p26, %p27
    %p29 = scmp.ne.s32.totalorder %s21, %s24
    %p30 = scmp.eq.s32.totalorder %s11, 0
    %p31 = por %p29, %p30
    %p32 = scmp.ne.s32.totalorder %s21, %s24
    %p33 = scmp.eq.s32.totalorder %s16, 1
    %p34 = por %p32, %p33
    %p35 = scmp.ne.s32.totalorder %s24, %s25
    %p36 = scmp.eq.s32.totalorder %s16, 0
    %p37 = por %p35, %p36
    %p38 = scmp.ne.s32.totalorder %s24, %s25
    %p39 = scmp.eq.s32.totalorder %s17, 1
    %p40 = por %p38, %p39
    %p42 = scmp.ne.s32.totalorder %s25, %s41
    %p43 = scmp.eq.s32.totalorder %s17, 0
    %p44 = por %p42, %p43
    %s46 = sadd.s32 %s45, 1
    %p49 = scmp.eq.s32.totalorder %s11, 1
    %p50 = scmp.ne.s32.totalorder %s45, %s47
    %p51 = scmp.eq.s32.totalorder %s11, 0
    %p52 = por %p50, %p51
    %p53 = scmp.ne.s32.totalorder %s45, %s47
    %p54 = scmp.eq.s32.totalorder %s16, 1
    %p55 = por %p53, %p54
    %p56 = scmp.ne.s32.totalorder %s47, %s48
    %p57 = scmp.eq.s32.totalorder %s16, 0
    %p58 = por %p56, %p57
    %p59 = scmp.ne.s32.totalorder %s47, %s48
    %p60 = scmp.eq.s32.totalorder %s17, 1
    %p61 = por %p59, %p60
    %p63 = scmp.ne.s32.totalorder %s48, %s62
    %p64 = scmp.eq.s32.totalorder %s17, 0
    %p65 = por %p63, %p64
    %s67 = sadd.s32 %s66, 1
    %p70 = scmp.eq.s32.totalorder %s11, 1
    %p71 = scmp.ne.s32.totalorder %s66, %s68
    %p72 = scmp.eq.s32.totalorder %s11, 0
    %p73 = por %p71, %p72
    %p74 = scmp.ne.s32.totalorder %s66, %s68
    %p75 = scmp.eq.s32.totalorder %s16, 1
    %p76 = por %p74, %p75
    %p77 = scmp.ne.s32.totalorder %s68, %s69
    %p78 = scmp.eq.s32.totalorder %s16, 0
    %p79 = por %p77, %p78
    %p80 = scmp.ne.s32.totalorder %s68, %s69
    %p81 = scmp.eq.s32.totalorder %s17, 1
    %p82 = por %p80, %p81
    %p84 = scmp.ne.s32.totalorder %s69, %s83
    %p85 = scmp.eq.s32.totalorder %s17, 0
    %p86 = por %p84, %p85
    %s88 = sadd.s32 %s87, 1
    %p91 = scmp.eq.s32.totalorder %s11, 1
    %p92 = scmp.ne.s32.totalorder %s87, %s89
    %p93 = scmp.eq.s32.totalorder %s11, 0
    %p94 = por %p92, %p93
    %p95 = scmp.ne.s32.totalorder %s87, %s89
    %p96 = scmp.eq.s32.totalorder %s16, 1
    %p97 = por %p95, %p96
    %p98 = scmp.ne.s32.totalorder %s89, %s90
    %p99 = scmp.eq.s32.totalorder %s16, 0
    %p100 = por %p98, %p99
    %p101 = scmp.ne.s32.totalorder %s89, %s90
    %p102 = scmp.eq.s32.totalorder %s17, 1
    %p103 = por %p101, %p102
    %p105 = scmp.ne.s32.totalorder %s90, %s104
    %p106 = scmp.eq.s32.totalorder %s17, 0
    %p107 = por %p105, %p106
    %s108 = ssub.s32 %s11, %s18
    %p109 = scmp.eq.s32.totalorder %s108, 0
    %s111 = sadd.s32 %s110, 1
    %s112 = scalar_select %p109, %s110, %s111
    %p115 = pneg %p109
    %p116 = scmp.eq.s32.totalorder %s11, 1
    %p117 = por %p115, %p116
    %p118 = scmp.ne.s32.totalorder %s110, %s113
    %p119 = scmp.eq.s32.totalorder %s11, 0
    %p120 = por %p118, %p119
    %p121 = scmp.ne.s32.totalorder %s110, %s113
    %p122 = scmp.eq.s32.totalorder %s16, 1
    %p123 = por %p121, %p122
    %p124 = scmp.ne.s32.totalorder %s113, %s114
    %p125 = scmp.eq.s32.totalorder %s16, 0
    %p126 = por %p124, %p125
    %p127 = scmp.ne.s32.totalorder %s113, %s114
    %p128 = scmp.eq.s32.totalorder %s17, 1
    %p129 = por %p127, %p128
    %p131 = scmp.ne.s32.totalorder %s114, %s130
    %p132 = scmp.eq.s32.totalorder %s17, 0
    %p133 = por %p131, %p132
    %p134 = scmp.le.s32.totalorder 1, %s11
    %p135 = scmp.lt.s32.totalorder %s11, 3
    %p136 = pnand %p134, %p135
    %p137 = pneg %p136
    // Predicated region
    $region9: #{hifuse_block_forward.6} parent=5 // pred_check
      _
    $region10: #{hifuse_block_forward.6} parent=5 // pred_check_branch
      %139 = sbr.rel (%p136) target = $region12
    $region11: #{hifuse_block_forward.6} parent=5 // pred_region
      %s140 = ssub.s32 %s11, 1
      // Predicated region
      $region13: #{hifuse_block_forward.6} parent=11 // pred_check
        %p141 = pneg %p58
      $region14: #{hifuse_block_forward.6} parent=11 // pred_check_branch
        %143 = sbr.rel (%p141) target = $region16
      $region15: #{hifuse_block_forward.6} parent=11 // pred_region
        _
      $region16: #{hifuse_block_forward.6} parent=11 // pred_fallthru
        _
      // Predicated region
      $region17: #{hifuse_block_forward.6} parent=11 // pred_check
        %p144 = pneg %p79
      $region18: #{hifuse_block_forward.6} parent=11 // pred_check_branch
        %146 = sbr.rel (%p144) target = $region20
      $region19: #{hifuse_block_forward.6} parent=11 // pred_region
        _
      $region20: #{hifuse_block_forward.6} parent=11 // pred_fallthru
        _
      // Predicated region
      $region21: #{hifuse_block_forward.6} parent=11 // pred_check
        %p147 = pneg %p100
      $region22: #{hifuse_block_forward.6} parent=11 // pred_check_branch
        %149 = sbr.rel (%p147) target = $region24
      $region23: #{hifuse_block_forward.6} parent=11 // pred_region
        _
      $region24: #{hifuse_block_forward.6} parent=11 // pred_fallthru
        _
    $region12: #{hifuse_block_forward.6} parent=5 // pred_fallthru
      _
    %p150 = scmp.lt.s32.totalorder %s11, 2
    // Predicated region
    $region25: #{hifuse_block_forward.6} parent=5 // pred_check
      %p151 = pneg %p150
    $region26: #{hifuse_block_forward.6} parent=5 // pred_check_branch
      %153 = sbr.rel (%p151) target = $region28
    $region27: #{hifuse_block_forward.6} parent=5 // pred_region
      // Predicated region
      $region29: #{hifuse_block_forward.6} parent=27 // pred_check
        %p154 = pneg %p31
      $region30: #{hifuse_block_forward.6} parent=27 // pred_check_branch
        %156 = sbr.rel (%p154) target = $region32
      $region31: #{hifuse_block_forward.6} parent=27 // pred_region
        %p157 = scmp.lt.s32.totalorder %s11, 1
        %s158 = scalar_select %p157, %s11, 1
        %s159 = smul.addr %s158, 32
        %s160 = smul.addr %s159, 4
        %s161 = scalar_lea.vmem %s0, %s160
      $region32: #{hifuse_block_forward.6} parent=27 // pred_fallthru
        _
    $region28: #{hifuse_block_forward.6} parent=5 // pred_fallthru
      _
    %p162 = scmp.le.s32.totalorder 1, %s11
    %p163 = scmp.lt.s32.totalorder %s11, 3
    %p164 = pnand %p162, %p163
    %p165 = pneg %p164
    // Predicated region
    $region33: #{hifuse_block_forward.6} parent=5 // pred_check
      _
    $region34: #{hifuse_block_forward.6} parent=5 // pred_check_branch
      %167 = sbr.rel (%p164) target = $region36
    $region35: #{hifuse_block_forward.6} parent=5 // pred_region
      %s168 = ssub.s32 %s11, 1
      %p169 = scmp.lt.s32.totalorder %s16, 1
      %s170 = scalar_select %p169, %s16, 1
      %s171 = smul.addr %s170, 32
      %s172 = smul.addr %s171, 4
      %s173 = scalar_lea.vmem %s0, %s172
      %p174 = pneg %p37
      %p175 = pneg %p34
      %p176 = pneg %p58
      %p177 = pneg %p55
      %p178 = pneg %p79
      %p179 = pneg %p76
      %p180 = pneg %p100
      %p181 = pneg %p97
      %p182 = pneg %p126
      %p183 = pneg %p123
      %p184 = scmp.lt.s32.totalorder %s16, 1
      %s185 = scalar_select %p184, %s16, 1
      %s186 = smul.addr %s185, 32
      %s187 = smul.addr %s186, 4
      %s188 = scalar_lea.vmem %s4, %s187
      %p189 = scmp.lt.s32.totalorder %s16, 1
      %s190 = scalar_select %p189, %s16, 1
      %s191 = smul.addr %s190, 32
      %s192 = smul.addr %s191, 4
      %s193 = scalar_lea.vmem %s0, %s192
      %p194 = scmp.lt.s32.totalorder %s16, 1
      %s195 = scalar_select %p194, %s16, 1
      %s196 = smul.addr %s195, 32
      %s197 = smul.addr %s196, 4
      %s198 = scalar_lea.vmem %s4, %s197
      %v200 = vld [vmem:[%s193] sm:$0xf]
      %v201 = vld [vmem:[%s193 + $0x4] sm:$0xf]
      %v202 = vld [vmem:[%s193 + $0x8] sm:$0xf]
      %v203 = vld [vmem:[%s193 + $0xc] sm:$0xf]
      %v204 = vld [vmem:[%s193 + $0x10] sm:$0xf]
      %v205 = vld [vmem:[%s193 + $0x14] sm:$0xf]
      %v206 = vld [vmem:[%s193 + $0x18] sm:$0xf]
      %v207 = vld [vmem:[%s193 + $0x1c] sm:$0xf]
      %v208 = vld [vmem:[%s193 + $0x20] sm:$0xf]
      %v209 = vld [vmem:[%s193 + $0x24] sm:$0xf]
      %v210 = vld [vmem:[%s193 + $0x28] sm:$0xf]
      %v211 = vld [vmem:[%s193 + $0x2c] sm:$0xf]
      %v212 = vld [vmem:[%s193 + $0x30] sm:$0xf]
      %v213 = vld [vmem:[%s193 + $0x34] sm:$0xf]
      %v214 = vld [vmem:[%s193 + $0x38] sm:$0xf]
      %v215 = vld [vmem:[%s193 + $0x3c] sm:$0xf]
      %v216 = vld [vmem:[%s193 + $0x40] sm:$0xf]
      %v217 = vld [vmem:[%s193 + $0x44] sm:$0xf]
      %v218 = vld [vmem:[%s193 + $0x48] sm:$0xf]
      %v219 = vld [vmem:[%s193 + $0x4c] sm:$0xf]
      %v220 = vld [vmem:[%s193 + $0x50] sm:$0xf]
      %v221 = vld [vmem:[%s193 + $0x54] sm:$0xf]
      %v222 = vld [vmem:[%s193 + $0x58] sm:$0xf]
      %v223 = vld [vmem:[%s193 + $0x5c] sm:$0xf]
      %v224 = vld [vmem:[%s193 + $0x60] sm:$0xf]
      %v225 = vld [vmem:[%s193 + $0x64] sm:$0xf]
      %v226 = vld [vmem:[%s193 + $0x68] sm:$0xf]
      %v227 = vld [vmem:[%s193 + $0x6c] sm:$0xf]
      %v228 = vld [vmem:[%s193 + $0x70] sm:$0xf]
      %v229 = vld [vmem:[%s193 + $0x74] sm:$0xf]
      %v230 = vld [vmem:[%s193 + $0x78] sm:$0xf]
      %v231 = vld [vmem:[%s193 + $0x7c] sm:$0xf]
      %v232 = vunpack.c.l.bf16 %v200
      %v233 = vunpack.c.l.bf16 %v201
      %v234 = vunpack.c.l.bf16 %v202
      %v235 = vunpack.c.l.bf16 %v203
      %v236 = vunpack.c.l.bf16 %v204
      %v237 = vunpack.c.l.bf16 %v205
      %v238 = vunpack.c.l.bf16 %v206
      %v239 = vunpack.c.l.bf16 %v207
      %v240 = vunpack.c.l.bf16 %v208
      %v241 = vunpack.c.l.bf16 %v209
      %v242 = vunpack.c.l.bf16 %v210
      %v243 = vunpack.c.l.bf16 %v211
      %v244 = vunpack.c.l.bf16 %v212
      %v245 = vunpack.c.l.bf16 %v213
      %v246 = vunpack.c.l.bf16 %v214
      %v247 = vunpack.c.l.bf16 %v215
      %v248 = vunpack.c.l.bf16 %v216
      %v249 = vunpack.c.l.bf16 %v217
      %v250 = vunpack.c.l.bf16 %v218
      %v251 = vunpack.c.l.bf16 %v219
      %v252 = vunpack.c.l.bf16 %v220
      %v253 = vunpack.c.l.bf16 %v221
      %v254 = vunpack.c.l.bf16 %v222
      %v255 = vunpack.c.l.bf16 %v223
      %v256 = vunpack.c.l.bf16 %v224
      %v257 = vunpack.c.l.bf16 %v225
      %v258 = vunpack.c.l.bf16 %v226
      %v259 = vunpack.c.l.bf16 %v227
      %v260 = vunpack.c.l.bf16 %v228
      %v261 = vunpack.c.l.bf16 %v229
      %v262 = vunpack.c.l.bf16 %v230
      %v263 = vunpack.c.l.bf16 %v231
      %vm264 = vcmask 31744
      %v265 = vsel %vm264, %v232, -inf
      %266 = vmax.xlane.f32.xlu0 %v265
      %v267 = vpop.xlane.xlu0 %266
      %v268 = vsel %vm264, %v233, -inf
      %269 = vmax.xlane.f32.xlu0 %v268
      %v270 = vpop.xlane.xlu0 %269
      %v271 = vsel %vm264, %v234, -inf
      %272 = vmax.xlane.f32.xlu0 %v271
      %v273 = vpop.xlane.xlu0 %272
      %v274 = vsel %vm264, %v235, -inf
      %275 = vmax.xlane.f32.xlu0 %v274
      %v276 = vpop.xlane.xlu0 %275
      %v277 = vsel %vm264, %v236, -inf
      %278 = vmax.xlane.f32.xlu0 %v277
      %v279 = vpop.xlane.xlu0 %278
      %v280 = vsel %vm264, %v237, -inf
      %281 = vmax.xlane.f32.xlu0 %v280
      %v282 = vpop.xlane.xlu0 %281
      %v283 = vsel %vm264, %v238, -inf
      %284 = vmax.xlane.f32.xlu0 %v283
      %v285 = vpop.xlane.xlu0 %284
      %v286 = vsel %vm264, %v239, -inf
      %287 = vmax.xlane.f32.xlu0 %v286
      %v288 = vpop.xlane.xlu0 %287
      %v289 = vsel %vm264, %v240, -inf
      %290 = vmax.xlane.f32.xlu0 %v289
      %v291 = vpop.xlane.xlu0 %290
      %v292 = vsel %vm264, %v241, -inf
      %293 = vmax.xlane.f32.xlu0 %v292
      %v294 = vpop.xlane.xlu0 %293
      %v295 = vsel %vm264, %v242, -inf
      %296 = vmax.xlane.f32.xlu0 %v295
      %v297 = vpop.xlane.xlu0 %296
      %v298 = vsel %vm264, %v243, -inf
      %299 = vmax.xlane.f32.xlu0 %v298
      %v300 = vpop.xlane.xlu0 %299
      %v301 = vsel %vm264, %v244, -inf
      %302 = vmax.xlane.f32.xlu0 %v301
      %v303 = vpop.xlane.xlu0 %302
      %v304 = vsel %vm264, %v245, -inf
      %305 = vmax.xlane.f32.xlu0 %v304
      %v306 = vpop.xlane.xlu0 %305
      %v307 = vsel %vm264, %v246, -inf
      %308 = vmax.xlane.f32.xlu0 %v307
      %v309 = vpop.xlane.xlu0 %308
      %v310 = vsel %vm264, %v247, -inf
      %311 = vmax.xlane.f32.xlu0 %v310
      %v312 = vpop.xlane.xlu0 %311
      %v313 = vsel %vm264, %v248, -inf
      %314 = vmax.xlane.f32.xlu0 %v313
      %v315 = vpop.xlane.xlu0 %314
      %v316 = vsel %vm264, %v249, -inf
      %317 = vmax.xlane.f32.xlu0 %v316
      %v318 = vpop.xlane.xlu0 %317
      %v319 = vsel %vm264, %v250, -inf
      %320 = vmax.xlane.f32.xlu0 %v319
      %v321 = vpop.xlane.xlu0 %320
      %v322 = vsel %vm264, %v251, -inf
      %323 = vmax.xlane.f32.xlu0 %v322
      %v324 = vpop.xlane.xlu0 %323
      %v325 = vsel %vm264, %v252, -inf
      %326 = vmax.xlane.f32.xlu0 %v325
      %v327 = vpop.xlane.xlu0 %326
      %v328 = vsel %vm264, %v253, -inf
      %329 = vmax.xlane.f32.xlu0 %v328
      %v330 = vpop.xlane.xlu0 %329
      %v331 = vsel %vm264, %v254, -inf
      %332 = vmax.xlane.f32.xlu0 %v331
      %v333 = vpop.xlane.xlu0 %332
      %v334 = vsel %vm264, %v255, -inf
      %335 = vmax.xlane.f32.xlu0 %v334
      %v336 = vpop.xlane.xlu0 %335
      %v337 = vsel %vm264, %v256, -inf
      %338 = vmax.xlane.f32.xlu0 %v337
      %v339 = vpop.xlane.xlu0 %338
      %v340 = vsel %vm264, %v257, -inf
      %341 = vmax.xlane.f32.xlu0 %v340
      %v342 = vpop.xlane.xlu0 %341
      %v343 = vsel %vm264, %v258, -inf
      %344 = vmax.xlane.f32.xlu0 %v343
      %v345 = vpop.xlane.xlu0 %344
      %v346 = vsel %vm264, %v259, -inf
      %347 = vmax.xlane.f32.xlu0 %v346
      %v348 = vpop.xlane.xlu0 %347
      %v349 = vsel %vm264, %v260, -inf
      %350 = vmax.xlane.f32.xlu0 %v349
      %v351 = vpop.xlane.xlu0 %350
      %v352 = vsel %vm264, %v261, -inf
      %353 = vmax.xlane.f32.xlu0 %v352
      %v354 = vpop.xlane.xlu0 %353
      %v355 = vsel %vm264, %v262, -inf
      %356 = vmax.xlane.f32.xlu0 %v355
      %v357 = vpop.xlane.xlu0 %356
      %v358 = vsel %vm264, %v263, -inf
      %359 = vmax.xlane.f32.xlu0 %v358
      %v360 = vpop.xlane.xlu0 %359
      %v361 = vsel %vm264, %v232, 0.0
      %362 = vadd.xlane.f32.xlu0 %v361
      %v363 = vpop.xlane.xlu0 %362
      %v364 = vsel %vm264, %v233, 0.0
      %365 = vadd.xlane.f32.xlu0 %v364
      %v366 = vpop.xlane.xlu0 %365
      %v367 = vsel %vm264, %v234, 0.0
      %368 = vadd.xlane.f32.xlu0 %v367
      %v369 = vpop.xlane.xlu0 %368
      %v370 = vsel %vm264, %v235, 0.0
      %371 = vadd.xlane.f32.xlu0 %v370
      %v372 = vpop.xlane.xlu0 %371
      %v373 = vsel %vm264, %v236, 0.0
      %374 = vadd.xlane.f32.xlu0 %v373
      %v375 = vpop.xlane.xlu0 %374
      %v376 = vsel %vm264, %v237, 0.0
      %377 = vadd.xlane.f32.xlu0 %v376
      %v378 = vpop.xlane.xlu0 %377
      %v379 = vsel %vm264, %v238, 0.0
      %380 = vadd.xlane.f32.xlu0 %v379
      %v381 = vpop.xlane.xlu0 %380
      %v382 = vsel %vm264, %v239, 0.0
      %383 = vadd.xlane.f32.xlu0 %v382
      %v384 = vpop.xlane.xlu0 %383
      %v385 = vsel %vm264, %v240, 0.0
      %386 = vadd.xlane.f32.xlu0 %v385
      %v387 = vpop.xlane.xlu0 %386
      %v388 = vsel %vm264, %v241, 0.0
      %389 = vadd.xlane.f32.xlu0 %v388
      %v390 = vpop.xlane.xlu0 %389
      %v391 = vsel %vm264, %v242, 0.0
      %392 = vadd.xlane.f32.xlu0 %v391
      %v393 = vpop.xlane.xlu0 %392
      %v394 = vsel %vm264, %v243, 0.0
      %395 = vadd.xlane.f32.xlu0 %v394
      %v396 = vpop.xlane.xlu0 %395
      %v397 = vsel %vm264, %v244, 0.0
      %398 = vadd.xlane.f32.xlu0 %v397
      %v399 = vpop.xlane.xlu0 %398
      %v400 = vsel %vm264, %v245, 0.0
      %401 = vadd.xlane.f32.xlu0 %v400
      %v402 = vpop.xlane.xlu0 %401
      %v403 = vsel %vm264, %v246, 0.0
      %404 = vadd.xlane.f32.xlu0 %v403
      %v405 = vpop.xlane.xlu0 %404
      %v406 = vsel %vm264, %v247, 0.0
      %407 = vadd.xlane.f32.xlu0 %v406
      %v408 = vpop.xlane.xlu0 %407
      %v409 = vsel %vm264, %v248, 0.0
      %410 = vadd.xlane.f32.xlu0 %v409
      %v411 = vpop.xlane.xlu0 %410
      %v412 = vsel %vm264, %v249, 0.0
      %413 = vadd.xlane.f32.xlu0 %v412
      %v414 = vpop.xlane.xlu0 %413
      %v415 = vsel %vm264, %v250, 0.0
      %416 = vadd.xlane.f32.xlu0 %v415
      %v417 = vpop.xlane.xlu0 %416
      %v418 = vsel %vm264, %v251, 0.0
      %419 = vadd.xlane.f32.xlu0 %v418
      %v420 = vpop.xlane.xlu0 %419
      %v421 = vsel %vm264, %v252, 0.0
      %422 = vadd.xlane.f32.xlu0 %v421
      %v423 = vpop.xlane.xlu0 %422
      %v424 = vsel %vm264, %v253, 0.0
      %425 = vadd.xlane.f32.xlu0 %v424
      %v426 = vpop.xlane.xlu0 %425
      %v427 = vsel %vm264, %v254, 0.0
      %428 = vadd.xlane.f32.xlu0 %v427
      %v429 = vpop.xlane.xlu0 %428
      %v430 = vsel %vm264, %v255, 0.0
      %431 = vadd.xlane.f32.xlu0 %v430
      %v432 = vpop.xlane.xlu0 %431
      %v433 = vsel %vm264, %v256, 0.0
      %434 = vadd.xlane.f32.xlu0 %v433
      %v435 = vpop.xlane.xlu0 %434
      %v436 = vsel %vm264, %v257, 0.0
      %437 = vadd.xlane.f32.xlu0 %v436
      %v438 = vpop.xlane.xlu0 %437
      %v439 = vsel %vm264, %v258, 0.0
      %440 = vadd.xlane.f32.xlu0 %v439
      %v441 = vpop.xlane.xlu0 %440
      %v442 = vsel %vm264, %v259, 0.0
      %443 = vadd.xlane.f32.xlu0 %v442
      %v444 = vpop.xlane.xlu0 %443
      %v445 = vsel %vm264, %v260, 0.0
      %446 = vadd.xlane.f32.xlu0 %v445
      %v447 = vpop.xlane.xlu0 %446
      %v448 = vsel %vm264, %v261, 0.0
      %449 = vadd.xlane.f32.xlu0 %v448
      %v450 = vpop.xlane.xlu0 %449
      %v451 = vsel %vm264, %v262, 0.0
      %452 = vadd.xlane.f32.xlu0 %v451
      %v453 = vpop.xlane.xlu0 %452
      %v454 = vsel %vm264, %v263, 0.0
      %455 = vadd.xlane.f32.xlu0 %v454
      %v456 = vpop.xlane.xlu0 %455
      %v457 = vrcp.pop 4.0
      %v458 = vmul.f32 4.0, %v457
      %v459 = vsub.f32 1.0, %v458
      %v460 = vmul.f32 %v457, %v459
      %v461 = vadd.f32 %v457, %v460
      %vm462 = vweird.f32 %v457
      %v463 = vsel %vm462, %v457, %v461
      %v464 = vmul.f32 %v363, %v463
      %v465 = vmul.f32 %v366, %v463
      %v466 = vmul.f32 %v369, %v463
      %v467 = vmul.f32 %v372, %v463
      %v468 = vmul.f32 %v375, %v463
      %v469 = vmul.f32 %v378, %v463
      %v470 = vmul.f32 %v381, %v463
      %v471 = vmul.f32 %v384, %v463
      %v472 = vmul.f32 %v387, %v463
      %v473 = vmul.f32 %v390, %v463
      %v474 = vmul.f32 %v393, %v463
      %v475 = vmul.f32 %v396, %v463
      %v476 = vmul.f32 %v399, %v463
      %v477 = vmul.f32 %v402, %v463
      %v478 = vmul.f32 %v405, %v463
      %v479 = vmul.f32 %v408, %v463
      %v480 = vmul.f32 %v411, %v463
      %v481 = vmul.f32 %v414, %v463
      %v482 = vmul.f32 %v417, %v463
      %v483 = vmul.f32 %v420, %v463
      %v484 = vmul.f32 %v423, %v463
      %v485 = vmul.f32 %v426, %v463
      %v486 = vmul.f32 %v429, %v463
      %v487 = vmul.f32 %v432, %v463
      %v488 = vmul.f32 %v435, %v463
      %v489 = vmul.f32 %v438, %v463
      %v490 = vmul.f32 %v441, %v463
      %v491 = vmul.f32 %v444, %v463
      %v492 = vmul.f32 %v447, %v463
      %v493 = vmul.f32 %v450, %v463
      %v494 = vmul.f32 %v453, %v463
      %v495 = vmul.f32 %v456, %v463
      %v528 = vlaneseq
      %v529 = vand.u32 %v528, 127
      %v530 = vperm.slane %v267, %v529
      %v531 = vadd.s32 %v529, 4294967288
      %v532 = vperm.slane %v270, %v531
      %vm533 = vcmask 130112
      %v534 = vsel %vm533, %v532, %v530
      %v535 = vperm.slane %v273, %v529
      %v536 = vperm.slane %v276, %v531
      %v537 = vsel %vm533, %v536, %v535
      %v538 = vperm.slane %v279, %v529
      %v539 = vperm.slane %v282, %v531
      %v540 = vsel %vm533, %v539, %v538
      %v541 = vperm.slane %v285, %v529
      %v542 = vperm.slane %v288, %v531
      %v543 = vsel %vm533, %v542, %v541
      %v544 = vperm.slane %v291, %v529
      %v545 = vperm.slane %v294, %v531
      %v546 = vsel %vm533, %v545, %v544
      %v547 = vperm.slane %v297, %v529
      %v548 = vperm.slane %v300, %v531
      %v549 = vsel %vm533, %v548, %v547
      %v550 = vperm.slane %v303, %v529
      %v551 = vperm.slane %v306, %v531
      %v552 = vsel %vm533, %v551, %v550
      %v553 = vperm.slane %v309, %v529
      %v554 = vperm.slane %v312, %v531
      %v555 = vsel %vm533, %v554, %v553
      %v556 = vperm.slane %v315, %v529
      %v557 = vperm.slane %v318, %v531
      %v558 = vsel %vm533, %v557, %v556
      %v559 = vperm.slane %v321, %v529
      %v560 = vperm.slane %v324, %v531
      %v561 = vsel %vm533, %v560, %v559
      %v562 = vperm.slane %v327, %v529
      %v563 = vperm.slane %v330, %v531
      %v564 = vsel %vm533, %v563, %v562
      %v565 = vperm.slane %v333, %v529
      %v566 = vperm.slane %v336, %v531
      %v567 = vsel %vm533, %v566, %v565
      %v568 = vperm.slane %v339, %v529
      %v569 = vperm.slane %v342, %v531
      %v570 = vsel %vm533, %v569, %v568
      %v571 = vperm.slane %v345, %v529
      %v572 = vperm.slane %v348, %v531
      %v573 = vsel %vm533, %v572, %v571
      %v574 = vperm.slane %v351, %v529
      %v575 = vperm.slane %v354, %v531
      %v576 = vsel %vm533, %v575, %v574
      %v577 = vperm.slane %v357, %v529
      %v578 = vperm.slane %v360, %v531
      %v579 = vsel %vm533, %v578, %v577
      %vm580 = vcmask 1041409
      %v581 = vsel %vm580, %v537, %v534
      %vm582 = vcmask 1042434
      %v583 = vsel %vm582, %v540, %v581
      %vm584 = vcmask 1043459
      %v585 = vsel %vm584, %v543, %v583
      %vm586 = vcmask 1044484
      %v587 = vsel %vm586, %v546, %v585
      %vm588 = vcmask 1045509
      %v589 = vsel %vm588, %v549, %v587
      %vm590 = vcmask 1046534
      %v591 = vsel %vm590, %v552, %v589
      %vm592 = vcmask 1047559
      %v593 = vsel %vm592, %v555, %v591
      %v594 = vsel %vm580, %v561, %v558
      %v595 = vsel %vm582, %v564, %v594
      %v596 = vsel %vm584, %v567, %v595
      %v597 = vsel %vm586, %v570, %v596
      %v598 = vsel %vm588, %v573, %v597
      %v599 = vsel %vm590, %v576, %v598
      %v600 = vsel %vm592, %v579, %v599
      %v635 = vadd.s32 %v529, 4294967280
      %v636 = vperm.slane %v464, %v635
      %v637 = vadd.s32 %v529, 4294967272
      %v638 = vperm.slane %v465, %v637
      %vm639 = vcmask 261312
      %v640 = vsel %vm639, %v638, %v636
      %v641 = vperm.slane %v466, %v635
      %v642 = vperm.slane %v467, %v637
      %v643 = vsel %vm639, %v642, %v641
      %v644 = vperm.slane %v468, %v635
      %v645 = vperm.slane %v469, %v637
      %v646 = vsel %vm639, %v645, %v644
      %v647 = vperm.slane %v470, %v635
      %v648 = vperm.slane %v471, %v637
      %v649 = vsel %vm639, %v648, %v647
      %v650 = vperm.slane %v472, %v635
      %v651 = vperm.slane %v473, %v637
      %v652 = vsel %vm639, %v651, %v650
      %v653 = vperm.slane %v474, %v635
      %v654 = vperm.slane %v475, %v637
      %v655 = vsel %vm639, %v654, %v653
      %v656 = vperm.slane %v476, %v635
      %v657 = vperm.slane %v477, %v637
      %v658 = vsel %vm639, %v657, %v656
      %v659 = vperm.slane %v478, %v635
      %v660 = vperm.slane %v479, %v637
      %v661 = vsel %vm639, %v660, %v659
      %v662 = vperm.slane %v480, %v635
      %v663 = vperm.slane %v481, %v637
      %v664 = vsel %vm639, %v663, %v662
      %v665 = vperm.slane %v482, %v635
      %v666 = vperm.slane %v483, %v637
      %v667 = vsel %vm639, %v666, %v665
      %v668 = vperm.slane %v484, %v635
      %v669 = vperm.slane %v485, %v637
      %v670 = vsel %vm639, %v669, %v668
      %v671 = vperm.slane %v486, %v635
      %v672 = vperm.slane %v487, %v637
      %v673 = vsel %vm639, %v672, %v671
      %v674 = vperm.slane %v488, %v635
      %v675 = vperm.slane %v489, %v637
      %v676 = vsel %vm639, %v675, %v674
      %v677 = vperm.slane %v490, %v635
      %v678 = vperm.slane %v491, %v637
      %v679 = vsel %vm639, %v678, %v677
      %v680 = vperm.slane %v492, %v635
      %v681 = vperm.slane %v493, %v637
      %v682 = vsel %vm639, %v681, %v680
      %v683 = vperm.slane %v494, %v635
      %v684 = vperm.slane %v495, %v637
      %v685 = vsel %vm639, %v684, %v683
      %v686 = vsel %vm580, %v643, %v640
      %v687 = vsel %vm582, %v646, %v686
      %v688 = vsel %vm584, %v649, %v687
      %v689 = vsel %vm586, %v652, %v688
      %v690 = vsel %vm588, %v655, %v689
      %v691 = vsel %vm590, %v658, %v690
      %v692 = vsel %vm592, %v661, %v691
      %v693 = vsel %vm580, %v667, %v664
      %v694 = vsel %vm582, %v670, %v693
      %v695 = vsel %vm584, %v673, %v694
      %v696 = vsel %vm586, %v676, %v695
      %v697 = vsel %vm588, %v679, %v696
      %v698 = vsel %vm590, %v682, %v697
      %v699 = vsel %vm592, %v685, %v698
      %vm702 = vcmask 130048
      %v703 = vsel %vm702, %v593, %v692
      %v704 = vsel %vm702, %v600, %v699
      %v705 = vpack.c.bf16 %v704, %v703
      %v706 = vld [vmem:[%s1] sm:$0xf]
      %v707 = vld [vmem:[%s1 + $0x4] sm:$0xf]
      %v708 = vld [vmem:[%s1 + $0x8] sm:$0xf]
      %v709 = vld [vmem:[%s1 + $0xc] sm:$0xf]
      %v714 = vunpack.c.l.b16 %v706
      %v715 = vunpack.c.l.b16 %v707
      %v716 = vunpack.c.l.b16 %v708
      %v717 = vunpack.c.l.b16 %v709
      %v718 = vpack.c.b16 %v715, %v714
      %v719 = vpack.c.b16 %v717, %v716
      %vm722 = vcmask 261120
      %v724 = vsel %vm722, %v705, 0
      %726 = vmatpush.bf16.msra.mxu0 0
      %727 = vmatpush.bf16.msra.mxu0 0
      %728 = vmatpush.bf16.msra.mxu0 0
      %729 = vmatpush.bf16.msra.mxu0 0
      %730 = vmatpush.bf16.msra.mxu0 0
      %731 = vmatpush.bf16.msra.mxu0 0
      %732 = vmatpush.bf16.msra.mxu0 %v719
      %733 = vmatpush.bf16.msra.mxu0 %v718
      %734 = vmatmul.bf16.gmra.mxu0 %v724
      %v735 = vpop.f32.mrf.mxu0
      %v736 = vadd.f32 0.0, %v735
      %v737 = vpop.f32.mrf.mxu0
      %v738 = vadd.f32 0.0, %v737
      %739 = vdwg.mxu0
      %742 = vrot.lane.b32.xlu0 %v736, 112
      %v743 = vpop.permute.xlu0 %742
      %744 = vrot.lane.b32.xlu0 %v738, 112
      %v745 = vpop.permute.xlu0 %744
      %748 = vrot.lane.b32.xlu0 %v736, 96
      %v749 = vpop.permute.xlu0 %748
      %750 = vrot.lane.b32.xlu0 %v738, 96
      %v751 = vpop.permute.xlu0 %750
      %754 = vrot.lane.b32.xlu0 %v736, 80
      %v755 = vpop.permute.xlu0 %754
      %756 = vrot.lane.b32.xlu0 %v738, 80
      %v757 = vpop.permute.xlu0 %756
      %760 = vrot.lane.b32.xlu0 %v736, 64
      %v761 = vpop.permute.xlu0 %760
      %762 = vrot.lane.b32.xlu0 %v738, 64
      %v763 = vpop.permute.xlu0 %762
      %766 = vrot.lane.b32.xlu0 %v736, 48
      %v767 = vpop.permute.xlu0 %766
      %768 = vrot.lane.b32.xlu0 %v738, 48
      %v769 = vpop.permute.xlu0 %768
      %772 = vrot.lane.b32.xlu0 %v736, 32
      %v773 = vpop.permute.xlu0 %772
      %774 = vrot.lane.b32.xlu0 %v738, 32
      %v775 = vpop.permute.xlu0 %774
      %v778 = vld [vmem:[%s2] sm:$0xf]
      %v779 = vld [vmem:[%s2 + $0x4] sm:$0xf]
      %v780 = vpack.c.bf16 %v738, %v736
      %v781 = vpack.c.bf16 %v745, %v743
      %v782 = vpack.c.bf16 %v751, %v749
      %v783 = vpack.c.bf16 %v757, %v755
      %v784 = vpack.c.bf16 %v763, %v761
      %v785 = vpack.c.bf16 %v769, %v767
      %v786 = vpack.c.bf16 %v775, %v773
      %s787 = sld [smem:[#allocation2]]
      %v788 = vstv %s787
      %v791 = vunpack.c.l.b16 %v778
      %v792 = vunpack.c.l.b16 %v779
      %v793 = vpack.c.b16 %v792, %v791
      %vm794 = vcmask 916480
      %v796 = vsel %vm794, %v793, 0
      %798 = vmatpush.bf16.msra.mxu0 0
      %799 = vmatpush.bf16.msra.mxu0 %v786
      %800 = vmatpush.bf16.msra.mxu0 %v785
      %801 = vmatpush.bf16.msra.mxu0 %v784
      %802 = vmatpush.bf16.msra.mxu0 %v783
      %803 = vmatpush.bf16.msra.mxu0 %v782
      %804 = vmatpush.bf16.msra.mxu0 %v781
      %805 = vmatpush.bf16.msra.mxu0 %v780
      %806 = vmatmul.bf16.gmra.mxu0 %v796
      %v807 = vpop.f32.mrf.mxu0
      %v808 = vadd.f32 %v788, %v807
      %v809 = vpop.f32.mrf.mxu0
      %v810 = vadd.f32 %v788, %v809
      %811 = vdwg.mxu0
      %v812 = vsub.f32 0.0, %v808
      %v813 = vsub.f32 0.0, %v810
      %v814 = vmul.f32 %v812, 1.442695
      %v815 = vpow.pop %v814
      %v816 = vmul.f32 %v813, 1.442695
      %v817 = vpow.pop %v816
      %v818 = vadd.f32 %v815, 1.0
      %v819 = vadd.f32 %v817, 1.0
      %v820 = vrcp.pop %v818
      %v821 = vmul.f32 %v818, %v820
      %v822 = vsub.f32 1.0, %v821
      %v823 = vmul.f32 %v820, %v822
      %v824 = vadd.f32 %v820, %v823
      %vm825 = vweird.f32 %v818
      %vm826 = vweird.f32 %v820
      %vm827 = vmor %vm825, %vm826
      %v828 = vsel %vm827, %v820, %v824
      %v829 = vand.u32 2147483647, %v818
      %vm830 = vcmp.eq.f32.partialorder %v829, 8.507059e+37
      %v831 = vand.u32 %v818, 2147483648
      %v832 = vor.u32 1.1754944e-38, %v831
      %v833 = vsel %vm830, %v832, %v828
      %v834 = vmul.f32 1.0, %v833
      %v835 = vrcp.pop %v819
      %v836 = vmul.f32 %v819, %v835
      %v837 = vsub.f32 1.0, %v836
      %v838 = vmul.f32 %v835, %v837
      %v839 = vadd.f32 %v835, %v838
      %vm840 = vweird.f32 %v819
      %vm841 = vweird.f32 %v835
      %vm842 = vmor %vm840, %vm841
      %v843 = vsel %vm842, %v835, %v839
      %v844 = vand.u32 2147483647, %v819
      %vm845 = vcmp.eq.f32.partialorder %v844, 8.507059e+37
      %v846 = vand.u32 %v819, 2147483648
      %v847 = vor.u32 1.1754944e-38, %v846
      %v848 = vsel %vm845, %v847, %v843
      %v849 = vmul.f32 1.0, %v848
      %v850 = vperm.slane %v834, 0
      %v851 = vlaneseq
      %v852 = vshrl.u32 %v851, 7
      %854 = vset.pattern.permute.xlu0 %v852
      %855 = vperm.xlu0 %854, %v850
      %v856 = vpop.permute.xlu0 %855
      %v857 = vlaneseq
      %v858 = vshrl.u32 %v857, 7
      %v859 = vadd.s32 %v858, 8
      %860 = vset.pattern.permute.xlu0 %v859
      %861 = vperm.xlu0 %860, %v850
      %v862 = vpop.permute.xlu0 %861
      %v863 = vperm.slane %v834, 1
      %v864 = vlaneseq
      %v865 = vshrl.u32 %v864, 7
      %867 = vset.pattern.permute.xlu0 %v865
      %868 = vperm.xlu0 %867, %v863
      %v869 = vpop.permute.xlu0 %868
      %v870 = vlaneseq
      %v871 = vshrl.u32 %v870, 7
      %v872 = vadd.s32 %v871, 8
      %873 = vset.pattern.permute.xlu0 %v872
      %874 = vperm.xlu0 %873, %v863
      %v875 = vpop.permute.xlu0 %874
      %v876 = vperm.slane %v834, 2
      %v877 = vlaneseq
      %v878 = vshrl.u32 %v877, 7
      %880 = vset.pattern.permute.xlu0 %v878
      %881 = vperm.xlu0 %880, %v876
      %v882 = vpop.permute.xlu0 %881
      %v883 = vlaneseq
      %v884 = vshrl.u32 %v883, 7
      %v885 = vadd.s32 %v884, 8
      %886 = vset.pattern.permute.xlu0 %v885
      %887 = vperm.xlu0 %886, %v876
      %v888 = vpop.permute.xlu0 %887
      %v889 = vperm.slane %v834, 3
      %v890 = vlaneseq
      %v891 = vshrl.u32 %v890, 7
      %893 = vset.pattern.permute.xlu0 %v891
      %894 = vperm.xlu0 %893, %v889
      %v895 = vpop.permute.xlu0 %894
      %v896 = vlaneseq
      %v897 = vshrl.u32 %v896, 7
      %v898 = vadd.s32 %v897, 8
      %899 = vset.pattern.permute.xlu0 %v898
      %900 = vperm.xlu0 %899, %v889
      %v901 = vpop.permute.xlu0 %900
      %v902 = vperm.slane %v834, 4
      %v903 = vlaneseq
      %v904 = vshrl.u32 %v903, 7
      %906 = vset.pattern.permute.xlu0 %v904
      %907 = vperm.xlu0 %906, %v902
      %v908 = vpop.permute.xlu0 %907
      %v909 = vlaneseq
      %v910 = vshrl.u32 %v909, 7
      %v911 = vadd.s32 %v910, 8
      %912 = vset.pattern.permute.xlu0 %v911
      %913 = vperm.xlu0 %912, %v902
      %v914 = vpop.permute.xlu0 %913
      %v915 = vperm.slane %v834, 5
      %v916 = vlaneseq
      %v917 = vshrl.u32 %v916, 7
      %919 = vset.pattern.permute.xlu0 %v917
      %920 = vperm.xlu0 %919, %v915
      %v921 = vpop.permute.xlu0 %920
      %v922 = vlaneseq
      %v923 = vshrl.u32 %v922, 7
      %v924 = vadd.s32 %v923, 8
      %925 = vset.pattern.permute.xlu0 %v924
      %926 = vperm.xlu0 %925, %v915
      %v927 = vpop.permute.xlu0 %926
      %v928 = vperm.slane %v834, 6
      %v929 = vlaneseq
      %v930 = vshrl.u32 %v929, 7
      %932 = vset.pattern.permute.xlu0 %v930
      %933 = vperm.xlu0 %932, %v928
      %v934 = vpop.permute.xlu0 %933
      %v935 = vlaneseq
      %v936 = vshrl.u32 %v935, 7
      %v937 = vadd.s32 %v936, 8
      %938 = vset.pattern.permute.xlu0 %v937
      %939 = vperm.xlu0 %938, %v928
      %v940 = vpop.permute.xlu0 %939
      %v941 = vperm.slane %v834, 7
      %v942 = vlaneseq
      %v943 = vshrl.u32 %v942, 7
      %945 = vset.pattern.permute.xlu0 %v943
      %946 = vperm.xlu0 %945, %v941
      %v947 = vpop.permute.xlu0 %946
      %v948 = vlaneseq
      %v949 = vshrl.u32 %v948, 7
      %v950 = vadd.s32 %v949, 8
      %951 = vset.pattern.permute.xlu0 %v950
      %952 = vperm.xlu0 %951, %v941
      %v953 = vpop.permute.xlu0 %952
      %v954 = vperm.slane %v849, 0
      %v955 = vlaneseq
      %v956 = vshrl.u32 %v955, 7
      %958 = vset.pattern.permute.xlu0 %v956
      %959 = vperm.xlu0 %958, %v954
      %v960 = vpop.permute.xlu0 %959
      %v961 = vlaneseq
      %v962 = vshrl.u32 %v961, 7
      %v963 = vadd.s32 %v962, 8
      %964 = vset.pattern.permute.xlu0 %v963
      %965 = vperm.xlu0 %964, %v954
      %v966 = vpop.permute.xlu0 %965
      %v967 = vperm.slane %v849, 1
      %v968 = vlaneseq
      %v969 = vshrl.u32 %v968, 7
      %971 = vset.pattern.permute.xlu0 %v969
      %972 = vperm.xlu0 %971, %v967
      %v973 = vpop.permute.xlu0 %972
      %v974 = vlaneseq
      %v975 = vshrl.u32 %v974, 7
      %v976 = vadd.s32 %v975, 8
      %977 = vset.pattern.permute.xlu0 %v976
      %978 = vperm.xlu0 %977, %v967
      %v979 = vpop.permute.xlu0 %978
      %v980 = vperm.slane %v849, 2
      %v981 = vlaneseq
      %v982 = vshrl.u32 %v981, 7
      %984 = vset.pattern.permute.xlu0 %v982
      %985 = vperm.xlu0 %984, %v980
      %v986 = vpop.permute.xlu0 %985
      %v987 = vlaneseq
      %v988 = vshrl.u32 %v987, 7
      %v989 = vadd.s32 %v988, 8
      %990 = vset.pattern.permute.xlu0 %v989
      %991 = vperm.xlu0 %990, %v980
      %v992 = vpop.permute.xlu0 %991
      %v993 = vperm.slane %v849, 3
      %v994 = vlaneseq
      %v995 = vshrl.u32 %v994, 7
      %997 = vset.pattern.permute.xlu0 %v995
      %998 = vperm.xlu0 %997, %v993
      %v999 = vpop.permute.xlu0 %998
      %v1000 = vlaneseq
      %v1001 = vshrl.u32 %v1000, 7
      %v1002 = vadd.s32 %v1001, 8
      %1003 = vset.pattern.permute.xlu0 %v1002
      %1004 = vperm.xlu0 %1003, %v993
      %v1005 = vpop.permute.xlu0 %1004
      %v1006 = vperm.slane %v849, 4
      %v1007 = vlaneseq
      %v1008 = vshrl.u32 %v1007, 7
      %1010 = vset.pattern.permute.xlu0 %v1008
      %1011 = vperm.xlu0 %1010, %v1006
      %v1012 = vpop.permute.xlu0 %1011
      %v1013 = vlaneseq
      %v1014 = vshrl.u32 %v1013, 7
      %v1015 = vadd.s32 %v1014, 8
      %1016 = vset.pattern.permute.xlu0 %v1015
      %1017 = vperm.xlu0 %1016, %v1006
      %v1018 = vpop.permute.xlu0 %1017
      %v1019 = vperm.slane %v849, 5
      %v1020 = vlaneseq
      %v1021 = vshrl.u32 %v1020, 7
      %1023 = vset.pattern.permute.xlu0 %v1021
      %1024 = vperm.xlu0 %1023, %v1019
      %v1025 = vpop.permute.xlu0 %1024
      %v1026 = vlaneseq
      %v1027 = vshrl.u32 %v1026, 7
      %v1028 = vadd.s32 %v1027, 8
      %1029 = vset.pattern.permute.xlu0 %v1028
      %1030 = vperm.xlu0 %1029, %v1019
      %v1031 = vpop.permute.xlu0 %1030
      %v1032 = vperm.slane %v849, 6
      %v1033 = vlaneseq
      %v1034 = vshrl.u32 %v1033, 7
      %1036 = vset.pattern.permute.xlu0 %v1034
      %1037 = vperm.xlu0 %1036, %v1032
      %v1038 = vpop.permute.xlu0 %1037
      %v1039 = vlaneseq
      %v1040 = vshrl.u32 %v1039, 7
      %v1041 = vadd.s32 %v1040, 8
      %1042 = vset.pattern.permute.xlu0 %v1041
      %1043 = vperm.xlu0 %1042, %v1032
      %v1044 = vpop.permute.xlu0 %1043
      %v1045 = vperm.slane %v849, 7
      %v1046 = vlaneseq
      %v1047 = vshrl.u32 %v1046, 7
      %1049 = vset.pattern.permute.xlu0 %v1047
      %1050 = vperm.xlu0 %1049, %v1045
      %v1051 = vpop.permute.xlu0 %1050
      %v1052 = vlaneseq
      %v1053 = vshrl.u32 %v1052, 7
      %v1054 = vadd.s32 %v1053, 8
      %1055 = vset.pattern.permute.xlu0 %v1054
      %1056 = vperm.xlu0 %1055, %v1045
      %v1057 = vpop.permute.xlu0 %1056
      %v1058 = vmul.f32 %v232, %v856
      %v1059 = vmul.f32 %v233, %v862
      %v1060 = vmul.f32 %v234, %v869
      %v1061 = vmul.f32 %v235, %v875
      %v1062 = vmul.f32 %v236, %v882
      %v1063 = vmul.f32 %v237, %v888
      %v1064 = vmul.f32 %v238, %v895
      %v1065 = vmul.f32 %v239, %v901
      %v1066 = vmul.f32 %v240, %v908
      %v1067 = vmul.f32 %v241, %v914
      %v1068 = vmul.f32 %v242, %v921
      %v1069 = vmul.f32 %v243, %v927
      %v1070 = vmul.f32 %v244, %v934
      %v1071 = vmul.f32 %v245, %v940
      %v1072 = vmul.f32 %v246, %v947
      %v1073 = vmul.f32 %v247, %v953
      %v1074 = vmul.f32 %v248, %v960
      %v1075 = vmul.f32 %v249, %v966
      %v1076 = vmul.f32 %v250, %v973
      %v1077 = vmul.f32 %v251, %v979
      %v1078 = vmul.f32 %v252, %v986
      %v1079 = vmul.f32 %v253, %v992
      %v1080 = vmul.f32 %v254, %v999
      %v1081 = vmul.f32 %v255, %v1005
      %v1082 = vmul.f32 %v256, %v1012
      %v1083 = vmul.f32 %v257, %v1018
      %v1084 = vmul.f32 %v258, %v1025
      %v1085 = vmul.f32 %v259, %v1031
      %v1086 = vmul.f32 %v260, %v1038
      %v1087 = vmul.f32 %v261, %v1044
      %v1088 = vmul.f32 %v262, %v1051
      %v1089 = vmul.f32 %v263, %v1057
      %v1090 = vpack.c.bf16 %v1058, %v1058
      %v1091 = vpack.c.bf16 %v1059, %v1059
      %v1092 = vpack.c.bf16 %v1060, %v1060
      %v1093 = vpack.c.bf16 %v1061, %v1061
      %v1094 = vpack.c.bf16 %v1062, %v1062
      %v1095 = vpack.c.bf16 %v1063, %v1063
      %v1096 = vpack.c.bf16 %v1064, %v1064
      %v1097 = vpack.c.bf16 %v1065, %v1065
      %v1098 = vpack.c.bf16 %v1066, %v1066
      %v1099 = vpack.c.bf16 %v1067, %v1067
      %v1100 = vpack.c.bf16 %v1068, %v1068
      %v1101 = vpack.c.bf16 %v1069, %v1069
      %v1102 = vpack.c.bf16 %v1070, %v1070
      %v1103 = vpack.c.bf16 %v1071, %v1071
      %v1104 = vpack.c.bf16 %v1072, %v1072
      %v1105 = vpack.c.bf16 %v1073, %v1073
      %v1106 = vpack.c.bf16 %v1074, %v1074
      %v1107 = vpack.c.bf16 %v1075, %v1075
      %v1108 = vpack.c.bf16 %v1076, %v1076
      %v1109 = vpack.c.bf16 %v1077, %v1077
      %v1110 = vpack.c.bf16 %v1078, %v1078
      %v1111 = vpack.c.bf16 %v1079, %v1079
      %v1112 = vpack.c.bf16 %v1080, %v1080
      %v1113 = vpack.c.bf16 %v1081, %v1081
      %v1114 = vpack.c.bf16 %v1082, %v1082
      %v1115 = vpack.c.bf16 %v1083, %v1083
      %v1116 = vpack.c.bf16 %v1084, %v1084
      %v1117 = vpack.c.bf16 %v1085, %v1085
      %v1118 = vpack.c.bf16 %v1086, %v1086
      %v1119 = vpack.c.bf16 %v1087, %v1087
      %v1120 = vpack.c.bf16 %v1088, %v1088
      %v1121 = vpack.c.bf16 %v1089, %v1089
      %vm1122 = vcmask 27648
      %1123 = vst.msk [vmem:[%s198] sm:$0xf] %vm1122, %v1090
      %1124 = vst.msk [vmem:[%s198 + $0x4] sm:$0xf] %vm1122, %v1091
      %1125 = vst.msk [vmem:[%s198 + $0x8] sm:$0xf] %vm1122, %v1092
      %1126 = vst.msk [vmem:[%s198 + $0xc] sm:$0xf] %vm1122, %v1093
      %1127 = vst.msk [vmem:[%s198 + $0x10] sm:$0xf] %vm1122, %v1094
      %1128 = vst.msk [vmem:[%s198 + $0x14] sm:$0xf] %vm1122, %v1095
      %1129 = vst.msk [vmem:[%s198 + $0x18] sm:$0xf] %vm1122, %v1096
      %1130 = vst.msk [vmem:[%s198 + $0x1c] sm:$0xf] %vm1122, %v1097
      %1131 = vst.msk [vmem:[%s198 + $0x20] sm:$0xf] %vm1122, %v1098
      %1132 = vst.msk [vmem:[%s198 + $0x24] sm:$0xf] %vm1122, %v1099
      %1133 = vst.msk [vmem:[%s198 + $0x28] sm:$0xf] %vm1122, %v1100
      %1134 = vst.msk [vmem:[%s198 + $0x2c] sm:$0xf] %vm1122, %v1101
      %1135 = vst.msk [vmem:[%s198 + $0x30] sm:$0xf] %vm1122, %v1102
      %1136 = vst.msk [vmem:[%s198 + $0x34] sm:$0xf] %vm1122, %v1103
      %1137 = vst.msk [vmem:[%s198 + $0x38] sm:$0xf] %vm1122, %v1104
      %1138 = vst.msk [vmem:[%s198 + $0x3c] sm:$0xf] %vm1122, %v1105
      %1139 = vst.msk [vmem:[%s198 + $0x40] sm:$0xf] %vm1122, %v1106
      %1140 = vst.msk [vmem:[%s198 + $0x44] sm:$0xf] %vm1122, %v1107
      %1141 = vst.msk [vmem:[%s198 + $0x48] sm:$0xf] %vm1122, %v1108
      %1142 = vst.msk [vmem:[%s198 + $0x4c] sm:$0xf] %vm1122, %v1109
      %1143 = vst.msk [vmem:[%s198 + $0x50] sm:$0xf] %vm1122, %v1110
      %1144 = vst.msk [vmem:[%s198 + $0x54] sm:$0xf] %vm1122, %v1111
      %1145 = vst.msk [vmem:[%s198 + $0x58] sm:$0xf] %vm1122, %v1112
      %1146 = vst.msk [vmem:[%s198 + $0x5c] sm:$0xf] %vm1122, %v1113
      %1147 = vst.msk [vmem:[%s198 + $0x60] sm:$0xf] %vm1122, %v1114
      %1148 = vst.msk [vmem:[%s198 + $0x64] sm:$0xf] %vm1122, %v1115
      %1149 = vst.msk [vmem:[%s198 + $0x68] sm:$0xf] %vm1122, %v1116
      %1150 = vst.msk [vmem:[%s198 + $0x6c] sm:$0xf] %vm1122, %v1117
      %1151 = vst.msk [vmem:[%s198 + $0x70] sm:$0xf] %vm1122, %v1118
      %1152 = vst.msk [vmem:[%s198 + $0x74] sm:$0xf] %vm1122, %v1119
      %1153 = vst.msk [vmem:[%s198 + $0x78] sm:$0xf] %vm1122, %v1120
      %1154 = vst.msk [vmem:[%s198 + $0x7c] sm:$0xf] %vm1122, %v1121
      %p1155 = scmp.lt.s32.totalorder %s16, 1
      %s1156 = scalar_select %p1155, %s16, 1
      %s1157 = smul.addr %s1156, 32
      %s1158 = smul.addr %s1157, 4
      %s1159 = scalar_lea.vmem %s4, %s1158
      // Predicated region
      $region37: #{hifuse_block_forward.6} parent=35 // pred_check
        %p1160 = pneg %p123
      $region38: #{hifuse_block_forward.6} parent=35 // pred_check_branch
        %1162 = sbr.rel (%p1160) target = $region40
      $region39: #{hifuse_block_forward.6} parent=35 // pred_region
        _
      $region40: #{hifuse_block_forward.6} parent=35 // pred_fallthru
        _
    $region36: #{hifuse_block_forward.6} parent=5 // pred_fallthru
      _
    %p1163 = scmp.le.s32.totalorder 2, %s11
    // Predicated region
    $region41: #{hifuse_block_forward.6} parent=5 // pred_check
      %p1164 = pneg %p1163
    $region42: #{hifuse_block_forward.6} parent=5 // pred_check_branch
      %1166 = sbr.rel (%p1164) target = $region44
    $region43: #{hifuse_block_forward.6} parent=5 // pred_region
      %s1167 = ssub.s32 %s11, 2
      // Predicated region
      $region45: #{hifuse_block_forward.6} parent=43 // pred_check
        %p1168 = pneg %p129
      $region46: #{hifuse_block_forward.6} parent=43 // pred_check_branch
        %1170 = sbr.rel (%p1168) target = $region48
      $region47: #{hifuse_block_forward.6} parent=43 // pred_region
        %p1171 = scmp.lt.s32.totalorder %s17, 1
        %s1172 = scalar_select %p1171, %s17, 1
        %s1173 = smul.addr %s1172, 32
        %s1174 = smul.addr %s1173, 4
        %s1175 = scalar_lea.vmem %s4, %s1174
      $region48: #{hifuse_block_forward.6} parent=43 // pred_fallthru
        _
    $region44: #{hifuse_block_forward.6} parent=5 // pred_fallthru
      _
  $region6: #{hifuse_block_forward.6} parent=0 // loop_footer
    %s15 = sadd.s32 1, %s11
  $region7: #{hifuse_block_forward.6} parent=0 // loop_footer_branch
    %10 = sbr.rel target = $region3
  $region8: #{hifuse_block_forward.6} parent=0 // loop_exit
    _

// kernel: hifuse_block_forward.5
$region0: #{hifuse_block_forward.5}
  #allocation0 [shape = 'u32[]', space=smem, size = 0x4, offset = 0x4, fixed_abs, tag = 'smem constant byte address 0x4 - core index']
  #allocation1 [shape = 'u32[72,128]{1,0:T(1,128)}', space=vmem, size = 0x9000, scoped, tag = 'internal scratch']
  %s0 = inlined_call_operand.vmem [shape: bf16[512,4], index: 0, kind: input, shape index: {}]
  %s1 = inlined_call_operand.vmem [shape: bf16[512,8], index: 1, kind: input, shape index: {}]
  %s2 = inlined_call_operand.vmem [shape: bf16[512,8], index: 2, kind: input, shape index: {}]
  %s3 = inlined_call_operand.vmem [shape: bf16[4,8], index: 3, kind: input, shape index: {}]
  %s4 = inlined_call_operand.vmem [shape: f32[1,8], index: 4, kind: input, shape index: {}]
  %s5 = inlined_call_operand.vmem [shape: bf16[8,8], index: 5, kind: input, shape index: {}]
  %s6 = inlined_call_operand.vmem [shape: f32[1,8], index: 6, kind: input, shape index: {}]
  %s7 = inlined_call_operand.vmem [shape: f32[1,24], index: 7, kind: input, shape index: {}]
  %s8 = inlined_call_operand.vmem [shape: f32[1,24], index: 8, kind: input, shape index: {}]
  %s9 = inlined_call_operand.vmem [shape: bf16[24,8], index: 9, kind: input, shape index: {}]
  %s10 = inlined_call_operand.vmem [shape: f32[1,8], index: 10, kind: input, shape index: {}]
  %s11 = inlined_call_operand.vmem [shape: bf16[512,8], index: 11, kind: output, shape index: {}]
  %s12 = sld [smem:[#allocation0]]
  $region77: #{hifuse_block_forward.5} parent=0
    _
  %s14 = ssub.s32 1, %s12
  %s15 = scalar_select 0, %s14, %s12
  loop: start=0, step=1, limit=4
  $region2: #{hifuse_block_forward.5} parent=0 // loop_pre_header
    _
  $region3: #{hifuse_block_forward.5} parent=0 // loop_header
    %s17 = sphi 0, %s21
    %p18 = scmp.ge.s32.totalorder %s17, 4
    %s27 = sphi 0, %s29
    %s30 = sphi 0, %s27
    %s31 = sphi 0, %s30
    %s47 = sphi 0, %s31
    %s53 = sphi 0, %s55
    %s56 = sphi 0, %s53
    %s57 = sphi 0, %s56
    %s73 = sphi 0, %s57
    %s79 = sphi 0, %s81
    %s82 = sphi 0, %s79
    %s83 = sphi 0, %s82
    %s99 = sphi 0, %s83
    %s103 = sphi 0, %s103
    %s105 = sphi 0, %s103
    %s106 = sphi 0, %s105
    %s120 = sphi 0, %s106
    %s124 = sphi 0, %s124
    %s126 = sphi 0, %s124
    %s127 = sphi 0, %s126
    %s141 = sphi 0, %s127
    %s145 = sphi 0, %s145
    %s147 = sphi 0, %s145
    %s148 = sphi 0, %s147
    %s162 = sphi 0, %s148
    %s166 = sphi 0, %s166
    %s168 = sphi 0, %s166
    %s169 = sphi 0, %s168
    %s183 = sphi 0, %s169
    %s187 = sphi 0, %s187
    %s189 = sphi 0, %s187
    %s190 = sphi 0, %s189
    %s204 = sphi 0, %s190
    %s208 = sphi 0, %s208
    %s210 = sphi 0, %s208
    %s211 = sphi 0, %s210
    %s225 = sphi 0, %s211
    %s229 = sphi 0, %s229
    %s231 = sphi 0, %s229
    %s232 = sphi 0, %s231
    %s246 = sphi 0, %s232
    %s250 = sphi 0, %s250
    %s252 = sphi 0, %s250
    %s253 = sphi 0, %s252
    %s267 = sphi 0, %s253
    %s273 = sphi 0, %s275
    %s276 = sphi 0, %s273
    %s277 = sphi 0, %s276
    %s293 = sphi 0, %s277
  $region4: #{hifuse_block_forward.5} parent=0 // loop_header_branch
    %20 = sbr.rel (%p18) target = $region8
  $region5: #{hifuse_block_forward.5} parent=0 // loop_body
    %s22 = ssub.s32 %s17, 1
    %s23 = ssub.s32 %s17, 2
    %s24 = sadd.s32 %s17, 1
    %s25 = ssub.s32 %s17, %s24
    %p26 = scmp.eq.s32.totalorder %s25, 0
    %s28 = sadd.s32 %s27, 1
    %s29 = scalar_select %p26, %s27, %s28
    %p32 = pneg %p26
    %p33 = scmp.eq.s32.totalorder %s17, 1
    %p34 = por %p32, %p33
    %p35 = scmp.ne.s32.totalorder %s27, %s30
    %p36 = scmp.eq.s32.totalorder %s17, 0
    %p37 = por %p35, %p36
    %p38 = scmp.ne.s32.totalorder %s27, %s30
    %p39 = scmp.eq.s32.totalorder %s22, 1
    %p40 = por %p38, %p39
    %p41 = scmp.ne.s32.totalorder %s30, %s31
    %p42 = scmp.eq.s32.totalorder %s22, 0
    %p43 = por %p41, %p42
    %p44 = scmp.ne.s32.totalorder %s30, %s31
    %p45 = scmp.eq.s32.totalorder %s23, 1
    %p46 = por %p44, %p45
    %p48 = scmp.ne.s32.totalorder %s31, %s47
    %p49 = scmp.eq.s32.totalorder %s23, 0
    %p50 = por %p48, %p49
    %s51 = ssub.s32 %s17, %s24
    %p52 = scmp.eq.s32.totalorder %s51, 0
    %s54 = sadd.s32 %s53, 1
    %s55 = scalar_select %p52, %s53, %s54
    %p58 = pneg %p52
    %p59 = scmp.eq.s32.totalorder %s17, 1
    %p60 = por %p58, %p59
    %p61 = scmp.ne.s32.totalorder %s53, %s56
    %p62 = scmp.eq.s32.totalorder %s17, 0
    %p63 = por %p61, %p62
    %p64 = scmp.ne.s32.totalorder %s53, %s56
    %p65 = scmp.eq.s32.totalorder %s22, 1
    %p66 = por %p64, %p65
    %p67 = scmp.ne.s32.totalorder %s56, %s57
    %p68 = scmp.eq.s32.totalorder %s22, 0
    %p69 = por %p67, %p68
    %p70 = scmp.ne.s32.totalorder %s56, %s57
    %p71 = scmp.eq.s32.totalorder %s23, 1
    %p72 = por %p70, %p71
    %p74 = scmp.ne.s32.totalorder %s57, %s73
    %p75 = scmp.eq.s32.totalorder %s23, 0
    %p76 = por %p74, %p75
    %s77 = ssub.s32 %s17, %s24
    %p78 = scmp.eq.s32.totalorder %s77, 0
    %s80 = sadd.s32 %s79, 1
    %s81 = scalar_select %p78, %s79, %s80
    %p84 = pneg %p78
    %p85 = scmp.eq.s32.totalorder %s17, 1
    %p86 = por %p84, %p85
    %p87 = scmp.ne.s32.totalorder %s79, %s82
    %p88 = scmp.eq.s32.totalorder %s17, 0
    %p89 = por %p87, %p88
    %p90 = scmp.ne.s32.totalorder %s79, %s82
    %p91 = scmp.eq.s32.totalorder %s22, 1
    %p92 = por %p90, %p91
    %p93 = scmp.ne.s32.totalorder %s82, %s83
    %p94 = scmp.eq.s32.totalorder %s22, 0
    %p95 = por %p93, %p94
    %p96 = scmp.ne.s32.totalorder %s82, %s83
    %p97 = scmp.eq.s32.totalorder %s23, 1
    %p98 = por %p96, %p97
    %p100 = scmp.ne.s32.totalorder %s83, %s99
    %p101 = scmp.eq.s32.totalorder %s23, 0
    %p102 = por %p100, %p101
    %s104 = sadd.s32 %s103, 1
    %p107 = scmp.eq.s32.totalorder %s17, 1
    %p108 = scmp.ne.s32.totalorder %s103, %s105
    %p109 = scmp.eq.s32.totalorder %s17, 0
    %p110 = por %p108, %p109
    %p111 = scmp.ne.s32.totalorder %s103, %s105
    %p112 = scmp.eq.s32.totalorder %s22, 1
    %p113 = por %p111, %p112
    %p114 = scmp.ne.s32.totalorder %s105, %s106
    %p115 = scmp.eq.s32.totalorder %s22, 0
    %p116 = por %p114, %p115
    %p117 = scmp.ne.s32.totalorder %s105, %s106
    %p118 = scmp.eq.s32.totalorder %s23, 1
    %p119 = por %p117, %p118
    %p121 = scmp.ne.s32.totalorder %s106, %s120
    %p122 = scmp.eq.s32.totalorder %s23, 0
    %p123 = por %p121, %p122
    %s125 = sadd.s32 %s124, 1
    %p128 = scmp.eq.s32.totalorder %s17, 1
    %p129 = scmp.ne.s32.totalorder %s124, %s126
    %p130 = scmp.eq.s32.totalorder %s17, 0
    %p131 = por %p129, %p130
    %p132 = scmp.ne.s32.totalorder %s124, %s126
    %p133 = scmp.eq.s32.totalorder %s22, 1
    %p134 = por %p132, %p133
    %p135 = scmp.ne.s32.totalorder %s126, %s127
    %p136 = scmp.eq.s32.totalorder %s22, 0
    %p137 = por %p135, %p136
    %p138 = scmp.ne.s32.totalorder %s126, %s127
    %p139 = scmp.eq.s32.totalorder %s23, 1
    %p140 = por %p138, %p139
    %p142 = scmp.ne.s32.totalorder %s127, %s141
    %p143 = scmp.eq.s32.totalorder %s23, 0
    %p144 = por %p142, %p143
    %s146 = sadd.s32 %s145, 1
    %p149 = scmp.eq.s32.totalorder %s17, 1
    %p150 = scmp.ne.s32.totalorder %s145, %s147
    %p151 = scmp.eq.s32.totalorder %s17, 0
    %p152 = por %p150, %p151
    %p153 = scmp.ne.s32.totalorder %s145, %s147
    %p154 = scmp.eq.s32.totalorder %s22, 1
    %p155 = por %p153, %p154
    %p156 = scmp.ne.s32.totalorder %s147, %s148
    %p157 = scmp.eq.s32.totalorder %s22, 0
    %p158 = por %p156, %p157
    %p159 = scmp.ne.s32.totalorder %s147, %s148
    %p160 = scmp.eq.s32.totalorder %s23, 1
    %p161 = por %p159, %p160
    %p163 = scmp.ne.s32.totalorder %s148, %s162
    %p164 = scmp.eq.s32.totalorder %s23, 0
    %p165 = por %p163, %p164
    %s167 = sadd.s32 %s166, 1
    %p170 = scmp.eq.s32.totalorder %s17, 1
    %p171 = scmp.ne.s32.totalorder %s166, %s168
    %p172 = scmp.eq.s32.totalorder %s17, 0
    %p173 = por %p171, %p172
    %p174 = scmp.ne.s32.totalorder %s166, %s168
    %p175 = scmp.eq.s32.totalorder %s22, 1
    %p176 = por %p174, %p175
    %p177 = scmp.ne.s32.totalorder %s168, %s169
    %p178 = scmp.eq.s32.totalorder %s22, 0
    %p179 = por %p177, %p178
    %p180 = scmp.ne.s32.totalorder %s168, %s169
    %p181 = scmp.eq.s32.totalorder %s23, 1
    %p182 = por %p180, %p181
    %p184 = scmp.ne.s32.totalorder %s169, %s183
    %p185 = scmp.eq.s32.totalorder %s23, 0
    %p186 = por %p184, %p185
    %s188 = sadd.s32 %s187, 1
    %p191 = scmp.eq.s32.totalorder %s17, 1
    %p192 = scmp.ne.s32.totalorder %s187, %s189
    %p193 = scmp.eq.s32.totalorder %s17, 0
    %p194 = por %p192, %p193
    %p195 = scmp.ne.s32.totalorder %s187, %s189
    %p196 = scmp.eq.s32.totalorder %s22, 1
    %p197 = por %p195, %p196
    %p198 = scmp.ne.s32.totalorder %s189, %s190
    %p199 = scmp.eq.s32.totalorder %s22, 0
    %p200 = por %p198, %p199
    %p201 = scmp.ne.s32.totalorder %s189, %s190
    %p202 = scmp.eq.s32.totalorder %s23, 1
    %p203 = por %p201, %p202
    %p205 = scmp.ne.s32.totalorder %s190, %s204
    %p206 = scmp.eq.s32.totalorder %s23, 0
    %p207 = por %p205, %p206
    %s209 = sadd.s32 %s208, 1
    %p212 = scmp.eq.s32.totalorder %s17, 1
    %p213 = scmp.ne.s32.totalorder %s208, %s210
    %p214 = scmp.eq.s32.totalorder %s17, 0
    %p215 = por %p213, %p214
    %p216 = scmp.ne.s32.totalorder %s208, %s210
    %p217 = scmp.eq.s32.totalorder %s22, 1
    %p218 = por %p216, %p217
    %p219 = scmp.ne.s32.totalorder %s210, %s211
    %p220 = scmp.eq.s32.totalorder %s22, 0
    %p221 = por %p219, %p220
    %p222 = scmp.ne.s32.totalorder %s210, %s211
    %p223 = scmp.eq.s32.totalorder %s23, 1
    %p224 = por %p222, %p223
    %p226 = scmp.ne.s32.totalorder %s211, %s225
    %p227 = scmp.eq.s32.totalorder %s23, 0
    %p228 = por %p226, %p227
    %s230 = sadd.s32 %s229, 1
    %p233 = scmp.eq.s32.totalorder %s17, 1
    %p234 = scmp.ne.s32.totalorder %s229, %s231
    %p235 = scmp.eq.s32.totalorder %s17, 0
    %p236 = por %p234, %p235
    %p237 = scmp.ne.s32.totalorder %s229, %s231
    %p238 = scmp.eq.s32.totalorder %s22, 1
    %p239 = por %p237, %p238
    %p240 = scmp.ne.s32.totalorder %s231, %s232
    %p241 = scmp.eq.s32.totalorder %s22, 0
    %p242 = por %p240, %p241
    %p243 = scmp.ne.s32.totalorder %s231, %s232
    %p244 = scmp.eq.s32.totalorder %s23, 1
    %p245 = por %p243, %p244
    %p247 = scmp.ne.s32.totalorder %s232, %s246
    %p248 = scmp.eq.s32.totalorder %s23, 0
    %p249 = por %p247, %p248
    %s251 = sadd.s32 %s250, 1
    %p254 = scmp.eq.s32.totalorder %s17, 1
    %p255 = scmp.ne.s32.totalorder %s250, %s252
    %p256 = scmp.eq.s32.totalorder %s17, 0
    %p257 = por %p255, %p256
    %p258 = scmp.ne.s32.totalorder %s250, %s252
    %p259 = scmp.eq.s32.totalorder %s22, 1
    %p260 = por %p258, %p259
    %p261 = scmp.ne.s32.totalorder %s252, %s253
    %p262 = scmp.eq.s32.totalorder %s22, 0
    %p263 = por %p261, %p262
    %p264 = scmp.ne.s32.totalorder %s252, %s253
    %p265 = scmp.eq.s32.totalorder %s23, 1
    %p266 = por %p264, %p265
    %p268 = scmp.ne.s32.totalorder %s253, %s267
    %p269 = scmp.eq.s32.totalorder %s23, 0
    %p270 = por %p268, %p269
    %s271 = ssub.s32 %s17, %s24
    %p272 = scmp.eq.s32.totalorder %s271, 0
    %s274 = sadd.s32 %s273, 1
    %s275 = scalar_select %p272, %s273, %s274
    %p278 = pneg %p272
    %p279 = scmp.eq.s32.totalorder %s17, 1
    %p280 = por %p278, %p279
    %p281 = scmp.ne.s32.totalorder %s273, %s276
    %p282 = scmp.eq.s32.totalorder %s17, 0
    %p283 = por %p281, %p282
    %p284 = scmp.ne.s32.totalorder %s273, %s276
    %p285 = scmp.eq.s32.totalorder %s22, 1
    %p286 = por %p284, %p285
    %p287 = scmp.ne.s32.totalorder %s276, %s277
    %p288 = scmp.eq.s32.totalorder %s22, 0
    %p289 = por %p287, %p288
    %p290 = scmp.ne.s32.totalorder %s276, %s277
    %p291 = scmp.eq.s32.totalorder %s23, 1
    %p292 = por %p290, %p291
    %p294 = scmp.ne.s32.totalorder %s277, %s293
    %p295 = scmp.eq.s32.totalorder %s23, 0
    %p296 = por %p294, %p295
    %p297 = scmp.le.s32.totalorder 1, %s17
    %p298 = scmp.lt.s32.totalorder %s17, 3
    %p299 = pnand %p297, %p298
    %p300 = pneg %p299
    // Predicated region
    $region9: #{hifuse_block_forward.5} parent=5 // pred_check
      _
    $region10: #{hifuse_block_forward.5} parent=5 // pred_check_branch
      %302 = sbr.rel (%p299) target = $region12
    $region11: #{hifuse_block_forward.5} parent=5 // pred_region
      %s303 = ssub.s32 %s17, 1
      // Predicated region
      $region13: #{hifuse_block_forward.5} parent=11 // pred_check
        %p304 = pneg %p116
      $region14: #{hifuse_block_forward.5} parent=11 // pred_check_branch
        %306 = sbr.rel (%p304) target = $region16
      $region15: #{hifuse_block_forward.5} parent=11 // pred_region
        _
      $region16: #{hifuse_block_forward.5} parent=11 // pred_fallthru
        _
      // Predicated region
      $region17: #{hifuse_block_forward.5} parent=11 // pred_check
        %p307 = pneg %p137
      $region18: #{hifuse_block_forward.5} parent=11 // pred_check_branch
        %309 = sbr.rel (%p307) target = $region20
      $region19: #{hifuse_block_forward.5} parent=11 // pred_region
        _
      $region20: #{hifuse_block_forward.5} parent=11 // pred_fallthru
        _
      // Predicated region
      $region21: #{hifuse_block_forward.5} parent=11 // pred_check
        %p310 = pneg %p158
      $region22: #{hifuse_block_forward.5} parent=11 // pred_check_branch
        %312 = sbr.rel (%p310) target = $region24
      $region23: #{hifuse_block_forward.5} parent=11 // pred_region
        _
      $region24: #{hifuse_block_forward.5} parent=11 // pred_fallthru
        _
      // Predicated region
      $region25: #{hifuse_block_forward.5} parent=11 // pred_check
        %p313 = pneg %p179
      $region26: #{hifuse_block_forward.5} parent=11 // pred_check_branch
        %315 = sbr.rel (%p313) target = $region28
      $region27: #{hifuse_block_forward.5} parent=11 // pred_region
        _
      $region28: #{hifuse_block_forward.5} parent=11 // pred_fallthru
        _
      // Predicated region
      $region29: #{hifuse_block_forward.5} parent=11 // pred_check
        %p316 = pneg %p200
      $region30: #{hifuse_block_forward.5} parent=11 // pred_check_branch
        %318 = sbr.rel (%p316) target = $region32
      $region31: #{hifuse_block_forward.5} parent=11 // pred_region
        _
      $region32: #{hifuse_block_forward.5} parent=11 // pred_fallthru
        _
      // Predicated region
      $region33: #{hifuse_block_forward.5} parent=11 // pred_check
        %p319 = pneg %p221
      $region34: #{hifuse_block_forward.5} parent=11 // pred_check_branch
        %321 = sbr.rel (%p319) target = $region36
      $region35: #{hifuse_block_forward.5} parent=11 // pred_region
        _
      $region36: #{hifuse_block_forward.5} parent=11 // pred_fallthru
        _
      // Predicated region
      $region37: #{hifuse_block_forward.5} parent=11 // pred_check
        %p322 = pneg %p242
      $region38: #{hifuse_block_forward.5} parent=11 // pred_check_branch
        %324 = sbr.rel (%p322) target = $region40
      $region39: #{hifuse_block_forward.5} parent=11 // pred_region
        _
      $region40: #{hifuse_block_forward.5} parent=11 // pred_fallthru
        _
      // Predicated region
      $region41: #{hifuse_block_forward.5} parent=11 // pred_check
        %p325 = pneg %p263
      $region42: #{hifuse_block_forward.5} parent=11 // pred_check_branch
        %327 = sbr.rel (%p325) target = $region44
      $region43: #{hifuse_block_forward.5} parent=11 // pred_region
        _
      $region44: #{hifuse_block_forward.5} parent=11 // pred_fallthru
        _
    $region12: #{hifuse_block_forward.5} parent=5 // pred_fallthru
      _
    %p328 = scmp.lt.s32.totalorder %s17, 2
    // Predicated region
    $region45: #{hifuse_block_forward.5} parent=5 // pred_check
      %p329 = pneg %p328
    $region46: #{hifuse_block_forward.5} parent=5 // pred_check_branch
      %331 = sbr.rel (%p329) target = $region48
    $region47: #{hifuse_block_forward.5} parent=5 // pred_region
      // Predicated region
      $region49: #{hifuse_block_forward.5} parent=47 // pred_check
        %p332 = pneg %p37
      $region50: #{hifuse_block_forward.5} parent=47 // pred_check_branch
        %334 = sbr.rel (%p332) target = $region52
      $region51: #{hifuse_block_forward.5} parent=47 // pred_region
        %s335 = smul.u32 32, %s17
        %p336 = scmp.lt.s32.totalorder %s335, 63
        %s337 = scalar_select %p336, %s335, 63
        %s338 = smul.addr %s337, 4
        %s339 = scalar_lea.vmem %s0, %s338
        %s340 = smul.u32 32, %s17
      $region52: #{hifuse_block_forward.5} parent=47 // pred_fallthru
        _
      // Predicated region
      $region53: #{hifuse_block_forward.5} parent=47 // pred_check
        %p341 = pneg %p63
      $region54: #{hifuse_block_forward.5} parent=47 // pred_check_branch
        %343 = sbr.rel (%p341) target = $region56
      $region55: #{hifuse_block_forward.5} parent=47 // pred_region
        %s344 = smul.u32 32, %s17
        %p345 = scmp.lt.s32.totalorder %s344, 63
        %s346 = scalar_select %p345, %s344, 63
        %s347 = smul.addr %s346, 4
        %s348 = scalar_lea.vmem %s1, %s347
        %s349 = smul.u32 32, %s17
      $region56: #{hifuse_block_forward.5} parent=47 // pred_fallthru
        _
      // Predicated region
      $region57: #{hifuse_block_forward.5} parent=47 // pred_check
        %p350 = pneg %p89
      $region58: #{hifuse_block_forward.5} parent=47 // pred_check_branch
        %352 = sbr.rel (%p350) target = $region60
      $region59: #{hifuse_block_forward.5} parent=47 // pred_region
        %s353 = smul.u32 32, %s17
        %p354 = scmp.lt.s32.totalorder %s353, 63
        %s355 = scalar_select %p354, %s353, 63
        %s356 = smul.addr %s355, 4
        %s357 = scalar_lea.vmem %s2, %s356
        %s358 = smul.u32 32, %s17
      $region60: #{hifuse_block_forward.5} parent=47 // pred_fallthru
        _
    $region48: #{hifuse_block_forward.5} parent=5 // pred_fallthru
      _
    %p359 = scmp.le.s32.totalorder 1, %s17
    %p360 = scmp.lt.s32.totalorder %s17, 3
    %p361 = pnand %p359, %p360
    %p362 = pneg %p361
    // Predicated region
    $region61: #{hifuse_block_forward.5} parent=5 // pred_check
      _
    $region62: #{hifuse_block_forward.5} parent=5 // pred_check_branch
      %364 = sbr.rel (%p361) target = $region64
    $region63: #{hifuse_block_forward.5} parent=5 // pred_region
      %s365 = ssub.s32 %s17, 1
      %s366 = smul.u32 32, %s22
      %p367 = scmp.lt.s32.totalorder %s366, 63
      %s368 = scalar_select %p367, %s366, 63
      %s369 = smul.addr %s368, 4
      %s370 = scalar_lea.vmem %s0, %s369
      %p371 = pneg %p43
      %p372 = pneg %p40
      %s373 = smul.u32 32, %s22
      %p374 = scmp.lt.s32.totalorder %s373, 63
      %s375 = scalar_select %p374, %s373, 63
      %s376 = smul.addr %s375, 4
      %s377 = scalar_lea.vmem %s1, %s376
      %p378 = pneg %p69
      %p379 = pneg %p66
      %s380 = smul.u32 32, %s22
      %p381 = scmp.lt.s32.totalorder %s380, 63
      %s382 = scalar_select %p381, %s380, 63
      %s383 = smul.addr %s382, 4
      %s384 = scalar_lea.vmem %s2, %s383
      %p385 = pneg %p95
      %p386 = pneg %p92
      %p387 = pneg %p116
      %p388 = pneg %p113
      %p389 = pneg %p137
      %p390 = pneg %p134
      %p391 = pneg %p158
      %p392 = pneg %p155
      %p393 = pneg %p179
      %p394 = pneg %p176
      %p395 = pneg %p200
      %p396 = pneg %p197
      %p397 = pneg %p221
      %p398 = pneg %p218
      %p399 = pneg %p242
      %p400 = pneg %p239
      %p401 = pneg %p263
      %p402 = pneg %p260
      %p403 = pneg %p289
      %p404 = pneg %p286
      %s405 = smul.u32 32, %s22
      %p406 = scmp.lt.s32.totalorder %s405, 63
      %s407 = scalar_select %p406, %s405, 63
      %s408 = smul.addr %s407, 4
      %s409 = scalar_lea.vmem %s11, %s408
      %s410 = smul.u32 32, %s22
      %p411 = scmp.lt.s32.totalorder %s410, 63
      %s412 = scalar_select %p411, %s410, 63
      %s413 = smul.addr %s412, 4
      %s414 = scalar_lea.vmem %s0, %s413
      %s415 = smul.u32 32, %s22
      %s416 = smul.u32 32, %s22
      %p417 = scmp.lt.s32.totalorder %s416, 63
      %s418 = scalar_select %p417, %s416, 63
      %s419 = smul.addr %s418, 4
      %s420 = scalar_lea.vmem %s1, %s419
      %s421 = smul.u32 32, %s22
      %s422 = smul.u32 32, %s22
      %p423 = scmp.lt.s32.totalorder %s422, 63
      %s424 = scalar_select %p423, %s422, 63
      %s425 = smul.addr %s424, 4
      %s426 = scalar_lea.vmem %s2, %s425
      %s427 = smul.u32 32, %s22
      %s428 = smul.u32 32, %s22
      %p429 = scmp.lt.s32.totalorder %s428, 63
      %s430 = scalar_select %p429, %s428, 63
      %s431 = smul.addr %s430, 4
      %s432 = scalar_lea.vmem %s11, %s431
      %s433 = smul.u32 32, %s22
      %v435 = vld [vmem:[%s426] sm:$0xf]
      %v436 = vld [vmem:[%s426 + $0x4] sm:$0xf]
      %v437 = vld [vmem:[%s426 + $0x8] sm:$0xf]
      %v438 = vld [vmem:[%s426 + $0xc] sm:$0xf]
      %v439 = vld [vmem:[%s426 + $0x10] sm:$0xf]
      %v440 = vld [vmem:[%s426 + $0x14] sm:$0xf]
      %v441 = vld [vmem:[%s426 + $0x18] sm:$0xf]
      %v442 = vld [vmem:[%s426 + $0x1c] sm:$0xf]
      %v443 = vld [vmem:[%s426 + $0x20] sm:$0xf]
      %v444 = vld [vmem:[%s426 + $0x24] sm:$0xf]
      %v445 = vld [vmem:[%s426 + $0x28] sm:$0xf]
      %v446 = vld [vmem:[%s426 + $0x2c] sm:$0xf]
      %v447 = vld [vmem:[%s426 + $0x30] sm:$0xf]
      %v448 = vld [vmem:[%s426 + $0x34] sm:$0xf]
      %v449 = vld [vmem:[%s426 + $0x38] sm:$0xf]
      %v450 = vld [vmem:[%s426 + $0x3c] sm:$0xf]
      %v451 = vld [vmem:[%s426 + $0x40] sm:$0xf]
      %v452 = vld [vmem:[%s426 + $0x44] sm:$0xf]
      %v453 = vld [vmem:[%s426 + $0x48] sm:$0xf]
      %v454 = vld [vmem:[%s426 + $0x4c] sm:$0xf]
      %v455 = vld [vmem:[%s426 + $0x50] sm:$0xf]
      %v456 = vld [vmem:[%s426 + $0x54] sm:$0xf]
      %v457 = vld [vmem:[%s426 + $0x58] sm:$0xf]
      %v458 = vld [vmem:[%s426 + $0x5c] sm:$0xf]
      %v459 = vld [vmem:[%s426 + $0x60] sm:$0xf]
      %v460 = vld [vmem:[%s426 + $0x64] sm:$0xf]
      %v461 = vld [vmem:[%s426 + $0x68] sm:$0xf]
      %v462 = vld [vmem:[%s426 + $0x6c] sm:$0xf]
      %v463 = vld [vmem:[%s426 + $0x70] sm:$0xf]
      %v464 = vld [vmem:[%s426 + $0x74] sm:$0xf]
      %v465 = vld [vmem:[%s426 + $0x78] sm:$0xf]
      %v466 = vld [vmem:[%s426 + $0x7c] sm:$0xf]
      %v467 = vunpack.c.l.bf16 %v435
      %v468 = vunpack.c.l.bf16 %v436
      %v469 = vunpack.c.l.bf16 %v437
      %v470 = vunpack.c.l.bf16 %v438
      %v471 = vunpack.c.l.bf16 %v439
      %v472 = vunpack.c.l.bf16 %v440
      %v473 = vunpack.c.l.bf16 %v441
      %v474 = vunpack.c.l.bf16 %v442
      %v475 = vunpack.c.l.bf16 %v443
      %v476 = vunpack.c.l.bf16 %v444
      %v477 = vunpack.c.l.bf16 %v445
      %v478 = vunpack.c.l.bf16 %v446
      %v479 = vunpack.c.l.bf16 %v447
      %v480 = vunpack.c.l.bf16 %v448
      %v481 = vunpack.c.l.bf16 %v449
      %v482 = vunpack.c.l.bf16 %v450
      %v483 = vunpack.c.l.bf16 %v451
      %v484 = vunpack.c.l.bf16 %v452
      %v485 = vunpack.c.l.bf16 %v453
      %v486 = vunpack.c.l.bf16 %v454
      %v487 = vunpack.c.l.bf16 %v455
      %v488 = vunpack.c.l.bf16 %v456
      %v489 = vunpack.c.l.bf16 %v457
      %v490 = vunpack.c.l.bf16 %v458
      %v491 = vunpack.c.l.bf16 %v459
      %v492 = vunpack.c.l.bf16 %v460
      %v493 = vunpack.c.l.bf16 %v461
      %v494 = vunpack.c.l.bf16 %v462
      %v495 = vunpack.c.l.bf16 %v463
      %v496 = vunpack.c.l.bf16 %v464
      %v497 = vunpack.c.l.bf16 %v465
      %v498 = vunpack.c.l.bf16 %v466
      %v499 = vld [vmem:[%s414] sm:$0xf]
      %v500 = vld [vmem:[%s414 + $0x4] sm:$0xf]
      %v501 = vld [vmem:[%s414 + $0x8] sm:$0xf]
      %v502 = vld [vmem:[%s414 + $0xc] sm:$0xf]
      %v503 = vld [vmem:[%s414 + $0x10] sm:$0xf]
      %v504 = vld [vmem:[%s414 + $0x14] sm:$0xf]
      %v505 = vld [vmem:[%s414 + $0x18] sm:$0xf]
      %v506 = vld [vmem:[%s414 + $0x1c] sm:$0xf]
      %v507 = vld [vmem:[%s414 + $0x20] sm:$0xf]
      %v508 = vld [vmem:[%s414 + $0x24] sm:$0xf]
      %v509 = vld [vmem:[%s414 + $0x28] sm:$0xf]
      %v510 = vld [vmem:[%s414 + $0x2c] sm:$0xf]
      %v511 = vld [vmem:[%s414 + $0x30] sm:$0xf]
      %v512 = vld [vmem:[%s414 + $0x34] sm:$0xf]
      %v513 = vld [vmem:[%s414 + $0x38] sm:$0xf]
      %v514 = vld [vmem:[%s414 + $0x3c] sm:$0xf]
      %v515 = vld [vmem:[%s414 + $0x40] sm:$0xf]
      %v516 = vld [vmem:[%s414 + $0x44] sm:$0xf]
      %v517 = vld [vmem:[%s414 + $0x48] sm:$0xf]
      %v518 = vld [vmem:[%s414 + $0x4c] sm:$0xf]
      %v519 = vld [vmem:[%s414 + $0x50] sm:$0xf]
      %v520 = vld [vmem:[%s414 + $0x54] sm:$0xf]
      %v521 = vld [vmem:[%s414 + $0x58] sm:$0xf]
      %v522 = vld [vmem:[%s414 + $0x5c] sm:$0xf]
      %v523 = vld [vmem:[%s414 + $0x60] sm:$0xf]
      %v524 = vld [vmem:[%s414 + $0x64] sm:$0xf]
      %v525 = vld [vmem:[%s414 + $0x68] sm:$0xf]
      %v526 = vld [vmem:[%s414 + $0x6c] sm:$0xf]
      %v527 = vld [vmem:[%s414 + $0x70] sm:$0xf]
      %v528 = vld [vmem:[%s414 + $0x74] sm:$0xf]
      %v529 = vld [vmem:[%s414 + $0x78] sm:$0xf]
      %v530 = vld [vmem:[%s414 + $0x7c] sm:$0xf]
      %v531 = vld [vmem:[%s3] sm:$0x3]
      %v532 = vld [vmem:[%s4] sm:$0x1]
      %v534 = vperm.slane %v532, 0
      %v568 = vunpack.c.l.b16 %v499
      %v569 = vunpack.c.l.b16 %v500
      %v570 = vunpack.c.l.b16 %v501
      %v571 = vunpack.c.l.b16 %v502
      %v572 = vunpack.c.l.b16 %v503
      %v573 = vunpack.c.l.b16 %v504
      %v574 = vunpack.c.l.b16 %v505
      %v575 = vunpack.c.l.b16 %v506
      %v576 = vunpack.c.l.b16 %v507
      %v577 = vunpack.c.l.b16 %v508
      %v578 = vunpack.c.l.b16 %v509
      %v579 = vunpack.c.l.b16 %v510
      %v580 = vunpack.c.l.b16 %v511
      %v581 = vunpack.c.l.b16 %v512
      %v582 = vunpack.c.l.b16 %v513
      %v583 = vunpack.c.l.b16 %v514
      %v584 = vunpack.c.l.b16 %v515
      %v585 = vunpack.c.l.b16 %v516
      %v586 = vunpack.c.l.b16 %v517
      %v587 = vunpack.c.l.b16 %v518
      %v588 = vunpack.c.l.b16 %v519
      %v589 = vunpack.c.l.b16 %v520
      %v590 = vunpack.c.l.b16 %v521
      %v591 = vunpack.c.l.b16 %v522
      %v592 = vunpack.c.l.b16 %v523
      %v593 = vunpack.c.l.b16 %v524
      %v594 = vunpack.c.l.b16 %v525
      %v595 = vunpack.c.l.b16 %v526
      %v596 = vunpack.c.l.b16 %v527
      %v597 = vunpack.c.l.b16 %v528
      %v598 = vunpack.c.l.b16 %v529
      %v599 = vunpack.c.l.b16 %v530
      %v600 = vpack.c.b16 %v569, %v568
      %v601 = vpack.c.b16 %v571, %v570
      %v602 = vpack.c.b16 %v573, %v572
      %v603 = vpack.c.b16 %v575, %v574
      %v604 = vpack.c.b16 %v577, %v576
      %v605 = vpack.c.b16 %v579, %v578
      %v606 = vpack.c.b16 %v581, %v580
      %v607 = vpack.c.b16 %v583, %v582
      %v608 = vpack.c.b16 %v585, %v584
      %v609 = vpack.c.b16 %v587, %v586
      %v610 = vpack.c.b16 %v589, %v588
      %v611 = vpack.c.b16 %v591, %v590
      %v612 = vpack.c.b16 %v593, %v592
      %v613 = vpack.c.b16 %v595, %v594
      %v614 = vpack.c.b16 %v597, %v596
      %v615 = vpack.c.b16 %v599, %v598
      %vm616 = vcmask 31744
      %v618 = vsel %vm616, %v600, 0
      %v621 = vsel %vm616, %v601, 0
      %v624 = vsel %vm616, %v602, 0
      %v627 = vsel %vm616, %v603, 0
      %v630 = vsel %vm616, %v604, 0
      %v633 = vsel %vm616, %v605, 0
      %v636 = vsel %vm616, %v606, 0
      %v639 = vsel %vm616, %v607, 0
      %v642 = vsel %vm616, %v608, 0
      %v645 = vsel %vm616, %v609, 0
      %v648 = vsel %vm616, %v610, 0
      %v651 = vsel %vm616, %v611, 0
      %v654 = vsel %vm616, %v612, 0
      %v657 = vsel %vm616, %v613, 0
      %v660 = vsel %vm616, %v614, 0
      %v663 = vsel %vm616, %v615, 0
      %vm665 = vcmask 1041408
      %v667 = vsel %vm665, %v531, 0
      %669 = vmatpush.bf16.msra.mxu0 0
      %670 = vmatpush.bf16.msra.mxu0 0
      %671 = vmatpush.bf16.msra.mxu0 0
      %672 = vmatpush.bf16.msra.mxu0 0
      %673 = vmatpush.bf16.msra.mxu0 0
      %674 = vmatpush.bf16.msra.mxu0 0
      %675 = vmatpush.bf16.msra.mxu0 0
      %676 = vmatpush.bf16.msra.mxu0 %v667
      %677 = vmatmul.bf16.gmra.mxu0 %v618
      %v678 = vpop.f32.mrf.mxu0
      %v679 = vadd.f32 %v534, %v678
      %v680 = vpop.f32.mrf.mxu0
      %v681 = vadd.f32 %v534, %v680
      %682 = vmatmul.bf16.gmra.mxu0 %v621
      %v683 = vpop.f32.mrf.mxu0
      %v684 = vadd.f32 %v534, %v683
      %v685 = vpop.f32.mrf.mxu0
      %v686 = vadd.f32 %v534, %v685
      %687 = vmatmul.bf16.gmra.mxu0 %v624
      %v688 = vpop.f32.mrf.mxu0
      %v689 = vadd.f32 %v534, %v688
      %v690 = vpop.f32.mrf.mxu0
      %v691 = vadd.f32 %v534, %v690
      %692 = vmatmul.bf16.gmra.mxu0 %v627
      %v693 = vpop.f32.mrf.mxu0
      %v694 = vadd.f32 %v534, %v693
      %v695 = vpop.f32.mrf.mxu0
      %v696 = vadd.f32 %v534, %v695
      %697 = vmatmul.bf16.gmra.mxu0 %v630
      %v698 = vpop.f32.mrf.mxu0
      %v699 = vadd.f32 %v534, %v698
      %v700 = vpop.f32.mrf.mxu0
      %v701 = vadd.f32 %v534, %v700
      %702 = vmatmul.bf16.gmra.mxu0 %v633
      %v703 = vpop.f32.mrf.mxu0
      %v704 = vadd.f32 %v534, %v703
      %v705 = vpop.f32.mrf.mxu0
      %v706 = vadd.f32 %v534, %v705
      %707 = vmatmul.bf16.gmra.mxu0 %v636
      %v708 = vpop.f32.mrf.mxu0
      %v709 = vadd.f32 %v534, %v708
      %v710 = vpop.f32.mrf.mxu0
      %v711 = vadd.f32 %v534, %v710
      %712 = vmatmul.bf16.gmra.mxu0 %v639
      %v713 = vpop.f32.mrf.mxu0
      %v714 = vadd.f32 %v534, %v713
      %v715 = vpop.f32.mrf.mxu0
      %v716 = vadd.f32 %v534, %v715
      %717 = vmatmul.bf16.gmra.mxu0 %v642
      %v718 = vpop.f32.mrf.mxu0
      %v719 = vadd.f32 %v534, %v718
      %v720 = vpop.f32.mrf.mxu0
      %v721 = vadd.f32 %v534, %v720
      %722 = vmatmul.bf16.gmra.mxu0 %v645
      %v723 = vpop.f32.mrf.mxu0
      %v724 = vadd.f32 %v534, %v723
      %v725 = vpop.f32.mrf.mxu0
      %v726 = vadd.f32 %v534, %v725
      %727 = vmatmul.bf16.gmra.mxu0 %v648
      %v728 = vpop.f32.mrf.mxu0
      %v729 = vadd.f32 %v534, %v728
      %v730 = vpop.f32.mrf.mxu0
      %v731 = vadd.f32 %v534, %v730
      %732 = vmatmul.bf16.gmra.mxu0 %v651
      %v733 = vpop.f32.mrf.mxu0
      %v734 = vadd.f32 %v534, %v733
      %v735 = vpop.f32.mrf.mxu0
      %v736 = vadd.f32 %v534, %v735
      %737 = vmatmul.bf16.gmra.mxu0 %v654
      %v738 = vpop.f32.mrf.mxu0
      %v739 = vadd.f32 %v534, %v738
      %v740 = vpop.f32.mrf.mxu0
      %v741 = vadd.f32 %v534, %v740
      %742 = vmatmul.bf16.gmra.mxu0 %v657
      %v743 = vpop.f32.mrf.mxu0
      %v744 = vadd.f32 %v534, %v743
      %v745 = vpop.f32.mrf.mxu0
      %v746 = vadd.f32 %v534, %v745
      %747 = vmatmul.bf16.gmra.mxu0 %v660
      %v748 = vpop.f32.mrf.mxu0
      %v749 = vadd.f32 %v534, %v748
      %v750 = vpop.f32.mrf.mxu0
      %v751 = vadd.f32 %v534, %v750
      %752 = vmatmul.bf16.gmra.mxu0 %v663
      %v753 = vpop.f32.mrf.mxu0
      %v754 = vadd.f32 %v534, %v753
      %v755 = vpop.f32.mrf.mxu0
      %v756 = vadd.f32 %v534, %v755
      %757 = vdwg.mxu0
      %v758 = vld [vmem:[%s420] sm:$0xf]
      %v759 = vld [vmem:[%s420 + $0x4] sm:$0xf]
      %v760 = vld [vmem:[%s420 + $0x8] sm:$0xf]
      %v761 = vld [vmem:[%s420 + $0xc] sm:$0xf]
      %v762 = vld [vmem:[%s420 + $0x10] sm:$0xf]
      %v763 = vld [vmem:[%s420 + $0x14] sm:$0xf]
      %v764 = vld [vmem:[%s420 + $0x18] sm:$0xf]
      %v765 = vld [vmem:[%s420 + $0x1c] sm:$0xf]
      %v766 = vld [vmem:[%s420 + $0x20] sm:$0xf]
      %v767 = vld [vmem:[%s420 + $0x24] sm:$0xf]
      %v768 = vld [vmem:[%s420 + $0x28] sm:$0xf]
      %v769 = vld [vmem:[%s420 + $0x2c] sm:$0xf]
      %v770 = vld [vmem:[%s420 + $0x30] sm:$0xf]
      %v771 = vld [vmem:[%s420 + $0x34] sm:$0xf]
      %v772 = vld [vmem:[%s420 + $0x38] sm:$0xf]
      %v773 = vld [vmem:[%s420 + $0x3c] sm:$0xf]
      %v774 = vld [vmem:[%s420 + $0x40] sm:$0xf]
      %v775 = vld [vmem:[%s420 + $0x44] sm:$0xf]
      %v776 = vld [vmem:[%s420 + $0x48] sm:$0xf]
      %v777 = vld [vmem:[%s420 + $0x4c] sm:$0xf]
      %v778 = vld [vmem:[%s420 + $0x50] sm:$0xf]
      %v779 = vld [vmem:[%s420 + $0x54] sm:$0xf]
      %v780 = vld [vmem:[%s420 + $0x58] sm:$0xf]
      %v781 = vld [vmem:[%s420 + $0x5c] sm:$0xf]
      %v782 = vld [vmem:[%s420 + $0x60] sm:$0xf]
      %v783 = vld [vmem:[%s420 + $0x64] sm:$0xf]
      %v784 = vld [vmem:[%s420 + $0x68] sm:$0xf]
      %v785 = vld [vmem:[%s420 + $0x6c] sm:$0xf]
      %v786 = vld [vmem:[%s420 + $0x70] sm:$0xf]
      %v787 = vld [vmem:[%s420 + $0x74] sm:$0xf]
      %v788 = vld [vmem:[%s420 + $0x78] sm:$0xf]
      %v789 = vld [vmem:[%s420 + $0x7c] sm:$0xf]
      %v790 = vld [vmem:[%s5] sm:$0xf]
      %v791 = vld [vmem:[%s6] sm:$0x1]
      %v793 = vperm.slane %v791, 0
      %v827 = vunpack.c.l.b16 %v758
      %v828 = vunpack.c.l.b16 %v759
      %v829 = vunpack.c.l.b16 %v760
      %v830 = vunpack.c.l.b16 %v761
      %v831 = vunpack.c.l.b16 %v762
      %v832 = vunpack.c.l.b16 %v763
      %v833 = vunpack.c.l.b16 %v764
      %v834 = vunpack.c.l.b16 %v765
      %v835 = vunpack.c.l.b16 %v766
      %v836 = vunpack.c.l.b16 %v767
      %v837 = vunpack.c.l.b16 %v768
      %v838 = vunpack.c.l.b16 %v769
      %v839 = vunpack.c.l.b16 %v770
      %v840 = vunpack.c.l.b16 %v771
      %v841 = vunpack.c.l.b16 %v772
      %v842 = vunpack.c.l.b16 %v773
      %v843 = vunpack.c.l.b16 %v774
      %v844 = vunpack.c.l.b16 %v775
      %v845 = vunpack.c.l.b16 %v776
      %v846 = vunpack.c.l.b16 %v777
      %v847 = vunpack.c.l.b16 %v778
      %v848 = vunpack.c.l.b16 %v779
      %v849 = vunpack.c.l.b16 %v780
      %v850 = vunpack.c.l.b16 %v781
      %v851 = vunpack.c.l.b16 %v782
      %v852 = vunpack.c.l.b16 %v783
      %v853 = vunpack.c.l.b16 %v784
      %v854 = vunpack.c.l.b16 %v785
      %v855 = vunpack.c.l.b16 %v786
      %v856 = vunpack.c.l.b16 %v787
      %v857 = vunpack.c.l.b16 %v788
      %v858 = vunpack.c.l.b16 %v789
      %v859 = vpack.c.b16 %v828, %v827
      %v860 = vpack.c.b16 %v830, %v829
      %v861 = vpack.c.b16 %v832, %v831
      %v862 = vpack.c.b16 %v834, %v833
      %v863 = vpack.c.b16 %v836, %v835
      %v864 = vpack.c.b16 %v838, %v837
      %v865 = vpack.c.b16 %v840, %v839
      %v866 = vpack.c.b16 %v842, %v841
      %v867 = vpack.c.b16 %v844, %v843
      %v868 = vpack.c.b16 %v846, %v845
      %v869 = vpack.c.b16 %v848, %v847
      %v870 = vpack.c.b16 %v850, %v849
      %v871 = vpack.c.b16 %v852, %v851
      %v872 = vpack.c.b16 %v854, %v853
      %v873 = vpack.c.b16 %v856, %v855
      %v874 = vpack.c.b16 %v858, %v857
      %vm875 = vcmask 64512
      %v877 = vsel %vm875, %v859, 0
      %v880 = vsel %vm875, %v860, 0
      %v883 = vsel %vm875, %v861, 0
      %v886 = vsel %vm875, %v862, 0
      %v889 = vsel %vm875, %v863, 0
      %v892 = vsel %vm875, %v864, 0
      %v895 = vsel %vm875, %v865, 0
      %v898 = vsel %vm875, %v866, 0
      %v901 = vsel %vm875, %v867, 0
      %v904 = vsel %vm875, %v868, 0
      %v907 = vsel %vm875, %v869, 0
      %v910 = vsel %vm875, %v870, 0
      %v913 = vsel %vm875, %v871, 0
      %v916 = vsel %vm875, %v872, 0
      %v919 = vsel %vm875, %v873, 0
      %v922 = vsel %vm875, %v874, 0
      %vm924 = vcmask 1043456
      %v926 = vsel %vm924, %v790, 0
      %928 = vmatpush.bf16.msra.mxu0 0
      %929 = vmatpush.bf16.msra.mxu0 0
      %930 = vmatpush.bf16.msra.mxu0 0
      %931 = vmatpush.bf16.msra.mxu0 0
      %932 = vmatpush.bf16.msra.mxu0 0
      %933 = vmatpush.bf16.msra.mxu0 0
      %934 = vmatpush.bf16.msra.mxu0 0
      %935 = vmatpush.bf16.msra.mxu0 %v926
      %936 = vmatmul.bf16.gmra.mxu0 %v877
      %v937 = vpop.f32.mrf.mxu0
      %v938 = vadd.f32 %v793, %v937
      %v939 = vpop.f32.mrf.mxu0
      %v940 = vadd.f32 %v793, %v939
      %941 = vmatmul.bf16.gmra.mxu0 %v880
      %v942 = vpop.f32.mrf.mxu0
      %v943 = vadd.f32 %v793, %v942
      %v944 = vpop.f32.mrf.mxu0
      %v945 = vadd.f32 %v793, %v944
      %946 = vmatmul.bf16.gmra.mxu0 %v883
      %v947 = vpop.f32.mrf.mxu0
      %v948 = vadd.f32 %v793, %v947
      %v949 = vpop.f32.mrf.mxu0
      %v950 = vadd.f32 %v793, %v949
      %951 = vmatmul.bf16.gmra.mxu0 %v886
      %v952 = vpop.f32.mrf.mxu0
      %v953 = vadd.f32 %v793, %v952
      %v954 = vpop.f32.mrf.mxu0
      %v955 = vadd.f32 %v793, %v954
      %956 = vmatmul.bf16.gmra.mxu0 %v889
      %v957 = vpop.f32.mrf.mxu0
      %v958 = vadd.f32 %v793, %v957
      %v959 = vpop.f32.mrf.mxu0
      %v960 = vadd.f32 %v793, %v959
      %961 = vmatmul.bf16.gmra.mxu0 %v892
      %v962 = vpop.f32.mrf.mxu0
      %v963 = vadd.f32 %v793, %v962
      %v964 = vpop.f32.mrf.mxu0
      %v965 = vadd.f32 %v793, %v964
      %966 = vmatmul.bf16.gmra.mxu0 %v895
      %v967 = vpop.f32.mrf.mxu0
      %v968 = vadd.f32 %v793, %v967
      %v969 = vpop.f32.mrf.mxu0
      %v970 = vadd.f32 %v793, %v969
      %971 = vmatmul.bf16.gmra.mxu0 %v898
      %v972 = vpop.f32.mrf.mxu0
      %v973 = vadd.f32 %v793, %v972
      %v974 = vpop.f32.mrf.mxu0
      %v975 = vadd.f32 %v793, %v974
      %976 = vmatmul.bf16.gmra.mxu0 %v901
      %v977 = vpop.f32.mrf.mxu0
      %v978 = vadd.f32 %v793, %v977
      %v979 = vpop.f32.mrf.mxu0
      %v980 = vadd.f32 %v793, %v979
      %981 = vmatmul.bf16.gmra.mxu0 %v904
      %v982 = vpop.f32.mrf.mxu0
      %v983 = vadd.f32 %v793, %v982
      %v984 = vpop.f32.mrf.mxu0
      %v985 = vadd.f32 %v793, %v984
      %986 = vmatmul.bf16.gmra.mxu0 %v907
      %v987 = vpop.f32.mrf.mxu0
      %v988 = vadd.f32 %v793, %v987
      %v989 = vpop.f32.mrf.mxu0
      %v990 = vadd.f32 %v793, %v989
      %991 = vmatmul.bf16.gmra.mxu0 %v910
      %v992 = vpop.f32.mrf.mxu0
      %v993 = vadd.f32 %v793, %v992
      %v994 = vpop.f32.mrf.mxu0
      %v995 = vadd.f32 %v793, %v994
      %996 = vmatmul.bf16.gmra.mxu0 %v913
      %v997 = vpop.f32.mrf.mxu0
      %v998 = vadd.f32 %v793, %v997
      %v999 = vpop.f32.mrf.mxu0
      %v1000 = vadd.f32 %v793, %v999
      %1001 = vmatmul.bf16.gmra.mxu0 %v916
      %v1002 = vpop.f32.mrf.mxu0
      %v1003 = vadd.f32 %v793, %v1002
      %v1004 = vpop.f32.mrf.mxu0
      %v1005 = vadd.f32 %v793, %v1004
      %1006 = vmatmul.bf16.gmra.mxu0 %v919
      %v1007 = vpop.f32.mrf.mxu0
      %v1008 = vadd.f32 %v793, %v1007
      %v1009 = vpop.f32.mrf.mxu0
      %v1010 = vadd.f32 %v793, %v1009
      %1011 = vmatmul.bf16.gmra.mxu0 %v922
      %v1012 = vpop.f32.mrf.mxu0
      %v1013 = vadd.f32 %v793, %v1012
      %v1014 = vpop.f32.mrf.mxu0
      %v1015 = vadd.f32 %v793, %v1014
      %1016 = vdwg.mxu0
      %1049 = vrot.lane.b32.xlu0 %v679, 8
      %v1050 = vpop.permute.xlu0 %1049
      %1051 = vrot.lane.b32.xlu0 %v681, 8
      %v1052 = vpop.permute.xlu0 %1051
      %1053 = vrot.lane.b32.xlu0 %v684, 8
      %v1054 = vpop.permute.xlu0 %1053
      %1055 = vrot.lane.b32.xlu0 %v686, 8
      %v1056 = vpop.permute.xlu0 %1055
      %1057 = vrot.lane.b32.xlu0 %v689, 8
      %v1058 = vpop.permute.xlu0 %1057
      %1059 = vrot.lane.b32.xlu0 %v691, 8
      %v1060 = vpop.permute.xlu0 %1059
      %1061 = vrot.lane.b32.xlu0 %v694, 8
      %v1062 = vpop.permute.xlu0 %1061
      %1063 = vrot.lane.b32.xlu0 %v696, 8
      %v1064 = vpop.permute.xlu0 %1063
      %1065 = vrot.lane.b32.xlu0 %v699, 8
      %v1066 = vpop.permute.xlu0 %1065
      %1067 = vrot.lane.b32.xlu0 %v701, 8
      %v1068 = vpop.permute.xlu0 %1067
      %1069 = vrot.lane.b32.xlu0 %v704, 8
      %v1070 = vpop.permute.xlu0 %1069
      %1071 = vrot.lane.b32.xlu0 %v706, 8
      %v1072 = vpop.permute.xlu0 %1071
      %1073 = vrot.lane.b32.xlu0 %v709, 8
      %v1074 = vpop.permute.xlu0 %1073
      %1075 = vrot.lane.b32.xlu0 %v711, 8
      %v1076 = vpop.permute.xlu0 %1075
      %1077 = vrot.lane.b32.xlu0 %v714, 8
      %v1078 = vpop.permute.xlu0 %1077
      %1079 = vrot.lane.b32.xlu0 %v716, 8
      %v1080 = vpop.permute.xlu0 %1079
      %1081 = vrot.lane.b32.xlu0 %v719, 8
      %v1082 = vpop.permute.xlu0 %1081
      %1083 = vrot.lane.b32.xlu0 %v721, 8
      %v1084 = vpop.permute.xlu0 %1083
      %1085 = vrot.lane.b32.xlu0 %v724, 8
      %v1086 = vpop.permute.xlu0 %1085
      %1087 = vrot.lane.b32.xlu0 %v726, 8
      %v1088 = vpop.permute.xlu0 %1087
      %1089 = vrot.lane.b32.xlu0 %v729, 8
      %v1090 = vpop.permute.xlu0 %1089
      %1091 = vrot.lane.b32.xlu0 %v731, 8
      %v1092 = vpop.permute.xlu0 %1091
      %1093 = vrot.lane.b32.xlu0 %v734, 8
      %v1094 = vpop.permute.xlu0 %1093
      %1095 = vrot.lane.b32.xlu0 %v736, 8
      %v1096 = vpop.permute.xlu0 %1095
      %1097 = vrot.lane.b32.xlu0 %v739, 8
      %v1098 = vpop.permute.xlu0 %1097
      %1099 = vrot.lane.b32.xlu0 %v741, 8
      %v1100 = vpop.permute.xlu0 %1099
      %1101 = vrot.lane.b32.xlu0 %v744, 8
      %v1102 = vpop.permute.xlu0 %1101
      %1103 = vrot.lane.b32.xlu0 %v746, 8
      %v1104 = vpop.permute.xlu0 %1103
      %1105 = vrot.lane.b32.xlu0 %v749, 8
      %v1106 = vpop.permute.xlu0 %1105
      %1107 = vrot.lane.b32.xlu0 %v751, 8
      %v1108 = vpop.permute.xlu0 %1107
      %1109 = vrot.lane.b32.xlu0 %v754, 8
      %v1110 = vpop.permute.xlu0 %1109
      %1111 = vrot.lane.b32.xlu0 %v756, 8
      %v1112 = vpop.permute.xlu0 %1111
      %1177 = vrot.lane.b32.xlu0 %v938, 16
      %v1178 = vpop.permute.xlu0 %1177
      %1179 = vrot.lane.b32.xlu0 %v940, 16
      %v1180 = vpop.permute.xlu0 %1179
      %1181 = vrot.lane.b32.xlu0 %v943, 16
      %v1182 = vpop.permute.xlu0 %1181
      %1183 = vrot.lane.b32.xlu0 %v945, 16
      %v1184 = vpop.permute.xlu0 %1183
      %1185 = vrot.lane.b32.xlu0 %v948, 16
      %v1186 = vpop.permute.xlu0 %1185
      %1187 = vrot.lane.b32.xlu0 %v950, 16
      %v1188 = vpop.permute.xlu0 %1187
      %1189 = vrot.lane.b32.xlu0 %v953, 16
      %v1190 = vpop.permute.xlu0 %1189
      %1191 = vrot.lane.b32.xlu0 %v955, 16
      %v1192 = vpop.permute.xlu0 %1191
      %1193 = vrot.lane.b32.xlu0 %v958, 16
      %v1194 = vpop.permute.xlu0 %1193
      %1195 = vrot.lane.b32.xlu0 %v960, 16
      %v1196 = vpop.permute.xlu0 %1195
      %1197 = vrot.lane.b32.xlu0 %v963, 16
      %v1198 = vpop.permute.xlu0 %1197
      %1199 = vrot.lane.b32.xlu0 %v965, 16
      %v1200 = vpop.permute.xlu0 %1199
      %1201 = vrot.lane.b32.xlu0 %v968, 16
      %v1202 = vpop.permute.xlu0 %1201
      %1203 = vrot.lane.b32.xlu0 %v970, 16
      %v1204 = vpop.permute.xlu0 %1203
      %1205 = vrot.lane.b32.xlu0 %v973, 16
      %v1206 = vpop.permute.xlu0 %1205
      %1207 = vrot.lane.b32.xlu0 %v975, 16
      %v1208 = vpop.permute.xlu0 %1207
      %1209 = vrot.lane.b32.xlu0 %v978, 16
      %v1210 = vpop.permute.xlu0 %1209
      %1211 = vrot.lane.b32.xlu0 %v980, 16
      %v1212 = vpop.permute.xlu0 %1211
      %1213 = vrot.lane.b32.xlu0 %v983, 16
      %v1214 = vpop.permute.xlu0 %1213
      %1215 = vrot.lane.b32.xlu0 %v985, 16
      %v1216 = vpop.permute.xlu0 %1215
      %1217 = vrot.lane.b32.xlu0 %v988, 16
      %v1218 = vpop.permute.xlu0 %1217
      %1219 = vrot.lane.b32.xlu0 %v990, 16
      %v1220 = vpop.permute.xlu0 %1219
      %1221 = vrot.lane.b32.xlu0 %v993, 16
      %v1222 = vpop.permute.xlu0 %1221
      %1223 = vrot.lane.b32.xlu0 %v995, 16
      %v1224 = vpop.permute.xlu0 %1223
      %1225 = vrot.lane.b32.xlu0 %v998, 16
      %v1226 = vpop.permute.xlu0 %1225
      %1227 = vrot.lane.b32.xlu0 %v1000, 16
      %v1228 = vpop.permute.xlu0 %1227
      %1229 = vrot.lane.b32.xlu0 %v1003, 16
      %v1230 = vpop.permute.xlu0 %1229
      %1231 = vrot.lane.b32.xlu0 %v1005, 16
      %v1232 = vpop.permute.xlu0 %1231
      %1233 = vrot.lane.b32.xlu0 %v1008, 16
      %v1234 = vpop.permute.xlu0 %1233
      %1235 = vrot.lane.b32.xlu0 %v1010, 16
      %v1236 = vpop.permute.xlu0 %1235
      %1237 = vrot.lane.b32.xlu0 %v1013, 16
      %v1238 = vpop.permute.xlu0 %1237
      %1239 = vrot.lane.b32.xlu0 %v1015, 16
      %v1240 = vpop.permute.xlu0 %1239
      %v1273 = vsel %vm875, %v467, %v1050
      %v1274 = vsel %vm875, %v468, %v1052
      %v1275 = vsel %vm875, %v469, %v1054
      %v1276 = vsel %vm875, %v470, %v1056
      %v1277 = vsel %vm875, %v471, %v1058
      %v1278 = vsel %vm875, %v472, %v1060
      %v1279 = vsel %vm875, %v473, %v1062
      %v1280 = vsel %vm875, %v474, %v1064
      %v1281 = vsel %vm875, %v475, %v1066
      %v1282 = vsel %vm875, %v476, %v1068
      %v1283 = vsel %vm875, %v477, %v1070
      %v1284 = vsel %vm875, %v478, %v1072
      %v1285 = vsel %vm875, %v479, %v1074
      %v1286 = vsel %vm875, %v480, %v1076
      %v1287 = vsel %vm875, %v481, %v1078
      %v1288 = vsel %vm875, %v482, %v1080
      %v1289 = vsel %vm875, %v483, %v1082
      %v1290 = vsel %vm875, %v484, %v1084
      %v1291 = vsel %vm875, %v485, %v1086
      %v1292 = vsel %vm875, %v486, %v1088
      %v1293 = vsel %vm875, %v487, %v1090
      %v1294 = vsel %vm875, %v488, %v1092
      %v1295 = vsel %vm875, %v489, %v1094
      %v1296 = vsel %vm875, %v490, %v1096
      %v1297 = vsel %vm875, %v491, %v1098
      %v1298 = vsel %vm875, %v492, %v1100
      %v1299 = vsel %vm875, %v493, %v1102
      %v1300 = vsel %vm875, %v494, %v1104
      %v1301 = vsel %vm875, %v495, %v1106
      %v1302 = vsel %vm875, %v496, %v1108
      %v1303 = vsel %vm875, %v497, %v1110
      %v1304 = vsel %vm875, %v498, %v1112
      %vm1305 = vcmask 130048
      %v1306 = vsel %vm1305, %v1273, %v1178
      %v1307 = vsel %vm1305, %v1274, %v1180
      %v1308 = vsel %vm1305, %v1275, %v1182
      %v1309 = vsel %vm1305, %v1276, %v1184
      %v1310 = vsel %vm1305, %v1277, %v1186
      %v1311 = vsel %vm1305, %v1278, %v1188
      %v1312 = vsel %vm1305, %v1279, %v1190
      %v1313 = vsel %vm1305, %v1280, %v1192
      %v1314 = vsel %vm1305, %v1281, %v1194
      %v1315 = vsel %vm1305, %v1282, %v1196
      %v1316 = vsel %vm1305, %v1283, %v1198
      %v1317 = vsel %vm1305, %v1284, %v1200
      %v1318 = vsel %vm1305, %v1285, %v1202
      %v1319 = vsel %vm1305, %v1286, %v1204
      %v1320 = vsel %vm1305, %v1287, %v1206
      %v1321 = vsel %vm1305, %v1288, %v1208
      %v1322 = vsel %vm1305, %v1289, %v1210
      %v1323 = vsel %vm1305, %v1290, %v1212
      %v1324 = vsel %vm1305, %v1291, %v1214
      %v1325 = vsel %vm1305, %v1292, %v1216
      %v1326 = vsel %vm1305, %v1293, %v1218
      %v1327 = vsel %vm1305, %v1294, %v1220
      %v1328 = vsel %vm1305, %v1295, %v1222
      %v1329 = vsel %vm1305, %v1296, %v1224
      %v1330 = vsel %vm1305, %v1297, %v1226
      %v1331 = vsel %vm1305, %v1298, %v1228
      %v1332 = vsel %vm1305, %v1299, %v1230
      %v1333 = vsel %vm1305, %v1300, %v1232
      %v1334 = vsel %vm1305, %v1301, %v1234
      %v1335 = vsel %vm1305, %v1302, %v1236
      %v1336 = vsel %vm1305, %v1303, %v1238
      %v1337 = vsel %vm1305, %v1304, %v1240
      %vm1338 = vcmask 195584
      %v1339 = vsel %vm1338, %v1306, 0.0
      %1340 = vadd.xlane.f32.xlu0 %v1339
      %v1341 = vpop.xlane.xlu0 %1340
      %v1342 = vsel %vm1338, %v1307, 0.0
      %1343 = vadd.xlane.f32.xlu0 %v1342
      %v1344 = vpop.xlane.xlu0 %1343
      %v1345 = vsel %vm1338, %v1308, 0.0
      %1346 = vadd.xlane.f32.xlu0 %v1345
      %v1347 = vpop.xlane.xlu0 %1346
      %v1348 = vsel %vm1338, %v1309, 0.0
      %1349 = vadd.xlane.f32.xlu0 %v1348
      %v1350 = vpop.xlane.xlu0 %1349
      %v1351 = vsel %vm1338, %v1310, 0.0
      %1352 = vadd.xlane.f32.xlu0 %v1351
      %v1353 = vpop.xlane.xlu0 %1352
      %v1354 = vsel %vm1338, %v1311, 0.0
      %1355 = vadd.xlane.f32.xlu0 %v1354
      %v1356 = vpop.xlane.xlu0 %1355
      %v1357 = vsel %vm1338, %v1312, 0.0
      %1358 = vadd.xlane.f32.xlu0 %v1357
      %v1359 = vpop.xlane.xlu0 %1358
      %v1360 = vsel %vm1338, %v1313, 0.0
      %1361 = vadd.xlane.f32.xlu0 %v1360
      %v1362 = vpop.xlane.xlu0 %1361
      %v1363 = vsel %vm1338, %v1314, 0.0
      %1364 = vadd.xlane.f32.xlu0 %v1363
      %v1365 = vpop.xlane.xlu0 %1364
      %v1366 = vsel %vm1338, %v1315, 0.0
      %1367 = vadd.xlane.f32.xlu0 %v1366
      %v1368 = vpop.xlane.xlu0 %1367
      %v1369 = vsel %vm1338, %v1316, 0.0
      %1370 = vadd.xlane.f32.xlu0 %v1369
      %v1371 = vpop.xlane.xlu0 %1370
      %v1372 = vsel %vm1338, %v1317, 0.0
      %1373 = vadd.xlane.f32.xlu0 %v1372
      %v1374 = vpop.xlane.xlu0 %1373
      %v1375 = vsel %vm1338, %v1318, 0.0
      %1376 = vadd.xlane.f32.xlu0 %v1375
      %v1377 = vpop.xlane.xlu0 %1376
      %v1378 = vsel %vm1338, %v1319, 0.0
      %1379 = vadd.xlane.f32.xlu0 %v1378
      %v1380 = vpop.xlane.xlu0 %1379
      %v1381 = vsel %vm1338, %v1320, 0.0
      %1382 = vadd.xlane.f32.xlu0 %v1381
      %v1383 = vpop.xlane.xlu0 %1382
      %v1384 = vsel %vm1338, %v1321, 0.0
      %1385 = vadd.xlane.f32.xlu0 %v1384
      %v1386 = vpop.xlane.xlu0 %1385
      %v1387 = vsel %vm1338, %v1322, 0.0
      %1388 = vadd.xlane.f32.xlu0 %v1387
      %v1389 = vpop.xlane.xlu0 %1388
      %v1390 = vsel %vm1338, %v1323, 0.0
      %1391 = vadd.xlane.f32.xlu0 %v1390
      %v1392 = vpop.xlane.xlu0 %1391
      %v1393 = vsel %vm1338, %v1324, 0.0
      %1394 = vadd.xlane.f32.xlu0 %v1393
      %v1395 = vpop.xlane.xlu0 %1394
      %v1396 = vsel %vm1338, %v1325, 0.0
      %1397 = vadd.xlane.f32.xlu0 %v1396
      %v1398 = vpop.xlane.xlu0 %1397
      %v1399 = vsel %vm1338, %v1326, 0.0
      %1400 = vadd.xlane.f32.xlu0 %v1399
      %v1401 = vpop.xlane.xlu0 %1400
      %v1402 = vsel %vm1338, %v1327, 0.0
      %1403 = vadd.xlane.f32.xlu0 %v1402
      %v1404 = vpop.xlane.xlu0 %1403
      %v1405 = vsel %vm1338, %v1328, 0.0
      %1406 = vadd.xlane.f32.xlu0 %v1405
      %v1407 = vpop.xlane.xlu0 %1406
      %v1408 = vsel %vm1338, %v1329, 0.0
      %1409 = vadd.xlane.f32.xlu0 %v1408
      %v1410 = vpop.xlane.xlu0 %1409
      %v1411 = vsel %vm1338, %v1330, 0.0
      %1412 = vadd.xlane.f32.xlu0 %v1411
      %v1413 = vpop.xlane.xlu0 %1412
      %v1414 = vsel %vm1338, %v1331, 0.0
      %1415 = vadd.xlane.f32.xlu0 %v1414
      %v1416 = vpop.xlane.xlu0 %1415
      %v1417 = vsel %vm1338, %v1332, 0.0
      %1418 = vadd.xlane.f32.xlu0 %v1417
      %v1419 = vpop.xlane.xlu0 %1418
      %v1420 = vsel %vm1338, %v1333, 0.0
      %1421 = vadd.xlane.f32.xlu0 %v1420
      %v1422 = vpop.xlane.xlu0 %1421
      %v1423 = vsel %vm1338, %v1334, 0.0
      %1424 = vadd.xlane.f32.xlu0 %v1423
      %v1425 = vpop.xlane.xlu0 %1424
      %v1426 = vsel %vm1338, %v1335, 0.0
      %1427 = vadd.xlane.f32.xlu0 %v1426
      %v1428 = vpop.xlane.xlu0 %1427
      %v1429 = vsel %vm1338, %v1336, 0.0
      %1430 = vadd.xlane.f32.xlu0 %v1429
      %v1431 = vpop.xlane.xlu0 %1430
      %v1432 = vsel %vm1338, %v1337, 0.0
      %1433 = vadd.xlane.f32.xlu0 %v1432
      %v1434 = vpop.xlane.xlu0 %1433
      %v1435 = vrcp.pop 24.0
      %v1436 = vmul.f32 24.0, %v1435
      %v1437 = vsub.f32 1.0, %v1436
      %v1438 = vmul.f32 %v1435, %v1437
      %v1439 = vadd.f32 %v1435, %v1438
      %vm1440 = vweird.f32 %v1435
      %v1441 = vsel %vm1440, %v1435, %v1439
      %v1442 = vmul.f32 %v1341, %v1441
      %v1443 = vmul.f32 %v1344, %v1441
      %v1444 = vmul.f32 %v1347, %v1441
      %v1445 = vmul.f32 %v1350, %v1441
      %v1446 = vmul.f32 %v1353, %v1441
      %v1447 = vmul.f32 %v1356, %v1441
      %v1448 = vmul.f32 %v1359, %v1441
      %v1449 = vmul.f32 %v1362, %v1441
      %v1450 = vmul.f32 %v1365, %v1441
      %v1451 = vmul.f32 %v1368, %v1441
      %v1452 = vmul.f32 %v1371, %v1441
      %v1453 = vmul.f32 %v1374, %v1441
      %v1454 = vmul.f32 %v1377, %v1441
      %v1455 = vmul.f32 %v1380, %v1441
      %v1456 = vmul.f32 %v1383, %v1441
      %v1457 = vmul.f32 %v1386, %v1441
      %v1458 = vmul.f32 %v1389, %v1441
      %v1459 = vmul.f32 %v1392, %v1441
      %v1460 = vmul.f32 %v1395, %v1441
      %v1461 = vmul.f32 %v1398, %v1441
      %v1462 = vmul.f32 %v1401, %v1441
      %v1463 = vmul.f32 %v1404, %v1441
      %v1464 = vmul.f32 %v1407, %v1441
      %v1465 = vmul.f32 %v1410, %v1441
      %v1466 = vmul.f32 %v1413, %v1441
      %v1467 = vmul.f32 %v1416, %v1441
      %v1468 = vmul.f32 %v1419, %v1441
      %v1469 = vmul.f32 %v1422, %v1441
      %v1470 = vmul.f32 %v1425, %v1441
      %v1471 = vmul.f32 %v1428, %v1441
      %v1472 = vmul.f32 %v1431, %v1441
      %v1473 = vmul.f32 %v1434, %v1441
      %v1474 = vsub.f32 %v1306, %v1442
      %v1475 = vsub.f32 %v1307, %v1443
      %v1476 = vsub.f32 %v1308, %v1444
      %v1477 = vsub.f32 %v1309, %v1445
      %v1478 = vsub.f32 %v1310, %v1446
      %v1479 = vsub.f32 %v1311, %v1447
      %v1480 = vsub.f32 %v1312, %v1448
      %v1481 = vsub.f32 %v1313, %v1449
      %v1482 = vsub.f32 %v1314, %v1450
      %v1483 = vsub.f32 %v1315, %v1451
      %v1484 = vsub.f32 %v1316, %v1452
      %v1485 = vsub.f32 %v1317, %v1453
      %v1486 = vsub.f32 %v1318, %v1454
      %v1487 = vsub.f32 %v1319, %v1455
      %v1488 = vsub.f32 %v1320, %v1456
      %v1489 = vsub.f32 %v1321, %v1457
      %v1490 = vsub.f32 %v1322, %v1458
      %v1491 = vsub.f32 %v1323, %v1459
      %v1492 = vsub.f32 %v1324, %v1460
      %v1493 = vsub.f32 %v1325, %v1461
      %v1494 = vsub.f32 %v1326, %v1462
      %v1495 = vsub.f32 %v1327, %v1463
      %v1496 = vsub.f32 %v1328, %v1464
      %v1497 = vsub.f32 %v1329, %v1465
      %v1498 = vsub.f32 %v1330, %v1466
      %v1499 = vsub.f32 %v1331, %v1467
      %v1500 = vsub.f32 %v1332, %v1468
      %v1501 = vsub.f32 %v1333, %v1469
      %v1502 = vsub.f32 %v1334, %v1470
      %v1503 = vsub.f32 %v1335, %v1471
      %v1504 = vsub.f32 %v1336, %v1472
      %v1505 = vsub.f32 %v1337, %v1473
      %v1506 = vmul.f32 %v1474, %v1474
      %v1507 = vmul.f32 %v1475, %v1475
      %v1508 = vmul.f32 %v1476, %v1476
      %v1509 = vmul.f32 %v1477, %v1477
      %v1510 = vmul.f32 %v1478, %v1478
      %v1511 = vmul.f32 %v1479, %v1479
      %v1512 = vmul.f32 %v1480, %v1480
      %v1513 = vmul.f32 %v1481, %v1481
      %v1514 = vmul.f32 %v1482, %v1482
      %v1515 = vmul.f32 %v1483, %v1483
      %v1516 = vmul.f32 %v1484, %v1484
      %v1517 = vmul.f32 %v1485, %v1485
      %v1518 = vmul.f32 %v1486, %v1486
      %v1519 = vmul.f32 %v1487, %v1487
      %v1520 = vmul.f32 %v1488, %v1488
      %v1521 = vmul.f32 %v1489, %v1489
      %v1522 = vmul.f32 %v1490, %v1490
      %v1523 = vmul.f32 %v1491, %v1491
      %v1524 = vmul.f32 %v1492, %v1492
      %v1525 = vmul.f32 %v1493, %v1493
      %v1526 = vmul.f32 %v1494, %v1494
      %v1527 = vmul.f32 %v1495, %v1495
      %v1528 = vmul.f32 %v1496, %v1496
      %v1529 = vmul.f32 %v1497, %v1497
      %v1530 = vmul.f32 %v1498, %v1498
      %v1531 = vmul.f32 %v1499, %v1499
      %v1532 = vmul.f32 %v1500, %v1500
      %v1533 = vmul.f32 %v1501, %v1501
      %v1534 = vmul.f32 %v1502, %v1502
      %v1535 = vmul.f32 %v1503, %v1503
      %v1536 = vmul.f32 %v1504, %v1504
      %v1537 = vmul.f32 %v1505, %v1505
      %v1538 = vsel %vm1338, %v1506, 0.0
      %1539 = vadd.xlane.f32.xlu0 %v1538
      %v1540 = vpop.xlane.xlu0 %1539
      %v1541 = vsel %vm1338, %v1507, 0.0
      %1542 = vadd.xlane.f32.xlu0 %v1541
      %v1543 = vpop.xlane.xlu0 %1542
      %v1544 = vsel %vm1338, %v1508, 0.0
      %1545 = vadd.xlane.f32.xlu0 %v1544
      %v1546 = vpop.xlane.xlu0 %1545
      %v1547 = vsel %vm1338, %v1509, 0.0
      %1548 = vadd.xlane.f32.xlu0 %v1547
      %v1549 = vpop.xlane.xlu0 %1548
      %v1550 = vsel %vm1338, %v1510, 0.0
      %1551 = vadd.xlane.f32.xlu0 %v1550
      %v1552 = vpop.xlane.xlu0 %1551
      %v1553 = vsel %vm1338, %v1511, 0.0
      %1554 = vadd.xlane.f32.xlu0 %v1553
      %v1555 = vpop.xlane.xlu0 %1554
      %v1556 = vsel %vm1338, %v1512, 0.0
      %1557 = vadd.xlane.f32.xlu0 %v1556
      %v1558 = vpop.xlane.xlu0 %1557
      %v1559 = vsel %vm1338, %v1513, 0.0
      %1560 = vadd.xlane.f32.xlu0 %v1559
      %v1561 = vpop.xlane.xlu0 %1560
      %v1562 = vsel %vm1338, %v1514, 0.0
      %1563 = vadd.xlane.f32.xlu0 %v1562
      %v1564 = vpop.xlane.xlu0 %1563
      %v1565 = vsel %vm1338, %v1515, 0.0
      %1566 = vadd.xlane.f32.xlu0 %v1565
      %v1567 = vpop.xlane.xlu0 %1566
      %v1568 = vsel %vm1338, %v1516, 0.0
      %1569 = vadd.xlane.f32.xlu0 %v1568
      %v1570 = vpop.xlane.xlu0 %1569
      %v1571 = vsel %vm1338, %v1517, 0.0
      %1572 = vadd.xlane.f32.xlu0 %v1571
      %v1573 = vpop.xlane.xlu0 %1572
      %v1574 = vsel %vm1338, %v1518, 0.0
      %1575 = vadd.xlane.f32.xlu0 %v1574
      %v1576 = vpop.xlane.xlu0 %1575
      %v1577 = vsel %vm1338, %v1519, 0.0
      %1578 = vadd.xlane.f32.xlu0 %v1577
      %v1579 = vpop.xlane.xlu0 %1578
      %v1580 = vsel %vm1338, %v1520, 0.0
      %1581 = vadd.xlane.f32.xlu0 %v1580
      %v1582 = vpop.xlane.xlu0 %1581
      %v1583 = vsel %vm1338, %v1521, 0.0
      %1584 = vadd.xlane.f32.xlu0 %v1583
      %v1585 = vpop.xlane.xlu0 %1584
      %v1586 = vsel %vm1338, %v1522, 0.0
      %1587 = vadd.xlane.f32.xlu0 %v1586
      %v1588 = vpop.xlane.xlu0 %1587
      %v1589 = vsel %vm1338, %v1523, 0.0
      %1590 = vadd.xlane.f32.xlu0 %v1589
      %v1591 = vpop.xlane.xlu0 %1590
      %v1592 = vsel %vm1338, %v1524, 0.0
      %1593 = vadd.xlane.f32.xlu0 %v1592
      %v1594 = vpop.xlane.xlu0 %1593
      %v1595 = vsel %vm1338, %v1525, 0.0
      %1596 = vadd.xlane.f32.xlu0 %v1595
      %v1597 = vpop.xlane.xlu0 %1596
      %v1598 = vsel %vm1338, %v1526, 0.0
      %1599 = vadd.xlane.f32.xlu0 %v1598
      %v1600 = vpop.xlane.xlu0 %1599
      %v1601 = vsel %vm1338, %v1527, 0.0
      %1602 = vadd.xlane.f32.xlu0 %v1601
      %v1603 = vpop.xlane.xlu0 %1602
      %v1604 = vsel %vm1338, %v1528, 0.0
      %1605 = vadd.xlane.f32.xlu0 %v1604
      %v1606 = vpop.xlane.xlu0 %1605
      %v1607 = vsel %vm1338, %v1529, 0.0
      %1608 = vadd.xlane.f32.xlu0 %v1607
      %v1609 = vpop.xlane.xlu0 %1608
      %v1610 = vsel %vm1338, %v1530, 0.0
      %1611 = vadd.xlane.f32.xlu0 %v1610
      %v1612 = vpop.xlane.xlu0 %1611
      %v1613 = vsel %vm1338, %v1531, 0.0
      %1614 = vadd.xlane.f32.xlu0 %v1613
      %v1615 = vpop.xlane.xlu0 %1614
      %v1616 = vsel %vm1338, %v1532, 0.0
      %1617 = vadd.xlane.f32.xlu0 %v1616
      %v1618 = vpop.xlane.xlu0 %1617
      %v1619 = vsel %vm1338, %v1533, 0.0
      %1620 = vadd.xlane.f32.xlu0 %v1619
      %v1621 = vpop.xlane.xlu0 %1620
      %v1622 = vsel %vm1338, %v1534, 0.0
      %1623 = vadd.xlane.f32.xlu0 %v1622
      %v1624 = vpop.xlane.xlu0 %1623
      %v1625 = vsel %vm1338, %v1535, 0.0
      %1626 = vadd.xlane.f32.xlu0 %v1625
      %v1627 = vpop.xlane.xlu0 %1626
      %v1628 = vsel %vm1338, %v1536, 0.0
      %1629 = vadd.xlane.f32.xlu0 %v1628
      %v1630 = vpop.xlane.xlu0 %1629
      %v1631 = vsel %vm1338, %v1537, 0.0
      %1632 = vadd.xlane.f32.xlu0 %v1631
      %v1633 = vpop.xlane.xlu0 %1632
      %v1634 = vmul.f32 %v1540, %v1441
      %v1635 = vmul.f32 %v1543, %v1441
      %v1636 = vmul.f32 %v1546, %v1441
      %v1637 = vmul.f32 %v1549, %v1441
      %v1638 = vmul.f32 %v1552, %v1441
      %v1639 = vmul.f32 %v1555, %v1441
      %v1640 = vmul.f32 %v1558, %v1441
      %v1641 = vmul.f32 %v1561, %v1441
      %v1642 = vmul.f32 %v1564, %v1441
      %v1643 = vmul.f32 %v1567, %v1441
      %v1644 = vmul.f32 %v1570, %v1441
      %v1645 = vmul.f32 %v1573, %v1441
      %v1646 = vmul.f32 %v1576, %v1441
      %v1647 = vmul.f32 %v1579, %v1441
      %v1648 = vmul.f32 %v1582, %v1441
      %v1649 = vmul.f32 %v1585, %v1441
      %v1650 = vmul.f32 %v1588, %v1441
      %v1651 = vmul.f32 %v1591, %v1441
      %v1652 = vmul.f32 %v1594, %v1441
      %v1653 = vmul.f32 %v1597, %v1441
      %v1654 = vmul.f32 %v1600, %v1441
      %v1655 = vmul.f32 %v1603, %v1441
      %v1656 = vmul.f32 %v1606, %v1441
      %v1657 = vmul.f32 %v1609, %v1441
      %v1658 = vmul.f32 %v1612, %v1441
      %v1659 = vmul.f32 %v1615, %v1441
      %v1660 = vmul.f32 %v1618, %v1441
      %v1661 = vmul.f32 %v1621, %v1441
      %v1662 = vmul.f32 %v1624, %v1441
      %v1663 = vmul.f32 %v1627, %v1441
      %v1664 = vmul.f32 %v1630, %v1441
      %v1665 = vmul.f32 %v1633, %v1441
      %v1666 = vadd.f32 %v1634, 1e-06
      %v1667 = vadd.f32 %v1635, 1e-06
      %v1668 = vadd.f32 %v1636, 1e-06
      %v1669 = vadd.f32 %v1637, 1e-06
      %v1670 = vadd.f32 %v1638, 1e-06
      %v1671 = vadd.f32 %v1639, 1e-06
      %v1672 = vadd.f32 %v1640, 1e-06
      %v1673 = vadd.f32 %v1641, 1e-06
      %v1674 = vadd.f32 %v1642, 1e-06
      %v1675 = vadd.f32 %v1643, 1e-06
      %v1676 = vadd.f32 %v1644, 1e-06
      %v1677 = vadd.f32 %v1645, 1e-06
      %v1678 = vadd.f32 %v1646, 1e-06
      %v1679 = vadd.f32 %v1647, 1e-06
      %v1680 = vadd.f32 %v1648, 1e-06
      %v1681 = vadd.f32 %v1649, 1e-06
      %v1682 = vadd.f32 %v1650, 1e-06
      %v1683 = vadd.f32 %v1651, 1e-06
      %v1684 = vadd.f32 %v1652, 1e-06
      %v1685 = vadd.f32 %v1653, 1e-06
      %v1686 = vadd.f32 %v1654, 1e-06
      %v1687 = vadd.f32 %v1655, 1e-06
      %v1688 = vadd.f32 %v1656, 1e-06
      %v1689 = vadd.f32 %v1657, 1e-06
      %v1690 = vadd.f32 %v1658, 1e-06
      %v1691 = vadd.f32 %v1659, 1e-06
      %v1692 = vadd.f32 %v1660, 1e-06
      %v1693 = vadd.f32 %v1661, 1e-06
      %v1694 = vadd.f32 %v1662, 1e-06
      %v1695 = vadd.f32 %v1663, 1e-06
      %v1696 = vadd.f32 %v1664, 1e-06
      %v1697 = vadd.f32 %v1665, 1e-06
      %v1698 = vrsqrt.pop %v1666
      %v1699 = vmul.f32 %v1698, %v1666
      %v1700 = vmul.f32 %v1699, %v1698
      %v1701 = vmul.f32 0.5, %v1700
      %v1702 = vsub.f32 1.5, %v1701
      %v1703 = vmul.f32 %v1698, %v1702
      %vm1704 = vweird.f32 %v1666
      %vm1705 = vweird.f32 %v1698
      %vm1706 = vmor %vm1704, %vm1705
      %v1707 = vsel %vm1706, %v1698, %v1703
      %v1708 = vrsqrt.pop %v1667
      %v1709 = vmul.f32 %v1708, %v1667
      %v1710 = vmul.f32 %v1709, %v1708
      %v1711 = vmul.f32 0.5, %v1710
      %v1712 = vsub.f32 1.5, %v1711
      %v1713 = vmul.f32 %v1708, %v1712
      %vm1714 = vweird.f32 %v1667
      %vm1715 = vweird.f32 %v1708
      %vm1716 = vmor %vm1714, %vm1715
      %v1717 = vsel %vm1716, %v1708, %v1713
      %v1718 = vrsqrt.pop %v1668
      %v1719 = vmul.f32 %v1718, %v1668
      %v1720 = vmul.f32 %v1719, %v1718
      %v1721 = vmul.f32 0.5, %v1720
      %v1722 = vsub.f32 1.5, %v1721
      %v1723 = vmul.f32 %v1718, %v1722
      %vm1724 = vweird.f32 %v1668
      %vm1725 = vweird.f32 %v1718
      %vm1726 = vmor %vm1724, %vm1725
      %v1727 = vsel %vm1726, %v1718, %v1723
      %v1728 = vrsqrt.pop %v1669
      %v1729 = vmul.f32 %v1728, %v1669
      %v1730 = vmul.f32 %v1729, %v1728
      %v1731 = vmul.f32 0.5, %v1730
      %v1732 = vsub.f32 1.5, %v1731
      %v1733 = vmul.f32 %v1728, %v1732
      %vm1734 = vweird.f32 %v1669
      %vm1735 = vweird.f32 %v1728
      %vm1736 = vmor %vm1734, %vm1735
      %v1737 = vsel %vm1736, %v1728, %v1733
      %v1738 = vrsqrt.pop %v1670
      %v1739 = vmul.f32 %v1738, %v1670
      %v1740 = vmul.f32 %v1739, %v1738
      %v1741 = vmul.f32 0.5, %v1740
      %v1742 = vsub.f32 1.5, %v1741
      %v1743 = vmul.f32 %v1738, %v1742
      %vm1744 = vweird.f32 %v1670
      %vm1745 = vweird.f32 %v1738
      %vm1746 = vmor %vm1744, %vm1745
      %v1747 = vsel %vm1746, %v1738, %v1743
      %v1748 = vrsqrt.pop %v1671
      %v1749 = vmul.f32 %v1748, %v1671
      %v1750 = vmul.f32 %v1749, %v1748
      %v1751 = vmul.f32 0.5, %v1750
      %v1752 = vsub.f32 1.5, %v1751
      %v1753 = vmul.f32 %v1748, %v1752
      %vm1754 = vweird.f32 %v1671
      %vm1755 = vweird.f32 %v1748
      %vm1756 = vmor %vm1754, %vm1755
      %v1757 = vsel %vm1756, %v1748, %v1753
      %v1758 = vrsqrt.pop %v1672
      %v1759 = vmul.f32 %v1758, %v1672
      %v1760 = vmul.f32 %v1759, %v1758
      %v1761 = vmul.f32 0.5, %v1760
      %v1762 = vsub.f32 1.5, %v1761
      %v1763 = vmul.f32 %v1758, %v1762
      %vm1764 = vweird.f32 %v1672
      %vm1765 = vweird.f32 %v1758
      %vm1766 = vmor %vm1764, %vm1765
      %v1767 = vsel %vm1766, %v1758, %v1763
      %v1768 = vrsqrt.pop %v1673
      %v1769 = vmul.f32 %v1768, %v1673
      %v1770 = vmul.f32 %v1769, %v1768
      %v1771 = vmul.f32 0.5, %v1770
      %v1772 = vsub.f32 1.5, %v1771
      %v1773 = vmul.f32 %v1768, %v1772
      %vm1774 = vweird.f32 %v1673
      %vm1775 = vweird.f32 %v1768
      %vm1776 = vmor %vm1774, %vm1775
      %v1777 = vsel %vm1776, %v1768, %v1773
      %v1778 = vrsqrt.pop %v1674
      %v1779 = vmul.f32 %v1778, %v1674
      %v1780 = vmul.f32 %v1779, %v1778
      %v1781 = vmul.f32 0.5, %v1780
      %v1782 = vsub.f32 1.5, %v1781
      %v1783 = vmul.f32 %v1778, %v1782
      %vm1784 = vweird.f32 %v1674
      %vm1785 = vweird.f32 %v1778
      %vm1786 = vmor %vm1784, %vm1785
      %v1787 = vsel %vm1786, %v1778, %v1783
      %v1788 = vrsqrt.pop %v1675
      %v1789 = vmul.f32 %v1788, %v1675
      %v1790 = vmul.f32 %v1789, %v1788
      %v1791 = vmul.f32 0.5, %v1790
      %v1792 = vsub.f32 1.5, %v1791
      %v1793 = vmul.f32 %v1788, %v1792
      %vm1794 = vweird.f32 %v1675
      %vm1795 = vweird.f32 %v1788
      %vm1796 = vmor %vm1794, %vm1795
      %v1797 = vsel %vm1796, %v1788, %v1793
      %v1798 = vrsqrt.pop %v1676
      %v1799 = vmul.f32 %v1798, %v1676
      %v1800 = vmul.f32 %v1799, %v1798
      %v1801 = vmul.f32 0.5, %v1800
      %v1802 = vsub.f32 1.5, %v1801
      %v1803 = vmul.f32 %v1798, %v1802
      %vm1804 = vweird.f32 %v1676
      %vm1805 = vweird.f32 %v1798
      %vm1806 = vmor %vm1804, %vm1805
      %v1807 = vsel %vm1806, %v1798, %v1803
      %v1808 = vrsqrt.pop %v1677
      %v1809 = vmul.f32 %v1808, %v1677
      %v1810 = vmul.f32 %v1809, %v1808
      %v1811 = vmul.f32 0.5, %v1810
      %v1812 = vsub.f32 1.5, %v1811
      %v1813 = vmul.f32 %v1808, %v1812
      %vm1814 = vweird.f32 %v1677
      %vm1815 = vweird.f32 %v1808
      %vm1816 = vmor %vm1814, %vm1815
      %v1817 = vsel %vm1816, %v1808, %v1813
      %v1818 = vrsqrt.pop %v1678
      %v1819 = vmul.f32 %v1818, %v1678
      %v1820 = vmul.f32 %v1819, %v1818
      %v1821 = vmul.f32 0.5, %v1820
      %v1822 = vsub.f32 1.5, %v1821
      %v1823 = vmul.f32 %v1818, %v1822
      %vm1824 = vweird.f32 %v1678
      %vm1825 = vweird.f32 %v1818
      %vm1826 = vmor %vm1824, %vm1825
      %v1827 = vsel %vm1826, %v1818, %v1823
      %v1828 = vrsqrt.pop %v1679
      %v1829 = vmul.f32 %v1828, %v1679
      %v1830 = vmul.f32 %v1829, %v1828
      %v1831 = vmul.f32 0.5, %v1830
      %v1832 = vsub.f32 1.5, %v1831
      %v1833 = vmul.f32 %v1828, %v1832
      %vm1834 = vweird.f32 %v1679
      %vm1835 = vweird.f32 %v1828
      %vm1836 = vmor %vm1834, %vm1835
      %v1837 = vsel %vm1836, %v1828, %v1833
      %v1838 = vrsqrt.pop %v1680
      %v1839 = vmul.f32 %v1838, %v1680
      %v1840 = vmul.f32 %v1839, %v1838
      %v1841 = vmul.f32 0.5, %v1840
      %v1842 = vsub.f32 1.5, %v1841
      %v1843 = vmul.f32 %v1838, %v1842
      %vm1844 = vweird.f32 %v1680
      %vm1845 = vweird.f32 %v1838
      %vm1846 = vmor %vm1844, %vm1845
      %v1847 = vsel %vm1846, %v1838, %v1843
      %v1848 = vrsqrt.pop %v1681
      %v1849 = vmul.f32 %v1848, %v1681
      %v1850 = vmul.f32 %v1849, %v1848
      %v1851 = vmul.f32 0.5, %v1850
      %v1852 = vsub.f32 1.5, %v1851
      %v1853 = vmul.f32 %v1848, %v1852
      %vm1854 = vweird.f32 %v1681
      %vm1855 = vweird.f32 %v1848
      %vm1856 = vmor %vm1854, %vm1855
      %v1857 = vsel %vm1856, %v1848, %v1853
      %v1858 = vrsqrt.pop %v1682
      %v1859 = vmul.f32 %v1858, %v1682
      %v1860 = vmul.f32 %v1859, %v1858
      %v1861 = vmul.f32 0.5, %v1860
      %v1862 = vsub.f32 1.5, %v1861
      %v1863 = vmul.f32 %v1858, %v1862
      %vm1864 = vweird.f32 %v1682
      %vm1865 = vweird.f32 %v1858
      %vm1866 = vmor %vm1864, %vm1865
      %v1867 = vsel %vm1866, %v1858, %v1863
      %v1868 = vrsqrt.pop %v1683
      %v1869 = vmul.f32 %v1868, %v1683
      %v1870 = vmul.f32 %v1869, %v1868
      %v1871 = vmul.f32 0.5, %v1870
      %v1872 = vsub.f32 1.5, %v1871
      %v1873 = vmul.f32 %v1868, %v1872
      %vm1874 = vweird.f32 %v1683
      %vm1875 = vweird.f32 %v1868
      %vm1876 = vmor %vm1874, %vm1875
      %v1877 = vsel %vm1876, %v1868, %v1873
      %v1878 = vrsqrt.pop %v1684
      %v1879 = vmul.f32 %v1878, %v1684
      %v1880 = vmul.f32 %v1879, %v1878
      %v1881 = vmul.f32 0.5, %v1880
      %v1882 = vsub.f32 1.5, %v1881
      %v1883 = vmul.f32 %v1878, %v1882
      %vm1884 = vweird.f32 %v1684
      %vm1885 = vweird.f32 %v1878
      %vm1886 = vmor %vm1884, %vm1885
      %v1887 = vsel %vm1886, %v1878, %v1883
      %v1888 = vrsqrt.pop %v1685
      %v1889 = vmul.f32 %v1888, %v1685
      %v1890 = vmul.f32 %v1889, %v1888
      %v1891 = vmul.f32 0.5, %v1890
      %v1892 = vsub.f32 1.5, %v1891
      %v1893 = vmul.f32 %v1888, %v1892
      %vm1894 = vweird.f32 %v1685
      %vm1895 = vweird.f32 %v1888
      %vm1896 = vmor %vm1894, %vm1895
      %v1897 = vsel %vm1896, %v1888, %v1893
      %v1898 = vrsqrt.pop %v1686
      %v1899 = vmul.f32 %v1898, %v1686
      %v1900 = vmul.f32 %v1899, %v1898
      %v1901 = vmul.f32 0.5, %v1900
      %v1902 = vsub.f32 1.5, %v1901
      %v1903 = vmul.f32 %v1898, %v1902
      %vm1904 = vweird.f32 %v1686
      %vm1905 = vweird.f32 %v1898
      %vm1906 = vmor %vm1904, %vm1905
      %v1907 = vsel %vm1906, %v1898, %v1903
      %v1908 = vrsqrt.pop %v1687
      %v1909 = vmul.f32 %v1908, %v1687
      %v1910 = vmul.f32 %v1909, %v1908
      %v1911 = vmul.f32 0.5, %v1910
      %v1912 = vsub.f32 1.5, %v1911
      %v1913 = vmul.f32 %v1908, %v1912
      %vm1914 = vweird.f32 %v1687
      %vm1915 = vweird.f32 %v1908
      %vm1916 = vmor %vm1914, %vm1915
      %v1917 = vsel %vm1916, %v1908, %v1913
      %v1918 = vrsqrt.pop %v1688
      %v1919 = vmul.f32 %v1918, %v1688
      %v1920 = vmul.f32 %v1919, %v1918
      %v1921 = vmul.f32 0.5, %v1920
      %v1922 = vsub.f32 1.5, %v1921
      %v1923 = vmul.f32 %v1918, %v1922
      %vm1924 = vweird.f32 %v1688
      %vm1925 = vweird.f32 %v1918
      %vm1926 = vmor %vm1924, %vm1925
      %v1927 = vsel %vm1926, %v1918, %v1923
      %v1928 = vrsqrt.pop %v1689
      %v1929 = vmul.f32 %v1928, %v1689
      %v1930 = vmul.f32 %v1929, %v1928
      %v1931 = vmul.f32 0.5, %v1930
      %v1932 = vsub.f32 1.5, %v1931
      %v1933 = vmul.f32 %v1928, %v1932
      %vm1934 = vweird.f32 %v1689
      %vm1935 = vweird.f32 %v1928
      %vm1936 = vmor %vm1934, %vm1935
      %v1937 = vsel %vm1936, %v1928, %v1933
      %v1938 = vrsqrt.pop %v1690
      %v1939 = vmul.f32 %v1938, %v1690
      %v1940 = vmul.f32 %v1939, %v1938
      %v1941 = vmul.f32 0.5, %v1940
      %v1942 = vsub.f32 1.5, %v1941
      %v1943 = vmul.f32 %v1938, %v1942
      %vm1944 = vweird.f32 %v1690
      %vm1945 = vweird.f32 %v1938
      %vm1946 = vmor %vm1944, %vm1945
      %v1947 = vsel %vm1946, %v1938, %v1943
      %v1948 = vrsqrt.pop %v1691
      %v1949 = vmul.f32 %v1948, %v1691
      %v1950 = vmul.f32 %v1949, %v1948
      %v1951 = vmul.f32 0.5, %v1950
      %v1952 = vsub.f32 1.5, %v1951
      %v1953 = vmul.f32 %v1948, %v1952
      %vm1954 = vweird.f32 %v1691
      %vm1955 = vweird.f32 %v1948
      %vm1956 = vmor %vm1954, %vm1955
      %v1957 = vsel %vm1956, %v1948, %v1953
      %v1958 = vrsqrt.pop %v1692
      %v1959 = vmul.f32 %v1958, %v1692
      %v1960 = vmul.f32 %v1959, %v1958
      %v1961 = vmul.f32 0.5, %v1960
      %v1962 = vsub.f32 1.5, %v1961
      %v1963 = vmul.f32 %v1958, %v1962
      %vm1964 = vweird.f32 %v1692
      %vm1965 = vweird.f32 %v1958
      %vm1966 = vmor %vm1964, %vm1965
      %v1967 = vsel %vm1966, %v1958, %v1963
      %v1968 = vrsqrt.pop %v1693
      %v1969 = vmul.f32 %v1968, %v1693
      %v1970 = vmul.f32 %v1969, %v1968
      %v1971 = vmul.f32 0.5, %v1970
      %v1972 = vsub.f32 1.5, %v1971
      %v1973 = vmul.f32 %v1968, %v1972
      %vm1974 = vweird.f32 %v1693
      %vm1975 = vweird.f32 %v1968
      %vm1976 = vmor %vm1974, %vm1975
      %v1977 = vsel %vm1976, %v1968, %v1973
      %v1978 = vrsqrt.pop %v1694
      %v1979 = vmul.f32 %v1978, %v1694
      %v1980 = vmul.f32 %v1979, %v1978
      %v1981 = vmul.f32 0.5, %v1980
      %v1982 = vsub.f32 1.5, %v1981
      %v1983 = vmul.f32 %v1978, %v1982
      %vm1984 = vweird.f32 %v1694
      %vm1985 = vweird.f32 %v1978
      %vm1986 = vmor %vm1984, %vm1985
      %v1987 = vsel %vm1986, %v1978, %v1983
      %v1988 = vrsqrt.pop %v1695
      %v1989 = vmul.f32 %v1988, %v1695
      %v1990 = vmul.f32 %v1989, %v1988
      %v1991 = vmul.f32 0.5, %v1990
      %v1992 = vsub.f32 1.5, %v1991
      %v1993 = vmul.f32 %v1988, %v1992
      %vm1994 = vweird.f32 %v1695
      %vm1995 = vweird.f32 %v1988
      %vm1996 = vmor %vm1994, %vm1995
      %v1997 = vsel %vm1996, %v1988, %v1993
      %v1998 = vrsqrt.pop %v1696
      %v1999 = vmul.f32 %v1998, %v1696
      %v2000 = vmul.f32 %v1999, %v1998
      %v2001 = vmul.f32 0.5, %v2000
      %v2002 = vsub.f32 1.5, %v2001
      %v2003 = vmul.f32 %v1998, %v2002
      %vm2004 = vweird.f32 %v1696
      %vm2005 = vweird.f32 %v1998
      %vm2006 = vmor %vm2004, %vm2005
      %v2007 = vsel %vm2006, %v1998, %v2003
      %v2008 = vrsqrt.pop %v1697
      %v2009 = vmul.f32 %v2008, %v1697
      %v2010 = vmul.f32 %v2009, %v2008
      %v2011 = vmul.f32 0.5, %v2010
      %v2012 = vsub.f32 1.5, %v2011
      %v2013 = vmul.f32 %v2008, %v2012
      %vm2014 = vweird.f32 %v1697
      %vm2015 = vweird.f32 %v2008
      %vm2016 = vmor %vm2014, %vm2015
      %v2017 = vsel %vm2016, %v2008, %v2013
      %v2018 = vmul.f32 %v1474, %v1707
      %v2019 = vmul.f32 %v1475, %v1717
      %v2020 = vmul.f32 %v1476, %v1727
      %v2021 = vmul.f32 %v1477, %v1737
      %v2022 = vmul.f32 %v1478, %v1747
      %v2023 = vmul.f32 %v1479, %v1757
      %v2024 = vmul.f32 %v1480, %v1767
      %v2025 = vmul.f32 %v1481, %v1777
      %v2026 = vmul.f32 %v1482, %v1787
      %v2027 = vmul.f32 %v1483, %v1797
      %v2028 = vmul.f32 %v1484, %v1807
      %v2029 = vmul.f32 %v1485, %v1817
      %v2030 = vmul.f32 %v1486, %v1827
      %v2031 = vmul.f32 %v1487, %v1837
      %v2032 = vmul.f32 %v1488, %v1847
      %v2033 = vmul.f32 %v1489, %v1857
      %v2034 = vmul.f32 %v1490, %v1867
      %v2035 = vmul.f32 %v1491, %v1877
      %v2036 = vmul.f32 %v1492, %v1887
      %v2037 = vmul.f32 %v1493, %v1897
      %v2038 = vmul.f32 %v1494, %v1907
      %v2039 = vmul.f32 %v1495, %v1917
      %v2040 = vmul.f32 %v1496, %v1927
      %v2041 = vmul.f32 %v1497, %v1937
      %v2042 = vmul.f32 %v1498, %v1947
      %v2043 = vmul.f32 %v1499, %v1957
      %v2044 = vmul.f32 %v1500, %v1967
      %v2045 = vmul.f32 %v1501, %v1977
      %v2046 = vmul.f32 %v1502, %v1987
      %v2047 = vmul.f32 %v1503, %v1997
      %v2048 = vmul.f32 %v1504, %v2007
      %v2049 = vmul.f32 %v1505, %v2017
      %v2050 = vld [vmem:[%s7] sm:$0x1]
      %v2052 = vperm.slane %v2050, 0
      %v2054 = vmul.f32 %v2018, %v2052
      %v2055 = vmul.f32 %v2019, %v2052
      %v2056 = vmul.f32 %v2020, %v2052
      %v2057 = vmul.f32 %v2021, %v2052
      %v2058 = vmul.f32 %v2022, %v2052
      %v2059 = vmul.f32 %v2023, %v2052
      %v2060 = vmul.f32 %v2024, %v2052
      %v2061 = vmul.f32 %v2025, %v2052
      %v2062 = vmul.f32 %v2026, %v2052
      %v2063 = vmul.f32 %v2027, %v2052
      %v2064 = vmul.f32 %v2028, %v2052
      %v2065 = vmul.f32 %v2029, %v2052
      %v2066 = vmul.f32 %v2030, %v2052
      %v2067 = vmul.f32 %v2031, %v2052
      %v2068 = vmul.f32 %v2032, %v2052
      %v2069 = vmul.f32 %v2033, %v2052
      %v2070 = vmul.f32 %v2034, %v2052
      %v2071 = vmul.f32 %v2035, %v2052
      %v2072 = vmul.f32 %v2036, %v2052
      %v2073 = vmul.f32 %v2037, %v2052
      %v2074 = vmul.f32 %v2038, %v2052
      %v2075 = vmul.f32 %v2039, %v2052
      %v2076 = vmul.f32 %v2040, %v2052
      %v2077 = vmul.f32 %v2041, %v2052
      %v2078 = vmul.f32 %v2042, %v2052
      %v2079 = vmul.f32 %v2043, %v2052
      %v2080 = vmul.f32 %v2044, %v2052
      %v2081 = vmul.f32 %v2045, %v2052
      %v2082 = vmul.f32 %v2046, %v2052
      %v2083 = vmul.f32 %v2047, %v2052
      %v2084 = vmul.f32 %v2048, %v2052
      %v2085 = vmul.f32 %v2049, %v2052
      %v2086 = vld [vmem:[%s8] sm:$0x1]
      %v2088 = vperm.slane %v2086, 0
      %v2090 = vadd.f32 %v2054, %v2088
      %v2091 = vadd.f32 %v2055, %v2088
      %v2092 = vadd.f32 %v2056, %v2088
      %v2093 = vadd.f32 %v2057, %v2088
      %v2094 = vadd.f32 %v2058, %v2088
      %v2095 = vadd.f32 %v2059, %v2088
      %v2096 = vadd.f32 %v2060, %v2088
      %v2097 = vadd.f32 %v2061, %v2088
      %v2098 = vadd.f32 %v2062, %v2088
      %v2099 = vadd.f32 %v2063, %v2088
      %v2100 = vadd.f32 %v2064, %v2088
      %v2101 = vadd.f32 %v2065, %v2088
      %v2102 = vadd.f32 %v2066, %v2088
      %v2103 = vadd.f32 %v2067, %v2088
      %v2104 = vadd.f32 %v2068, %v2088
      %v2105 = vadd.f32 %v2069, %v2088
      %v2106 = vadd.f32 %v2070, %v2088
      %v2107 = vadd.f32 %v2071, %v2088
      %v2108 = vadd.f32 %v2072, %v2088
      %v2109 = vadd.f32 %v2073, %v2088
      %v2110 = vadd.f32 %v2074, %v2088
      %v2111 = vadd.f32 %v2075, %v2088
      %v2112 = vadd.f32 %v2076, %v2088
      %v2113 = vadd.f32 %v2077, %v2088
      %v2114 = vadd.f32 %v2078, %v2088
      %v2115 = vadd.f32 %v2079, %v2088
      %v2116 = vadd.f32 %v2080, %v2088
      %v2117 = vadd.f32 %v2081, %v2088
      %v2118 = vadd.f32 %v2082, %v2088
      %v2119 = vadd.f32 %v2083, %v2088
      %v2120 = vadd.f32 %v2084, %v2088
      %v2121 = vadd.f32 %v2085, %v2088
      %v2122 = vpack.c.bf16 %v2091, %v2090
      %v2123 = vpack.c.bf16 %v2093, %v2092
      %v2124 = vpack.c.bf16 %v2095, %v2094
      %v2125 = vpack.c.bf16 %v2097, %v2096
      %v2126 = vpack.c.bf16 %v2099, %v2098
      %v2127 = vpack.c.bf16 %v2101, %v2100
      %v2128 = vpack.c.bf16 %v2103, %v2102
      %v2129 = vpack.c.bf16 %v2105, %v2104
      %v2130 = vpack.c.bf16 %v2107, %v2106
      %v2131 = vpack.c.bf16 %v2109, %v2108
      %v2132 = vpack.c.bf16 %v2111, %v2110
      %v2133 = vpack.c.bf16 %v2113, %v2112
      %v2134 = vpack.c.bf16 %v2115, %v2114
      %v2135 = vpack.c.bf16 %v2117, %v2116
      %v2136 = vpack.c.bf16 %v2119, %v2118
      %v2137 = vpack.c.bf16 %v2121, %v2120
      %v2138 = vld [vmem:[%s9] sm:$0xf]
      %v2139 = vld [vmem:[%s9 + $0x4] sm:$0xf]
      %v2140 = vld [vmem:[%s9 + $0x8] sm:$0xf]
      %v2141 = vld [vmem:[%s10] sm:$0x1]
      %v2143 = vperm.slane %v2141, 0
      %v2148 = vunpack.c.l.b16 %v2138
      %v2149 = vunpack.c.l.b16 %v2139
      %v2150 = vunpack.c.l.b16 %v2140
      %v2151 = vpack.c.b16 %v2149, %v2148
      %v2152 = vpack.c.b16 %v2150, %v2150
      %v2155 = vsel %vm1338, %v2122, 0
      %v2158 = vsel %vm1338, %v2123, 0
      %v2161 = vsel %vm1338, %v2124, 0
      %v2164 = vsel %vm1338, %v2125, 0
      %v2167 = vsel %vm1338, %v2126, 0
      %v2170 = vsel %vm1338, %v2127, 0
      %v2173 = vsel %vm1338, %v2128, 0
      %v2176 = vsel %vm1338, %v2129, 0
      %v2179 = vsel %vm1338, %v2130, 0
      %v2182 = vsel %vm1338, %v2131, 0
      %v2185 = vsel %vm1338, %v2132, 0
      %v2188 = vsel %vm1338, %v2133, 0
      %v2191 = vsel %vm1338, %v2134, 0
      %v2194 = vsel %vm1338, %v2135, 0
      %v2197 = vsel %vm1338, %v2136, 0
      %v2200 = vsel %vm1338, %v2137, 0
      %v2203 = vsel %vm924, %v2152, 0
      %2205 = vmatpush.bf16.msra.mxu0 0
      %2206 = vmatpush.bf16.msra.mxu0 0
      %2207 = vmatpush.bf16.msra.mxu0 0
      %2208 = vmatpush.bf16.msra.mxu0 0
      %2209 = vmatpush.bf16.msra.mxu0 0
      %2210 = vmatpush.bf16.msra.mxu0 0
      %2211 = vmatpush.bf16.msra.mxu0 %v2203
      %2212 = vmatpush.bf16.msra.mxu0 %v2151
      %2213 = vmatmul.bf16.gmra.mxu0 %v2155
      %v2214 = vpop.f32.mrf.mxu0
      %v2215 = vadd.f32 %v2143, %v2214
      %v2216 = vpop.f32.mrf.mxu0
      %v2217 = vadd.f32 %v2143, %v2216
      %2218 = vmatmul.bf16.gmra.mxu0 %v2158
      %v2219 = vpop.f32.mrf.mxu0
      %v2220 = vadd.f32 %v2143, %v2219
      %v2221 = vpop.f32.mrf.mxu0
      %v2222 = vadd.f32 %v2143, %v2221
      %2223 = vmatmul.bf16.gmra.mxu0 %v2161
      %v2224 = vpop.f32.mrf.mxu0
      %v2225 = vadd.f32 %v2143, %v2224
      %v2226 = vpop.f32.mrf.mxu0
      %v2227 = vadd.f32 %v2143, %v2226
      %2228 = vmatmul.bf16.gmra.mxu0 %v2164
      %v2229 = vpop.f32.mrf.mxu0
      %v2230 = vadd.f32 %v2143, %v2229
      %v2231 = vpop.f32.mrf.mxu0
      %v2232 = vadd.f32 %v2143, %v2231
      %2233 = vmatmul.bf16.gmra.mxu0 %v2167
      %v2234 = vpop.f32.mrf.mxu0
      %v2235 = vadd.f32 %v2143, %v2234
      %v2236 = vpop.f32.mrf.mxu0
      %v2237 = vadd.f32 %v2143, %v2236
      %2238 = vmatmul.bf16.gmra.mxu0 %v2170
      %v2239 = vpop.f32.mrf.mxu0
      %v2240 = vadd.f32 %v2143, %v2239
      %v2241 = vpop.f32.mrf.mxu0
      %v2242 = vadd.f32 %v2143, %v2241
      %2243 = vmatmul.bf16.gmra.mxu0 %v2173
      %v2244 = vpop.f32.mrf.mxu0
      %v2245 = vadd.f32 %v2143, %v2244
      %v2246 = vpop.f32.mrf.mxu0
      %v2247 = vadd.f32 %v2143, %v2246
      %2248 = vmatmul.bf16.gmra.mxu0 %v2176
      %v2249 = vpop.f32.mrf.mxu0
      %v2250 = vadd.f32 %v2143, %v2249
      %v2251 = vpop.f32.mrf.mxu0
      %v2252 = vadd.f32 %v2143, %v2251
      %2253 = vmatmul.bf16.gmra.mxu0 %v2179
      %v2254 = vpop.f32.mrf.mxu0
      %v2255 = vadd.f32 %v2143, %v2254
      %v2256 = vpop.f32.mrf.mxu0
      %v2257 = vadd.f32 %v2143, %v2256
      %2258 = vmatmul.bf16.gmra.mxu0 %v2182
      %v2259 = vpop.f32.mrf.mxu0
      %v2260 = vadd.f32 %v2143, %v2259
      %v2261 = vpop.f32.mrf.mxu0
      %v2262 = vadd.f32 %v2143, %v2261
      %2263 = vmatmul.bf16.gmra.mxu0 %v2185
      %v2264 = vpop.f32.mrf.mxu0
      %v2265 = vadd.f32 %v2143, %v2264
      %v2266 = vpop.f32.mrf.mxu0
      %v2267 = vadd.f32 %v2143, %v2266
      %2268 = vmatmul.bf16.gmra.mxu0 %v2188
      %v2269 = vpop.f32.mrf.mxu0
      %v2270 = vadd.f32 %v2143, %v2269
      %v2271 = vpop.f32.mrf.mxu0
      %v2272 = vadd.f32 %v2143, %v2271
      %2273 = vmatmul.bf16.gmra.mxu0 %v2191
      %v2274 = vpop.f32.mrf.mxu0
      %v2275 = vadd.f32 %v2143, %v2274
      %v2276 = vpop.f32.mrf.mxu0
      %v2277 = vadd.f32 %v2143, %v2276
      %2278 = vmatmul.bf16.gmra.mxu0 %v2194
      %v2279 = vpop.f32.mrf.mxu0
      %v2280 = vadd.f32 %v2143, %v2279
      %v2281 = vpop.f32.mrf.mxu0
      %v2282 = vadd.f32 %v2143, %v2281
      %2283 = vmatmul.bf16.gmra.mxu0 %v2197
      %v2284 = vpop.f32.mrf.mxu0
      %v2285 = vadd.f32 %v2143, %v2284
      %v2286 = vpop.f32.mrf.mxu0
      %v2287 = vadd.f32 %v2143, %v2286
      %2288 = vmatmul.bf16.gmra.mxu0 %v2200
      %v2289 = vpop.f32.mrf.mxu0
      %v2290 = vadd.f32 %v2143, %v2289
      %v2291 = vpop.f32.mrf.mxu0
      %v2292 = vadd.f32 %v2143, %v2291
      %2293 = vdwg.mxu0
      %v2294 = vmul.f32 %v2215, 0.5
      %v2295 = vmul.f32 %v2217, 0.5
      %v2296 = vmul.f32 %v2220, 0.5
      %v2297 = vmul.f32 %v2222, 0.5
      %v2298 = vmul.f32 %v2225, 0.5
      %v2299 = vmul.f32 %v2227, 0.5
      %v2300 = vmul.f32 %v2230, 0.5
      %v2301 = vmul.f32 %v2232, 0.5
      %v2302 = vmul.f32 %v2235, 0.5
      %v2303 = vmul.f32 %v2237, 0.5
      %v2304 = vmul.f32 %v2240, 0.5
      %v2305 = vmul.f32 %v2242, 0.5
      %v2306 = vmul.f32 %v2245, 0.5
      %v2307 = vmul.f32 %v2247, 0.5
      %v2308 = vmul.f32 %v2250, 0.5
      %v2309 = vmul.f32 %v2252, 0.5
      %v2310 = vmul.f32 %v2255, 0.5
      %v2311 = vmul.f32 %v2257, 0.5
      %v2312 = vmul.f32 %v2260, 0.5
      %v2313 = vmul.f32 %v2262, 0.5
      %v2314 = vmul.f32 %v2265, 0.5
      %v2315 = vmul.f32 %v2267, 0.5
      %v2316 = vmul.f32 %v2270, 0.5
      %v2317 = vmul.f32 %v2272, 0.5
      %v2318 = vmul.f32 %v2275, 0.5
      %v2319 = vmul.f32 %v2277, 0.5
      %v2320 = vmul.f32 %v2280, 0.5
      %v2321 = vmul.f32 %v2282, 0.5
      %v2322 = vmul.f32 %v2285, 0.5
      %v2323 = vmul.f32 %v2287, 0.5
      %v2324 = vmul.f32 %v2290, 0.5
      %v2325 = vmul.f32 %v2292, 0.5
      %v2326 = vmul.f32 %v2215, 0.044715
      %v2327 = vmul.f32 %v2217, 0.044715
      %v2328 = vmul.f32 %v2220, 0.044715
      %v2329 = vmul.f32 %v2222, 0.044715
      %v2330 = vmul.f32 %v2225, 0.044715
      %v2331 = vmul.f32 %v2227, 0.044715
      %v2332 = vmul.f32 %v2230, 0.044715
      %v2333 = vmul.f32 %v2232, 0.044715
      %v2334 = vmul.f32 %v2235, 0.044715
      %v2335 = vmul.f32 %v2237, 0.044715
      %v2336 = vmul.f32 %v2240, 0.044715
      %v2337 = vmul.f32 %v2242, 0.044715
      %v2338 = vmul.f32 %v2245, 0.044715
      %v2339 = vmul.f32 %v2247, 0.044715
      %v2340 = vmul.f32 %v2250, 0.044715
      %v2341 = vmul.f32 %v2252, 0.044715
      %v2342 = vmul.f32 %v2255, 0.044715
      %v2343 = vmul.f32 %v2257, 0.044715
      %v2344 = vmul.f32 %v2260, 0.044715
      %v2345 = vmul.f32 %v2262, 0.044715
      %v2346 = vmul.f32 %v2265, 0.044715
      %v2347 = vmul.f32 %v2267, 0.044715
      %v2348 = vmul.f32 %v2270, 0.044715
      %v2349 = vmul.f32 %v2272, 0.044715
      %v2350 = vmul.f32 %v2275, 0.044715
      %v2351 = vmul.f32 %v2277, 0.044715
      %v2352 = vmul.f32 %v2280, 0.044715
      %v2353 = vmul.f32 %v2282, 0.044715
      %v2354 = vmul.f32 %v2285, 0.044715
      %v2355 = vmul.f32 %v2287, 0.044715
      %v2356 = vmul.f32 %v2290, 0.044715
      %v2357 = vmul.f32 %v2292, 0.044715
      %v2358 = vmul.f32 %v2326, %v2215
      %v2359 = vmul.f32 %v2327, %v2217
      %v2360 = vmul.f32 %v2328, %v2220
      %v2361 = vmul.f32 %v2329, %v2222
      %v2362 = vmul.f32 %v2330, %v2225
      %v2363 = vmul.f32 %v2331, %v2227
      %v2364 = vmul.f32 %v2332, %v2230
      %v2365 = vmul.f32 %v2333, %v2232
      %v2366 = vmul.f32 %v2334, %v2235
      %v2367 = vmul.f32 %v2335, %v2237
      %v2368 = vmul.f32 %v2336, %v2240
      %v2369 = vmul.f32 %v2337, %v2242
      %v2370 = vmul.f32 %v2338, %v2245
      %v2371 = vmul.f32 %v2339, %v2247
      %v2372 = vmul.f32 %v2340, %v2250
      %v2373 = vmul.f32 %v2341, %v2252
      %v2374 = vmul.f32 %v2342, %v2255
      %v2375 = vmul.f32 %v2343, %v2257
      %v2376 = vmul.f32 %v2344, %v2260
      %v2377 = vmul.f32 %v2345, %v2262
      %v2378 = vmul.f32 %v2346, %v2265
      %v2379 = vmul.f32 %v2347, %v2267
      %v2380 = vmul.f32 %v2348, %v2270
      %v2381 = vmul.f32 %v2349, %v2272
      %v2382 = vmul.f32 %v2350, %v2275
      %v2383 = vmul.f32 %v2351, %v2277
      %v2384 = vmul.f32 %v2352, %v2280
      %v2385 = vmul.f32 %v2353, %v2282
      %v2386 = vmul.f32 %v2354, %v2285
      %v2387 = vmul.f32 %v2355, %v2287
      %v2388 = vmul.f32 %v2356, %v2290
      %v2389 = vmul.f32 %v2357, %v2292
      %v2390 = vmul.f32 %v2358, %v2215
      %v2391 = vmul.f32 %v2359, %v2217
      %v2392 = vmul.f32 %v2360, %v2220
      %v2393 = vmul.f32 %v2361, %v2222
      %v2394 = vmul.f32 %v2362, %v2225
      %v2395 = vmul.f32 %v2363, %v2227
      %v2396 = vmul.f32 %v2364, %v2230
      %v2397 = vmul.f32 %v2365, %v2232
      %v2398 = vmul.f32 %v2366, %v2235
      %v2399 = vmul.f32 %v2367, %v2237
      %v2400 = vmul.f32 %v2368, %v2240
      %v2401 = vmul.f32 %v2369, %v2242
      %v2402 = vmul.f32 %v2370, %v2245
      %v2403 = vmul.f32 %v2371, %v2247
      %v2404 = vmul.f32 %v2372, %v2250
      %v2405 = vmul.f32 %v2373, %v2252
      %v2406 = vmul.f32 %v2374, %v2255
      %v2407 = vmul.f32 %v2375, %v2257
      %v2408 = vmul.f32 %v2376, %v2260
      %v2409 = vmul.f32 %v2377, %v2262
      %v2410 = vmul.f32 %v2378, %v2265
      %v2411 = vmul.f32 %v2379, %v2267
      %v2412 = vmul.f32 %v2380, %v2270
      %v2413 = vmul.f32 %v2381, %v2272
      %v2414 = vmul.f32 %v2382, %v2275
      %v2415 = vmul.f32 %v2383, %v2277
      %v2416 = vmul.f32 %v2384, %v2280
      %v2417 = vmul.f32 %v2385, %v2282
      %v2418 = vmul.f32 %v2386, %v2285
      %v2419 = vmul.f32 %v2387, %v2287
      %v2420 = vmul.f32 %v2388, %v2290
      %v2421 = vmul.f32 %v2389, %v2292
      %v2422 = vadd.f32 %v2215, %v2390
      %v2423 = vadd.f32 %v2217, %v2391
      %v2424 = vadd.f32 %v2220, %v2392
      %v2425 = vadd.f32 %v2222, %v2393
      %v2426 = vadd.f32 %v2225, %v2394
      %v2427 = vadd.f32 %v2227, %v2395
      %v2428 = vadd.f32 %v2230, %v2396
      %v2429 = vadd.f32 %v2232, %v2397
      %v2430 = vadd.f32 %v2235, %v2398
      %v2431 = vadd.f32 %v2237, %v2399
      %v2432 = vadd.f32 %v2240, %v2400
      %v2433 = vadd.f32 %v2242, %v2401
      %v2434 = vadd.f32 %v2245, %v2402
      %v2435 = vadd.f32 %v2247, %v2403
      %v2436 = vadd.f32 %v2250, %v2404
      %v2437 = vadd.f32 %v2252, %v2405
      %v2438 = vadd.f32 %v2255, %v2406
      %v2439 = vadd.f32 %v2257, %v2407
      %v2440 = vadd.f32 %v2260, %v2408
      %v2441 = vadd.f32 %v2262, %v2409
      %v2442 = vadd.f32 %v2265, %v2410
      %v2443 = vadd.f32 %v2267, %v2411
      %v2444 = vadd.f32 %v2270, %v2412
      %v2445 = vadd.f32 %v2272, %v2413
      %v2446 = vadd.f32 %v2275, %v2414
      %v2447 = vadd.f32 %v2277, %v2415
      %v2448 = vadd.f32 %v2280, %v2416
      %v2449 = vadd.f32 %v2282, %v2417
      %v2450 = vadd.f32 %v2285, %v2418
      %v2451 = vadd.f32 %v2287, %v2419
      %v2452 = vadd.f32 %v2290, %v2420
      %v2453 = vadd.f32 %v2292, %v2421
      %v2454 = vmul.f32 %v2422, 0.7978846
      %v2455 = vmul.f32 %v2423, 0.7978846
      %v2456 = vmul.f32 %v2424, 0.7978846
      %v2457 = vmul.f32 %v2425, 0.7978846
      %v2458 = vmul.f32 %v2426, 0.7978846
      %v2459 = vmul.f32 %v2427, 0.7978846
      %v2460 = vmul.f32 %v2428, 0.7978846
      %v2461 = vmul.f32 %v2429, 0.7978846
      %v2462 = vmul.f32 %v2430, 0.7978846
      %v2463 = vmul.f32 %v2431, 0.7978846
      %v2464 = vmul.f32 %v2432, 0.7978846
      %v2465 = vmul.f32 %v2433, 0.7978846
      %v2466 = vmul.f32 %v2434, 0.7978846
      %v2467 = vmul.f32 %v2435, 0.7978846
      %v2468 = vmul.f32 %v2436, 0.7978846
      %v2469 = vmul.f32 %v2437, 0.7978846
      %v2470 = vmul.f32 %v2438, 0.7978846
      %v2471 = vmul.f32 %v2439, 0.7978846
      %v2472 = vmul.f32 %v2440, 0.7978846
      %v2473 = vmul.f32 %v2441, 0.7978846
      %v2474 = vmul.f32 %v2442, 0.7978846
      %v2475 = vmul.f32 %v2443, 0.7978846
      %v2476 = vmul.f32 %v2444, 0.7978846
      %v2477 = vmul.f32 %v2445, 0.7978846
      %v2478 = vmul.f32 %v2446, 0.7978846
      %v2479 = vmul.f32 %v2447, 0.7978846
      %v2480 = vmul.f32 %v2448, 0.7978846
      %v2481 = vmul.f32 %v2449, 0.7978846
      %v2482 = vmul.f32 %v2450, 0.7978846
      %v2483 = vmul.f32 %v2451, 0.7978846
      %v2484 = vmul.f32 %v2452, 0.7978846
      %v2485 = vmul.f32 %v2453, 0.7978846
      %v2486 = vtanh.pop %v2454
      %v2487 = vtanh.pop %v2455
      %v2488 = vtanh.pop %v2456
      %v2489 = vtanh.pop %v2457
      %v2490 = vtanh.pop %v2458
      %v2491 = vtanh.pop %v2459
      %v2492 = vtanh.pop %v2460
      %v2493 = vtanh.pop %v2461
      %v2494 = vtanh.pop %v2462
      %v2495 = vtanh.pop %v2463
      %v2496 = vtanh.pop %v2464
      %v2497 = vtanh.pop %v2465
      %v2498 = vtanh.pop %v2466
      %v2499 = vtanh.pop %v2467
      %v2500 = vtanh.pop %v2468
      %v2501 = vtanh.pop %v2469
      %v2502 = vtanh.pop %v2470
      %v2503 = vtanh.pop %v2471
      %v2504 = vtanh.pop %v2472
      %v2505 = vtanh.pop %v2473
      %v2506 = vtanh.pop %v2474
      %v2507 = vtanh.pop %v2475
      %v2508 = vtanh.pop %v2476
      %v2509 = vtanh.pop %v2477
      %v2510 = vtanh.pop %v2478
      %v2511 = vtanh.pop %v2479
      %v2512 = vtanh.pop %v2480
      %v2513 = vtanh.pop %v2481
      %v2514 = vtanh.pop %v2482
      %v2515 = vtanh.pop %v2483
      %v2516 = vtanh.pop %v2484
      %v2517 = vtanh.pop %v2485
      %v2518 = vadd.f32 %v2486, 1.0
      %v2519 = vadd.f32 %v2487, 1.0
      %v2520 = vadd.f32 %v2488, 1.0
      %v2521 = vadd.f32 %v2489, 1.0
      %v2522 = vadd.f32 %v2490, 1.0
      %v2523 = vadd.f32 %v2491, 1.0
      %v2524 = vadd.f32 %v2492, 1.0
      %v2525 = vadd.f32 %v2493, 1.0
      %v2526 = vadd.f32 %v2494, 1.0
      %v2527 = vadd.f32 %v2495, 1.0
      %v2528 = vadd.f32 %v2496, 1.0
      %v2529 = vadd.f32 %v2497, 1.0
      %v2530 = vadd.f32 %v2498, 1.0
      %v2531 = vadd.f32 %v2499, 1.0
      %v2532 = vadd.f32 %v2500, 1.0
      %v2533 = vadd.f32 %v2501, 1.0
      %v2534 = vadd.f32 %v2502, 1.0
      %v2535 = vadd.f32 %v2503, 1.0
      %v2536 = vadd.f32 %v2504, 1.0
      %v2537 = vadd.f32 %v2505, 1.0
      %v2538 = vadd.f32 %v2506, 1.0
      %v2539 = vadd.f32 %v2507, 1.0
      %v2540 = vadd.f32 %v2508, 1.0
      %v2541 = vadd.f32 %v2509, 1.0
      %v2542 = vadd.f32 %v2510, 1.0
      %v2543 = vadd.f32 %v2511, 1.0
      %v2544 = vadd.f32 %v2512, 1.0
      %v2545 = vadd.f32 %v2513, 1.0
      %v2546 = vadd.f32 %v2514, 1.0
      %v2547 = vadd.f32 %v2515, 1.0
      %v2548 = vadd.f32 %v2516, 1.0
      %v2549 = vadd.f32 %v2517, 1.0
      %v2550 = vmul.f32 %v2294, %v2518
      %v2551 = vmul.f32 %v2295, %v2519
      %v2552 = vmul.f32 %v2296, %v2520
      %v2553 = vmul.f32 %v2297, %v2521
      %v2554 = vmul.f32 %v2298, %v2522
      %v2555 = vmul.f32 %v2299, %v2523
      %v2556 = vmul.f32 %v2300, %v2524
      %v2557 = vmul.f32 %v2301, %v2525
      %v2558 = vmul.f32 %v2302, %v2526
      %v2559 = vmul.f32 %v2303, %v2527
      %v2560 = vmul.f32 %v2304, %v2528
      %v2561 = vmul.f32 %v2305, %v2529
      %v2562 = vmul.f32 %v2306, %v2530
      %v2563 = vmul.f32 %v2307, %v2531
      %v2564 = vmul.f32 %v2308, %v2532
      %v2565 = vmul.f32 %v2309, %v2533
      %v2566 = vmul.f32 %v2310, %v2534
      %v2567 = vmul.f32 %v2311, %v2535
      %v2568 = vmul.f32 %v2312, %v2536
      %v2569 = vmul.f32 %v2313, %v2537
      %v2570 = vmul.f32 %v2314, %v2538
      %v2571 = vmul.f32 %v2315, %v2539
      %v2572 = vmul.f32 %v2316, %v2540
      %v2573 = vmul.f32 %v2317, %v2541
      %v2574 = vmul.f32 %v2318, %v2542
      %v2575 = vmul.f32 %v2319, %v2543
      %v2576 = vmul.f32 %v2320, %v2544
      %v2577 = vmul.f32 %v2321, %v2545
      %v2578 = vmul.f32 %v2322, %v2546
      %v2579 = vmul.f32 %v2323, %v2547
      %v2580 = vmul.f32 %v2324, %v2548
      %v2581 = vmul.f32 %v2325, %v2549
      %v2582 = vpack.c.bf16 %v2550, %v2550
      %v2583 = vpack.c.bf16 %v2551, %v2551
      %v2584 = vpack.c.bf16 %v2552, %v2552
      %v2585 = vpack.c.bf16 %v2553, %v2553
      %v2586 = vpack.c.bf16 %v2554, %v2554
      %v2587 = vpack.c.bf16 %v2555, %v2555
      %v2588 = vpack.c.bf16 %v2556, %v2556
      %v2589 = vpack.c.bf16 %v2557, %v2557
      %v2590 = vpack.c.bf16 %v2558, %v2558
      %v2591 = vpack.c.bf16 %v2559, %v2559
      %v2592 = vpack.c.bf16 %v2560, %v2560
      %v2593 = vpack.c.bf16 %v2561, %v2561
      %v2594 = vpack.c.bf16 %v2562, %v2562
      %v2595 = vpack.c.bf16 %v2563, %v2563
      %v2596 = vpack.c.bf16 %v2564, %v2564
      %v2597 = vpack.c.bf16 %v2565, %v2565
      %v2598 = vpack.c.bf16 %v2566, %v2566
      %v2599 = vpack.c.bf16 %v2567, %v2567
      %v2600 = vpack.c.bf16 %v2568, %v2568
      %v2601 = vpack.c.bf16 %v2569, %v2569
      %v2602 = vpack.c.bf16 %v2570, %v2570
      %v2603 = vpack.c.bf16 %v2571, %v2571
      %v2604 = vpack.c.bf16 %v2572, %v2572
      %v2605 = vpack.c.bf16 %v2573, %v2573
      %v2606 = vpack.c.bf16 %v2574, %v2574
      %v2607 = vpack.c.bf16 %v2575, %v2575
      %v2608 = vpack.c.bf16 %v2576, %v2576
      %v2609 = vpack.c.bf16 %v2577, %v2577
      %v2610 = vpack.c.bf16 %v2578, %v2578
      %v2611 = vpack.c.bf16 %v2579, %v2579
      %v2612 = vpack.c.bf16 %v2580, %v2580
      %v2613 = vpack.c.bf16 %v2581, %v2581
      %vm2614 = vcmask 60416
      %2615 = vst.msk [vmem:[%s432] sm:$0xf] %vm2614, %v2582
      %2616 = vst.msk [vmem:[%s432 + $0x4] sm:$0xf] %vm2614, %v2583
      %2617 = vst.msk [vmem:[%s432 + $0x8] sm:$0xf] %vm2614, %v2584
      %2618 = vst.msk [vmem:[%s432 + $0xc] sm:$0xf] %vm2614, %v2585
      %2619 = vst.msk [vmem:[%s432 + $0x10] sm:$0xf] %vm2614, %v2586
      %2620 = vst.msk [vmem:[%s432 + $0x14] sm:$0xf] %vm2614, %v2587
      %2621 = vst.msk [vmem:[%s432 + $0x18] sm:$0xf] %vm2614, %v2588
      %2622 = vst.msk [vmem:[%s432 + $0x1c] sm:$0xf] %vm2614, %v2589
      %2623 = vst.msk [vmem:[%s432 + $0x20] sm:$0xf] %vm2614, %v2590
      %2624 = vst.msk [vmem:[%s432 + $0x24] sm:$0xf] %vm2614, %v2591
      %2625 = vst.msk [vmem:[%s432 + $0x28] sm:$0xf] %vm2614, %v2592
      %2626 = vst.msk [vmem:[%s432 + $0x2c] sm:$0xf] %vm2614, %v2593
      %2627 = vst.msk [vmem:[%s432 + $0x30] sm:$0xf] %vm2614, %v2594
      %2628 = vst.msk [vmem:[%s432 + $0x34] sm:$0xf] %vm2614, %v2595
      %2629 = vst.msk [vmem:[%s432 + $0x38] sm:$0xf] %vm2614, %v2596
      %2630 = vst.msk [vmem:[%s432 + $0x3c] sm:$0xf] %vm2614, %v2597
      %2631 = vst.msk [vmem:[%s432 + $0x40] sm:$0xf] %vm2614, %v2598
      %2632 = vst.msk [vmem:[%s432 + $0x44] sm:$0xf] %vm2614, %v2599
      %2633 = vst.msk [vmem:[%s432 + $0x48] sm:$0xf] %vm2614, %v2600
      %2634 = vst.msk [vmem:[%s432 + $0x4c] sm:$0xf] %vm2614, %v2601
      %2635 = vst.msk [vmem:[%s432 + $0x50] sm:$0xf] %vm2614, %v2602
      %2636 = vst.msk [vmem:[%s432 + $0x54] sm:$0xf] %vm2614, %v2603
      %2637 = vst.msk [vmem:[%s432 + $0x58] sm:$0xf] %vm2614, %v2604
      %2638 = vst.msk [vmem:[%s432 + $0x5c] sm:$0xf] %vm2614, %v2605
      %2639 = vst.msk [vmem:[%s432 + $0x60] sm:$0xf] %vm2614, %v2606
      %2640 = vst.msk [vmem:[%s432 + $0x64] sm:$0xf] %vm2614, %v2607
      %2641 = vst.msk [vmem:[%s432 + $0x68] sm:$0xf] %vm2614, %v2608
      %2642 = vst.msk [vmem:[%s432 + $0x6c] sm:$0xf] %vm2614, %v2609
      %2643 = vst.msk [vmem:[%s432 + $0x70] sm:$0xf] %vm2614, %v2610
      %2644 = vst.msk [vmem:[%s432 + $0x74] sm:$0xf] %vm2614, %v2611
      %2645 = vst.msk [vmem:[%s432 + $0x78] sm:$0xf] %vm2614, %v2612
      %2646 = vst.msk [vmem:[%s432 + $0x7c] sm:$0xf] %vm2614, %v2613
      %s2647 = smul.u32 32, %s22
      %p2648 = scmp.lt.s32.totalorder %s2647, 63
      %s2649 = scalar_select %p2648, %s2647, 63
      %s2650 = smul.addr %s2649, 4
      %s2651 = scalar_lea.vmem %s11, %s2650
      // Predicated region
      $region65: #{hifuse_block_forward.5} parent=63 // pred_check
        %p2652 = pneg %p286
      $region66: #{hifuse_block_forward.5} parent=63 // pred_check_branch
        %2654 = sbr.rel (%p2652) target = $region68
      $region67: #{hifuse_block_forward.5} parent=63 // pred_region
        %s2655 = smul.u32 32, %s22
      $region68: #{hifuse_block_forward.5} parent=63 // pred_fallthru
        _
    $region64: #{hifuse_block_forward.5} parent=5 // pred_fallthru
      _
    %p2656 = scmp.le.s32.totalorder 2, %s17
    // Predicated region
    $region69: #{hifuse_block_forward.5} parent=5 // pred_check
      %p2657 = pneg %p2656
    $region70: #{hifuse_block_forward.5} parent=5 // pred_check_branch
      %2659 = sbr.rel (%p2657) target = $region72
    $region71: #{hifuse_block_forward.5} parent=5 // pred_region
      %s2660 = ssub.s32 %s17, 2
      // Predicated region
      $region73: #{hifuse_block_forward.5} parent=71 // pred_check
        %p2661 = pneg %p292
      $region74: #{hifuse_block_forward.5} parent=71 // pred_check_branch
        %2663 = sbr.rel (%p2661) target = $region76
      $region75: #{hifuse_block_forward.5} parent=71 // pred_region
        %s2664 = smul.u32 32, %s23
        %p2665 = scmp.lt.s32.totalorder %s2664, 63
        %s2666 = scalar_select %p2665, %s2664, 63
        %s2667 = smul.addr %s2666, 4
        %s2668 = scalar_lea.vmem %s11, %s2667
      $region76: #{hifuse_block_forward.5} parent=71 // pred_fallthru
        _
    $region72: #{hifuse_block_forward.5} parent=5 // pred_fallthru
      _
  $region6: #{hifuse_block_forward.5} parent=0 // loop_footer
    %s21 = sadd.s32 1, %s17
  $region7: #{hifuse_block_forward.5} parent=0 // loop_footer_branch
    %16 = sbr.rel target = $region3
  $region8: #{hifuse_block_forward.5} parent=0 // loop_exit
    _

// kernel: hifuse_block_forward.7
$region0: #{hifuse_block_forward.7}
  #allocation0 [shape = 'u32[]', space=smem, size = 0x4, offset = 0x4, fixed_abs, tag = 'smem constant byte address 0x4 - core index']
  #allocation1 [shape = 'u32[72,128]{1,0:T(1,128)}', space=vmem, size = 0x9000, scoped, tag = 'internal scratch']
  #allocation2 [shape = 'f32[18,18,20]{2,1,0:T(8,128)}', space=vmem, size = 0x36000, scoped, tag = 'scratch operand']
  %s0 = inlined_call_operand.vmem [shape: bf16[2,16,16,8], index: 0, kind: input, shape index: {}]
  %s1 = inlined_call_operand.vmem [shape: bf16[2,16,16,4], index: 1, kind: input, shape index: {}]
  %s2 = inlined_call_operand.vmem [shape: bf16[2,16,16,8], index: 2, kind: input, shape index: {}]
  %s3 = inlined_call_operand.vmem [shape: bf16[2,256,8], index: 3, kind: input, shape index: {}]
  %s4 = inlined_call_operand.vmem [shape: bf16[8,4], index: 4, kind: input, shape index: {}]
  %s5 = inlined_call_operand.vmem [shape: bf16[4,8], index: 5, kind: input, shape index: {}]
  %s6 = inlined_call_operand.vmem [shape: f32[1,20], index: 6, kind: input, shape index: {}]
  %s7 = inlined_call_operand.vmem [shape: f32[1,20], index: 7, kind: input, shape index: {}]
  %s8 = inlined_call_operand.vmem [shape: f32[9,20], index: 8, kind: input, shape index: {}]
  %s9 = inlined_call_operand.vmem [shape: f32[1,20], index: 9, kind: input, shape index: {}]
  %s10 = inlined_call_operand.vmem [shape: f32[1,20], index: 10, kind: input, shape index: {}]
  %s11 = inlined_call_operand.vmem [shape: bf16[20,80], index: 11, kind: input, shape index: {}]
  %s12 = inlined_call_operand.vmem [shape: bf16[80,8], index: 12, kind: input, shape index: {}]
  %s13 = inlined_call_operand.vmem [shape: f32[1,8], index: 13, kind: input, shape index: {}]
  %s14 = inlined_call_operand.vmem [shape: f32[2,256,8], index: 14, kind: output, shape index: {}]
  %s15 = sld [smem:[#allocation0]]
  $region89: #{hifuse_block_forward.7} parent=0
    _
  %s17 = ssub.s32 1, %s15
  %s18 = scalar_select 0, %s17, %s15
  loop: start=0, step=1, limit=4
  $region2: #{hifuse_block_forward.7} parent=0 // loop_pre_header
    _
  $region3: #{hifuse_block_forward.7} parent=0 // loop_header
    %s20 = sphi 0, %s24
    %p21 = scmp.ge.s32.totalorder %s20, 4
    %s30 = sphi 0, %s32
    %s33 = sphi 0, %s30
    %s34 = sphi 0, %s33
    %s50 = sphi 0, %s34
    %s56 = sphi 0, %s58
    %s59 = sphi 0, %s56
    %s60 = sphi 0, %s59
    %s76 = sphi 0, %s60
    %s82 = sphi 0, %s84
    %s85 = sphi 0, %s82
    %s86 = sphi 0, %s85
    %s102 = sphi 0, %s86
    %s108 = sphi 0, %s110
    %s111 = sphi 0, %s108
    %s112 = sphi 0, %s111
    %s128 = sphi 0, %s112
    %s132 = sphi 0, %s132
    %s134 = sphi 0, %s132
    %s135 = sphi 0, %s134
    %s149 = sphi 0, %s135
    %s153 = sphi 0, %s153
    %s155 = sphi 0, %s153
    %s156 = sphi 0, %s155
    %s170 = sphi 0, %s156
    %s174 = sphi 0, %s174
    %s176 = sphi 0, %s174
    %s177 = sphi 0, %s176
    %s191 = sphi 0, %s177
    %s195 = sphi 0, %s195
    %s197 = sphi 0, %s195
    %s198 = sphi 0, %s197
    %s212 = sphi 0, %s198
    %s216 = sphi 0, %s216
    %s218 = sphi 0, %s216
    %s219 = sphi 0, %s218
    %s233 = sphi 0, %s219
    %s237 = sphi 0, %s237
    %s239 = sphi 0, %s237
    %s240 = sphi 0, %s239
    %s254 = sphi 0, %s240
    %s258 = sphi 0, %s258
    %s260 = sphi 0, %s258
    %s261 = sphi 0, %s260
    %s275 = sphi 0, %s261
    %s279 = sphi 0, %s279
    %s281 = sphi 0, %s279
    %s282 = sphi 0, %s281
    %s296 = sphi 0, %s282
    %s300 = sphi 0, %s300
    %s302 = sphi 0, %s300
    %s303 = sphi 0, %s302
    %s317 = sphi 0, %s303
    %s321 = sphi 0, %s321
    %s323 = sphi 0, %s321
    %s324 = sphi 0, %s323
    %s338 = sphi 0, %s324
    %s344 = sphi 0, %s346
    %s347 = sphi 0, %s344
    %s348 = sphi 0, %s347
    %s364 = sphi 0, %s348
  $region4: #{hifuse_block_forward.7} parent=0 // loop_header_branch
    %23 = sbr.rel (%p21) target = $region8
  $region5: #{hifuse_block_forward.7} parent=0 // loop_body
    %s25 = ssub.s32 %s20, 1
    %s26 = ssub.s32 %s20, 2
    %s27 = sadd.s32 %s20, 1
    %s28 = ssub.s32 %s20, %s27
    %p29 = scmp.eq.s32.totalorder %s28, 0
    %s31 = sadd.s32 %s30, 1
    %s32 = scalar_select %p29, %s30, %s31
    %p35 = pneg %p29
    %p36 = scmp.eq.s32.totalorder %s20, 1
    %p37 = por %p35, %p36
    %p38 = scmp.ne.s32.totalorder %s30, %s33
    %p39 = scmp.eq.s32.totalorder %s20, 0
    %p40 = por %p38, %p39
    %p41 = scmp.ne.s32.totalorder %s30, %s33
    %p42 = scmp.eq.s32.totalorder %s25, 1
    %p43 = por %p41, %p42
    %p44 = scmp.ne.s32.totalorder %s33, %s34
    %p45 = scmp.eq.s32.totalorder %s25, 0
    %p46 = por %p44, %p45
    %p47 = scmp.ne.s32.totalorder %s33, %s34
    %p48 = scmp.eq.s32.totalorder %s26, 1
    %p49 = por %p47, %p48
    %p51 = scmp.ne.s32.totalorder %s34, %s50
    %p52 = scmp.eq.s32.totalorder %s26, 0
    %p53 = por %p51, %p52
    %s54 = ssub.s32 %s20, %s27
    %p55 = scmp.eq.s32.totalorder %s54, 0
    %s57 = sadd.s32 %s56, 1
    %s58 = scalar_select %p55, %s56, %s57
    %p61 = pneg %p55
    %p62 = scmp.eq.s32.totalorder %s20, 1
    %p63 = por %p61, %p62
    %p64 = scmp.ne.s32.totalorder %s56, %s59
    %p65 = scmp.eq.s32.totalorder %s20, 0
    %p66 = por %p64, %p65
    %p67 = scmp.ne.s32.totalorder %s56, %s59
    %p68 = scmp.eq.s32.totalorder %s25, 1
    %p69 = por %p67, %p68
    %p70 = scmp.ne.s32.totalorder %s59, %s60
    %p71 = scmp.eq.s32.totalorder %s25, 0
    %p72 = por %p70, %p71
    %p73 = scmp.ne.s32.totalorder %s59, %s60
    %p74 = scmp.eq.s32.totalorder %s26, 1
    %p75 = por %p73, %p74
    %p77 = scmp.ne.s32.totalorder %s60, %s76
    %p78 = scmp.eq.s32.totalorder %s26, 0
    %p79 = por %p77, %p78
    %s80 = ssub.s32 %s20, %s27
    %p81 = scmp.eq.s32.totalorder %s80, 0
    %s83 = sadd.s32 %s82, 1
    %s84 = scalar_select %p81, %s82, %s83
    %p87 = pneg %p81
    %p88 = scmp.eq.s32.totalorder %s20, 1
    %p89 = por %p87, %p88
    %p90 = scmp.ne.s32.totalorder %s82, %s85
    %p91 = scmp.eq.s32.totalorder %s20, 0
    %p92 = por %p90, %p91
    %p93 = scmp.ne.s32.totalorder %s82, %s85
    %p94 = scmp.eq.s32.totalorder %s25, 1
    %p95 = por %p93, %p94
    %p96 = scmp.ne.s32.totalorder %s85, %s86
    %p97 = scmp.eq.s32.totalorder %s25, 0
    %p98 = por %p96, %p97
    %p99 = scmp.ne.s32.totalorder %s85, %s86
    %p100 = scmp.eq.s32.totalorder %s26, 1
    %p101 = por %p99, %p100
    %p103 = scmp.ne.s32.totalorder %s86, %s102
    %p104 = scmp.eq.s32.totalorder %s26, 0
    %p105 = por %p103, %p104
    %s106 = ssub.s32 %s20, %s27
    %p107 = scmp.eq.s32.totalorder %s106, 0
    %s109 = sadd.s32 %s108, 1
    %s110 = scalar_select %p107, %s108, %s109
    %p113 = pneg %p107
    %p114 = scmp.eq.s32.totalorder %s20, 1
    %p115 = por %p113, %p114
    %p116 = scmp.ne.s32.totalorder %s108, %s111
    %p117 = scmp.eq.s32.totalorder %s20, 0
    %p118 = por %p116, %p117
    %p119 = scmp.ne.s32.totalorder %s108, %s111
    %p120 = scmp.eq.s32.totalorder %s25, 1
    %p121 = por %p119, %p120
    %p122 = scmp.ne.s32.totalorder %s111, %s112
    %p123 = scmp.eq.s32.totalorder %s25, 0
    %p124 = por %p122, %p123
    %p125 = scmp.ne.s32.totalorder %s111, %s112
    %p126 = scmp.eq.s32.totalorder %s26, 1
    %p127 = por %p125, %p126
    %p129 = scmp.ne.s32.totalorder %s112, %s128
    %p130 = scmp.eq.s32.totalorder %s26, 0
    %p131 = por %p129, %p130
    %s133 = sadd.s32 %s132, 1
    %p136 = scmp.eq.s32.totalorder %s20, 1
    %p137 = scmp.ne.s32.totalorder %s132, %s134
    %p138 = scmp.eq.s32.totalorder %s20, 0
    %p139 = por %p137, %p138
    %p140 = scmp.ne.s32.totalorder %s132, %s134
    %p141 = scmp.eq.s32.totalorder %s25, 1
    %p142 = por %p140, %p141
    %p143 = scmp.ne.s32.totalorder %s134, %s135
    %p144 = scmp.eq.s32.totalorder %s25, 0
    %p145 = por %p143, %p144
    %p146 = scmp.ne.s32.totalorder %s134, %s135
    %p147 = scmp.eq.s32.totalorder %s26, 1
    %p148 = por %p146, %p147
    %p150 = scmp.ne.s32.totalorder %s135, %s149
    %p151 = scmp.eq.s32.totalorder %s26, 0
    %p152 = por %p150, %p151
    %s154 = sadd.s32 %s153, 1
    %p157 = scmp.eq.s32.totalorder %s20, 1
    %p158 = scmp.ne.s32.totalorder %s153, %s155
    %p159 = scmp.eq.s32.totalorder %s20, 0
    %p160 = por %p158, %p159
    %p161 = scmp.ne.s32.totalorder %s153, %s155
    %p162 = scmp.eq.s32.totalorder %s25, 1
    %p163 = por %p161, %p162
    %p164 = scmp.ne.s32.totalorder %s155, %s156
    %p165 = scmp.eq.s32.totalorder %s25, 0
    %p166 = por %p164, %p165
    %p167 = scmp.ne.s32.totalorder %s155, %s156
    %p168 = scmp.eq.s32.totalorder %s26, 1
    %p169 = por %p167, %p168
    %p171 = scmp.ne.s32.totalorder %s156, %s170
    %p172 = scmp.eq.s32.totalorder %s26, 0
    %p173 = por %p171, %p172
    %s175 = sadd.s32 %s174, 1
    %p178 = scmp.eq.s32.totalorder %s20, 1
    %p179 = scmp.ne.s32.totalorder %s174, %s176
    %p180 = scmp.eq.s32.totalorder %s20, 0
    %p181 = por %p179, %p180
    %p182 = scmp.ne.s32.totalorder %s174, %s176
    %p183 = scmp.eq.s32.totalorder %s25, 1
    %p184 = por %p182, %p183
    %p185 = scmp.ne.s32.totalorder %s176, %s177
    %p186 = scmp.eq.s32.totalorder %s25, 0
    %p187 = por %p185, %p186
    %p188 = scmp.ne.s32.totalorder %s176, %s177
    %p189 = scmp.eq.s32.totalorder %s26, 1
    %p190 = por %p188, %p189
    %p192 = scmp.ne.s32.totalorder %s177, %s191
    %p193 = scmp.eq.s32.totalorder %s26, 0
    %p194 = por %p192, %p193
    %s196 = sadd.s32 %s195, 1
    %p199 = scmp.eq.s32.totalorder %s20, 1
    %p200 = scmp.ne.s32.totalorder %s195, %s197
    %p201 = scmp.eq.s32.totalorder %s20, 0
    %p202 = por %p200, %p201
    %p203 = scmp.ne.s32.totalorder %s195, %s197
    %p204 = scmp.eq.s32.totalorder %s25, 1
    %p205 = por %p203, %p204
    %p206 = scmp.ne.s32.totalorder %s197, %s198
    %p207 = scmp.eq.s32.totalorder %s25, 0
    %p208 = por %p206, %p207
    %p209 = scmp.ne.s32.totalorder %s197, %s198
    %p210 = scmp.eq.s32.totalorder %s26, 1
    %p211 = por %p209, %p210
    %p213 = scmp.ne.s32.totalorder %s198, %s212
    %p214 = scmp.eq.s32.totalorder %s26, 0
    %p215 = por %p213, %p214
    %s217 = sadd.s32 %s216, 1
    %p220 = scmp.eq.s32.totalorder %s20, 1
    %p221 = scmp.ne.s32.totalorder %s216, %s218
    %p222 = scmp.eq.s32.totalorder %s20, 0
    %p223 = por %p221, %p222
    %p224 = scmp.ne.s32.totalorder %s216, %s218
    %p225 = scmp.eq.s32.totalorder %s25, 1
    %p226 = por %p224, %p225
    %p227 = scmp.ne.s32.totalorder %s218, %s219
    %p228 = scmp.eq.s32.totalorder %s25, 0
    %p229 = por %p227, %p228
    %p230 = scmp.ne.s32.totalorder %s218, %s219
    %p231 = scmp.eq.s32.totalorder %s26, 1
    %p232 = por %p230, %p231
    %p234 = scmp.ne.s32.totalorder %s219, %s233
    %p235 = scmp.eq.s32.totalorder %s26, 0
    %p236 = por %p234, %p235
    %s238 = sadd.s32 %s237, 1
    %p241 = scmp.eq.s32.totalorder %s20, 1
    %p242 = scmp.ne.s32.totalorder %s237, %s239
    %p243 = scmp.eq.s32.totalorder %s20, 0
    %p244 = por %p242, %p243
    %p245 = scmp.ne.s32.totalorder %s237, %s239
    %p246 = scmp.eq.s32.totalorder %s25, 1
    %p247 = por %p245, %p246
    %p248 = scmp.ne.s32.totalorder %s239, %s240
    %p249 = scmp.eq.s32.totalorder %s25, 0
    %p250 = por %p248, %p249
    %p251 = scmp.ne.s32.totalorder %s239, %s240
    %p252 = scmp.eq.s32.totalorder %s26, 1
    %p253 = por %p251, %p252
    %p255 = scmp.ne.s32.totalorder %s240, %s254
    %p256 = scmp.eq.s32.totalorder %s26, 0
    %p257 = por %p255, %p256
    %s259 = sadd.s32 %s258, 1
    %p262 = scmp.eq.s32.totalorder %s20, 1
    %p263 = scmp.ne.s32.totalorder %s258, %s260
    %p264 = scmp.eq.s32.totalorder %s20, 0
    %p265 = por %p263, %p264
    %p266 = scmp.ne.s32.totalorder %s258, %s260
    %p267 = scmp.eq.s32.totalorder %s25, 1
    %p268 = por %p266, %p267
    %p269 = scmp.ne.s32.totalorder %s260, %s261
    %p270 = scmp.eq.s32.totalorder %s25, 0
    %p271 = por %p269, %p270
    %p272 = scmp.ne.s32.totalorder %s260, %s261
    %p273 = scmp.eq.s32.totalorder %s26, 1
    %p274 = por %p272, %p273
    %p276 = scmp.ne.s32.totalorder %s261, %s275
    %p277 = scmp.eq.s32.totalorder %s26, 0
    %p278 = por %p276, %p277
    %s280 = sadd.s32 %s279, 1
    %p283 = scmp.eq.s32.totalorder %s20, 1
    %p284 = scmp.ne.s32.totalorder %s279, %s281
    %p285 = scmp.eq.s32.totalorder %s20, 0
    %p286 = por %p284, %p285
    %p287 = scmp.ne.s32.totalorder %s279, %s281
    %p288 = scmp.eq.s32.totalorder %s25, 1
    %p289 = por %p287, %p288
    %p290 = scmp.ne.s32.totalorder %s281, %s282
    %p291 = scmp.eq.s32.totalorder %s25, 0
    %p292 = por %p290, %p291
    %p293 = scmp.ne.s32.totalorder %s281, %s282
    %p294 = scmp.eq.s32.totalorder %s26, 1
    %p295 = por %p293, %p294
    %p297 = scmp.ne.s32.totalorder %s282, %s296
    %p298 = scmp.eq.s32.totalorder %s26, 0
    %p299 = por %p297, %p298
    %s301 = sadd.s32 %s300, 1
    %p304 = scmp.eq.s32.totalorder %s20, 1
    %p305 = scmp.ne.s32.totalorder %s300, %s302
    %p306 = scmp.eq.s32.totalorder %s20, 0
    %p307 = por %p305, %p306
    %p308 = scmp.ne.s32.totalorder %s300, %s302
    %p309 = scmp.eq.s32.totalorder %s25, 1
    %p310 = por %p308, %p309
    %p311 = scmp.ne.s32.totalorder %s302, %s303
    %p312 = scmp.eq.s32.totalorder %s25, 0
    %p313 = por %p311, %p312
    %p314 = scmp.ne.s32.totalorder %s302, %s303
    %p315 = scmp.eq.s32.totalorder %s26, 1
    %p316 = por %p314, %p315
    %p318 = scmp.ne.s32.totalorder %s303, %s317
    %p319 = scmp.eq.s32.totalorder %s26, 0
    %p320 = por %p318, %p319
    %s322 = sadd.s32 %s321, 1
    %p325 = scmp.eq.s32.totalorder %s20, 1
    %p326 = scmp.ne.s32.totalorder %s321, %s323
    %p327 = scmp.eq.s32.totalorder %s20, 0
    %p328 = por %p326, %p327
    %p329 = scmp.ne.s32.totalorder %s321, %s323
    %p330 = scmp.eq.s32.totalorder %s25, 1
    %p331 = por %p329, %p330
    %p332 = scmp.ne.s32.totalorder %s323, %s324
    %p333 = scmp.eq.s32.totalorder %s25, 0
    %p334 = por %p332, %p333
    %p335 = scmp.ne.s32.totalorder %s323, %s324
    %p336 = scmp.eq.s32.totalorder %s26, 1
    %p337 = por %p335, %p336
    %p339 = scmp.ne.s32.totalorder %s324, %s338
    %p340 = scmp.eq.s32.totalorder %s26, 0
    %p341 = por %p339, %p340
    %s342 = ssub.s32 %s20, %s27
    %p343 = scmp.eq.s32.totalorder %s342, 0
    %s345 = sadd.s32 %s344, 1
    %s346 = scalar_select %p343, %s344, %s345
    %p349 = pneg %p343
    %p350 = scmp.eq.s32.totalorder %s20, 1
    %p351 = por %p349, %p350
    %p352 = scmp.ne.s32.totalorder %s344, %s347
    %p353 = scmp.eq.s32.totalorder %s20, 0
    %p354 = por %p352, %p353
    %p355 = scmp.ne.s32.totalorder %s344, %s347
    %p356 = scmp.eq.s32.totalorder %s25, 1
    %p357 = por %p355, %p356
    %p358 = scmp.ne.s32.totalorder %s347, %s348
    %p359 = scmp.eq.s32.totalorder %s25, 0
    %p360 = por %p358, %p359
    %p361 = scmp.ne.s32.totalorder %s347, %s348
    %p362 = scmp.eq.s32.totalorder %s26, 1
    %p363 = por %p361, %p362
    %p365 = scmp.ne.s32.totalorder %s348, %s364
    %p366 = scmp.eq.s32.totalorder %s26, 0
    %p367 = por %p365, %p366
    %p368 = scmp.le.s32.totalorder 1, %s20
    %p369 = scmp.lt.s32.totalorder %s20, 3
    %p370 = pnand %p368, %p369
    %p371 = pneg %p370
    // Predicated region
    $region9: #{hifuse_block_forward.7} parent=5 // pred_check
      _
    $region10: #{hifuse_block_forward.7} parent=5 // pred_check_branch
      %373 = sbr.rel (%p370) target = $region12
    $region11: #{hifuse_block_forward.7} parent=5 // pred_region
      %s374 = ssub.s32 %s20, 1
      // Predicated region
      $region13: #{hifuse_block_forward.7} parent=11 // pred_check
        %p375 = pneg %p145
      $region14: #{hifuse_block_forward.7} parent=11 // pred_check_branch
        %377 = sbr.rel (%p375) target = $region16
      $region15: #{hifuse_block_forward.7} parent=11 // pred_region
        _
      $region16: #{hifuse_block_forward.7} parent=11 // pred_fallthru
        _
      // Predicated region
      $region17: #{hifuse_block_forward.7} parent=11 // pred_check
        %p378 = pneg %p166
      $region18: #{hifuse_block_forward.7} parent=11 // pred_check_branch
        %380 = sbr.rel (%p378) target = $region20
      $region19: #{hifuse_block_forward.7} parent=11 // pred_region
        _
      $region20: #{hifuse_block_forward.7} parent=11 // pred_fallthru
        _
      // Predicated region
      $region21: #{hifuse_block_forward.7} parent=11 // pred_check
        %p381 = pneg %p187
      $region22: #{hifuse_block_forward.7} parent=11 // pred_check_branch
        %383 = sbr.rel (%p381) target = $region24
      $region23: #{hifuse_block_forward.7} parent=11 // pred_region
        _
      $region24: #{hifuse_block_forward.7} parent=11 // pred_fallthru
        _
      // Predicated region
      $region25: #{hifuse_block_forward.7} parent=11 // pred_check
        %p384 = pneg %p208
      $region26: #{hifuse_block_forward.7} parent=11 // pred_check_branch
        %386 = sbr.rel (%p384) target = $region28
      $region27: #{hifuse_block_forward.7} parent=11 // pred_region
        _
      $region28: #{hifuse_block_forward.7} parent=11 // pred_fallthru
        _
      // Predicated region
      $region29: #{hifuse_block_forward.7} parent=11 // pred_check
        %p387 = pneg %p229
      $region30: #{hifuse_block_forward.7} parent=11 // pred_check_branch
        %389 = sbr.rel (%p387) target = $region32
      $region31: #{hifuse_block_forward.7} parent=11 // pred_region
        _
      $region32: #{hifuse_block_forward.7} parent=11 // pred_fallthru
        _
      // Predicated region
      $region33: #{hifuse_block_forward.7} parent=11 // pred_check
        %p390 = pneg %p250
      $region34: #{hifuse_block_forward.7} parent=11 // pred_check_branch
        %392 = sbr.rel (%p390) target = $region36
      $region35: #{hifuse_block_forward.7} parent=11 // pred_region
        _
      $region36: #{hifuse_block_forward.7} parent=11 // pred_fallthru
        _
      // Predicated region
      $region37: #{hifuse_block_forward.7} parent=11 // pred_check
        %p393 = pneg %p271
      $region38: #{hifuse_block_forward.7} parent=11 // pred_check_branch
        %395 = sbr.rel (%p393) target = $region40
      $region39: #{hifuse_block_forward.7} parent=11 // pred_region
        _
      $region40: #{hifuse_block_forward.7} parent=11 // pred_fallthru
        _
      // Predicated region
      $region41: #{hifuse_block_forward.7} parent=11 // pred_check
        %p396 = pneg %p292
      $region42: #{hifuse_block_forward.7} parent=11 // pred_check_branch
        %398 = sbr.rel (%p396) target = $region44
      $region43: #{hifuse_block_forward.7} parent=11 // pred_region
        _
      $region44: #{hifuse_block_forward.7} parent=11 // pred_fallthru
        _
      // Predicated region
      $region45: #{hifuse_block_forward.7} parent=11 // pred_check
        %p399 = pneg %p313
      $region46: #{hifuse_block_forward.7} parent=11 // pred_check_branch
        %401 = sbr.rel (%p399) target = $region48
      $region47: #{hifuse_block_forward.7} parent=11 // pred_region
        _
      $region48: #{hifuse_block_forward.7} parent=11 // pred_fallthru
        _
      // Predicated region
      $region49: #{hifuse_block_forward.7} parent=11 // pred_check
        %p402 = pneg %p334
      $region50: #{hifuse_block_forward.7} parent=11 // pred_check_branch
        %404 = sbr.rel (%p402) target = $region52
      $region51: #{hifuse_block_forward.7} parent=11 // pred_region
        _
      $region52: #{hifuse_block_forward.7} parent=11 // pred_fallthru
        _
    $region12: #{hifuse_block_forward.7} parent=5 // pred_fallthru
      _
    %p405 = scmp.lt.s32.totalorder %s20, 2
    // Predicated region
    $region53: #{hifuse_block_forward.7} parent=5 // pred_check
      %p406 = pneg %p405
    $region54: #{hifuse_block_forward.7} parent=5 // pred_check_branch
      %408 = sbr.rel (%p406) target = $region56
    $region55: #{hifuse_block_forward.7} parent=5 // pred_region
      // Predicated region
      $region57: #{hifuse_block_forward.7} parent=55 // pred_check
        %p409 = pneg %p40
      $region58: #{hifuse_block_forward.7} parent=55 // pred_check_branch
        %411 = sbr.rel (%p409) target = $region60
      $region59: #{hifuse_block_forward.7} parent=55 // pred_region
        %p412 = scmp.lt.s32.totalorder %s20, 1
        %s413 = scalar_select %p412, %s20, 1
        %s414 = smul.addr %s413, 32
        %s415 = smul.addr %s414, 4
        %s416 = scalar_lea.vmem %s0, %s415
      $region60: #{hifuse_block_forward.7} parent=55 // pred_fallthru
        _
      // Predicated region
      $region61: #{hifuse_block_forward.7} parent=55 // pred_check
        %p417 = pneg %p66
      $region62: #{hifuse_block_forward.7} parent=55 // pred_check_branch
        %419 = sbr.rel (%p417) target = $region64
      $region63: #{hifuse_block_forward.7} parent=55 // pred_region
        %p420 = scmp.lt.s32.totalorder %s20, 1
        %s421 = scalar_select %p420, %s20, 1
        %s422 = smul.addr %s421, 32
        %s423 = smul.addr %s422, 4
        %s424 = scalar_lea.vmem %s1, %s423
      $region64: #{hifuse_block_forward.7} parent=55 // pred_fallthru
        _
      // Predicated region
      $region65: #{hifuse_block_forward.7} parent=55 // pred_check
        %p425 = pneg %p92
      $region66: #{hifuse_block_forward.7} parent=55 // pred_check_branch
        %427 = sbr.rel (%p425) target = $region68
      $region67: #{hifuse_block_forward.7} parent=55 // pred_region
        %p428 = scmp.lt.s32.totalorder %s20, 1
        %s429 = scalar_select %p428, %s20, 1
        %s430 = smul.addr %s429, 32
        %s431 = smul.addr %s430, 4
        %s432 = scalar_lea.vmem %s2, %s431
      $region68: #{hifuse_block_forward.7} parent=55 // pred_fallthru
        _
      // Predicated region
      $region69: #{hifuse_block_forward.7} parent=55 // pred_check
        %p433 = pneg %p118
      $region70: #{hifuse_block_forward.7} parent=55 // pred_check_branch
        %435 = sbr.rel (%p433) target = $region72
      $region71: #{hifuse_block_forward.7} parent=55 // pred_region
        %p436 = scmp.lt.s32.totalorder %s20, 1
        %s437 = scalar_select %p436, %s20, 1
        %s438 = smul.addr %s437, 32
        %s439 = smul.addr %s438, 4
        %s440 = scalar_lea.vmem %s3, %s439
      $region72: #{hifuse_block_forward.7} parent=55 // pred_fallthru
        _
    $region56: #{hifuse_block_forward.7} parent=5 // pred_fallthru
      _
    %p441 = scmp.le.s32.totalorder 1, %s20
    %p442 = scmp.lt.s32.totalorder %s20, 3
    %p443 = pnand %p441, %p442
    %p444 = pneg %p443
    // Predicated region
    $region73: #{hifuse_block_forward.7} parent=5 // pred_check
      _
    $region74: #{hifuse_block_forward.7} parent=5 // pred_check_branch
      %446 = sbr.rel (%p443) target = $region76
    $region75: #{hifuse_block_forward.7} parent=5 // pred_region
      %s447 = ssub.s32 %s20, 1
      %p448 = scmp.lt.s32.totalorder %s25, 1
      %s449 = scalar_select %p448, %s25, 1
      %s450 = smul.addr %s449, 32
      %s451 = smul.addr %s450, 4
      %s452 = scalar_lea.vmem %s0, %s451
      %p453 = pneg %p46
      %p454 = pneg %p43
      %p455 = scmp.lt.s32.totalorder %s25, 1
      %s456 = scalar_select %p455, %s25, 1
      %s457 = smul.addr %s456, 32
      %s458 = smul.addr %s457, 4
      %s459 = scalar_lea.vmem %s1, %s458
      %p460 = pneg %p72
      %p461 = pneg %p69
      %p462 = scmp.lt.s32.totalorder %s25, 1
      %s463 = scalar_select %p462, %s25, 1
      %s464 = smul.addr %s463, 32
      %s465 = smul.addr %s464, 4
      %s466 = scalar_lea.vmem %s2, %s465
      %p467 = pneg %p98
      %p468 = pneg %p95
      %p469 = scmp.lt.s32.totalorder %s25, 1
      %s470 = scalar_select %p469, %s25, 1
      %s471 = smul.addr %s470, 32
      %s472 = smul.addr %s471, 4
      %s473 = scalar_lea.vmem %s3, %s472
      %p474 = pneg %p124
      %p475 = pneg %p121
      %p476 = pneg %p145
      %p477 = pneg %p142
      %p478 = pneg %p166
      %p479 = pneg %p163
      %p480 = pneg %p187
      %p481 = pneg %p184
      %p482 = pneg %p208
      %p483 = pneg %p205
      %p484 = pneg %p229
      %p485 = pneg %p226
      %p486 = pneg %p250
      %p487 = pneg %p247
      %p488 = pneg %p271
      %p489 = pneg %p268
      %p490 = pneg %p292
      %p491 = pneg %p289
      %p492 = pneg %p313
      %p493 = pneg %p310
      %p494 = pneg %p334
      %p495 = pneg %p331
      %p496 = pneg %p360
      %p497 = pneg %p357
      %p498 = scmp.lt.s32.totalorder %s25, 1
      %s499 = scalar_select %p498, %s25, 1
      %s500 = smul.addr %s499, 32
      %s501 = smul.addr %s500, 8
      %s502 = scalar_lea.vmem %s14, %s501
      %p503 = scmp.lt.s32.totalorder %s25, 1
      %s504 = scalar_select %p503, %s25, 1
      %s505 = smul.addr %s504, 32
      %s506 = smul.addr %s505, 4
      %s507 = scalar_lea.vmem %s0, %s506
      %p508 = scmp.lt.s32.totalorder %s25, 1
      %s509 = scalar_select %p508, %s25, 1
      %s510 = smul.addr %s509, 32
      %s511 = smul.addr %s510, 4
      %s512 = scalar_lea.vmem %s1, %s511
      %p513 = scmp.lt.s32.totalorder %s25, 1
      %s514 = scalar_select %p513, %s25, 1
      %s515 = smul.addr %s514, 32
      %s516 = smul.addr %s515, 4
      %s517 = scalar_lea.vmem %s2, %s516
      %p518 = scmp.lt.s32.totalorder %s25, 1
      %s519 = scalar_select %p518, %s25, 1
      %s520 = smul.addr %s519, 32
      %s521 = smul.addr %s520, 4
      %s522 = scalar_lea.vmem %s3, %s521
      %p523 = scmp.lt.s32.totalorder %s25, 1
      %s524 = scalar_select %p523, %s25, 1
      %s525 = smul.addr %s524, 32
      %s526 = smul.addr %s525, 8
      %s527 = scalar_lea.vmem %s14, %s526
      %v529 = vld [vmem:[%s507] sm:$0xf]
      %v530 = vld [vmem:[%s507 + $0x4] sm:$0xf]
      %v531 = vld [vmem:[%s507 + $0x8] sm:$0xf]
      %v532 = vld [vmem:[%s507 + $0xc] sm:$0xf]
      %v533 = vld [vmem:[%s507 + $0x10] sm:$0xf]
      %v534 = vld [vmem:[%s507 + $0x14] sm:$0xf]
      %v535 = vld [vmem:[%s507 + $0x18] sm:$0xf]
      %v536 = vld [vmem:[%s507 + $0x1c] sm:$0xf]
      %v537 = vld [vmem:[%s507 + $0x20] sm:$0xf]
      %v538 = vld [vmem:[%s507 + $0x24] sm:$0xf]
      %v539 = vld [vmem:[%s507 + $0x28] sm:$0xf]
      %v540 = vld [vmem:[%s507 + $0x2c] sm:$0xf]
      %v541 = vld [vmem:[%s507 + $0x30] sm:$0xf]
      %v542 = vld [vmem:[%s507 + $0x34] sm:$0xf]
      %v543 = vld [vmem:[%s507 + $0x38] sm:$0xf]
      %v544 = vld [vmem:[%s507 + $0x3c] sm:$0xf]
      %v545 = vld [vmem:[%s507 + $0x40] sm:$0xf]
      %v546 = vld [vmem:[%s507 + $0x44] sm:$0xf]
      %v547 = vld [vmem:[%s507 + $0x48] sm:$0xf]
      %v548 = vld [vmem:[%s507 + $0x4c] sm:$0xf]
      %v549 = vld [vmem:[%s507 + $0x50] sm:$0xf]
      %v550 = vld [vmem:[%s507 + $0x54] sm:$0xf]
      %v551 = vld [vmem:[%s507 + $0x58] sm:$0xf]
      %v552 = vld [vmem:[%s507 + $0x5c] sm:$0xf]
      %v553 = vld [vmem:[%s507 + $0x60] sm:$0xf]
      %v554 = vld [vmem:[%s507 + $0x64] sm:$0xf]
      %v555 = vld [vmem:[%s507 + $0x68] sm:$0xf]
      %v556 = vld [vmem:[%s507 + $0x6c] sm:$0xf]
      %v557 = vld [vmem:[%s507 + $0x70] sm:$0xf]
      %v558 = vld [vmem:[%s507 + $0x74] sm:$0xf]
      %v559 = vld [vmem:[%s507 + $0x78] sm:$0xf]
      %v560 = vld [vmem:[%s507 + $0x7c] sm:$0xf]
      %v561 = vunpack.c.l.bf16 %v529
      %v562 = vunpack.c.l.bf16 %v530
      %v563 = vunpack.c.l.bf16 %v531
      %v564 = vunpack.c.l.bf16 %v532
      %v565 = vunpack.c.l.bf16 %v533
      %v566 = vunpack.c.l.bf16 %v534
      %v567 = vunpack.c.l.bf16 %v535
      %v568 = vunpack.c.l.bf16 %v536
      %v569 = vunpack.c.l.bf16 %v537
      %v570 = vunpack.c.l.bf16 %v538
      %v571 = vunpack.c.l.bf16 %v539
      %v572 = vunpack.c.l.bf16 %v540
      %v573 = vunpack.c.l.bf16 %v541
      %v574 = vunpack.c.l.bf16 %v542
      %v575 = vunpack.c.l.bf16 %v543
      %v576 = vunpack.c.l.bf16 %v544
      %v577 = vunpack.c.l.bf16 %v545
      %v578 = vunpack.c.l.bf16 %v546
      %v579 = vunpack.c.l.bf16 %v547
      %v580 = vunpack.c.l.bf16 %v548
      %v581 = vunpack.c.l.bf16 %v549
      %v582 = vunpack.c.l.bf16 %v550
      %v583 = vunpack.c.l.bf16 %v551
      %v584 = vunpack.c.l.bf16 %v552
      %v585 = vunpack.c.l.bf16 %v553
      %v586 = vunpack.c.l.bf16 %v554
      %v587 = vunpack.c.l.bf16 %v555
      %v588 = vunpack.c.l.bf16 %v556
      %v589 = vunpack.c.l.bf16 %v557
      %v590 = vunpack.c.l.bf16 %v558
      %v591 = vunpack.c.l.bf16 %v559
      %v592 = vunpack.c.l.bf16 %v560
      %vm593 = vcmask 64512
      %v594 = vsel %vm593, %v561, -inf
      %v595 = vsel %vm593, %v562, -inf
      %v596 = vsel %vm593, %v563, -inf
      %v597 = vsel %vm593, %v564, -inf
      %v598 = vsel %vm593, %v565, -inf
      %v599 = vmax.f32 %v594, %v598
      %v600 = vsel %vm593, %v566, -inf
      %v601 = vmax.f32 %v595, %v600
      %v602 = vsel %vm593, %v567, -inf
      %v603 = vmax.f32 %v596, %v602
      %v604 = vsel %vm593, %v568, -inf
      %v605 = vmax.f32 %v597, %v604
      %v606 = vsel %vm593, %v569, -inf
      %v607 = vmax.f32 %v599, %v606
      %v608 = vsel %vm593, %v570, -inf
      %v609 = vmax.f32 %v601, %v608
      %v610 = vsel %vm593, %v571, -inf
      %v611 = vmax.f32 %v603, %v610
      %v612 = vsel %vm593, %v572, -inf
      %v613 = vmax.f32 %v605, %v612
      %v614 = vsel %vm593, %v573, -inf
      %v615 = vmax.f32 %v607, %v614
      %v616 = vsel %vm593, %v574, -inf
      %v617 = vmax.f32 %v609, %v616
      %v618 = vsel %vm593, %v575, -inf
      %v619 = vmax.f32 %v611, %v618
      %v620 = vsel %vm593, %v576, -inf
      %v621 = vmax.f32 %v613, %v620
      %v622 = vsel %vm593, %v577, -inf
      %v623 = vmax.f32 %v615, %v622
      %v624 = vsel %vm593, %v578, -inf
      %v625 = vmax.f32 %v617, %v624
      %v626 = vsel %vm593, %v579, -inf
      %v627 = vmax.f32 %v619, %v626
      %v628 = vsel %vm593, %v580, -inf
      %v629 = vmax.f32 %v621, %v628
      %v630 = vsel %vm593, %v581, -inf
      %v631 = vmax.f32 %v623, %v630
      %v632 = vsel %vm593, %v582, -inf
      %v633 = vmax.f32 %v625, %v632
      %v634 = vsel %vm593, %v583, -inf
      %v635 = vmax.f32 %v627, %v634
      %v636 = vsel %vm593, %v584, -inf
      %v637 = vmax.f32 %v629, %v636
      %v638 = vsel %vm593, %v585, -inf
      %v639 = vmax.f32 %v631, %v638
      %v640 = vsel %vm593, %v586, -inf
      %v641 = vmax.f32 %v633, %v640
      %v642 = vsel %vm593, %v587, -inf
      %v643 = vmax.f32 %v635, %v642
      %v644 = vsel %vm593, %v588, -inf
      %v645 = vmax.f32 %v637, %v644
      %v646 = vsel %vm593, %v589, -inf
      %v647 = vmax.f32 %v639, %v646
      %v648 = vsel %vm593, %v590, -inf
      %v649 = vmax.f32 %v641, %v648
      %v650 = vsel %vm593, %v591, -inf
      %v651 = vmax.f32 %v643, %v650
      %v652 = vsel %vm593, %v592, -inf
      %v653 = vmax.f32 %v645, %v652
      %v654 = vmax.f32 %v647, %v649
      %v655 = vmax.f32 %v651, %v653
      %v656 = vmax.f32 %v654, %v655
      %v657 = vrot.slane %v656, 4
      %v658 = vmax.f32 %v656, %v657
      %v659 = vrot.slane %v658, 2
      %v660 = vmax.f32 %v658, %v659
      %v661 = vrot.slane %v660, 1
      %v662 = vmax.f32 %v660, %v661
      %v663 = vpack.c.bf16 %v662, %v662
      %v664 = vsel %vm593, %v561, 0.0
      %v665 = vsel %vm593, %v562, 0.0
      %v666 = vadd.f32 %v664, %v665
      %v667 = vsel %vm593, %v563, 0.0
      %v668 = vadd.f32 %v666, %v667
      %v669 = vsel %vm593, %v564, 0.0
      %v670 = vadd.f32 %v668, %v669
      %v671 = vsel %vm593, %v565, 0.0
      %v672 = vadd.f32 %v670, %v671
      %v673 = vsel %vm593, %v566, 0.0
      %v674 = vadd.f32 %v672, %v673
      %v675 = vsel %vm593, %v567, 0.0
      %v676 = vadd.f32 %v674, %v675
      %v677 = vsel %vm593, %v568, 0.0
      %v678 = vadd.f32 %v676, %v677
      %v679 = vsel %vm593, %v569, 0.0
      %v680 = vadd.f32 %v678, %v679
      %v681 = vsel %vm593, %v570, 0.0
      %v682 = vadd.f32 %v680, %v681
      %v683 = vsel %vm593, %v571, 0.0
      %v684 = vadd.f32 %v682, %v683
      %v685 = vsel %vm593, %v572, 0.0
      %v686 = vadd.f32 %v684, %v685
      %v687 = vsel %vm593, %v573, 0.0
      %v688 = vadd.f32 %v686, %v687
      %v689 = vsel %vm593, %v574, 0.0
      %v690 = vadd.f32 %v688, %v689
      %v691 = vsel %vm593, %v575, 0.0
      %v692 = vadd.f32 %v690, %v691
      %v693 = vsel %vm593, %v576, 0.0
      %v694 = vadd.f32 %v692, %v693
      %v695 = vsel %vm593, %v577, 0.0
      %v696 = vadd.f32 %v694, %v695
      %v697 = vsel %vm593, %v578, 0.0
      %v698 = vadd.f32 %v696, %v697
      %v699 = vsel %vm593, %v579, 0.0
      %v700 = vadd.f32 %v698, %v699
      %v701 = vsel %vm593, %v580, 0.0
      %v702 = vadd.f32 %v700, %v701
      %v703 = vsel %vm593, %v581, 0.0
      %v704 = vadd.f32 %v702, %v703
      %v705 = vsel %vm593, %v582, 0.0
      %v706 = vadd.f32 %v704, %v705
      %v707 = vsel %vm593, %v583, 0.0
      %v708 = vadd.f32 %v706, %v707
      %v709 = vsel %vm593, %v584, 0.0
      %v710 = vadd.f32 %v708, %v709
      %v711 = vsel %vm593, %v585, 0.0
      %v712 = vadd.f32 %v710, %v711
      %v713 = vsel %vm593, %v586, 0.0
      %v714 = vadd.f32 %v712, %v713
      %v715 = vsel %vm593, %v587, 0.0
      %v716 = vadd.f32 %v714, %v715
      %v717 = vsel %vm593, %v588, 0.0
      %v718 = vadd.f32 %v716, %v717
      %v719 = vsel %vm593, %v589, 0.0
      %v720 = vadd.f32 %v718, %v719
      %v721 = vsel %vm593, %v590, 0.0
      %v722 = vadd.f32 %v720, %v721
      %v723 = vsel %vm593, %v591, 0.0
      %v724 = vadd.f32 %v722, %v723
      %v725 = vsel %vm593, %v592, 0.0
      %v726 = vadd.f32 %v724, %v725
      %v727 = vrot.slane %v726, 4
      %v728 = vadd.f32 %v726, %v727
      %v729 = vrot.slane %v728, 2
      %v730 = vadd.f32 %v728, %v729
      %v731 = vrot.slane %v730, 1
      %v732 = vadd.f32 %v730, %v731
      %v733 = vrcp.pop 256.0
      %v734 = vmul.f32 256.0, %v733
      %v735 = vsub.f32 1.0, %v734
      %v736 = vmul.f32 %v733, %v735
      %v737 = vadd.f32 %v733, %v736
      %vm738 = vweird.f32 %v733
      %v739 = vsel %vm738, %v733, %v737
      %v740 = vmul.f32 %v732, %v739
      %v741 = vpack.c.bf16 %v740, %v740
      %v742 = vld [vmem:[%s4] sm:$0xf]
      %v743 = vld [vmem:[%s5] sm:$0x3]
      %v745 = vsel %vm593, %v663, 0
      %vm747 = vcmask 1043456
      %v749 = vsel %vm747, %v742, 0
      %751 = vmatpush.bf16.msra.mxu0 0
      %752 = vmatpush.bf16.msra.mxu0 0
      %753 = vmatpush.bf16.msra.mxu0 0
      %754 = vmatpush.bf16.msra.mxu0 0
      %755 = vmatpush.bf16.msra.mxu0 0
      %756 = vmatpush.bf16.msra.mxu0 0
      %757 = vmatpush.bf16.msra.mxu0 0
      %758 = vmatpush.bf16.msra.mxu0 %v749
      %759 = vmatmul.bf16.gmra.mxu0 %v745
      %v760 = vpop.f32.mrf.mxu0
      %v761 = vadd.f32 0.0, %v760
      %v762 = vpop.f32.mrf.mxu0
      %763 = vdwg.mxu0
      %v764 = vmax.f32 %v761, 0.0
      %v766 = vsel %vm593, %v741, 0
      %768 = vmatpush.bf16.msra.mxu0 0
      %769 = vmatpush.bf16.msra.mxu0 0
      %770 = vmatpush.bf16.msra.mxu0 0
      %771 = vmatpush.bf16.msra.mxu0 0
      %772 = vmatpush.bf16.msra.mxu0 0
      %773 = vmatpush.bf16.msra.mxu0 0
      %774 = vmatpush.bf16.msra.mxu0 0
      %775 = vmatpush.bf16.msra.mxu0 %v749
      %776 = vmatmul.bf16.gmra.mxu0 %v766
      %v777 = vpop.f32.mrf.mxu0
      %v778 = vadd.f32 0.0, %v777
      %v779 = vpop.f32.mrf.mxu0
      %780 = vdwg.mxu0
      %v781 = vmax.f32 %v778, 0.0
      %v782 = vpack.c.bf16 %v764, %v764
      %v783 = vpack.c.bf16 %v781, %v781
      %vm784 = vcmask 31744
      %v786 = vsel %vm784, %v783, 0
      %vm788 = vcmask 1041408
      %v790 = vsel %vm788, %v743, 0
      %792 = vmatpush.bf16.msra.mxu0 0
      %793 = vmatpush.bf16.msra.mxu0 0
      %794 = vmatpush.bf16.msra.mxu0 0
      %795 = vmatpush.bf16.msra.mxu0 0
      %796 = vmatpush.bf16.msra.mxu0 0
      %797 = vmatpush.bf16.msra.mxu0 0
      %798 = vmatpush.bf16.msra.mxu0 0
      %799 = vmatpush.bf16.msra.mxu0 %v790
      %800 = vmatmul.bf16.gmra.mxu0 %v786
      %v801 = vpop.f32.mrf.mxu0
      %v802 = vadd.f32 0.0, %v801
      %v803 = vpop.f32.mrf.mxu0
      %804 = vdwg.mxu0
      %v806 = vsel %vm784, %v782, 0
      %808 = vmatpush.bf16.msra.mxu0 0
      %809 = vmatpush.bf16.msra.mxu0 0
      %810 = vmatpush.bf16.msra.mxu0 0
      %811 = vmatpush.bf16.msra.mxu0 0
      %812 = vmatpush.bf16.msra.mxu0 0
      %813 = vmatpush.bf16.msra.mxu0 0
      %814 = vmatpush.bf16.msra.mxu0 0
      %815 = vmatpush.bf16.msra.mxu0 %v790
      %816 = vmatmul.bf16.gmra.mxu0 %v806
      %v817 = vpop.f32.mrf.mxu0
      %v818 = vadd.f32 %v802, %v817
      %v819 = vpop.f32.mrf.mxu0
      %820 = vdwg.mxu0
      %v821 = vsub.f32 0.0, %v818
      %v822 = vmul.f32 %v821, 1.442695
      %v823 = vpow.pop %v822
      %v824 = vadd.f32 %v823, 1.0
      %v825 = vrcp.pop %v824
      %v826 = vmul.f32 %v824, %v825
      %v827 = vsub.f32 1.0, %v826
      %v828 = vmul.f32 %v825, %v827
      %v829 = vadd.f32 %v825, %v828
      %vm830 = vweird.f32 %v824
      %vm831 = vweird.f32 %v825
      %vm832 = vmor %vm830, %vm831
      %v833 = vsel %vm832, %v825, %v829
      %v834 = vand.u32 2147483647, %v824
      %vm835 = vcmp.eq.f32.partialorder %v834, 8.507059e+37
      %v836 = vand.u32 %v824, 2147483648
      %v837 = vor.u32 1.1754944e-38, %v836
      %v838 = vsel %vm835, %v837, %v833
      %v839 = vmul.f32 1.0, %v838
      %v840 = vperm.slane %v839, 0
      %v841 = vmul.f32 %v561, %v840
      %v842 = vmul.f32 %v562, %v840
      %v843 = vmul.f32 %v563, %v840
      %v844 = vmul.f32 %v564, %v840
      %v845 = vmul.f32 %v565, %v840
      %v846 = vmul.f32 %v566, %v840
      %v847 = vmul.f32 %v567, %v840
      %v848 = vmul.f32 %v568, %v840
      %v849 = vmul.f32 %v569, %v840
      %v850 = vmul.f32 %v570, %v840
      %v851 = vmul.f32 %v571, %v840
      %v852 = vmul.f32 %v572, %v840
      %v853 = vmul.f32 %v573, %v840
      %v854 = vmul.f32 %v574, %v840
      %v855 = vmul.f32 %v575, %v840
      %v856 = vmul.f32 %v576, %v840
      %v857 = vmul.f32 %v577, %v840
      %v858 = vmul.f32 %v578, %v840
      %v859 = vmul.f32 %v579, %v840
      %v860 = vmul.f32 %v580, %v840
      %v861 = vmul.f32 %v581, %v840
      %v862 = vmul.f32 %v582, %v840
      %v863 = vmul.f32 %v583, %v840
      %v864 = vmul.f32 %v584, %v840
      %v865 = vmul.f32 %v585, %v840
      %v866 = vmul.f32 %v586, %v840
      %v867 = vmul.f32 %v587, %v840
      %v868 = vmul.f32 %v588, %v840
      %v869 = vmul.f32 %v589, %v840
      %v870 = vmul.f32 %v590, %v840
      %v871 = vmul.f32 %v591, %v840
      %v872 = vmul.f32 %v592, %v840
      %v873 = vld [vmem:[%s512] sm:$0xf]
      %v874 = vld [vmem:[%s512 + $0x4] sm:$0xf]
      %v875 = vld [vmem:[%s512 + $0x8] sm:$0xf]
      %v876 = vld [vmem:[%s512 + $0xc] sm:$0xf]
      %v877 = vld [vmem:[%s512 + $0x10] sm:$0xf]
      %v878 = vld [vmem:[%s512 + $0x14] sm:$0xf]
      %v879 = vld [vmem:[%s512 + $0x18] sm:$0xf]
      %v880 = vld [vmem:[%s512 + $0x1c] sm:$0xf]
      %v881 = vld [vmem:[%s512 + $0x20] sm:$0xf]
      %v882 = vld [vmem:[%s512 + $0x24] sm:$0xf]
      %v883 = vld [vmem:[%s512 + $0x28] sm:$0xf]
      %v884 = vld [vmem:[%s512 + $0x2c] sm:$0xf]
      %v885 = vld [vmem:[%s512 + $0x30] sm:$0xf]
      %v886 = vld [vmem:[%s512 + $0x34] sm:$0xf]
      %v887 = vld [vmem:[%s512 + $0x38] sm:$0xf]
      %v888 = vld [vmem:[%s512 + $0x3c] sm:$0xf]
      %v889 = vld [vmem:[%s512 + $0x40] sm:$0xf]
      %v890 = vld [vmem:[%s512 + $0x44] sm:$0xf]
      %v891 = vld [vmem:[%s512 + $0x48] sm:$0xf]
      %v892 = vld [vmem:[%s512 + $0x4c] sm:$0xf]
      %v893 = vld [vmem:[%s512 + $0x50] sm:$0xf]
      %v894 = vld [vmem:[%s512 + $0x54] sm:$0xf]
      %v895 = vld [vmem:[%s512 + $0x58] sm:$0xf]
      %v896 = vld [vmem:[%s512 + $0x5c] sm:$0xf]
      %v897 = vld [vmem:[%s512 + $0x60] sm:$0xf]
      %v898 = vld [vmem:[%s512 + $0x64] sm:$0xf]
      %v899 = vld [vmem:[%s512 + $0x68] sm:$0xf]
      %v900 = vld [vmem:[%s512 + $0x6c] sm:$0xf]
      %v901 = vld [vmem:[%s512 + $0x70] sm:$0xf]
      %v902 = vld [vmem:[%s512 + $0x74] sm:$0xf]
      %v903 = vld [vmem:[%s512 + $0x78] sm:$0xf]
      %v904 = vld [vmem:[%s512 + $0x7c] sm:$0xf]
      %v905 = vunpack.c.l.bf16 %v873
      %v906 = vunpack.c.l.bf16 %v874
      %v907 = vunpack.c.l.bf16 %v875
      %v908 = vunpack.c.l.bf16 %v876
      %v909 = vunpack.c.l.bf16 %v877
      %v910 = vunpack.c.l.bf16 %v878
      %v911 = vunpack.c.l.bf16 %v879
      %v912 = vunpack.c.l.bf16 %v880
      %v913 = vunpack.c.l.bf16 %v881
      %v914 = vunpack.c.l.bf16 %v882
      %v915 = vunpack.c.l.bf16 %v883
      %v916 = vunpack.c.l.bf16 %v884
      %v917 = vunpack.c.l.bf16 %v885
      %v918 = vunpack.c.l.bf16 %v886
      %v919 = vunpack.c.l.bf16 %v887
      %v920 = vunpack.c.l.bf16 %v888
      %v921 = vunpack.c.l.bf16 %v889
      %v922 = vunpack.c.l.bf16 %v890
      %v923 = vunpack.c.l.bf16 %v891
      %v924 = vunpack.c.l.bf16 %v892
      %v925 = vunpack.c.l.bf16 %v893
      %v926 = vunpack.c.l.bf16 %v894
      %v927 = vunpack.c.l.bf16 %v895
      %v928 = vunpack.c.l.bf16 %v896
      %v929 = vunpack.c.l.bf16 %v897
      %v930 = vunpack.c.l.bf16 %v898
      %v931 = vunpack.c.l.bf16 %v899
      %v932 = vunpack.c.l.bf16 %v900
      %v933 = vunpack.c.l.bf16 %v901
      %v934 = vunpack.c.l.bf16 %v902
      %v935 = vunpack.c.l.bf16 %v903
      %v936 = vunpack.c.l.bf16 %v904
      %v937 = vld [vmem:[%s517] sm:$0xf]
      %v938 = vld [vmem:[%s517 + $0x4] sm:$0xf]
      %v939 = vld [vmem:[%s517 + $0x8] sm:$0xf]
      %v940 = vld [vmem:[%s517 + $0xc] sm:$0xf]
      %v941 = vld [vmem:[%s517 + $0x10] sm:$0xf]
      %v942 = vld [vmem:[%s517 + $0x14] sm:$0xf]
      %v943 = vld [vmem:[%s517 + $0x18] sm:$0xf]
      %v944 = vld [vmem:[%s517 + $0x1c] sm:$0xf]
      %v945 = vld [vmem:[%s517 + $0x20] sm:$0xf]
      %v946 = vld [vmem:[%s517 + $0x24] sm:$0xf]
      %v947 = vld [vmem:[%s517 + $0x28] sm:$0xf]
      %v948 = vld [vmem:[%s517 + $0x2c] sm:$0xf]
      %v949 = vld [vmem:[%s517 + $0x30] sm:$0xf]
      %v950 = vld [vmem:[%s517 + $0x34] sm:$0xf]
      %v951 = vld [vmem:[%s517 + $0x38] sm:$0xf]
      %v952 = vld [vmem:[%s517 + $0x3c] sm:$0xf]
      %v953 = vld [vmem:[%s517 + $0x40] sm:$0xf]
      %v954 = vld [vmem:[%s517 + $0x44] sm:$0xf]
      %v955 = vld [vmem:[%s517 + $0x48] sm:$0xf]
      %v956 = vld [vmem:[%s517 + $0x4c] sm:$0xf]
      %v957 = vld [vmem:[%s517 + $0x50] sm:$0xf]
      %v958 = vld [vmem:[%s517 + $0x54] sm:$0xf]
      %v959 = vld [vmem:[%s517 + $0x58] sm:$0xf]
      %v960 = vld [vmem:[%s517 + $0x5c] sm:$0xf]
      %v961 = vld [vmem:[%s517 + $0x60] sm:$0xf]
      %v962 = vld [vmem:[%s517 + $0x64] sm:$0xf]
      %v963 = vld [vmem:[%s517 + $0x68] sm:$0xf]
      %v964 = vld [vmem:[%s517 + $0x6c] sm:$0xf]
      %v965 = vld [vmem:[%s517 + $0x70] sm:$0xf]
      %v966 = vld [vmem:[%s517 + $0x74] sm:$0xf]
      %v967 = vld [vmem:[%s517 + $0x78] sm:$0xf]
      %v968 = vld [vmem:[%s517 + $0x7c] sm:$0xf]
      %v969 = vunpack.c.l.bf16 %v937
      %v970 = vunpack.c.l.bf16 %v938
      %v971 = vunpack.c.l.bf16 %v939
      %v972 = vunpack.c.l.bf16 %v940
      %v973 = vunpack.c.l.bf16 %v941
      %v974 = vunpack.c.l.bf16 %v942
      %v975 = vunpack.c.l.bf16 %v943
      %v976 = vunpack.c.l.bf16 %v944
      %v977 = vunpack.c.l.bf16 %v945
      %v978 = vunpack.c.l.bf16 %v946
      %v979 = vunpack.c.l.bf16 %v947
      %v980 = vunpack.c.l.bf16 %v948
      %v981 = vunpack.c.l.bf16 %v949
      %v982 = vunpack.c.l.bf16 %v950
      %v983 = vunpack.c.l.bf16 %v951
      %v984 = vunpack.c.l.bf16 %v952
      %v985 = vunpack.c.l.bf16 %v953
      %v986 = vunpack.c.l.bf16 %v954
      %v987 = vunpack.c.l.bf16 %v955
      %v988 = vunpack.c.l.bf16 %v956
      %v989 = vunpack.c.l.bf16 %v957
      %v990 = vunpack.c.l.bf16 %v958
      %v991 = vunpack.c.l.bf16 %v959
      %v992 = vunpack.c.l.bf16 %v960
      %v993 = vunpack.c.l.bf16 %v961
      %v994 = vunpack.c.l.bf16 %v962
      %v995 = vunpack.c.l.bf16 %v963
      %v996 = vunpack.c.l.bf16 %v964
      %v997 = vunpack.c.l.bf16 %v965
      %v998 = vunpack.c.l.bf16 %v966
      %v999 = vunpack.c.l.bf16 %v967
      %v1000 = vunpack.c.l.bf16 %v968
      %1033 = vrot.lane.b32.xlu0 %v905, 8
      %v1034 = vpop.permute.xlu0 %1033
      %1035 = vrot.lane.b32.xlu0 %v906, 8
      %v1036 = vpop.permute.xlu0 %1035
      %1037 = vrot.lane.b32.xlu0 %v907, 8
      %v1038 = vpop.permute.xlu0 %1037
      %1039 = vrot.lane.b32.xlu0 %v908, 8
      %v1040 = vpop.permute.xlu0 %1039
      %1041 = vrot.lane.b32.xlu0 %v909, 8
      %v1042 = vpop.permute.xlu0 %1041
      %1043 = vrot.lane.b32.xlu0 %v910, 8
      %v1044 = vpop.permute.xlu0 %1043
      %1045 = vrot.lane.b32.xlu0 %v911, 8
      %v1046 = vpop.permute.xlu0 %1045
      %1047 = vrot.lane.b32.xlu0 %v912, 8
      %v1048 = vpop.permute.xlu0 %1047
      %1049 = vrot.lane.b32.xlu0 %v913, 8
      %v1050 = vpop.permute.xlu0 %1049
      %1051 = vrot.lane.b32.xlu0 %v914, 8
      %v1052 = vpop.permute.xlu0 %1051
      %1053 = vrot.lane.b32.xlu0 %v915, 8
      %v1054 = vpop.permute.xlu0 %1053
      %1055 = vrot.lane.b32.xlu0 %v916, 8
      %v1056 = vpop.permute.xlu0 %1055
      %1057 = vrot.lane.b32.xlu0 %v917, 8
      %v1058 = vpop.permute.xlu0 %1057
      %1059 = vrot.lane.b32.xlu0 %v918, 8
      %v1060 = vpop.permute.xlu0 %1059
      %1061 = vrot.lane.b32.xlu0 %v919, 8
      %v1062 = vpop.permute.xlu0 %1061
      %1063 = vrot.lane.b32.xlu0 %v920, 8
      %v1064 = vpop.permute.xlu0 %1063
      %1065 = vrot.lane.b32.xlu0 %v921, 8
      %v1066 = vpop.permute.xlu0 %1065
      %1067 = vrot.lane.b32.xlu0 %v922, 8
      %v1068 = vpop.permute.xlu0 %1067
      %1069 = vrot.lane.b32.xlu0 %v923, 8
      %v1070 = vpop.permute.xlu0 %1069
      %1071 = vrot.lane.b32.xlu0 %v924, 8
      %v1072 = vpop.permute.xlu0 %1071
      %1073 = vrot.lane.b32.xlu0 %v925, 8
      %v1074 = vpop.permute.xlu0 %1073
      %1075 = vrot.lane.b32.xlu0 %v926, 8
      %v1076 = vpop.permute.xlu0 %1075
      %1077 = vrot.lane.b32.xlu0 %v927, 8
      %v1078 = vpop.permute.xlu0 %1077
      %1079 = vrot.lane.b32.xlu0 %v928, 8
      %v1080 = vpop.permute.xlu0 %1079
      %1081 = vrot.lane.b32.xlu0 %v929, 8
      %v1082 = vpop.permute.xlu0 %1081
      %1083 = vrot.lane.b32.xlu0 %v930, 8
      %v1084 = vpop.permute.xlu0 %1083
      %1085 = vrot.lane.b32.xlu0 %v931, 8
      %v1086 = vpop.permute.xlu0 %1085
      %1087 = vrot.lane.b32.xlu0 %v932, 8
      %v1088 = vpop.permute.xlu0 %1087
      %1089 = vrot.lane.b32.xlu0 %v933, 8
      %v1090 = vpop.permute.xlu0 %1089
      %1091 = vrot.lane.b32.xlu0 %v934, 8
      %v1092 = vpop.permute.xlu0 %1091
      %1093 = vrot.lane.b32.xlu0 %v935, 8
      %v1094 = vpop.permute.xlu0 %1093
      %1095 = vrot.lane.b32.xlu0 %v936, 8
      %v1096 = vpop.permute.xlu0 %1095
      %1161 = vrot.lane.b32.xlu0 %v969, 12
      %v1162 = vpop.permute.xlu0 %1161
      %1163 = vrot.lane.b32.xlu0 %v970, 12
      %v1164 = vpop.permute.xlu0 %1163
      %1165 = vrot.lane.b32.xlu0 %v971, 12
      %v1166 = vpop.permute.xlu0 %1165
      %1167 = vrot.lane.b32.xlu0 %v972, 12
      %v1168 = vpop.permute.xlu0 %1167
      %1169 = vrot.lane.b32.xlu0 %v973, 12
      %v1170 = vpop.permute.xlu0 %1169
      %1171 = vrot.lane.b32.xlu0 %v974, 12
      %v1172 = vpop.permute.xlu0 %1171
      %1173 = vrot.lane.b32.xlu0 %v975, 12
      %v1174 = vpop.permute.xlu0 %1173
      %1175 = vrot.lane.b32.xlu0 %v976, 12
      %v1176 = vpop.permute.xlu0 %1175
      %1177 = vrot.lane.b32.xlu0 %v977, 12
      %v1178 = vpop.permute.xlu0 %1177
      %1179 = vrot.lane.b32.xlu0 %v978, 12
      %v1180 = vpop.permute.xlu0 %1179
      %1181 = vrot.lane.b32.xlu0 %v979, 12
      %v1182 = vpop.permute.xlu0 %1181
      %1183 = vrot.lane.b32.xlu0 %v980, 12
      %v1184 = vpop.permute.xlu0 %1183
      %1185 = vrot.lane.b32.xlu0 %v981, 12
      %v1186 = vpop.permute.xlu0 %1185
      %1187 = vrot.lane.b32.xlu0 %v982, 12
      %v1188 = vpop.permute.xlu0 %1187
      %1189 = vrot.lane.b32.xlu0 %v983, 12
      %v1190 = vpop.permute.xlu0 %1189
      %1191 = vrot.lane.b32.xlu0 %v984, 12
      %v1192 = vpop.permute.xlu0 %1191
      %1193 = vrot.lane.b32.xlu0 %v985, 12
      %v1194 = vpop.permute.xlu0 %1193
      %1195 = vrot.lane.b32.xlu0 %v986, 12
      %v1196 = vpop.permute.xlu0 %1195
      %1197 = vrot.lane.b32.xlu0 %v987, 12
      %v1198 = vpop.permute.xlu0 %1197
      %1199 = vrot.lane.b32.xlu0 %v988, 12
      %v1200 = vpop.permute.xlu0 %1199
      %1201 = vrot.lane.b32.xlu0 %v989, 12
      %v1202 = vpop.permute.xlu0 %1201
      %1203 = vrot.lane.b32.xlu0 %v990, 12
      %v1204 = vpop.permute.xlu0 %1203
      %1205 = vrot.lane.b32.xlu0 %v991, 12
      %v1206 = vpop.permute.xlu0 %1205
      %1207 = vrot.lane.b32.xlu0 %v992, 12
      %v1208 = vpop.permute.xlu0 %1207
      %1209 = vrot.lane.b32.xlu0 %v993, 12
      %v1210 = vpop.permute.xlu0 %1209
      %1211 = vrot.lane.b32.xlu0 %v994, 12
      %v1212 = vpop.permute.xlu0 %1211
      %1213 = vrot.lane.b32.xlu0 %v995, 12
      %v1214 = vpop.permute.xlu0 %1213
      %1215 = vrot.lane.b32.xlu0 %v996, 12
      %v1216 = vpop.permute.xlu0 %1215
      %1217 = vrot.lane.b32.xlu0 %v997, 12
      %v1218 = vpop.permute.xlu0 %1217
      %1219 = vrot.lane.b32.xlu0 %v998, 12
      %v1220 = vpop.permute.xlu0 %1219
      %1221 = vrot.lane.b32.xlu0 %v999, 12
      %v1222 = vpop.permute.xlu0 %1221
      %1223 = vrot.lane.b32.xlu0 %v1000, 12
      %v1224 = vpop.permute.xlu0 %1223
      %v1257 = vsel %vm593, %v841, %v1034
      %v1258 = vsel %vm593, %v842, %v1036
      %v1259 = vsel %vm593, %v843, %v1038
      %v1260 = vsel %vm593, %v844, %v1040
      %v1261 = vsel %vm593, %v845, %v1042
      %v1262 = vsel %vm593, %v846, %v1044
      %v1263 = vsel %vm593, %v847, %v1046
      %v1264 = vsel %vm593, %v848, %v1048
      %v1265 = vsel %vm593, %v849, %v1050
      %v1266 = vsel %vm593, %v850, %v1052
      %v1267 = vsel %vm593, %v851, %v1054
      %v1268 = vsel %vm593, %v852, %v1056
      %v1269 = vsel %vm593, %v853, %v1058
      %v1270 = vsel %vm593, %v854, %v1060
      %v1271 = vsel %vm593, %v855, %v1062
      %v1272 = vsel %vm593, %v856, %v1064
      %v1273 = vsel %vm593, %v857, %v1066
      %v1274 = vsel %vm593, %v858, %v1068
      %v1275 = vsel %vm593, %v859, %v1070
      %v1276 = vsel %vm593, %v860, %v1072
      %v1277 = vsel %vm593, %v861, %v1074
      %v1278 = vsel %vm593, %v862, %v1076
      %v1279 = vsel %vm593, %v863, %v1078
      %v1280 = vsel %vm593, %v864, %v1080
      %v1281 = vsel %vm593, %v865, %v1082
      %v1282 = vsel %vm593, %v866, %v1084
      %v1283 = vsel %vm593, %v867, %v1086
      %v1284 = vsel %vm593, %v868, %v1088
      %v1285 = vsel %vm593, %v869, %v1090
      %v1286 = vsel %vm593, %v870, %v1092
      %v1287 = vsel %vm593, %v871, %v1094
      %v1288 = vsel %vm593, %v872, %v1096
      %vm1289 = vcmask 97280
      %v1290 = vsel %vm1289, %v1257, %v1162
      %v1291 = vsel %vm1289, %v1258, %v1164
      %v1292 = vsel %vm1289, %v1259, %v1166
      %v1293 = vsel %vm1289, %v1260, %v1168
      %v1294 = vsel %vm1289, %v1261, %v1170
      %v1295 = vsel %vm1289, %v1262, %v1172
      %v1296 = vsel %vm1289, %v1263, %v1174
      %v1297 = vsel %vm1289, %v1264, %v1176
      %v1298 = vsel %vm1289, %v1265, %v1178
      %v1299 = vsel %vm1289, %v1266, %v1180
      %v1300 = vsel %vm1289, %v1267, %v1182
      %v1301 = vsel %vm1289, %v1268, %v1184
      %v1302 = vsel %vm1289, %v1269, %v1186
      %v1303 = vsel %vm1289, %v1270, %v1188
      %v1304 = vsel %vm1289, %v1271, %v1190
      %v1305 = vsel %vm1289, %v1272, %v1192
      %v1306 = vsel %vm1289, %v1273, %v1194
      %v1307 = vsel %vm1289, %v1274, %v1196
      %v1308 = vsel %vm1289, %v1275, %v1198
      %v1309 = vsel %vm1289, %v1276, %v1200
      %v1310 = vsel %vm1289, %v1277, %v1202
      %v1311 = vsel %vm1289, %v1278, %v1204
      %v1312 = vsel %vm1289, %v1279, %v1206
      %v1313 = vsel %vm1289, %v1280, %v1208
      %v1314 = vsel %vm1289, %v1281, %v1210
      %v1315 = vsel %vm1289, %v1282, %v1212
      %v1316 = vsel %vm1289, %v1283, %v1214
      %v1317 = vsel %vm1289, %v1284, %v1216
      %v1318 = vsel %vm1289, %v1285, %v1218
      %v1319 = vsel %vm1289, %v1286, %v1220
      %v1320 = vsel %vm1289, %v1287, %v1222
      %v1321 = vsel %vm1289, %v1288, %v1224
      %vm1322 = vcmask 162816
      %v1323 = vsel %vm1322, %v1290, 0.0
      %1324 = vadd.xlane.f32.xlu0 %v1323
      %v1325 = vpop.xlane.xlu0 %1324
      %v1326 = vsel %vm1322, %v1291, 0.0
      %1327 = vadd.xlane.f32.xlu0 %v1326
      %v1328 = vpop.xlane.xlu0 %1327
      %v1329 = vsel %vm1322, %v1292, 0.0
      %1330 = vadd.xlane.f32.xlu0 %v1329
      %v1331 = vpop.xlane.xlu0 %1330
      %v1332 = vsel %vm1322, %v1293, 0.0
      %1333 = vadd.xlane.f32.xlu0 %v1332
      %v1334 = vpop.xlane.xlu0 %1333
      %v1335 = vsel %vm1322, %v1294, 0.0
      %1336 = vadd.xlane.f32.xlu0 %v1335
      %v1337 = vpop.xlane.xlu0 %1336
      %v1338 = vsel %vm1322, %v1295, 0.0
      %1339 = vadd.xlane.f32.xlu0 %v1338
      %v1340 = vpop.xlane.xlu0 %1339
      %v1341 = vsel %vm1322, %v1296, 0.0
      %1342 = vadd.xlane.f32.xlu0 %v1341
      %v1343 = vpop.xlane.xlu0 %1342
      %v1344 = vsel %vm1322, %v1297, 0.0
      %1345 = vadd.xlane.f32.xlu0 %v1344
      %v1346 = vpop.xlane.xlu0 %1345
      %v1347 = vsel %vm1322, %v1298, 0.0
      %1348 = vadd.xlane.f32.xlu0 %v1347
      %v1349 = vpop.xlane.xlu0 %1348
      %v1350 = vsel %vm1322, %v1299, 0.0
      %1351 = vadd.xlane.f32.xlu0 %v1350
      %v1352 = vpop.xlane.xlu0 %1351
      %v1353 = vsel %vm1322, %v1300, 0.0
      %1354 = vadd.xlane.f32.xlu0 %v1353
      %v1355 = vpop.xlane.xlu0 %1354
      %v1356 = vsel %vm1322, %v1301, 0.0
      %1357 = vadd.xlane.f32.xlu0 %v1356
      %v1358 = vpop.xlane.xlu0 %1357
      %v1359 = vsel %vm1322, %v1302, 0.0
      %1360 = vadd.xlane.f32.xlu0 %v1359
      %v1361 = vpop.xlane.xlu0 %1360
      %v1362 = vsel %vm1322, %v1303, 0.0
      %1363 = vadd.xlane.f32.xlu0 %v1362
      %v1364 = vpop.xlane.xlu0 %1363
      %v1365 = vsel %vm1322, %v1304, 0.0
      %1366 = vadd.xlane.f32.xlu0 %v1365
      %v1367 = vpop.xlane.xlu0 %1366
      %v1368 = vsel %vm1322, %v1305, 0.0
      %1369 = vadd.xlane.f32.xlu0 %v1368
      %v1370 = vpop.xlane.xlu0 %1369
      %v1371 = vsel %vm1322, %v1306, 0.0
      %1372 = vadd.xlane.f32.xlu0 %v1371
      %v1373 = vpop.xlane.xlu0 %1372
      %v1374 = vsel %vm1322, %v1307, 0.0
      %1375 = vadd.xlane.f32.xlu0 %v1374
      %v1376 = vpop.xlane.xlu0 %1375
      %v1377 = vsel %vm1322, %v1308, 0.0
      %1378 = vadd.xlane.f32.xlu0 %v1377
      %v1379 = vpop.xlane.xlu0 %1378
      %v1380 = vsel %vm1322, %v1309, 0.0
      %1381 = vadd.xlane.f32.xlu0 %v1380
      %v1382 = vpop.xlane.xlu0 %1381
      %v1383 = vsel %vm1322, %v1310, 0.0
      %1384 = vadd.xlane.f32.xlu0 %v1383
      %v1385 = vpop.xlane.xlu0 %1384
      %v1386 = vsel %vm1322, %v1311, 0.0
      %1387 = vadd.xlane.f32.xlu0 %v1386
      %v1388 = vpop.xlane.xlu0 %1387
      %v1389 = vsel %vm1322, %v1312, 0.0
      %1390 = vadd.xlane.f32.xlu0 %v1389
      %v1391 = vpop.xlane.xlu0 %1390
      %v1392 = vsel %vm1322, %v1313, 0.0
      %1393 = vadd.xlane.f32.xlu0 %v1392
      %v1394 = vpop.xlane.xlu0 %1393
      %v1395 = vsel %vm1322, %v1314, 0.0
      %1396 = vadd.xlane.f32.xlu0 %v1395
      %v1397 = vpop.xlane.xlu0 %1396
      %v1398 = vsel %vm1322, %v1315, 0.0
      %1399 = vadd.xlane.f32.xlu0 %v1398
      %v1400 = vpop.xlane.xlu0 %1399
      %v1401 = vsel %vm1322, %v1316, 0.0
      %1402 = vadd.xlane.f32.xlu0 %v1401
      %v1403 = vpop.xlane.xlu0 %1402
      %v1404 = vsel %vm1322, %v1317, 0.0
      %1405 = vadd.xlane.f32.xlu0 %v1404
      %v1406 = vpop.xlane.xlu0 %1405
      %v1407 = vsel %vm1322, %v1318, 0.0
      %1408 = vadd.xlane.f32.xlu0 %v1407
      %v1409 = vpop.xlane.xlu0 %1408
      %v1410 = vsel %vm1322, %v1319, 0.0
      %1411 = vadd.xlane.f32.xlu0 %v1410
      %v1412 = vpop.xlane.xlu0 %1411
      %v1413 = vsel %vm1322, %v1320, 0.0
      %1414 = vadd.xlane.f32.xlu0 %v1413
      %v1415 = vpop.xlane.xlu0 %1414
      %v1416 = vsel %vm1322, %v1321, 0.0
      %1417 = vadd.xlane.f32.xlu0 %v1416
      %v1418 = vpop.xlane.xlu0 %1417
      %v1419 = vrcp.pop 20.0
      %v1420 = vmul.f32 20.0, %v1419
      %v1421 = vsub.f32 1.0, %v1420
      %v1422 = vmul.f32 %v1419, %v1421
      %v1423 = vadd.f32 %v1419, %v1422
      %vm1424 = vweird.f32 %v1419
      %v1425 = vsel %vm1424, %v1419, %v1423
      %v1426 = vmul.f32 %v1325, %v1425
      %v1427 = vmul.f32 %v1328, %v1425
      %v1428 = vmul.f32 %v1331, %v1425
      %v1429 = vmul.f32 %v1334, %v1425
      %v1430 = vmul.f32 %v1337, %v1425
      %v1431 = vmul.f32 %v1340, %v1425
      %v1432 = vmul.f32 %v1343, %v1425
      %v1433 = vmul.f32 %v1346, %v1425
      %v1434 = vmul.f32 %v1349, %v1425
      %v1435 = vmul.f32 %v1352, %v1425
      %v1436 = vmul.f32 %v1355, %v1425
      %v1437 = vmul.f32 %v1358, %v1425
      %v1438 = vmul.f32 %v1361, %v1425
      %v1439 = vmul.f32 %v1364, %v1425
      %v1440 = vmul.f32 %v1367, %v1425
      %v1441 = vmul.f32 %v1370, %v1425
      %v1442 = vmul.f32 %v1373, %v1425
      %v1443 = vmul.f32 %v1376, %v1425
      %v1444 = vmul.f32 %v1379, %v1425
      %v1445 = vmul.f32 %v1382, %v1425
      %v1446 = vmul.f32 %v1385, %v1425
      %v1447 = vmul.f32 %v1388, %v1425
      %v1448 = vmul.f32 %v1391, %v1425
      %v1449 = vmul.f32 %v1394, %v1425
      %v1450 = vmul.f32 %v1397, %v1425
      %v1451 = vmul.f32 %v1400, %v1425
      %v1452 = vmul.f32 %v1403, %v1425
      %v1453 = vmul.f32 %v1406, %v1425
      %v1454 = vmul.f32 %v1409, %v1425
      %v1455 = vmul.f32 %v1412, %v1425
      %v1456 = vmul.f32 %v1415, %v1425
      %v1457 = vmul.f32 %v1418, %v1425
      %v1458 = vsub.f32 %v1290, %v1426
      %v1459 = vsub.f32 %v1291, %v1427
      %v1460 = vsub.f32 %v1292, %v1428
      %v1461 = vsub.f32 %v1293, %v1429
      %v1462 = vsub.f32 %v1294, %v1430
      %v1463 = vsub.f32 %v1295, %v1431
      %v1464 = vsub.f32 %v1296, %v1432
      %v1465 = vsub.f32 %v1297, %v1433
      %v1466 = vsub.f32 %v1298, %v1434
      %v1467 = vsub.f32 %v1299, %v1435
      %v1468 = vsub.f32 %v1300, %v1436
      %v1469 = vsub.f32 %v1301, %v1437
      %v1470 = vsub.f32 %v1302, %v1438
      %v1471 = vsub.f32 %v1303, %v1439
      %v1472 = vsub.f32 %v1304, %v1440
      %v1473 = vsub.f32 %v1305, %v1441
      %v1474 = vsub.f32 %v1306, %v1442
      %v1475 = vsub.f32 %v1307, %v1443
      %v1476 = vsub.f32 %v1308, %v1444
      %v1477 = vsub.f32 %v1309, %v1445
      %v1478 = vsub.f32 %v1310, %v1446
      %v1479 = vsub.f32 %v1311, %v1447
      %v1480 = vsub.f32 %v1312, %v1448
      %v1481 = vsub.f32 %v1313, %v1449
      %v1482 = vsub.f32 %v1314, %v1450
      %v1483 = vsub.f32 %v1315, %v1451
      %v1484 = vsub.f32 %v1316, %v1452
      %v1485 = vsub.f32 %v1317, %v1453
      %v1486 = vsub.f32 %v1318, %v1454
      %v1487 = vsub.f32 %v1319, %v1455
      %v1488 = vsub.f32 %v1320, %v1456
      %v1489 = vsub.f32 %v1321, %v1457
      %v1490 = vmul.f32 %v1458, %v1458
      %v1491 = vmul.f32 %v1459, %v1459
      %v1492 = vmul.f32 %v1460, %v1460
      %v1493 = vmul.f32 %v1461, %v1461
      %v1494 = vmul.f32 %v1462, %v1462
      %v1495 = vmul.f32 %v1463, %v1463
      %v1496 = vmul.f32 %v1464, %v1464
      %v1497 = vmul.f32 %v1465, %v1465
      %v1498 = vmul.f32 %v1466, %v1466
      %v1499 = vmul.f32 %v1467, %v1467
      %v1500 = vmul.f32 %v1468, %v1468
      %v1501 = vmul.f32 %v1469, %v1469
      %v1502 = vmul.f32 %v1470, %v1470
      %v1503 = vmul.f32 %v1471, %v1471
      %v1504 = vmul.f32 %v1472, %v1472
      %v1505 = vmul.f32 %v1473, %v1473
      %v1506 = vmul.f32 %v1474, %v1474
      %v1507 = vmul.f32 %v1475, %v1475
      %v1508 = vmul.f32 %v1476, %v1476
      %v1509 = vmul.f32 %v1477, %v1477
      %v1510 = vmul.f32 %v1478, %v1478
      %v1511 = vmul.f32 %v1479, %v1479
      %v1512 = vmul.f32 %v1480, %v1480
      %v1513 = vmul.f32 %v1481, %v1481
      %v1514 = vmul.f32 %v1482, %v1482
      %v1515 = vmul.f32 %v1483, %v1483
      %v1516 = vmul.f32 %v1484, %v1484
      %v1517 = vmul.f32 %v1485, %v1485
      %v1518 = vmul.f32 %v1486, %v1486
      %v1519 = vmul.f32 %v1487, %v1487
      %v1520 = vmul.f32 %v1488, %v1488
      %v1521 = vmul.f32 %v1489, %v1489
      %v1522 = vsel %vm1322, %v1490, 0.0
      %1523 = vadd.xlane.f32.xlu0 %v1522
      %v1524 = vpop.xlane.xlu0 %1523
      %v1525 = vsel %vm1322, %v1491, 0.0
      %1526 = vadd.xlane.f32.xlu0 %v1525
      %v1527 = vpop.xlane.xlu0 %1526
      %v1528 = vsel %vm1322, %v1492, 0.0
      %1529 = vadd.xlane.f32.xlu0 %v1528
      %v1530 = vpop.xlane.xlu0 %1529
      %v1531 = vsel %vm1322, %v1493, 0.0
      %1532 = vadd.xlane.f32.xlu0 %v1531
      %v1533 = vpop.xlane.xlu0 %1532
      %v1534 = vsel %vm1322, %v1494, 0.0
      %1535 = vadd.xlane.f32.xlu0 %v1534
      %v1536 = vpop.xlane.xlu0 %1535
      %v1537 = vsel %vm1322, %v1495, 0.0
      %1538 = vadd.xlane.f32.xlu0 %v1537
      %v1539 = vpop.xlane.xlu0 %1538
      %v1540 = vsel %vm1322, %v1496, 0.0
      %1541 = vadd.xlane.f32.xlu0 %v1540
      %v1542 = vpop.xlane.xlu0 %1541
      %v1543 = vsel %vm1322, %v1497, 0.0
      %1544 = vadd.xlane.f32.xlu0 %v1543
      %v1545 = vpop.xlane.xlu0 %1544
      %v1546 = vsel %vm1322, %v1498, 0.0
      %1547 = vadd.xlane.f32.xlu0 %v1546
      %v1548 = vpop.xlane.xlu0 %1547
      %v1549 = vsel %vm1322, %v1499, 0.0
      %1550 = vadd.xlane.f32.xlu0 %v1549
      %v1551 = vpop.xlane.xlu0 %1550
      %v1552 = vsel %vm1322, %v1500, 0.0
      %1553 = vadd.xlane.f32.xlu0 %v1552
      %v1554 = vpop.xlane.xlu0 %1553
      %v1555 = vsel %vm1322, %v1501, 0.0
      %1556 = vadd.xlane.f32.xlu0 %v1555
      %v1557 = vpop.xlane.xlu0 %1556
      %v1558 = vsel %vm1322, %v1502, 0.0
      %1559 = vadd.xlane.f32.xlu0 %v1558
      %v1560 = vpop.xlane.xlu0 %1559
      %v1561 = vsel %vm1322, %v1503, 0.0
      %1562 = vadd.xlane.f32.xlu0 %v1561
      %v1563 = vpop.xlane.xlu0 %1562
      %v1564 = vsel %vm1322, %v1504, 0.0
      %1565 = vadd.xlane.f32.xlu0 %v1564
      %v1566 = vpop.xlane.xlu0 %1565
      %v1567 = vsel %vm1322, %v1505, 0.0
      %1568 = vadd.xlane.f32.xlu0 %v1567
      %v1569 = vpop.xlane.xlu0 %1568
      %v1570 = vsel %vm1322, %v1506, 0.0
      %1571 = vadd.xlane.f32.xlu0 %v1570
      %v1572 = vpop.xlane.xlu0 %1571
      %v1573 = vsel %vm1322, %v1507, 0.0
      %1574 = vadd.xlane.f32.xlu0 %v1573
      %v1575 = vpop.xlane.xlu0 %1574
      %v1576 = vsel %vm1322, %v1508, 0.0
      %1577 = vadd.xlane.f32.xlu0 %v1576
      %v1578 = vpop.xlane.xlu0 %1577
      %v1579 = vsel %vm1322, %v1509, 0.0
      %1580 = vadd.xlane.f32.xlu0 %v1579
      %v1581 = vpop.xlane.xlu0 %1580
      %v1582 = vsel %vm1322, %v1510, 0.0
      %1583 = vadd.xlane.f32.xlu0 %v1582
      %v1584 = vpop.xlane.xlu0 %1583
      %v1585 = vsel %vm1322, %v1511, 0.0
      %1586 = vadd.xlane.f32.xlu0 %v1585
      %v1587 = vpop.xlane.xlu0 %1586
      %v1588 = vsel %vm1322, %v1512, 0.0
      %1589 = vadd.xlane.f32.xlu0 %v1588
      %v1590 = vpop.xlane.xlu0 %1589
      %v1591 = vsel %vm1322, %v1513, 0.0
      %1592 = vadd.xlane.f32.xlu0 %v1591
      %v1593 = vpop.xlane.xlu0 %1592
      %v1594 = vsel %vm1322, %v1514, 0.0
      %1595 = vadd.xlane.f32.xlu0 %v1594
      %v1596 = vpop.xlane.xlu0 %1595
      %v1597 = vsel %vm1322, %v1515, 0.0
      %1598 = vadd.xlane.f32.xlu0 %v1597
      %v1599 = vpop.xlane.xlu0 %1598
      %v1600 = vsel %vm1322, %v1516, 0.0
      %1601 = vadd.xlane.f32.xlu0 %v1600
      %v1602 = vpop.xlane.xlu0 %1601
      %v1603 = vsel %vm1322, %v1517, 0.0
      %1604 = vadd.xlane.f32.xlu0 %v1603
      %v1605 = vpop.xlane.xlu0 %1604
      %v1606 = vsel %vm1322, %v1518, 0.0
      %1607 = vadd.xlane.f32.xlu0 %v1606
      %v1608 = vpop.xlane.xlu0 %1607
      %v1609 = vsel %vm1322, %v1519, 0.0
      %1610 = vadd.xlane.f32.xlu0 %v1609
      %v1611 = vpop.xlane.xlu0 %1610
      %v1612 = vsel %vm1322, %v1520, 0.0
      %1613 = vadd.xlane.f32.xlu0 %v1612
      %v1614 = vpop.xlane.xlu0 %1613
      %v1615 = vsel %vm1322, %v1521, 0.0
      %1616 = vadd.xlane.f32.xlu0 %v1615
      %v1617 = vpop.xlane.xlu0 %1616
      %v1618 = vmul.f32 %v1524, %v1425
      %v1619 = vmul.f32 %v1527, %v1425
      %v1620 = vmul.f32 %v1530, %v1425
      %v1621 = vmul.f32 %v1533, %v1425
      %v1622 = vmul.f32 %v1536, %v1425
      %v1623 = vmul.f32 %v1539, %v1425
      %v1624 = vmul.f32 %v1542, %v1425
      %v1625 = vmul.f32 %v1545, %v1425
      %v1626 = vmul.f32 %v1548, %v1425
      %v1627 = vmul.f32 %v1551, %v1425
      %v1628 = vmul.f32 %v1554, %v1425
      %v1629 = vmul.f32 %v1557, %v1425
      %v1630 = vmul.f32 %v1560, %v1425
      %v1631 = vmul.f32 %v1563, %v1425
      %v1632 = vmul.f32 %v1566, %v1425
      %v1633 = vmul.f32 %v1569, %v1425
      %v1634 = vmul.f32 %v1572, %v1425
      %v1635 = vmul.f32 %v1575, %v1425
      %v1636 = vmul.f32 %v1578, %v1425
      %v1637 = vmul.f32 %v1581, %v1425
      %v1638 = vmul.f32 %v1584, %v1425
      %v1639 = vmul.f32 %v1587, %v1425
      %v1640 = vmul.f32 %v1590, %v1425
      %v1641 = vmul.f32 %v1593, %v1425
      %v1642 = vmul.f32 %v1596, %v1425
      %v1643 = vmul.f32 %v1599, %v1425
      %v1644 = vmul.f32 %v1602, %v1425
      %v1645 = vmul.f32 %v1605, %v1425
      %v1646 = vmul.f32 %v1608, %v1425
      %v1647 = vmul.f32 %v1611, %v1425
      %v1648 = vmul.f32 %v1614, %v1425
      %v1649 = vmul.f32 %v1617, %v1425
      %v1650 = vadd.f32 %v1618, 1e-06
      %v1651 = vadd.f32 %v1619, 1e-06
      %v1652 = vadd.f32 %v1620, 1e-06
      %v1653 = vadd.f32 %v1621, 1e-06
      %v1654 = vadd.f32 %v1622, 1e-06
      %v1655 = vadd.f32 %v1623, 1e-06
      %v1656 = vadd.f32 %v1624, 1e-06
      %v1657 = vadd.f32 %v1625, 1e-06
      %v1658 = vadd.f32 %v1626, 1e-06
      %v1659 = vadd.f32 %v1627, 1e-06
      %v1660 = vadd.f32 %v1628, 1e-06
      %v1661 = vadd.f32 %v1629, 1e-06
      %v1662 = vadd.f32 %v1630, 1e-06
      %v1663 = vadd.f32 %v1631, 1e-06
      %v1664 = vadd.f32 %v1632, 1e-06
      %v1665 = vadd.f32 %v1633, 1e-06
      %v1666 = vadd.f32 %v1634, 1e-06
      %v1667 = vadd.f32 %v1635, 1e-06
      %v1668 = vadd.f32 %v1636, 1e-06
      %v1669 = vadd.f32 %v1637, 1e-06
      %v1670 = vadd.f32 %v1638, 1e-06
      %v1671 = vadd.f32 %v1639, 1e-06
      %v1672 = vadd.f32 %v1640, 1e-06
      %v1673 = vadd.f32 %v1641, 1e-06
      %v1674 = vadd.f32 %v1642, 1e-06
      %v1675 = vadd.f32 %v1643, 1e-06
      %v1676 = vadd.f32 %v1644, 1e-06
      %v1677 = vadd.f32 %v1645, 1e-06
      %v1678 = vadd.f32 %v1646, 1e-06
      %v1679 = vadd.f32 %v1647, 1e-06
      %v1680 = vadd.f32 %v1648, 1e-06
      %v1681 = vadd.f32 %v1649, 1e-06
      %v1682 = vrsqrt.pop %v1650
      %v1683 = vmul.f32 %v1682, %v1650
      %v1684 = vmul.f32 %v1683, %v1682
      %v1685 = vmul.f32 0.5, %v1684
      %v1686 = vsub.f32 1.5, %v1685
      %v1687 = vmul.f32 %v1682, %v1686
      %vm1688 = vweird.f32 %v1650
      %vm1689 = vweird.f32 %v1682
      %vm1690 = vmor %vm1688, %vm1689
      %v1691 = vsel %vm1690, %v1682, %v1687
      %v1692 = vrsqrt.pop %v1651
      %v1693 = vmul.f32 %v1692, %v1651
      %v1694 = vmul.f32 %v1693, %v1692
      %v1695 = vmul.f32 0.5, %v1694
      %v1696 = vsub.f32 1.5, %v1695
      %v1697 = vmul.f32 %v1692, %v1696
      %vm1698 = vweird.f32 %v1651
      %vm1699 = vweird.f32 %v1692
      %vm1700 = vmor %vm1698, %vm1699
      %v1701 = vsel %vm1700, %v1692, %v1697
      %v1702 = vrsqrt.pop %v1652
      %v1703 = vmul.f32 %v1702, %v1652
      %v1704 = vmul.f32 %v1703, %v1702
      %v1705 = vmul.f32 0.5, %v1704
      %v1706 = vsub.f32 1.5, %v1705
      %v1707 = vmul.f32 %v1702, %v1706
      %vm1708 = vweird.f32 %v1652
      %vm1709 = vweird.f32 %v1702
      %vm1710 = vmor %vm1708, %vm1709
      %v1711 = vsel %vm1710, %v1702, %v1707
      %v1712 = vrsqrt.pop %v1653
      %v1713 = vmul.f32 %v1712, %v1653
      %v1714 = vmul.f32 %v1713, %v1712
      %v1715 = vmul.f32 0.5, %v1714
      %v1716 = vsub.f32 1.5, %v1715
      %v1717 = vmul.f32 %v1712, %v1716
      %vm1718 = vweird.f32 %v1653
      %vm1719 = vweird.f32 %v1712
      %vm1720 = vmor %vm1718, %vm1719
      %v1721 = vsel %vm1720, %v1712, %v1717
      %v1722 = vrsqrt.pop %v1654
      %v1723 = vmul.f32 %v1722, %v1654
      %v1724 = vmul.f32 %v1723, %v1722
      %v1725 = vmul.f32 0.5, %v1724
      %v1726 = vsub.f32 1.5, %v1725
      %v1727 = vmul.f32 %v1722, %v1726
      %vm1728 = vweird.f32 %v1654
      %vm1729 = vweird.f32 %v1722
      %vm1730 = vmor %vm1728, %vm1729
      %v1731 = vsel %vm1730, %v1722, %v1727
      %v1732 = vrsqrt.pop %v1655
      %v1733 = vmul.f32 %v1732, %v1655
      %v1734 = vmul.f32 %v1733, %v1732
      %v1735 = vmul.f32 0.5, %v1734
      %v1736 = vsub.f32 1.5, %v1735
      %v1737 = vmul.f32 %v1732, %v1736
      %vm1738 = vweird.f32 %v1655
      %vm1739 = vweird.f32 %v1732
      %vm1740 = vmor %vm1738, %vm1739
      %v1741 = vsel %vm1740, %v1732, %v1737
      %v1742 = vrsqrt.pop %v1656
      %v1743 = vmul.f32 %v1742, %v1656
      %v1744 = vmul.f32 %v1743, %v1742
      %v1745 = vmul.f32 0.5, %v1744
      %v1746 = vsub.f32 1.5, %v1745
      %v1747 = vmul.f32 %v1742, %v1746
      %vm1748 = vweird.f32 %v1656
      %vm1749 = vweird.f32 %v1742
      %vm1750 = vmor %vm1748, %vm1749
      %v1751 = vsel %vm1750, %v1742, %v1747
      %v1752 = vrsqrt.pop %v1657
      %v1753 = vmul.f32 %v1752, %v1657
      %v1754 = vmul.f32 %v1753, %v1752
      %v1755 = vmul.f32 0.5, %v1754
      %v1756 = vsub.f32 1.5, %v1755
      %v1757 = vmul.f32 %v1752, %v1756
      %vm1758 = vweird.f32 %v1657
      %vm1759 = vweird.f32 %v1752
      %vm1760 = vmor %vm1758, %vm1759
      %v1761 = vsel %vm1760, %v1752, %v1757
      %v1762 = vrsqrt.pop %v1658
      %v1763 = vmul.f32 %v1762, %v1658
      %v1764 = vmul.f32 %v1763, %v1762
      %v1765 = vmul.f32 0.5, %v1764
      %v1766 = vsub.f32 1.5, %v1765
      %v1767 = vmul.f32 %v1762, %v1766
      %vm1768 = vweird.f32 %v1658
      %vm1769 = vweird.f32 %v1762
      %vm1770 = vmor %vm1768, %vm1769
      %v1771 = vsel %vm1770, %v1762, %v1767
      %v1772 = vrsqrt.pop %v1659
      %v1773 = vmul.f32 %v1772, %v1659
      %v1774 = vmul.f32 %v1773, %v1772
      %v1775 = vmul.f32 0.5, %v1774
      %v1776 = vsub.f32 1.5, %v1775
      %v1777 = vmul.f32 %v1772, %v1776
      %vm1778 = vweird.f32 %v1659
      %vm1779 = vweird.f32 %v1772
      %vm1780 = vmor %vm1778, %vm1779
      %v1781 = vsel %vm1780, %v1772, %v1777
      %v1782 = vrsqrt.pop %v1660
      %v1783 = vmul.f32 %v1782, %v1660
      %v1784 = vmul.f32 %v1783, %v1782
      %v1785 = vmul.f32 0.5, %v1784
      %v1786 = vsub.f32 1.5, %v1785
      %v1787 = vmul.f32 %v1782, %v1786
      %vm1788 = vweird.f32 %v1660
      %vm1789 = vweird.f32 %v1782
      %vm1790 = vmor %vm1788, %vm1789
      %v1791 = vsel %vm1790, %v1782, %v1787
      %v1792 = vrsqrt.pop %v1661
      %v1793 = vmul.f32 %v1792, %v1661
      %v1794 = vmul.f32 %v1793, %v1792
      %v1795 = vmul.f32 0.5, %v1794
      %v1796 = vsub.f32 1.5, %v1795
      %v1797 = vmul.f32 %v1792, %v1796
      %vm1798 = vweird.f32 %v1661
      %vm1799 = vweird.f32 %v1792
      %vm1800 = vmor %vm1798, %vm1799
      %v1801 = vsel %vm1800, %v1792, %v1797
      %v1802 = vrsqrt.pop %v1662
      %v1803 = vmul.f32 %v1802, %v1662
      %v1804 = vmul.f32 %v1803, %v1802
      %v1805 = vmul.f32 0.5, %v1804
      %v1806 = vsub.f32 1.5, %v1805
      %v1807 = vmul.f32 %v1802, %v1806
      %vm1808 = vweird.f32 %v1662
      %vm1809 = vweird.f32 %v1802
      %vm1810 = vmor %vm1808, %vm1809
      %v1811 = vsel %vm1810, %v1802, %v1807
      %v1812 = vrsqrt.pop %v1663
      %v1813 = vmul.f32 %v1812, %v1663
      %v1814 = vmul.f32 %v1813, %v1812
      %v1815 = vmul.f32 0.5, %v1814
      %v1816 = vsub.f32 1.5, %v1815
      %v1817 = vmul.f32 %v1812, %v1816
      %vm1818 = vweird.f32 %v1663
      %vm1819 = vweird.f32 %v1812
      %vm1820 = vmor %vm1818, %vm1819
      %v1821 = vsel %vm1820, %v1812, %v1817
      %v1822 = vrsqrt.pop %v1664
      %v1823 = vmul.f32 %v1822, %v1664
      %v1824 = vmul.f32 %v1823, %v1822
      %v1825 = vmul.f32 0.5, %v1824
      %v1826 = vsub.f32 1.5, %v1825
      %v1827 = vmul.f32 %v1822, %v1826
      %vm1828 = vweird.f32 %v1664
      %vm1829 = vweird.f32 %v1822
      %vm1830 = vmor %vm1828, %vm1829
      %v1831 = vsel %vm1830, %v1822, %v1827
      %v1832 = vrsqrt.pop %v1665
      %v1833 = vmul.f32 %v1832, %v1665
      %v1834 = vmul.f32 %v1833, %v1832
      %v1835 = vmul.f32 0.5, %v1834
      %v1836 = vsub.f32 1.5, %v1835
      %v1837 = vmul.f32 %v1832, %v1836
      %vm1838 = vweird.f32 %v1665
      %vm1839 = vweird.f32 %v1832
      %vm1840 = vmor %vm1838, %vm1839
      %v1841 = vsel %vm1840, %v1832, %v1837
      %v1842 = vrsqrt.pop %v1666
      %v1843 = vmul.f32 %v1842, %v1666
      %v1844 = vmul.f32 %v1843, %v1842
      %v1845 = vmul.f32 0.5, %v1844
      %v1846 = vsub.f32 1.5, %v1845
      %v1847 = vmul.f32 %v1842, %v1846
      %vm1848 = vweird.f32 %v1666
      %vm1849 = vweird.f32 %v1842
      %vm1850 = vmor %vm1848, %vm1849
      %v1851 = vsel %vm1850, %v1842, %v1847
      %v1852 = vrsqrt.pop %v1667
      %v1853 = vmul.f32 %v1852, %v1667
      %v1854 = vmul.f32 %v1853, %v1852
      %v1855 = vmul.f32 0.5, %v1854
      %v1856 = vsub.f32 1.5, %v1855
      %v1857 = vmul.f32 %v1852, %v1856
      %vm1858 = vweird.f32 %v1667
      %vm1859 = vweird.f32 %v1852
      %vm1860 = vmor %vm1858, %vm1859
      %v1861 = vsel %vm1860, %v1852, %v1857
      %v1862 = vrsqrt.pop %v1668
      %v1863 = vmul.f32 %v1862, %v1668
      %v1864 = vmul.f32 %v1863, %v1862
      %v1865 = vmul.f32 0.5, %v1864
      %v1866 = vsub.f32 1.5, %v1865
      %v1867 = vmul.f32 %v1862, %v1866
      %vm1868 = vweird.f32 %v1668
      %vm1869 = vweird.f32 %v1862
      %vm1870 = vmor %vm1868, %vm1869
      %v1871 = vsel %vm1870, %v1862, %v1867
      %v1872 = vrsqrt.pop %v1669
      %v1873 = vmul.f32 %v1872, %v1669
      %v1874 = vmul.f32 %v1873, %v1872
      %v1875 = vmul.f32 0.5, %v1874
      %v1876 = vsub.f32 1.5, %v1875
      %v1877 = vmul.f32 %v1872, %v1876
      %vm1878 = vweird.f32 %v1669
      %vm1879 = vweird.f32 %v1872
      %vm1880 = vmor %vm1878, %vm1879
      %v1881 = vsel %vm1880, %v1872, %v1877
      %v1882 = vrsqrt.pop %v1670
      %v1883 = vmul.f32 %v1882, %v1670
      %v1884 = vmul.f32 %v1883, %v1882
      %v1885 = vmul.f32 0.5, %v1884
      %v1886 = vsub.f32 1.5, %v1885
      %v1887 = vmul.f32 %v1882, %v1886
      %vm1888 = vweird.f32 %v1670
      %vm1889 = vweird.f32 %v1882
      %vm1890 = vmor %vm1888, %vm1889
      %v1891 = vsel %vm1890, %v1882, %v1887
      %v1892 = vrsqrt.pop %v1671
      %v1893 = vmul.f32 %v1892, %v1671
      %v1894 = vmul.f32 %v1893, %v1892
      %v1895 = vmul.f32 0.5, %v1894
      %v1896 = vsub.f32 1.5, %v1895
      %v1897 = vmul.f32 %v1892, %v1896
      %vm1898 = vweird.f32 %v1671
      %vm1899 = vweird.f32 %v1892
      %vm1900 = vmor %vm1898, %vm1899
      %v1901 = vsel %vm1900, %v1892, %v1897
      %v1902 = vrsqrt.pop %v1672
      %v1903 = vmul.f32 %v1902, %v1672
      %v1904 = vmul.f32 %v1903, %v1902
      %v1905 = vmul.f32 0.5, %v1904
      %v1906 = vsub.f32 1.5, %v1905
      %v1907 = vmul.f32 %v1902, %v1906
      %vm1908 = vweird.f32 %v1672
      %vm1909 = vweird.f32 %v1902
      %vm1910 = vmor %vm1908, %vm1909
      %v1911 = vsel %vm1910, %v1902, %v1907
      %v1912 = vrsqrt.pop %v1673
      %v1913 = vmul.f32 %v1912, %v1673
      %v1914 = vmul.f32 %v1913, %v1912
      %v1915 = vmul.f32 0.5, %v1914
      %v1916 = vsub.f32 1.5, %v1915
      %v1917 = vmul.f32 %v1912, %v1916
      %vm1918 = vweird.f32 %v1673
      %vm1919 = vweird.f32 %v1912
      %vm1920 = vmor %vm1918, %vm1919
      %v1921 = vsel %vm1920, %v1912, %v1917
      %v1922 = vrsqrt.pop %v1674
      %v1923 = vmul.f32 %v1922, %v1674
      %v1924 = vmul.f32 %v1923, %v1922
      %v1925 = vmul.f32 0.5, %v1924
      %v1926 = vsub.f32 1.5, %v1925
      %v1927 = vmul.f32 %v1922, %v1926
      %vm1928 = vweird.f32 %v1674
      %vm1929 = vweird.f32 %v1922
      %vm1930 = vmor %vm1928, %vm1929
      %v1931 = vsel %vm1930, %v1922, %v1927
      %v1932 = vrsqrt.pop %v1675
      %v1933 = vmul.f32 %v1932, %v1675
      %v1934 = vmul.f32 %v1933, %v1932
      %v1935 = vmul.f32 0.5, %v1934
      %v1936 = vsub.f32 1.5, %v1935
      %v1937 = vmul.f32 %v1932, %v1936
      %vm1938 = vweird.f32 %v1675
      %vm1939 = vweird.f32 %v1932
      %vm1940 = vmor %vm1938, %vm1939
      %v1941 = vsel %vm1940, %v1932, %v1937
      %v1942 = vrsqrt.pop %v1676
      %v1943 = vmul.f32 %v1942, %v1676
      %v1944 = vmul.f32 %v1943, %v1942
      %v1945 = vmul.f32 0.5, %v1944
      %v1946 = vsub.f32 1.5, %v1945
      %v1947 = vmul.f32 %v1942, %v1946
      %vm1948 = vweird.f32 %v1676
      %vm1949 = vweird.f32 %v1942
      %vm1950 = vmor %vm1948, %vm1949
      %v1951 = vsel %vm1950, %v1942, %v1947
      %v1952 = vrsqrt.pop %v1677
      %v1953 = vmul.f32 %v1952, %v1677
      %v1954 = vmul.f32 %v1953, %v1952
      %v1955 = vmul.f32 0.5, %v1954
      %v1956 = vsub.f32 1.5, %v1955
      %v1957 = vmul.f32 %v1952, %v1956
      %vm1958 = vweird.f32 %v1677
      %vm1959 = vweird.f32 %v1952
      %vm1960 = vmor %vm1958, %vm1959
      %v1961 = vsel %vm1960, %v1952, %v1957
      %v1962 = vrsqrt.pop %v1678
      %v1963 = vmul.f32 %v1962, %v1678
      %v1964 = vmul.f32 %v1963, %v1962
      %v1965 = vmul.f32 0.5, %v1964
      %v1966 = vsub.f32 1.5, %v1965
      %v1967 = vmul.f32 %v1962, %v1966
      %vm1968 = vweird.f32 %v1678
      %vm1969 = vweird.f32 %v1962
      %vm1970 = vmor %vm1968, %vm1969
      %v1971 = vsel %vm1970, %v1962, %v1967
      %v1972 = vrsqrt.pop %v1679
      %v1973 = vmul.f32 %v1972, %v1679
      %v1974 = vmul.f32 %v1973, %v1972
      %v1975 = vmul.f32 0.5, %v1974
      %v1976 = vsub.f32 1.5, %v1975
      %v1977 = vmul.f32 %v1972, %v1976
      %vm1978 = vweird.f32 %v1679
      %vm1979 = vweird.f32 %v1972
      %vm1980 = vmor %vm1978, %vm1979
      %v1981 = vsel %vm1980, %v1972, %v1977
      %v1982 = vrsqrt.pop %v1680
      %v1983 = vmul.f32 %v1982, %v1680
      %v1984 = vmul.f32 %v1983, %v1982
      %v1985 = vmul.f32 0.5, %v1984
      %v1986 = vsub.f32 1.5, %v1985
      %v1987 = vmul.f32 %v1982, %v1986
      %vm1988 = vweird.f32 %v1680
      %vm1989 = vweird.f32 %v1982
      %vm1990 = vmor %vm1988, %vm1989
      %v1991 = vsel %vm1990, %v1982, %v1987
      %v1992 = vrsqrt.pop %v1681
      %v1993 = vmul.f32 %v1992, %v1681
      %v1994 = vmul.f32 %v1993, %v1992
      %v1995 = vmul.f32 0.5, %v1994
      %v1996 = vsub.f32 1.5, %v1995
      %v1997 = vmul.f32 %v1992, %v1996
      %vm1998 = vweird.f32 %v1681
      %vm1999 = vweird.f32 %v1992
      %vm2000 = vmor %vm1998, %vm1999
      %v2001 = vsel %vm2000, %v1992, %v1997
      %v2002 = vmul.f32 %v1458, %v1691
      %v2003 = vmul.f32 %v1459, %v1701
      %v2004 = vmul.f32 %v1460, %v1711
      %v2005 = vmul.f32 %v1461, %v1721
      %v2006 = vmul.f32 %v1462, %v1731
      %v2007 = vmul.f32 %v1463, %v1741
      %v2008 = vmul.f32 %v1464, %v1751
      %v2009 = vmul.f32 %v1465, %v1761
      %v2010 = vmul.f32 %v1466, %v1771
      %v2011 = vmul.f32 %v1467, %v1781
      %v2012 = vmul.f32 %v1468, %v1791
      %v2013 = vmul.f32 %v1469, %v1801
      %v2014 = vmul.f32 %v1470, %v1811
      %v2015 = vmul.f32 %v1471, %v1821
      %v2016 = vmul.f32 %v1472, %v1831
      %v2017 = vmul.f32 %v1473, %v1841
      %v2018 = vmul.f32 %v1474, %v1851
      %v2019 = vmul.f32 %v1475, %v1861
      %v2020 = vmul.f32 %v1476, %v1871
      %v2021 = vmul.f32 %v1477, %v1881
      %v2022 = vmul.f32 %v1478, %v1891
      %v2023 = vmul.f32 %v1479, %v1901
      %v2024 = vmul.f32 %v1480, %v1911
      %v2025 = vmul.f32 %v1481, %v1921
      %v2026 = vmul.f32 %v1482, %v1931
      %v2027 = vmul.f32 %v1483, %v1941
      %v2028 = vmul.f32 %v1484, %v1951
      %v2029 = vmul.f32 %v1485, %v1961
      %v2030 = vmul.f32 %v1486, %v1971
      %v2031 = vmul.f32 %v1487, %v1981
      %v2032 = vmul.f32 %v1488, %v1991
      %v2033 = vmul.f32 %v1489, %v2001
      %v2034 = vld [vmem:[%s6] sm:$0x1]
      %v2036 = vperm.slane %v2034, 0
      %v2038 = vmul.f32 %v2002, %v2036
      %v2039 = vmul.f32 %v2003, %v2036
      %v2040 = vmul.f32 %v2004, %v2036
      %v2041 = vmul.f32 %v2005, %v2036
      %v2042 = vmul.f32 %v2006, %v2036
      %v2043 = vmul.f32 %v2007, %v2036
      %v2044 = vmul.f32 %v2008, %v2036
      %v2045 = vmul.f32 %v2009, %v2036
      %v2046 = vmul.f32 %v2010, %v2036
      %v2047 = vmul.f32 %v2011, %v2036
      %v2048 = vmul.f32 %v2012, %v2036
      %v2049 = vmul.f32 %v2013, %v2036
      %v2050 = vmul.f32 %v2014, %v2036
      %v2051 = vmul.f32 %v2015, %v2036
      %v2052 = vmul.f32 %v2016, %v2036
      %v2053 = vmul.f32 %v2017, %v2036
      %v2054 = vmul.f32 %v2018, %v2036
      %v2055 = vmul.f32 %v2019, %v2036
      %v2056 = vmul.f32 %v2020, %v2036
      %v2057 = vmul.f32 %v2021, %v2036
      %v2058 = vmul.f32 %v2022, %v2036
      %v2059 = vmul.f32 %v2023, %v2036
      %v2060 = vmul.f32 %v2024, %v2036
      %v2061 = vmul.f32 %v2025, %v2036
      %v2062 = vmul.f32 %v2026, %v2036
      %v2063 = vmul.f32 %v2027, %v2036
      %v2064 = vmul.f32 %v2028, %v2036
      %v2065 = vmul.f32 %v2029, %v2036
      %v2066 = vmul.f32 %v2030, %v2036
      %v2067 = vmul.f32 %v2031, %v2036
      %v2068 = vmul.f32 %v2032, %v2036
      %v2069 = vmul.f32 %v2033, %v2036
      %v2070 = vld [vmem:[%s7] sm:$0x1]
      %v2072 = vperm.slane %v2070, 0
      %v2074 = vadd.f32 %v2038, %v2072
      %v2075 = vadd.f32 %v2039, %v2072
      %v2076 = vadd.f32 %v2040, %v2072
      %v2077 = vadd.f32 %v2041, %v2072
      %v2078 = vadd.f32 %v2042, %v2072
      %v2079 = vadd.f32 %v2043, %v2072
      %v2080 = vadd.f32 %v2044, %v2072
      %v2081 = vadd.f32 %v2045, %v2072
      %v2082 = vadd.f32 %v2046, %v2072
      %v2083 = vadd.f32 %v2047, %v2072
      %v2084 = vadd.f32 %v2048, %v2072
      %v2085 = vadd.f32 %v2049, %v2072
      %v2086 = vadd.f32 %v2050, %v2072
      %v2087 = vadd.f32 %v2051, %v2072
      %v2088 = vadd.f32 %v2052, %v2072
      %v2089 = vadd.f32 %v2053, %v2072
      %v2090 = vadd.f32 %v2054, %v2072
      %v2091 = vadd.f32 %v2055, %v2072
      %v2092 = vadd.f32 %v2056, %v2072
      %v2093 = vadd.f32 %v2057, %v2072
      %v2094 = vadd.f32 %v2058, %v2072
      %v2095 = vadd.f32 %v2059, %v2072
      %v2096 = vadd.f32 %v2060, %v2072
      %v2097 = vadd.f32 %v2061, %v2072
      %v2098 = vadd.f32 %v2062, %v2072
      %v2099 = vadd.f32 %v2063, %v2072
      %v2100 = vadd.f32 %v2064, %v2072
      %v2101 = vadd.f32 %v2065, %v2072
      %v2102 = vadd.f32 %v2066, %v2072
      %v2103 = vadd.f32 %v2067, %v2072
      %v2104 = vadd.f32 %v2068, %v2072
      %v2105 = vadd.f32 %v2069, %v2072
      %2106 = vst.msk [vmem:[#allocation2] sm:$0xff] %vm1322, 0.0
      %2107 = vst.msk [vmem:[#allocation2 + $0x8] sm:$0xff] %vm1322, 0.0
      %vm2108 = vcmask 156672
      %2109 = vst.msk [vmem:[#allocation2 + $0x10] sm:$0x3] %vm2108, 0.0
      %s2110 = scalar_lea.vmem [#allocation2], 408
      %2111 = vst.msk [vmem:[%s2110] sm:$0xff] %vm1322, 0.0
      %2112 = vst.msk [vmem:[%s2110 + $0x8] sm:$0xff] %vm1322, 0.0
      %2113 = vst.msk [vmem:[%s2110 + $0x10] sm:$0x3] %vm2108, 0.0
      %s2114 = scalar_lea.vmem [#allocation2], 24
      %vm2115 = vcmask 155648
      %2116 = vst.msk [vmem:[%s2114] sm:$0x1] %vm2115, 0.0
      %2117 = vst.msk [vmem:[%s2114 + $0x18] sm:$0x1] %vm2115, 0.0
      %2118 = vst.msk [vmem:[%s2114 + $0x30] sm:$0x1] %vm2115, 0.0
      %2119 = vst.msk [vmem:[%s2114 + $0x48] sm:$0x1] %vm2115, 0.0
      %2120 = vst.msk [vmem:[%s2114 + $0x60] sm:$0x1] %vm2115, 0.0
      %2121 = vst.msk [vmem:[%s2114 + $0x78] sm:$0x1] %vm2115, 0.0
      %2122 = vst.msk [vmem:[%s2114 + $0x90] sm:$0x1] %vm2115, 0.0
      %2123 = vst.msk [vmem:[%s2114 + $0xa8] sm:$0x1] %vm2115, 0.0
      %2124 = vst.msk [vmem:[%s2114 + $0xc0] sm:$0x1] %vm2115, 0.0
      %2125 = vst.msk [vmem:[%s2114 + $0xd8] sm:$0x1] %vm2115, 0.0
      %2126 = vst.msk [vmem:[%s2114 + $0xf0] sm:$0x1] %vm2115, 0.0
      %2127 = vst.msk [vmem:[%s2114 + $0x108] sm:$0x1] %vm2115, 0.0
      %2128 = vst.msk [vmem:[%s2114 + $0x120] sm:$0x1] %vm2115, 0.0
      %2129 = vst.msk [vmem:[%s2114 + $0x138] sm:$0x1] %vm2115, 0.0
      %2130 = vst.msk [vmem:[%s2114 + $0x150] sm:$0x1] %vm2115, 0.0
      %2131 = vst.msk [vmem:[%s2114 + $0x168] sm:$0x1] %vm2115, 0.0
      %2132 = vst.msk [vmem:[%s2114 + $0x11] sm:$0x1] %vm2115, 0.0
      %2133 = vst.msk [vmem:[%s2114 + $0x29] sm:$0x1] %vm2115, 0.0
      %2134 = vst.msk [vmem:[%s2114 + $0x41] sm:$0x1] %vm2115, 0.0
      %2135 = vst.msk [vmem:[%s2114 + $0x59] sm:$0x1] %vm2115, 0.0
      %2136 = vst.msk [vmem:[%s2114 + $0x71] sm:$0x1] %vm2115, 0.0
      %2137 = vst.msk [vmem:[%s2114 + $0x89] sm:$0x1] %vm2115, 0.0
      %2138 = vst.msk [vmem:[%s2114 + $0xa1] sm:$0x1] %vm2115, 0.0
      %2139 = vst.msk [vmem:[%s2114 + $0xb9] sm:$0x1] %vm2115, 0.0
      %2140 = vst.msk [vmem:[%s2114 + $0xd1] sm:$0x1] %vm2115, 0.0
      %2141 = vst.msk [vmem:[%s2114 + $0xe9] sm:$0x1] %vm2115, 0.0
      %2142 = vst.msk [vmem:[%s2114 + $0x101] sm:$0x1] %vm2115, 0.0
      %2143 = vst.msk [vmem:[%s2114 + $0x119] sm:$0x1] %vm2115, 0.0
      %2144 = vst.msk [vmem:[%s2114 + $0x131] sm:$0x1] %vm2115, 0.0
      %2145 = vst.msk [vmem:[%s2114 + $0x149] sm:$0x1] %vm2115, 0.0
      %2146 = vst.msk [vmem:[%s2114 + $0x161] sm:$0x1] %vm2115, 0.0
      %2147 = vst.msk [vmem:[%s2114 + $0x179] sm:$0x1] %vm2115, 0.0
      %2148 = vst.msk [vmem:[%s2114 + $0x1] sm:$0xff] %vm1322, %v2074
      %2149 = vst.msk [vmem:[%s2114 + $0x9] sm:$0xff] %vm1322, %v2075
      %2150 = vst.msk [vmem:[%s2114 + $0x19] sm:$0xff] %vm1322, %v2076
      %2151 = vst.msk [vmem:[%s2114 + $0x21] sm:$0xff] %vm1322, %v2077
      %2152 = vst.msk [vmem:[%s2114 + $0x31] sm:$0xff] %vm1322, %v2078
      %2153 = vst.msk [vmem:[%s2114 + $0x39] sm:$0xff] %vm1322, %v2079
      %2154 = vst.msk [vmem:[%s2114 + $0x49] sm:$0xff] %vm1322, %v2080
      %2155 = vst.msk [vmem:[%s2114 + $0x51] sm:$0xff] %vm1322, %v2081
      %2156 = vst.msk [vmem:[%s2114 + $0x61] sm:$0xff] %vm1322, %v2082
      %2157 = vst.msk [vmem:[%s2114 + $0x69] sm:$0xff] %vm1322, %v2083
      %2158 = vst.msk [vmem:[%s2114 + $0x79] sm:$0xff] %vm1322, %v2084
      %2159 = vst.msk [vmem:[%s2114 + $0x81] sm:$0xff] %vm1322, %v2085
      %2160 = vst.msk [vmem:[%s2114 + $0x91] sm:$0xff] %vm1322, %v2086
      %2161 = vst.msk [vmem:[%s2114 + $0x99] sm:$0xff] %vm1322, %v2087
      %2162 = vst.msk [vmem:[%s2114 + $0xa9] sm:$0xff] %vm1322, %v2088
      %2163 = vst.msk [vmem:[%s2114 + $0xb1] sm:$0xff] %vm1322, %v2089
      %2164 = vst.msk [vmem:[%s2114 + $0xc1] sm:$0xff] %vm1322, %v2090
      %2165 = vst.msk [vmem:[%s2114 + $0xc9] sm:$0xff] %vm1322, %v2091
      %2166 = vst.msk [vmem:[%s2114 + $0xd9] sm:$0xff] %vm1322, %v2092
      %2167 = vst.msk [vmem:[%s2114 + $0xe1] sm:$0xff] %vm1322, %v2093
      %2168 = vst.msk [vmem:[%s2114 + $0xf1] sm:$0xff] %vm1322, %v2094
      %2169 = vst.msk [vmem:[%s2114 + $0xf9] sm:$0xff] %vm1322, %v2095
      %2170 = vst.msk [vmem:[%s2114 + $0x109] sm:$0xff] %vm1322, %v2096
      %2171 = vst.msk [vmem:[%s2114 + $0x111] sm:$0xff] %vm1322, %v2097
      %2172 = vst.msk [vmem:[%s2114 + $0x121] sm:$0xff] %vm1322, %v2098
      %2173 = vst.msk [vmem:[%s2114 + $0x129] sm:$0xff] %vm1322, %v2099
      %2174 = vst.msk [vmem:[%s2114 + $0x139] sm:$0xff] %vm1322, %v2100
      %2175 = vst.msk [vmem:[%s2114 + $0x141] sm:$0xff] %vm1322, %v2101
      %2176 = vst.msk [vmem:[%s2114 + $0x151] sm:$0xff] %vm1322, %v2102
      %2177 = vst.msk [vmem:[%s2114 + $0x159] sm:$0xff] %vm1322, %v2103
      %2178 = vst.msk [vmem:[%s2114 + $0x169] sm:$0xff] %vm1322, %v2104
      %2179 = vst.msk [vmem:[%s2114 + $0x171] sm:$0xff] %vm1322, %v2105
      %v2180 = vld [vmem:[%s8] sm:$0xff]
      %v2181 = vld [vmem:[%s8 + $0x8] sm:$0x1]
      %v2182 = vld [vmem:[#allocation2] sm:$0xff]
      %v2183 = vld [vmem:[#allocation2 + $0x8] sm:$0xff]
      %v2184 = vld [vmem:[#allocation2 + $0x18] sm:$0xff]
      %v2185 = vld [vmem:[#allocation2 + $0x20] sm:$0xff]
      %v2186 = vld [vmem:[#allocation2 + $0x30] sm:$0xff]
      %v2187 = vld [vmem:[#allocation2 + $0x38] sm:$0xff]
      %v2188 = vld [vmem:[#allocation2 + $0x48] sm:$0xff]
      %v2189 = vld [vmem:[#allocation2 + $0x50] sm:$0xff]
      %v2190 = vld [vmem:[#allocation2 + $0x60] sm:$0xff]
      %v2191 = vld [vmem:[#allocation2 + $0x68] sm:$0xff]
      %v2192 = vld [vmem:[#allocation2 + $0x78] sm:$0xff]
      %v2193 = vld [vmem:[#allocation2 + $0x80] sm:$0xff]
      %v2194 = vld [vmem:[#allocation2 + $0x90] sm:$0xff]
      %v2195 = vld [vmem:[#allocation2 + $0x98] sm:$0xff]
      %v2196 = vld [vmem:[#allocation2 + $0xa8] sm:$0xff]
      %v2197 = vld [vmem:[#allocation2 + $0xb0] sm:$0xff]
      %v2198 = vld [vmem:[#allocation2 + $0xc0] sm:$0xff]
      %v2199 = vld [vmem:[#allocation2 + $0xc8] sm:$0xff]
      %v2200 = vld [vmem:[#allocation2 + $0xd8] sm:$0xff]
      %v2201 = vld [vmem:[#allocation2 + $0xe0] sm:$0xff]
      %v2202 = vld [vmem:[#allocation2 + $0xf0] sm:$0xff]
      %v2203 = vld [vmem:[#allocation2 + $0xf8] sm:$0xff]
      %v2204 = vld [vmem:[#allocation2 + $0x108] sm:$0xff]
      %v2205 = vld [vmem:[#allocation2 + $0x110] sm:$0xff]
      %v2206 = vld [vmem:[#allocation2 + $0x120] sm:$0xff]
      %v2207 = vld [vmem:[#allocation2 + $0x128] sm:$0xff]
      %v2208 = vld [vmem:[#allocation2 + $0x138] sm:$0xff]
      %v2209 = vld [vmem:[#allocation2 + $0x140] sm:$0xff]
      %v2210 = vld [vmem:[#allocation2 + $0x150] sm:$0xff]
      %v2211 = vld [vmem:[#allocation2 + $0x158] sm:$0xff]
      %v2212 = vld [vmem:[#allocation2 + $0x168] sm:$0xff]
      %v2213 = vld [vmem:[#allocation2 + $0x170] sm:$0xff]
      %v2214 = vperm.slane %v2180, 0
      %v2215 = vmul.f32 %v2182, %v2214
      %v2216 = vmul.f32 %v2183, %v2214
      %v2217 = vmul.f32 %v2184, %v2214
      %v2218 = vmul.f32 %v2185, %v2214
      %v2219 = vmul.f32 %v2186, %v2214
      %v2220 = vmul.f32 %v2187, %v2214
      %v2221 = vmul.f32 %v2188, %v2214
      %v2222 = vmul.f32 %v2189, %v2214
      %v2223 = vmul.f32 %v2190, %v2214
      %v2224 = vmul.f32 %v2191, %v2214
      %v2225 = vmul.f32 %v2192, %v2214
      %v2226 = vmul.f32 %v2193, %v2214
      %v2227 = vmul.f32 %v2194, %v2214
      %v2228 = vmul.f32 %v2195, %v2214
      %v2229 = vmul.f32 %v2196, %v2214
      %v2230 = vmul.f32 %v2197, %v2214
      %v2231 = vmul.f32 %v2198, %v2214
      %v2232 = vmul.f32 %v2199, %v2214
      %v2233 = vmul.f32 %v2200, %v2214
      %v2234 = vmul.f32 %v2201, %v2214
      %v2235 = vmul.f32 %v2202, %v2214
      %v2236 = vmul.f32 %v2203, %v2214
      %v2237 = vmul.f32 %v2204, %v2214
      %v2238 = vmul.f32 %v2205, %v2214
      %v2239 = vmul.f32 %v2206, %v2214
      %v2240 = vmul.f32 %v2207, %v2214
      %v2241 = vmul.f32 %v2208, %v2214
      %v2242 = vmul.f32 %v2209, %v2214
      %v2243 = vmul.f32 %v2210, %v2214
      %v2244 = vmul.f32 %v2211, %v2214
      %v2245 = vmul.f32 %v2212, %v2214
      %v2246 = vmul.f32 %v2213, %v2214
      %v2247 = vadd.f32 %v2215, 0.0
      %v2248 = vadd.f32 %v2216, 0.0
      %v2249 = vadd.f32 %v2217, 0.0
      %v2250 = vadd.f32 %v2218, 0.0
      %v2251 = vadd.f32 %v2219, 0.0
      %v2252 = vadd.f32 %v2220, 0.0
      %v2253 = vadd.f32 %v2221, 0.0
      %v2254 = vadd.f32 %v2222, 0.0
      %v2255 = vadd.f32 %v2223, 0.0
      %v2256 = vadd.f32 %v2224, 0.0
      %v2257 = vadd.f32 %v2225, 0.0
      %v2258 = vadd.f32 %v2226, 0.0
      %v2259 = vadd.f32 %v2227, 0.0
      %v2260 = vadd.f32 %v2228, 0.0
      %v2261 = vadd.f32 %v2229, 0.0
      %v2262 = vadd.f32 %v2230, 0.0
      %v2263 = vadd.f32 %v2231, 0.0
      %v2264 = vadd.f32 %v2232, 0.0
      %v2265 = vadd.f32 %v2233, 0.0
      %v2266 = vadd.f32 %v2234, 0.0
      %v2267 = vadd.f32 %v2235, 0.0
      %v2268 = vadd.f32 %v2236, 0.0
      %v2269 = vadd.f32 %v2237, 0.0
      %v2270 = vadd.f32 %v2238, 0.0
      %v2271 = vadd.f32 %v2239, 0.0
      %v2272 = vadd.f32 %v2240, 0.0
      %v2273 = vadd.f32 %v2241, 0.0
      %v2274 = vadd.f32 %v2242, 0.0
      %v2275 = vadd.f32 %v2243, 0.0
      %v2276 = vadd.f32 %v2244, 0.0
      %v2277 = vadd.f32 %v2245, 0.0
      %v2278 = vadd.f32 %v2246, 0.0
      %v2279 = vld [vmem:[#allocation2 + $0x1] sm:$0xff]
      %v2280 = vld [vmem:[#allocation2 + $0x9] sm:$0xff]
      %v2281 = vld [vmem:[#allocation2 + $0x19] sm:$0xff]
      %v2282 = vld [vmem:[#allocation2 + $0x21] sm:$0xff]
      %v2283 = vld [vmem:[#allocation2 + $0x31] sm:$0xff]
      %v2284 = vld [vmem:[#allocation2 + $0x39] sm:$0xff]
      %v2285 = vld [vmem:[#allocation2 + $0x49] sm:$0xff]
      %v2286 = vld [vmem:[#allocation2 + $0x51] sm:$0xff]
      %v2287 = vld [vmem:[#allocation2 + $0x61] sm:$0xff]
      %v2288 = vld [vmem:[#allocation2 + $0x69] sm:$0xff]
      %v2289 = vld [vmem:[#allocation2 + $0x79] sm:$0xff]
      %v2290 = vld [vmem:[#allocation2 + $0x81] sm:$0xff]
      %v2291 = vld [vmem:[#allocation2 + $0x91] sm:$0xff]
      %v2292 = vld [vmem:[#allocation2 + $0x99] sm:$0xff]
      %v2293 = vld [vmem:[#allocation2 + $0xa9] sm:$0xff]
      %v2294 = vld [vmem:[#allocation2 + $0xb1] sm:$0xff]
      %v2295 = vld [vmem:[#allocation2 + $0xc1] sm:$0xff]
      %v2296 = vld [vmem:[#allocation2 + $0xc9] sm:$0xff]
      %v2297 = vld [vmem:[#allocation2 + $0xd9] sm:$0xff]
      %v2298 = vld [vmem:[#allocation2 + $0xe1] sm:$0xff]
      %v2299 = vld [vmem:[#allocation2 + $0xf1] sm:$0xff]
      %v2300 = vld [vmem:[#allocation2 + $0xf9] sm:$0xff]
      %v2301 = vld [vmem:[#allocation2 + $0x109] sm:$0xff]
      %v2302 = vld [vmem:[#allocation2 + $0x111] sm:$0xff]
      %v2303 = vld [vmem:[#allocation2 + $0x121] sm:$0xff]
      %v2304 = vld [vmem:[#allocation2 + $0x129] sm:$0xff]
      %v2305 = vld [vmem:[#allocation2 + $0x139] sm:$0xff]
      %v2306 = vld [vmem:[#allocation2 + $0x141] sm:$0xff]
      %v2307 = vld [vmem:[#allocation2 + $0x151] sm:$0xff]
      %v2308 = vld [vmem:[#allocation2 + $0x159] sm:$0xff]
      %v2309 = vld [vmem:[#allocation2 + $0x169] sm:$0xff]
      %v2310 = vld [vmem:[#allocation2 + $0x171] sm:$0xff]
      %v2311 = vperm.slane %v2180, 1
      %v2312 = vmul.f32 %v2279, %v2311
      %v2313 = vmul.f32 %v2280, %v2311
      %v2314 = vmul.f32 %v2281, %v2311
      %v2315 = vmul.f32 %v2282, %v2311
      %v2316 = vmul.f32 %v2283, %v2311
      %v2317 = vmul.f32 %v2284, %v2311
      %v2318 = vmul.f32 %v2285, %v2311
      %v2319 = vmul.f32 %v2286, %v2311
      %v2320 = vmul.f32 %v2287, %v2311
      %v2321 = vmul.f32 %v2288, %v2311
      %v2322 = vmul.f32 %v2289, %v2311
      %v2323 = vmul.f32 %v2290, %v2311
      %v2324 = vmul.f32 %v2291, %v2311
      %v2325 = vmul.f32 %v2292, %v2311
      %v2326 = vmul.f32 %v2293, %v2311
      %v2327 = vmul.f32 %v2294, %v2311
      %v2328 = vmul.f32 %v2295, %v2311
      %v2329 = vmul.f32 %v2296, %v2311
      %v2330 = vmul.f32 %v2297, %v2311
      %v2331 = vmul.f32 %v2298, %v2311
      %v2332 = vmul.f32 %v2299, %v2311
      %v2333 = vmul.f32 %v2300, %v2311
      %v2334 = vmul.f32 %v2301, %v2311
      %v2335 = vmul.f32 %v2302, %v2311
      %v2336 = vmul.f32 %v2303, %v2311
      %v2337 = vmul.f32 %v2304, %v2311
      %v2338 = vmul.f32 %v2305, %v2311
      %v2339 = vmul.f32 %v2306, %v2311
      %v2340 = vmul.f32 %v2307, %v2311
      %v2341 = vmul.f32 %v2308, %v2311
      %v2342 = vmul.f32 %v2309, %v2311
      %v2343 = vmul.f32 %v2310, %v2311
      %v2344 = vadd.f32 %v2247, %v2312
      %v2345 = vadd.f32 %v2248, %v2313
      %v2346 = vadd.f32 %v2249, %v2314
      %v2347 = vadd.f32 %v2250, %v2315
      %v2348 = vadd.f32 %v2251, %v2316
      %v2349 = vadd.f32 %v2252, %v2317
      %v2350 = vadd.f32 %v2253, %v2318
      %v2351 = vadd.f32 %v2254, %v2319
      %v2352 = vadd.f32 %v2255, %v2320
      %v2353 = vadd.f32 %v2256, %v2321
      %v2354 = vadd.f32 %v2257, %v2322
      %v2355 = vadd.f32 %v2258, %v2323
      %v2356 = vadd.f32 %v2259, %v2324
      %v2357 = vadd.f32 %v2260, %v2325
      %v2358 = vadd.f32 %v2261, %v2326
      %v2359 = vadd.f32 %v2262, %v2327
      %v2360 = vadd.f32 %v2263, %v2328
      %v2361 = vadd.f32 %v2264, %v2329
      %v2362 = vadd.f32 %v2265, %v2330
      %v2363 = vadd.f32 %v2266, %v2331
      %v2364 = vadd.f32 %v2267, %v2332
      %v2365 = vadd.f32 %v2268, %v2333
      %v2366 = vadd.f32 %v2269, %v2334
      %v2367 = vadd.f32 %v2270, %v2335
      %v2368 = vadd.f32 %v2271, %v2336
      %v2369 = vadd.f32 %v2272, %v2337
      %v2370 = vadd.f32 %v2273, %v2338
      %v2371 = vadd.f32 %v2274, %v2339
      %v2372 = vadd.f32 %v2275, %v2340
      %v2373 = vadd.f32 %v2276, %v2341
      %v2374 = vadd.f32 %v2277, %v2342
      %v2375 = vadd.f32 %v2278, %v2343
      %v2376 = vld [vmem:[#allocation2 + $0x2] sm:$0xff]
      %v2377 = vld [vmem:[#allocation2 + $0xa] sm:$0xff]
      %v2378 = vld [vmem:[#allocation2 + $0x1a] sm:$0xff]
      %v2379 = vld [vmem:[#allocation2 + $0x22] sm:$0xff]
      %v2380 = vld [vmem:[#allocation2 + $0x32] sm:$0xff]
      %v2381 = vld [vmem:[#allocation2 + $0x3a] sm:$0xff]
      %v2382 = vld [vmem:[#allocation2 + $0x4a] sm:$0xff]
      %v2383 = vld [vmem:[#allocation2 + $0x52] sm:$0xff]
      %v2384 = vld [vmem:[#allocation2 + $0x62] sm:$0xff]
      %v2385 = vld [vmem:[#allocation2 + $0x6a] sm:$0xff]
      %v2386 = vld [vmem:[#allocation2 + $0x7a] sm:$0xff]
      %v2387 = vld [vmem:[#allocation2 + $0x82] sm:$0xff]
      %v2388 = vld [vmem:[#allocation2 + $0x92] sm:$0xff]
      %v2389 = vld [vmem:[#allocation2 + $0x9a] sm:$0xff]
      %v2390 = vld [vmem:[#allocation2 + $0xaa] sm:$0xff]
      %v2391 = vld [vmem:[#allocation2 + $0xb2] sm:$0xff]
      %v2392 = vld [vmem:[#allocation2 + $0xc2] sm:$0xff]
      %v2393 = vld [vmem:[#allocation2 + $0xca] sm:$0xff]
      %v2394 = vld [vmem:[#allocation2 + $0xda] sm:$0xff]
      %v2395 = vld [vmem:[#allocation2 + $0xe2] sm:$0xff]
      %v2396 = vld [vmem:[#allocation2 + $0xf2] sm:$0xff]
      %v2397 = vld [vmem:[#allocation2 + $0xfa] sm:$0xff]
      %v2398 = vld [vmem:[#allocation2 + $0x10a] sm:$0xff]
      %v2399 = vld [vmem:[#allocation2 + $0x112] sm:$0xff]
      %v2400 = vld [vmem:[#allocation2 + $0x122] sm:$0xff]
      %v2401 = vld [vmem:[#allocation2 + $0x12a] sm:$0xff]
      %v2402 = vld [vmem:[#allocation2 + $0x13a] sm:$0xff]
      %v2403 = vld [vmem:[#allocation2 + $0x142] sm:$0xff]
      %v2404 = vld [vmem:[#allocation2 + $0x152] sm:$0xff]
      %v2405 = vld [vmem:[#allocation2 + $0x15a] sm:$0xff]
      %v2406 = vld [vmem:[#allocation2 + $0x16a] sm:$0xff]
      %v2407 = vld [vmem:[#allocation2 + $0x172] sm:$0xff]
      %v2408 = vperm.slane %v2180, 2
      %v2409 = vmul.f32 %v2376, %v2408
      %v2410 = vmul.f32 %v2377, %v2408
      %v2411 = vmul.f32 %v2378, %v2408
      %v2412 = vmul.f32 %v2379, %v2408
      %v2413 = vmul.f32 %v2380, %v2408
      %v2414 = vmul.f32 %v2381, %v2408
      %v2415 = vmul.f32 %v2382, %v2408
      %v2416 = vmul.f32 %v2383, %v2408
      %v2417 = vmul.f32 %v2384, %v2408
      %v2418 = vmul.f32 %v2385, %v2408
      %v2419 = vmul.f32 %v2386, %v2408
      %v2420 = vmul.f32 %v2387, %v2408
      %v2421 = vmul.f32 %v2388, %v2408
      %v2422 = vmul.f32 %v2389, %v2408
      %v2423 = vmul.f32 %v2390, %v2408
      %v2424 = vmul.f32 %v2391, %v2408
      %v2425 = vmul.f32 %v2392, %v2408
      %v2426 = vmul.f32 %v2393, %v2408
      %v2427 = vmul.f32 %v2394, %v2408
      %v2428 = vmul.f32 %v2395, %v2408
      %v2429 = vmul.f32 %v2396, %v2408
      %v2430 = vmul.f32 %v2397, %v2408
      %v2431 = vmul.f32 %v2398, %v2408
      %v2432 = vmul.f32 %v2399, %v2408
      %v2433 = vmul.f32 %v2400, %v2408
      %v2434 = vmul.f32 %v2401, %v2408
      %v2435 = vmul.f32 %v2402, %v2408
      %v2436 = vmul.f32 %v2403, %v2408
      %v2437 = vmul.f32 %v2404, %v2408
      %v2438 = vmul.f32 %v2405, %v2408
      %v2439 = vmul.f32 %v2406, %v2408
      %v2440 = vmul.f32 %v2407, %v2408
      %v2441 = vadd.f32 %v2344, %v2409
      %v2442 = vadd.f32 %v2345, %v2410
      %v2443 = vadd.f32 %v2346, %v2411
      %v2444 = vadd.f32 %v2347, %v2412
      %v2445 = vadd.f32 %v2348, %v2413
      %v2446 = vadd.f32 %v2349, %v2414
      %v2447 = vadd.f32 %v2350, %v2415
      %v2448 = vadd.f32 %v2351, %v2416
      %v2449 = vadd.f32 %v2352, %v2417
      %v2450 = vadd.f32 %v2353, %v2418
      %v2451 = vadd.f32 %v2354, %v2419
      %v2452 = vadd.f32 %v2355, %v2420
      %v2453 = vadd.f32 %v2356, %v2421
      %v2454 = vadd.f32 %v2357, %v2422
      %v2455 = vadd.f32 %v2358, %v2423
      %v2456 = vadd.f32 %v2359, %v2424
      %v2457 = vadd.f32 %v2360, %v2425
      %v2458 = vadd.f32 %v2361, %v2426
      %v2459 = vadd.f32 %v2362, %v2427
      %v2460 = vadd.f32 %v2363, %v2428
      %v2461 = vadd.f32 %v2364, %v2429
      %v2462 = vadd.f32 %v2365, %v2430
      %v2463 = vadd.f32 %v2366, %v2431
      %v2464 = vadd.f32 %v2367, %v2432
      %v2465 = vadd.f32 %v2368, %v2433
      %v2466 = vadd.f32 %v2369, %v2434
      %v2467 = vadd.f32 %v2370, %v2435
      %v2468 = vadd.f32 %v2371, %v2436
      %v2469 = vadd.f32 %v2372, %v2437
      %v2470 = vadd.f32 %v2373, %v2438
      %v2471 = vadd.f32 %v2374, %v2439
      %v2472 = vadd.f32 %v2375, %v2440
      %v2473 = vld [vmem:[%s2114] sm:$0xff]
      %v2474 = vld [vmem:[%s2114 + $0x8] sm:$0xff]
      %v2475 = vld [vmem:[%s2114 + $0x18] sm:$0xff]
      %v2476 = vld [vmem:[%s2114 + $0x20] sm:$0xff]
      %v2477 = vld [vmem:[%s2114 + $0x30] sm:$0xff]
      %v2478 = vld [vmem:[%s2114 + $0x38] sm:$0xff]
      %v2479 = vld [vmem:[%s2114 + $0x48] sm:$0xff]
      %v2480 = vld [vmem:[%s2114 + $0x50] sm:$0xff]
      %v2481 = vld [vmem:[%s2114 + $0x60] sm:$0xff]
      %v2482 = vld [vmem:[%s2114 + $0x68] sm:$0xff]
      %v2483 = vld [vmem:[%s2114 + $0x78] sm:$0xff]
      %v2484 = vld [vmem:[%s2114 + $0x80] sm:$0xff]
      %v2485 = vld [vmem:[%s2114 + $0x90] sm:$0xff]
      %v2486 = vld [vmem:[%s2114 + $0x98] sm:$0xff]
      %v2487 = vld [vmem:[%s2114 + $0xa8] sm:$0xff]
      %v2488 = vld [vmem:[%s2114 + $0xb0] sm:$0xff]
      %v2489 = vld [vmem:[%s2114 + $0xc0] sm:$0xff]
      %v2490 = vld [vmem:[%s2114 + $0xc8] sm:$0xff]
      %v2491 = vld [vmem:[%s2114 + $0xd8] sm:$0xff]
      %v2492 = vld [vmem:[%s2114 + $0xe0] sm:$0xff]
      %v2493 = vld [vmem:[%s2114 + $0xf0] sm:$0xff]
      %v2494 = vld [vmem:[%s2114 + $0xf8] sm:$0xff]
      %v2495 = vld [vmem:[%s2114 + $0x108] sm:$0xff]
      %v2496 = vld [vmem:[%s2114 + $0x110] sm:$0xff]
      %v2497 = vld [vmem:[%s2114 + $0x120] sm:$0xff]
      %v2498 = vld [vmem:[%s2114 + $0x128] sm:$0xff]
      %v2499 = vld [vmem:[%s2114 + $0x138] sm:$0xff]
      %v2500 = vld [vmem:[%s2114 + $0x140] sm:$0xff]
      %v2501 = vld [vmem:[%s2114 + $0x150] sm:$0xff]
      %v2502 = vld [vmem:[%s2114 + $0x158] sm:$0xff]
      %v2503 = vld [vmem:[%s2114 + $0x168] sm:$0xff]
      %v2504 = vld [vmem:[%s2114 + $0x170] sm:$0xff]
      %v2505 = vperm.slane %v2180, 3
      %v2506 = vmul.f32 %v2473, %v2505
      %v2507 = vmul.f32 %v2474, %v2505
      %v2508 = vmul.f32 %v2475, %v2505
      %v2509 = vmul.f32 %v2476, %v2505
      %v2510 = vmul.f32 %v2477, %v2505
      %v2511 = vmul.f32 %v2478, %v2505
      %v2512 = vmul.f32 %v2479, %v2505
      %v2513 = vmul.f32 %v2480, %v2505
      %v2514 = vmul.f32 %v2481, %v2505
      %v2515 = vmul.f32 %v2482, %v2505
      %v2516 = vmul.f32 %v2483, %v2505
      %v2517 = vmul.f32 %v2484, %v2505
      %v2518 = vmul.f32 %v2485, %v2505
      %v2519 = vmul.f32 %v2486, %v2505
      %v2520 = vmul.f32 %v2487, %v2505
      %v2521 = vmul.f32 %v2488, %v2505
      %v2522 = vmul.f32 %v2489, %v2505
      %v2523 = vmul.f32 %v2490, %v2505
      %v2524 = vmul.f32 %v2491, %v2505
      %v2525 = vmul.f32 %v2492, %v2505
      %v2526 = vmul.f32 %v2493, %v2505
      %v2527 = vmul.f32 %v2494, %v2505
      %v2528 = vmul.f32 %v2495, %v2505
      %v2529 = vmul.f32 %v2496, %v2505
      %v2530 = vmul.f32 %v2497, %v2505
      %v2531 = vmul.f32 %v2498, %v2505
      %v2532 = vmul.f32 %v2499, %v2505
      %v2533 = vmul.f32 %v2500, %v2505
      %v2534 = vmul.f32 %v2501, %v2505
      %v2535 = vmul.f32 %v2502, %v2505
      %v2536 = vmul.f32 %v2503, %v2505
      %v2537 = vmul.f32 %v2504, %v2505
      %v2538 = vadd.f32 %v2441, %v2506
      %v2539 = vadd.f32 %v2442, %v2507
      %v2540 = vadd.f32 %v2443, %v2508
      %v2541 = vadd.f32 %v2444, %v2509
      %v2542 = vadd.f32 %v2445, %v2510
      %v2543 = vadd.f32 %v2446, %v2511
      %v2544 = vadd.f32 %v2447, %v2512
      %v2545 = vadd.f32 %v2448, %v2513
      %v2546 = vadd.f32 %v2449, %v2514
      %v2547 = vadd.f32 %v2450, %v2515
      %v2548 = vadd.f32 %v2451, %v2516
      %v2549 = vadd.f32 %v2452, %v2517
      %v2550 = vadd.f32 %v2453, %v2518
      %v2551 = vadd.f32 %v2454, %v2519
      %v2552 = vadd.f32 %v2455, %v2520
      %v2553 = vadd.f32 %v2456, %v2521
      %v2554 = vadd.f32 %v2457, %v2522
      %v2555 = vadd.f32 %v2458, %v2523
      %v2556 = vadd.f32 %v2459, %v2524
      %v2557 = vadd.f32 %v2460, %v2525
      %v2558 = vadd.f32 %v2461, %v2526
      %v2559 = vadd.f32 %v2462, %v2527
      %v2560 = vadd.f32 %v2463, %v2528
      %v2561 = vadd.f32 %v2464, %v2529
      %v2562 = vadd.f32 %v2465, %v2530
      %v2563 = vadd.f32 %v2466, %v2531
      %v2564 = vadd.f32 %v2467, %v2532
      %v2565 = vadd.f32 %v2468, %v2533
      %v2566 = vadd.f32 %v2469, %v2534
      %v2567 = vadd.f32 %v2470, %v2535
      %v2568 = vadd.f32 %v2471, %v2536
      %v2569 = vadd.f32 %v2472, %v2537
      %v2570 = vld [vmem:[%s2114 + $0x1] sm:$0xff]
      %v2571 = vld [vmem:[%s2114 + $0x9] sm:$0xff]
      %v2572 = vld [vmem:[%s2114 + $0x19] sm:$0xff]
      %v2573 = vld [vmem:[%s2114 + $0x21] sm:$0xff]
      %v2574 = vld [vmem:[%s2114 + $0x31] sm:$0xff]
      %v2575 = vld [vmem:[%s2114 + $0x39] sm:$0xff]
      %v2576 = vld [vmem:[%s2114 + $0x49] sm:$0xff]
      %v2577 = vld [vmem:[%s2114 + $0x51] sm:$0xff]
      %v2578 = vld [vmem:[%s2114 + $0x61] sm:$0xff]
      %v2579 = vld [vmem:[%s2114 + $0x69] sm:$0xff]
      %v2580 = vld [vmem:[%s2114 + $0x79] sm:$0xff]
      %v2581 = vld [vmem:[%s2114 + $0x81] sm:$0xff]
      %v2582 = vld [vmem:[%s2114 + $0x91] sm:$0xff]
      %v2583 = vld [vmem:[%s2114 + $0x99] sm:$0xff]
      %v2584 = vld [vmem:[%s2114 + $0xa9] sm:$0xff]
      %v2585 = vld [vmem:[%s2114 + $0xb1] sm:$0xff]
      %v2586 = vld [vmem:[%s2114 + $0xc1] sm:$0xff]
      %v2587 = vld [vmem:[%s2114 + $0xc9] sm:$0xff]
      %v2588 = vld [vmem:[%s2114 + $0xd9] sm:$0xff]
      %v2589 = vld [vmem:[%s2114 + $0xe1] sm:$0xff]
      %v2590 = vld [vmem:[%s2114 + $0xf1] sm:$0xff]
      %v2591 = vld [vmem:[%s2114 + $0xf9] sm:$0xff]
      %v2592 = vld [vmem:[%s2114 + $0x109] sm:$0xff]
      %v2593 = vld [vmem:[%s2114 + $0x111] sm:$0xff]
      %v2594 = vld [vmem:[%s2114 + $0x121] sm:$0xff]
      %v2595 = vld [vmem:[%s2114 + $0x129] sm:$0xff]
      %v2596 = vld [vmem:[%s2114 + $0x139] sm:$0xff]
      %v2597 = vld [vmem:[%s2114 + $0x141] sm:$0xff]
      %v2598 = vld [vmem:[%s2114 + $0x151] sm:$0xff]
      %v2599 = vld [vmem:[%s2114 + $0x159] sm:$0xff]
      %v2600 = vld [vmem:[%s2114 + $0x169] sm:$0xff]
      %v2601 = vld [vmem:[%s2114 + $0x171] sm:$0xff]
      %v2602 = vperm.slane %v2180, 4
      %v2603 = vmul.f32 %v2570, %v2602
      %v2604 = vmul.f32 %v2571, %v2602
      %v2605 = vmul.f32 %v2572, %v2602
      %v2606 = vmul.f32 %v2573, %v2602
      %v2607 = vmul.f32 %v2574, %v2602
      %v2608 = vmul.f32 %v2575, %v2602
      %v2609 = vmul.f32 %v2576, %v2602
      %v2610 = vmul.f32 %v2577, %v2602
      %v2611 = vmul.f32 %v2578, %v2602
      %v2612 = vmul.f32 %v2579, %v2602
      %v2613 = vmul.f32 %v2580, %v2602
      %v2614 = vmul.f32 %v2581, %v2602
      %v2615 = vmul.f32 %v2582, %v2602
      %v2616 = vmul.f32 %v2583, %v2602
      %v2617 = vmul.f32 %v2584, %v2602
      %v2618 = vmul.f32 %v2585, %v2602
      %v2619 = vmul.f32 %v2586, %v2602
      %v2620 = vmul.f32 %v2587, %v2602
      %v2621 = vmul.f32 %v2588, %v2602
      %v2622 = vmul.f32 %v2589, %v2602
      %v2623 = vmul.f32 %v2590, %v2602
      %v2624 = vmul.f32 %v2591, %v2602
      %v2625 = vmul.f32 %v2592, %v2602
      %v2626 = vmul.f32 %v2593, %v2602
      %v2627 = vmul.f32 %v2594, %v2602
      %v2628 = vmul.f32 %v2595, %v2602
      %v2629 = vmul.f32 %v2596, %v2602
      %v2630 = vmul.f32 %v2597, %v2602
      %v2631 = vmul.f32 %v2598, %v2602
      %v2632 = vmul.f32 %v2599, %v2602
      %v2633 = vmul.f32 %v2600, %v2602
      %v2634 = vmul.f32 %v2601, %v2602
      %v2635 = vadd.f32 %v2538, %v2603
      %v2636 = vadd.f32 %v2539, %v2604
      %v2637 = vadd.f32 %v2540, %v2605
      %v2638 = vadd.f32 %v2541, %v2606
      %v2639 = vadd.f32 %v2542, %v2607
      %v2640 = vadd.f32 %v2543, %v2608
      %v2641 = vadd.f32 %v2544, %v2609
      %v2642 = vadd.f32 %v2545, %v2610
      %v2643 = vadd.f32 %v2546, %v2611
      %v2644 = vadd.f32 %v2547, %v2612
      %v2645 = vadd.f32 %v2548, %v2613
      %v2646 = vadd.f32 %v2549, %v2614
      %v2647 = vadd.f32 %v2550, %v2615
      %v2648 = vadd.f32 %v2551, %v2616
      %v2649 = vadd.f32 %v2552, %v2617
      %v2650 = vadd.f32 %v2553, %v2618
      %v2651 = vadd.f32 %v2554, %v2619
      %v2652 = vadd.f32 %v2555, %v2620
      %v2653 = vadd.f32 %v2556, %v2621
      %v2654 = vadd.f32 %v2557, %v2622
      %v2655 = vadd.f32 %v2558, %v2623
      %v2656 = vadd.f32 %v2559, %v2624
      %v2657 = vadd.f32 %v2560, %v2625
      %v2658 = vadd.f32 %v2561, %v2626
      %v2659 = vadd.f32 %v2562, %v2627
      %v2660 = vadd.f32 %v2563, %v2628
      %v2661 = vadd.f32 %v2564, %v2629
      %v2662 = vadd.f32 %v2565, %v2630
      %v2663 = vadd.f32 %v2566, %v2631
      %v2664 = vadd.f32 %v2567, %v2632
      %v2665 = vadd.f32 %v2568, %v2633
      %v2666 = vadd.f32 %v2569, %v2634
      %v2667 = vld [vmem:[%s2114 + $0x2] sm:$0xff]
      %v2668 = vld [vmem:[%s2114 + $0xa] sm:$0xff]
      %v2669 = vld [vmem:[%s2114 + $0x1a] sm:$0xff]
      %v2670 = vld [vmem:[%s2114 + $0x22] sm:$0xff]
      %v2671 = vld [vmem:[%s2114 + $0x32] sm:$0xff]
      %v2672 = vld [vmem:[%s2114 + $0x3a] sm:$0xff]
      %v2673 = vld [vmem:[%s2114 + $0x4a] sm:$0xff]
      %v2674 = vld [vmem:[%s2114 + $0x52] sm:$0xff]
      %v2675 = vld [vmem:[%s2114 + $0x62] sm:$0xff]
      %v2676 = vld [vmem:[%s2114 + $0x6a] sm:$0xff]
      %v2677 = vld [vmem:[%s2114 + $0x7a] sm:$0xff]
      %v2678 = vld [vmem:[%s2114 + $0x82] sm:$0xff]
      %v2679 = vld [vmem:[%s2114 + $0x92] sm:$0xff]
      %v2680 = vld [vmem:[%s2114 + $0x9a] sm:$0xff]
      %v2681 = vld [vmem:[%s2114 + $0xaa] sm:$0xff]
      %v2682 = vld [vmem:[%s2114 + $0xb2] sm:$0xff]
      %v2683 = vld [vmem:[%s2114 + $0xc2] sm:$0xff]
      %v2684 = vld [vmem:[%s2114 + $0xca] sm:$0xff]
      %v2685 = vld [vmem:[%s2114 + $0xda] sm:$0xff]
      %v2686 = vld [vmem:[%s2114 + $0xe2] sm:$0xff]
      %v2687 = vld [vmem:[%s2114 + $0xf2] sm:$0xff]
      %v2688 = vld [vmem:[%s2114 + $0xfa] sm:$0xff]
      %v2689 = vld [vmem:[%s2114 + $0x10a] sm:$0xff]
      %v2690 = vld [vmem:[%s2114 + $0x112] sm:$0xff]
      %v2691 = vld [vmem:[%s2114 + $0x122] sm:$0xff]
      %v2692 = vld [vmem:[%s2114 + $0x12a] sm:$0xff]
      %v2693 = vld [vmem:[%s2114 + $0x13a] sm:$0xff]
      %v2694 = vld [vmem:[%s2114 + $0x142] sm:$0xff]
      %v2695 = vld [vmem:[%s2114 + $0x152] sm:$0xff]
      %v2696 = vld [vmem:[%s2114 + $0x15a] sm:$0xff]
      %v2697 = vld [vmem:[%s2114 + $0x16a] sm:$0xff]
      %v2698 = vld [vmem:[%s2114 + $0x172] sm:$0xff]
      %v2699 = vperm.slane %v2180, 5
      %v2700 = vmul.f32 %v2667, %v2699
      %v2701 = vmul.f32 %v2668, %v2699
      %v2702 = vmul.f32 %v2669, %v2699
      %v2703 = vmul.f32 %v2670, %v2699
      %v2704 = vmul.f32 %v2671, %v2699
      %v2705 = vmul.f32 %v2672, %v2699
      %v2706 = vmul.f32 %v2673, %v2699
      %v2707 = vmul.f32 %v2674, %v2699
      %v2708 = vmul.f32 %v2675, %v2699
      %v2709 = vmul.f32 %v2676, %v2699
      %v2710 = vmul.f32 %v2677, %v2699
      %v2711 = vmul.f32 %v2678, %v2699
      %v2712 = vmul.f32 %v2679, %v2699
      %v2713 = vmul.f32 %v2680, %v2699
      %v2714 = vmul.f32 %v2681, %v2699
      %v2715 = vmul.f32 %v2682, %v2699
      %v2716 = vmul.f32 %v2683, %v2699
      %v2717 = vmul.f32 %v2684, %v2699
      %v2718 = vmul.f32 %v2685, %v2699
      %v2719 = vmul.f32 %v2686, %v2699
      %v2720 = vmul.f32 %v2687, %v2699
      %v2721 = vmul.f32 %v2688, %v2699
      %v2722 = vmul.f32 %v2689, %v2699
      %v2723 = vmul.f32 %v2690, %v2699
      %v2724 = vmul.f32 %v2691, %v2699
      %v2725 = vmul.f32 %v2692, %v2699
      %v2726 = vmul.f32 %v2693, %v2699
      %v2727 = vmul.f32 %v2694, %v2699
      %v2728 = vmul.f32 %v2695, %v2699
      %v2729 = vmul.f32 %v2696, %v2699
      %v2730 = vmul.f32 %v2697, %v2699
      %v2731 = vmul.f32 %v2698, %v2699
      %v2732 = vadd.f32 %v2635, %v2700
      %v2733 = vadd.f32 %v2636, %v2701
      %v2734 = vadd.f32 %v2637, %v2702
      %v2735 = vadd.f32 %v2638, %v2703
      %v2736 = vadd.f32 %v2639, %v2704
      %v2737 = vadd.f32 %v2640, %v2705
      %v2738 = vadd.f32 %v2641, %v2706
      %v2739 = vadd.f32 %v2642, %v2707
      %v2740 = vadd.f32 %v2643, %v2708
      %v2741 = vadd.f32 %v2644, %v2709
      %v2742 = vadd.f32 %v2645, %v2710
      %v2743 = vadd.f32 %v2646, %v2711
      %v2744 = vadd.f32 %v2647, %v2712
      %v2745 = vadd.f32 %v2648, %v2713
      %v2746 = vadd.f32 %v2649, %v2714
      %v2747 = vadd.f32 %v2650, %v2715
      %v2748 = vadd.f32 %v2651, %v2716
      %v2749 = vadd.f32 %v2652, %v2717
      %v2750 = vadd.f32 %v2653, %v2718
      %v2751 = vadd.f32 %v2654, %v2719
      %v2752 = vadd.f32 %v2655, %v2720
      %v2753 = vadd.f32 %v2656, %v2721
      %v2754 = vadd.f32 %v2657, %v2722
      %v2755 = vadd.f32 %v2658, %v2723
      %v2756 = vadd.f32 %v2659, %v2724
      %v2757 = vadd.f32 %v2660, %v2725
      %v2758 = vadd.f32 %v2661, %v2726
      %v2759 = vadd.f32 %v2662, %v2727
      %v2760 = vadd.f32 %v2663, %v2728
      %v2761 = vadd.f32 %v2664, %v2729
      %v2762 = vadd.f32 %v2665, %v2730
      %v2763 = vadd.f32 %v2666, %v2731
      %s2764 = scalar_lea.vmem [#allocation2], 48
      %v2765 = vld [vmem:[%s2764] sm:$0xff]
      %v2766 = vld [vmem:[%s2764 + $0x8] sm:$0xff]
      %v2767 = vld [vmem:[%s2764 + $0x18] sm:$0xff]
      %v2768 = vld [vmem:[%s2764 + $0x20] sm:$0xff]
      %v2769 = vld [vmem:[%s2764 + $0x30] sm:$0xff]
      %v2770 = vld [vmem:[%s2764 + $0x38] sm:$0xff]
      %v2771 = vld [vmem:[%s2764 + $0x48] sm:$0xff]
      %v2772 = vld [vmem:[%s2764 + $0x50] sm:$0xff]
      %v2773 = vld [vmem:[%s2764 + $0x60] sm:$0xff]
      %v2774 = vld [vmem:[%s2764 + $0x68] sm:$0xff]
      %v2775 = vld [vmem:[%s2764 + $0x78] sm:$0xff]
      %v2776 = vld [vmem:[%s2764 + $0x80] sm:$0xff]
      %v2777 = vld [vmem:[%s2764 + $0x90] sm:$0xff]
      %v2778 = vld [vmem:[%s2764 + $0x98] sm:$0xff]
      %v2779 = vld [vmem:[%s2764 + $0xa8] sm:$0xff]
      %v2780 = vld [vmem:[%s2764 + $0xb0] sm:$0xff]
      %v2781 = vld [vmem:[%s2764 + $0xc0] sm:$0xff]
      %v2782 = vld [vmem:[%s2764 + $0xc8] sm:$0xff]
      %v2783 = vld [vmem:[%s2764 + $0xd8] sm:$0xff]
      %v2784 = vld [vmem:[%s2764 + $0xe0] sm:$0xff]
      %v2785 = vld [vmem:[%s2764 + $0xf0] sm:$0xff]
      %v2786 = vld [vmem:[%s2764 + $0xf8] sm:$0xff]
      %v2787 = vld [vmem:[%s2764 + $0x108] sm:$0xff]
      %v2788 = vld [vmem:[%s2764 + $0x110] sm:$0xff]
      %v2789 = vld [vmem:[%s2764 + $0x120] sm:$0xff]
      %v2790 = vld [vmem:[%s2764 + $0x128] sm:$0xff]
      %v2791 = vld [vmem:[%s2764 + $0x138] sm:$0xff]
      %v2792 = vld [vmem:[%s2764 + $0x140] sm:$0xff]
      %v2793 = vld [vmem:[%s2764 + $0x150] sm:$0xff]
      %v2794 = vld [vmem:[%s2764 + $0x158] sm:$0xff]
      %v2795 = vld [vmem:[%s2764 + $0x168] sm:$0xff]
      %v2796 = vld [vmem:[%s2764 + $0x170] sm:$0xff]
      %v2797 = vperm.slane %v2180, 6
      %v2798 = vmul.f32 %v2765, %v2797
      %v2799 = vmul.f32 %v2766, %v2797
      %v2800 = vmul.f32 %v2767, %v2797
      %v2801 = vmul.f32 %v2768, %v2797
      %v2802 = vmul.f32 %v2769, %v2797
      %v2803 = vmul.f32 %v2770, %v2797
      %v2804 = vmul.f32 %v2771, %v2797
      %v2805 = vmul.f32 %v2772, %v2797
      %v2806 = vmul.f32 %v2773, %v2797
      %v2807 = vmul.f32 %v2774, %v2797
      %v2808 = vmul.f32 %v2775, %v2797
      %v2809 = vmul.f32 %v2776, %v2797
      %v2810 = vmul.f32 %v2777, %v2797
      %v2811 = vmul.f32 %v2778, %v2797
      %v2812 = vmul.f32 %v2779, %v2797
      %v2813 = vmul.f32 %v2780, %v2797
      %v2814 = vmul.f32 %v2781, %v2797
      %v2815 = vmul.f32 %v2782, %v2797
      %v2816 = vmul.f32 %v2783, %v2797
      %v2817 = vmul.f32 %v2784, %v2797
      %v2818 = vmul.f32 %v2785, %v2797
      %v2819 = vmul.f32 %v2786, %v2797
      %v2820 = vmul.f32 %v2787, %v2797
      %v2821 = vmul.f32 %v2788, %v2797
      %v2822 = vmul.f32 %v2789, %v2797
      %v2823 = vmul.f32 %v2790, %v2797
      %v2824 = vmul.f32 %v2791, %v2797
      %v2825 = vmul.f32 %v2792, %v2797
      %v2826 = vmul.f32 %v2793, %v2797
      %v2827 = vmul.f32 %v2794, %v2797
      %v2828 = vmul.f32 %v2795, %v2797
      %v2829 = vmul.f32 %v2796, %v2797
      %v2830 = vadd.f32 %v2732, %v2798
      %v2831 = vadd.f32 %v2733, %v2799
      %v2832 = vadd.f32 %v2734, %v2800
      %v2833 = vadd.f32 %v2735, %v2801
      %v2834 = vadd.f32 %v2736, %v2802
      %v2835 = vadd.f32 %v2737, %v2803
      %v2836 = vadd.f32 %v2738, %v2804
      %v2837 = vadd.f32 %v2739, %v2805
      %v2838 = vadd.f32 %v2740, %v2806
      %v2839 = vadd.f32 %v2741, %v2807
      %v2840 = vadd.f32 %v2742, %v2808
      %v2841 = vadd.f32 %v2743, %v2809
      %v2842 = vadd.f32 %v2744, %v2810
      %v2843 = vadd.f32 %v2745, %v2811
      %v2844 = vadd.f32 %v2746, %v2812
      %v2845 = vadd.f32 %v2747, %v2813
      %v2846 = vadd.f32 %v2748, %v2814
      %v2847 = vadd.f32 %v2749, %v2815
      %v2848 = vadd.f32 %v2750, %v2816
      %v2849 = vadd.f32 %v2751, %v2817
      %v2850 = vadd.f32 %v2752, %v2818
      %v2851 = vadd.f32 %v2753, %v2819
      %v2852 = vadd.f32 %v2754, %v2820
      %v2853 = vadd.f32 %v2755, %v2821
      %v2854 = vadd.f32 %v2756, %v2822
      %v2855 = vadd.f32 %v2757, %v2823
      %v2856 = vadd.f32 %v2758, %v2824
      %v2857 = vadd.f32 %v2759, %v2825
      %v2858 = vadd.f32 %v2760, %v2826
      %v2859 = vadd.f32 %v2761, %v2827
      %v2860 = vadd.f32 %v2762, %v2828
      %v2861 = vadd.f32 %v2763, %v2829
      %v2862 = vld [vmem:[%s2764 + $0x1] sm:$0xff]
      %v2863 = vld [vmem:[%s2764 + $0x9] sm:$0xff]
      %v2864 = vld [vmem:[%s2764 + $0x19] sm:$0xff]
      %v2865 = vld [vmem:[%s2764 + $0x21] sm:$0xff]
      %v2866 = vld [vmem:[%s2764 + $0x31] sm:$0xff]
      %v2867 = vld [vmem:[%s2764 + $0x39] sm:$0xff]
      %v2868 = vld [vmem:[%s2764 + $0x49] sm:$0xff]
      %v2869 = vld [vmem:[%s2764 + $0x51] sm:$0xff]
      %v2870 = vld [vmem:[%s2764 + $0x61] sm:$0xff]
      %v2871 = vld [vmem:[%s2764 + $0x69] sm:$0xff]
      %v2872 = vld [vmem:[%s2764 + $0x79] sm:$0xff]
      %v2873 = vld [vmem:[%s2764 + $0x81] sm:$0xff]
      %v2874 = vld [vmem:[%s2764 + $0x91] sm:$0xff]
      %v2875 = vld [vmem:[%s2764 + $0x99] sm:$0xff]
      %v2876 = vld [vmem:[%s2764 + $0xa9] sm:$0xff]
      %v2877 = vld [vmem:[%s2764 + $0xb1] sm:$0xff]
      %v2878 = vld [vmem:[%s2764 + $0xc1] sm:$0xff]
      %v2879 = vld [vmem:[%s2764 + $0xc9] sm:$0xff]
      %v2880 = vld [vmem:[%s2764 + $0xd9] sm:$0xff]
      %v2881 = vld [vmem:[%s2764 + $0xe1] sm:$0xff]
      %v2882 = vld [vmem:[%s2764 + $0xf1] sm:$0xff]
      %v2883 = vld [vmem:[%s2764 + $0xf9] sm:$0xff]
      %v2884 = vld [vmem:[%s2764 + $0x109] sm:$0xff]
      %v2885 = vld [vmem:[%s2764 + $0x111] sm:$0xff]
      %v2886 = vld [vmem:[%s2764 + $0x121] sm:$0xff]
      %v2887 = vld [vmem:[%s2764 + $0x129] sm:$0xff]
      %v2888 = vld [vmem:[%s2764 + $0x139] sm:$0xff]
      %v2889 = vld [vmem:[%s2764 + $0x141] sm:$0xff]
      %v2890 = vld [vmem:[%s2764 + $0x151] sm:$0xff]
      %v2891 = vld [vmem:[%s2764 + $0x159] sm:$0xff]
      %v2892 = vld [vmem:[%s2764 + $0x169] sm:$0xff]
      %v2893 = vld [vmem:[%s2764 + $0x171] sm:$0xff]
      %v2894 = vperm.slane %v2180, 7
      %v2895 = vmul.f32 %v2862, %v2894
      %v2896 = vmul.f32 %v2863, %v2894
      %v2897 = vmul.f32 %v2864, %v2894
      %v2898 = vmul.f32 %v2865, %v2894
      %v2899 = vmul.f32 %v2866, %v2894
      %v2900 = vmul.f32 %v2867, %v2894
      %v2901 = vmul.f32 %v2868, %v2894
      %v2902 = vmul.f32 %v2869, %v2894
      %v2903 = vmul.f32 %v2870, %v2894
      %v2904 = vmul.f32 %v2871, %v2894
      %v2905 = vmul.f32 %v2872, %v2894
      %v2906 = vmul.f32 %v2873, %v2894
      %v2907 = vmul.f32 %v2874, %v2894
      %v2908 = vmul.f32 %v2875, %v2894
      %v2909 = vmul.f32 %v2876, %v2894
      %v2910 = vmul.f32 %v2877, %v2894
      %v2911 = vmul.f32 %v2878, %v2894
      %v2912 = vmul.f32 %v2879, %v2894
      %v2913 = vmul.f32 %v2880, %v2894
      %v2914 = vmul.f32 %v2881, %v2894
      %v2915 = vmul.f32 %v2882, %v2894
      %v2916 = vmul.f32 %v2883, %v2894
      %v2917 = vmul.f32 %v2884, %v2894
      %v2918 = vmul.f32 %v2885, %v2894
      %v2919 = vmul.f32 %v2886, %v2894
      %v2920 = vmul.f32 %v2887, %v2894
      %v2921 = vmul.f32 %v2888, %v2894
      %v2922 = vmul.f32 %v2889, %v2894
      %v2923 = vmul.f32 %v2890, %v2894
      %v2924 = vmul.f32 %v2891, %v2894
      %v2925 = vmul.f32 %v2892, %v2894
      %v2926 = vmul.f32 %v2893, %v2894
      %v2927 = vadd.f32 %v2830, %v2895
      %v2928 = vadd.f32 %v2831, %v2896
      %v2929 = vadd.f32 %v2832, %v2897
      %v2930 = vadd.f32 %v2833, %v2898
      %v2931 = vadd.f32 %v2834, %v2899
      %v2932 = vadd.f32 %v2835, %v2900
      %v2933 = vadd.f32 %v2836, %v2901
      %v2934 = vadd.f32 %v2837, %v2902
      %v2935 = vadd.f32 %v2838, %v2903
      %v2936 = vadd.f32 %v2839, %v2904
      %v2937 = vadd.f32 %v2840, %v2905
      %v2938 = vadd.f32 %v2841, %v2906
      %v2939 = vadd.f32 %v2842, %v2907
      %v2940 = vadd.f32 %v2843, %v2908
      %v2941 = vadd.f32 %v2844, %v2909
      %v2942 = vadd.f32 %v2845, %v2910
      %v2943 = vadd.f32 %v2846, %v2911
      %v2944 = vadd.f32 %v2847, %v2912
      %v2945 = vadd.f32 %v2848, %v2913
      %v2946 = vadd.f32 %v2849, %v2914
      %v2947 = vadd.f32 %v2850, %v2915
      %v2948 = vadd.f32 %v2851, %v2916
      %v2949 = vadd.f32 %v2852, %v2917
      %v2950 = vadd.f32 %v2853, %v2918
      %v2951 = vadd.f32 %v2854, %v2919
      %v2952 = vadd.f32 %v2855, %v2920
      %v2953 = vadd.f32 %v2856, %v2921
      %v2954 = vadd.f32 %v2857, %v2922
      %v2955 = vadd.f32 %v2858, %v2923
      %v2956 = vadd.f32 %v2859, %v2924
      %v2957 = vadd.f32 %v2860, %v2925
      %v2958 = vadd.f32 %v2861, %v2926
      %v2959 = vld [vmem:[%s2764 + $0x2] sm:$0xff]
      %v2960 = vld [vmem:[%s2764 + $0xa] sm:$0xff]
      %v2961 = vld [vmem:[%s2764 + $0x1a] sm:$0xff]
      %v2962 = vld [vmem:[%s2764 + $0x22] sm:$0xff]
      %v2963 = vld [vmem:[%s2764 + $0x32] sm:$0xff]
      %v2964 = vld [vmem:[%s2764 + $0x3a] sm:$0xff]
      %v2965 = vld [vmem:[%s2764 + $0x4a] sm:$0xff]
      %v2966 = vld [vmem:[%s2764 + $0x52] sm:$0xff]
      %v2967 = vld [vmem:[%s2764 + $0x62] sm:$0xff]
      %v2968 = vld [vmem:[%s2764 + $0x6a] sm:$0xff]
      %v2969 = vld [vmem:[%s2764 + $0x7a] sm:$0xff]
      %v2970 = vld [vmem:[%s2764 + $0x82] sm:$0xff]
      %v2971 = vld [vmem:[%s2764 + $0x92] sm:$0xff]
      %v2972 = vld [vmem:[%s2764 + $0x9a] sm:$0xff]
      %v2973 = vld [vmem:[%s2764 + $0xaa] sm:$0xff]
      %v2974 = vld [vmem:[%s2764 + $0xb2] sm:$0xff]
      %v2975 = vld [vmem:[%s2764 + $0xc2] sm:$0xff]
      %v2976 = vld [vmem:[%s2764 + $0xca] sm:$0xff]
      %v2977 = vld [vmem:[%s2764 + $0xda] sm:$0xff]
      %v2978 = vld [vmem:[%s2764 + $0xe2] sm:$0xff]
      %v2979 = vld [vmem:[%s2764 + $0xf2] sm:$0xff]
      %v2980 = vld [vmem:[%s2764 + $0xfa] sm:$0xff]
      %v2981 = vld [vmem:[%s2764 + $0x10a] sm:$0xff]
      %v2982 = vld [vmem:[%s2764 + $0x112] sm:$0xff]
      %v2983 = vld [vmem:[%s2764 + $0x122] sm:$0xff]
      %v2984 = vld [vmem:[%s2764 + $0x12a] sm:$0xff]
      %v2985 = vld [vmem:[%s2764 + $0x13a] sm:$0xff]
      %v2986 = vld [vmem:[%s2764 + $0x142] sm:$0xff]
      %v2987 = vld [vmem:[%s2764 + $0x152] sm:$0xff]
      %v2988 = vld [vmem:[%s2764 + $0x15a] sm:$0xff]
      %v2989 = vld [vmem:[%s2764 + $0x16a] sm:$0xff]
      %v2990 = vld [vmem:[%s2764 + $0x172] sm:$0xff]
      %v2991 = vperm.slane %v2181, 0
      %v2992 = vmul.f32 %v2959, %v2991
      %v2993 = vmul.f32 %v2960, %v2991
      %v2994 = vmul.f32 %v2961, %v2991
      %v2995 = vmul.f32 %v2962, %v2991
      %v2996 = vmul.f32 %v2963, %v2991
      %v2997 = vmul.f32 %v2964, %v2991
      %v2998 = vmul.f32 %v2965, %v2991
      %v2999 = vmul.f32 %v2966, %v2991
      %v3000 = vmul.f32 %v2967, %v2991
      %v3001 = vmul.f32 %v2968, %v2991
      %v3002 = vmul.f32 %v2969, %v2991
      %v3003 = vmul.f32 %v2970, %v2991
      %v3004 = vmul.f32 %v2971, %v2991
      %v3005 = vmul.f32 %v2972, %v2991
      %v3006 = vmul.f32 %v2973, %v2991
      %v3007 = vmul.f32 %v2974, %v2991
      %v3008 = vmul.f32 %v2975, %v2991
      %v3009 = vmul.f32 %v2976, %v2991
      %v3010 = vmul.f32 %v2977, %v2991
      %v3011 = vmul.f32 %v2978, %v2991
      %v3012 = vmul.f32 %v2979, %v2991
      %v3013 = vmul.f32 %v2980, %v2991
      %v3014 = vmul.f32 %v2981, %v2991
      %v3015 = vmul.f32 %v2982, %v2991
      %v3016 = vmul.f32 %v2983, %v2991
      %v3017 = vmul.f32 %v2984, %v2991
      %v3018 = vmul.f32 %v2985, %v2991
      %v3019 = vmul.f32 %v2986, %v2991
      %v3020 = vmul.f32 %v2987, %v2991
      %v3021 = vmul.f32 %v2988, %v2991
      %v3022 = vmul.f32 %v2989, %v2991
      %v3023 = vmul.f32 %v2990, %v2991
      %v3024 = vadd.f32 %v2927, %v2992
      %v3025 = vadd.f32 %v2928, %v2993
      %v3026 = vadd.f32 %v2929, %v2994
      %v3027 = vadd.f32 %v2930, %v2995
      %v3028 = vadd.f32 %v2931, %v2996
      %v3029 = vadd.f32 %v2932, %v2997
      %v3030 = vadd.f32 %v2933, %v2998
      %v3031 = vadd.f32 %v2934, %v2999
      %v3032 = vadd.f32 %v2935, %v3000
      %v3033 = vadd.f32 %v2936, %v3001
      %v3034 = vadd.f32 %v2937, %v3002
      %v3035 = vadd.f32 %v2938, %v3003
      %v3036 = vadd.f32 %v2939, %v3004
      %v3037 = vadd.f32 %v2940, %v3005
      %v3038 = vadd.f32 %v2941, %v3006
      %v3039 = vadd.f32 %v2942, %v3007
      %v3040 = vadd.f32 %v2943, %v3008
      %v3041 = vadd.f32 %v2944, %v3009
      %v3042 = vadd.f32 %v2945, %v3010
      %v3043 = vadd.f32 %v2946, %v3011
      %v3044 = vadd.f32 %v2947, %v3012
      %v3045 = vadd.f32 %v2948, %v3013
      %v3046 = vadd.f32 %v2949, %v3014
      %v3047 = vadd.f32 %v2950, %v3015
      %v3048 = vadd.f32 %v2951, %v3016
      %v3049 = vadd.f32 %v2952, %v3017
      %v3050 = vadd.f32 %v2953, %v3018
      %v3051 = vadd.f32 %v2954, %v3019
      %v3052 = vadd.f32 %v2955, %v3020
      %v3053 = vadd.f32 %v2956, %v3021
      %v3054 = vadd.f32 %v2957, %v3022
      %v3055 = vadd.f32 %v2958, %v3023
      %v3056 = vmul.f32 %v3024, 0.5
      %v3057 = vmul.f32 %v3025, 0.5
      %v3058 = vmul.f32 %v3026, 0.5
      %v3059 = vmul.f32 %v3027, 0.5
      %v3060 = vmul.f32 %v3028, 0.5
      %v3061 = vmul.f32 %v3029, 0.5
      %v3062 = vmul.f32 %v3030, 0.5
      %v3063 = vmul.f32 %v3031, 0.5
      %v3064 = vmul.f32 %v3032, 0.5
      %v3065 = vmul.f32 %v3033, 0.5
      %v3066 = vmul.f32 %v3034, 0.5
      %v3067 = vmul.f32 %v3035, 0.5
      %v3068 = vmul.f32 %v3036, 0.5
      %v3069 = vmul.f32 %v3037, 0.5
      %v3070 = vmul.f32 %v3038, 0.5
      %v3071 = vmul.f32 %v3039, 0.5
      %v3072 = vmul.f32 %v3040, 0.5
      %v3073 = vmul.f32 %v3041, 0.5
      %v3074 = vmul.f32 %v3042, 0.5
      %v3075 = vmul.f32 %v3043, 0.5
      %v3076 = vmul.f32 %v3044, 0.5
      %v3077 = vmul.f32 %v3045, 0.5
      %v3078 = vmul.f32 %v3046, 0.5
      %v3079 = vmul.f32 %v3047, 0.5
      %v3080 = vmul.f32 %v3048, 0.5
      %v3081 = vmul.f32 %v3049, 0.5
      %v3082 = vmul.f32 %v3050, 0.5
      %v3083 = vmul.f32 %v3051, 0.5
      %v3084 = vmul.f32 %v3052, 0.5
      %v3085 = vmul.f32 %v3053, 0.5
      %v3086 = vmul.f32 %v3054, 0.5
      %v3087 = vmul.f32 %v3055, 0.5
      %v3088 = vmul.f32 %v3024, 0.044715
      %v3089 = vmul.f32 %v3025, 0.044715
      %v3090 = vmul.f32 %v3026, 0.044715
      %v3091 = vmul.f32 %v3027, 0.044715
      %v3092 = vmul.f32 %v3028, 0.044715
      %v3093 = vmul.f32 %v3029, 0.044715
      %v3094 = vmul.f32 %v3030, 0.044715
      %v3095 = vmul.f32 %v3031, 0.044715
      %v3096 = vmul.f32 %v3032, 0.044715
      %v3097 = vmul.f32 %v3033, 0.044715
      %v3098 = vmul.f32 %v3034, 0.044715
      %v3099 = vmul.f32 %v3035, 0.044715
      %v3100 = vmul.f32 %v3036, 0.044715
      %v3101 = vmul.f32 %v3037, 0.044715
      %v3102 = vmul.f32 %v3038, 0.044715
      %v3103 = vmul.f32 %v3039, 0.044715
      %v3104 = vmul.f32 %v3040, 0.044715
      %v3105 = vmul.f32 %v3041, 0.044715
      %v3106 = vmul.f32 %v3042, 0.044715
      %v3107 = vmul.f32 %v3043, 0.044715
      %v3108 = vmul.f32 %v3044, 0.044715
      %v3109 = vmul.f32 %v3045, 0.044715
      %v3110 = vmul.f32 %v3046, 0.044715
      %v3111 = vmul.f32 %v3047, 0.044715
      %v3112 = vmul.f32 %v3048, 0.044715
      %v3113 = vmul.f32 %v3049, 0.044715
      %v3114 = vmul.f32 %v3050, 0.044715
      %v3115 = vmul.f32 %v3051, 0.044715
      %v3116 = vmul.f32 %v3052, 0.044715
      %v3117 = vmul.f32 %v3053, 0.044715
      %v3118 = vmul.f32 %v3054, 0.044715
      %v3119 = vmul.f32 %v3055, 0.044715
      %v3120 = vmul.f32 %v3088, %v3024
      %v3121 = vmul.f32 %v3089, %v3025
      %v3122 = vmul.f32 %v3090, %v3026
      %v3123 = vmul.f32 %v3091, %v3027
      %v3124 = vmul.f32 %v3092, %v3028
      %v3125 = vmul.f32 %v3093, %v3029
      %v3126 = vmul.f32 %v3094, %v3030
      %v3127 = vmul.f32 %v3095, %v3031
      %v3128 = vmul.f32 %v3096, %v3032
      %v3129 = vmul.f32 %v3097, %v3033
      %v3130 = vmul.f32 %v3098, %v3034
      %v3131 = vmul.f32 %v3099, %v3035
      %v3132 = vmul.f32 %v3100, %v3036
      %v3133 = vmul.f32 %v3101, %v3037
      %v3134 = vmul.f32 %v3102, %v3038
      %v3135 = vmul.f32 %v3103, %v3039
      %v3136 = vmul.f32 %v3104, %v3040
      %v3137 = vmul.f32 %v3105, %v3041
      %v3138 = vmul.f32 %v3106, %v3042
      %v3139 = vmul.f32 %v3107, %v3043
      %v3140 = vmul.f32 %v3108, %v3044
      %v3141 = vmul.f32 %v3109, %v3045
      %v3142 = vmul.f32 %v3110, %v3046
      %v3143 = vmul.f32 %v3111, %v3047
      %v3144 = vmul.f32 %v3112, %v3048
      %v3145 = vmul.f32 %v3113, %v3049
      %v3146 = vmul.f32 %v3114, %v3050
      %v3147 = vmul.f32 %v3115, %v3051
      %v3148 = vmul.f32 %v3116, %v3052
      %v3149 = vmul.f32 %v3117, %v3053
      %v3150 = vmul.f32 %v3118, %v3054
      %v3151 = vmul.f32 %v3119, %v3055
      %v3152 = vmul.f32 %v3120, %v3024
      %v3153 = vmul.f32 %v3121, %v3025
      %v3154 = vmul.f32 %v3122, %v3026
      %v3155 = vmul.f32 %v3123, %v3027
      %v3156 = vmul.f32 %v3124, %v3028
      %v3157 = vmul.f32 %v3125, %v3029
      %v3158 = vmul.f32 %v3126, %v3030
      %v3159 = vmul.f32 %v3127, %v3031
      %v3160 = vmul.f32 %v3128, %v3032
      %v3161 = vmul.f32 %v3129, %v3033
      %v3162 = vmul.f32 %v3130, %v3034
      %v3163 = vmul.f32 %v3131, %v3035
      %v3164 = vmul.f32 %v3132, %v3036
      %v3165 = vmul.f32 %v3133, %v3037
      %v3166 = vmul.f32 %v3134, %v3038
      %v3167 = vmul.f32 %v3135, %v3039
      %v3168 = vmul.f32 %v3136, %v3040
      %v3169 = vmul.f32 %v3137, %v3041
      %v3170 = vmul.f32 %v3138, %v3042
      %v3171 = vmul.f32 %v3139, %v3043
      %v3172 = vmul.f32 %v3140, %v3044
      %v3173 = vmul.f32 %v3141, %v3045
      %v3174 = vmul.f32 %v3142, %v3046
      %v3175 = vmul.f32 %v3143, %v3047
      %v3176 = vmul.f32 %v3144, %v3048
      %v3177 = vmul.f32 %v3145, %v3049
      %v3178 = vmul.f32 %v3146, %v3050
      %v3179 = vmul.f32 %v3147, %v3051
      %v3180 = vmul.f32 %v3148, %v3052
      %v3181 = vmul.f32 %v3149, %v3053
      %v3182 = vmul.f32 %v3150, %v3054
      %v3183 = vmul.f32 %v3151, %v3055
      %v3184 = vadd.f32 %v3024, %v3152
      %v3185 = vadd.f32 %v3025, %v3153
      %v3186 = vadd.f32 %v3026, %v3154
      %v3187 = vadd.f32 %v3027, %v3155
      %v3188 = vadd.f32 %v3028, %v3156
      %v3189 = vadd.f32 %v3029, %v3157
      %v3190 = vadd.f32 %v3030, %v3158
      %v3191 = vadd.f32 %v3031, %v3159
      %v3192 = vadd.f32 %v3032, %v3160
      %v3193 = vadd.f32 %v3033, %v3161
      %v3194 = vadd.f32 %v3034, %v3162
      %v3195 = vadd.f32 %v3035, %v3163
      %v3196 = vadd.f32 %v3036, %v3164
      %v3197 = vadd.f32 %v3037, %v3165
      %v3198 = vadd.f32 %v3038, %v3166
      %v3199 = vadd.f32 %v3039, %v3167
      %v3200 = vadd.f32 %v3040, %v3168
      %v3201 = vadd.f32 %v3041, %v3169
      %v3202 = vadd.f32 %v3042, %v3170
      %v3203 = vadd.f32 %v3043, %v3171
      %v3204 = vadd.f32 %v3044, %v3172
      %v3205 = vadd.f32 %v3045, %v3173
      %v3206 = vadd.f32 %v3046, %v3174
      %v3207 = vadd.f32 %v3047, %v3175
      %v3208 = vadd.f32 %v3048, %v3176
      %v3209 = vadd.f32 %v3049, %v3177
      %v3210 = vadd.f32 %v3050, %v3178
      %v3211 = vadd.f32 %v3051, %v3179
      %v3212 = vadd.f32 %v3052, %v3180
      %v3213 = vadd.f32 %v3053, %v3181
      %v3214 = vadd.f32 %v3054, %v3182
      %v3215 = vadd.f32 %v3055, %v3183
      %v3216 = vmul.f32 %v3184, 0.7978846
      %v3217 = vmul.f32 %v3185, 0.7978846
      %v3218 = vmul.f32 %v3186, 0.7978846
      %v3219 = vmul.f32 %v3187, 0.7978846
      %v3220 = vmul.f32 %v3188, 0.7978846
      %v3221 = vmul.f32 %v3189, 0.7978846
      %v3222 = vmul.f32 %v3190, 0.7978846
      %v3223 = vmul.f32 %v3191, 0.7978846
      %v3224 = vmul.f32 %v3192, 0.7978846
      %v3225 = vmul.f32 %v3193, 0.7978846
      %v3226 = vmul.f32 %v3194, 0.7978846
      %v3227 = vmul.f32 %v3195, 0.7978846
      %v3228 = vmul.f32 %v3196, 0.7978846
      %v3229 = vmul.f32 %v3197, 0.7978846
      %v3230 = vmul.f32 %v3198, 0.7978846
      %v3231 = vmul.f32 %v3199, 0.7978846
      %v3232 = vmul.f32 %v3200, 0.7978846
      %v3233 = vmul.f32 %v3201, 0.7978846
      %v3234 = vmul.f32 %v3202, 0.7978846
      %v3235 = vmul.f32 %v3203, 0.7978846
      %v3236 = vmul.f32 %v3204, 0.7978846
      %v3237 = vmul.f32 %v3205, 0.7978846
      %v3238 = vmul.f32 %v3206, 0.7978846
      %v3239 = vmul.f32 %v3207, 0.7978846
      %v3240 = vmul.f32 %v3208, 0.7978846
      %v3241 = vmul.f32 %v3209, 0.7978846
      %v3242 = vmul.f32 %v3210, 0.7978846
      %v3243 = vmul.f32 %v3211, 0.7978846
      %v3244 = vmul.f32 %v3212, 0.7978846
      %v3245 = vmul.f32 %v3213, 0.7978846
      %v3246 = vmul.f32 %v3214, 0.7978846
      %v3247 = vmul.f32 %v3215, 0.7978846
      %v3248 = vtanh.pop %v3216
      %v3249 = vtanh.pop %v3217
      %v3250 = vtanh.pop %v3218
      %v3251 = vtanh.pop %v3219
      %v3252 = vtanh.pop %v3220
      %v3253 = vtanh.pop %v3221
      %v3254 = vtanh.pop %v3222
      %v3255 = vtanh.pop %v3223
      %v3256 = vtanh.pop %v3224
      %v3257 = vtanh.pop %v3225
      %v3258 = vtanh.pop %v3226
      %v3259 = vtanh.pop %v3227
      %v3260 = vtanh.pop %v3228
      %v3261 = vtanh.pop %v3229
      %v3262 = vtanh.pop %v3230
      %v3263 = vtanh.pop %v3231
      %v3264 = vtanh.pop %v3232
      %v3265 = vtanh.pop %v3233
      %v3266 = vtanh.pop %v3234
      %v3267 = vtanh.pop %v3235
      %v3268 = vtanh.pop %v3236
      %v3269 = vtanh.pop %v3237
      %v3270 = vtanh.pop %v3238
      %v3271 = vtanh.pop %v3239
      %v3272 = vtanh.pop %v3240
      %v3273 = vtanh.pop %v3241
      %v3274 = vtanh.pop %v3242
      %v3275 = vtanh.pop %v3243
      %v3276 = vtanh.pop %v3244
      %v3277 = vtanh.pop %v3245
      %v3278 = vtanh.pop %v3246
      %v3279 = vtanh.pop %v3247
      %v3280 = vadd.f32 %v3248, 1.0
      %v3281 = vadd.f32 %v3249, 1.0
      %v3282 = vadd.f32 %v3250, 1.0
      %v3283 = vadd.f32 %v3251, 1.0
      %v3284 = vadd.f32 %v3252, 1.0
      %v3285 = vadd.f32 %v3253, 1.0
      %v3286 = vadd.f32 %v3254, 1.0
      %v3287 = vadd.f32 %v3255, 1.0
      %v3288 = vadd.f32 %v3256, 1.0
      %v3289 = vadd.f32 %v3257, 1.0
      %v3290 = vadd.f32 %v3258, 1.0
      %v3291 = vadd.f32 %v3259, 1.0
      %v3292 = vadd.f32 %v3260, 1.0
      %v3293 = vadd.f32 %v3261, 1.0
      %v3294 = vadd.f32 %v3262, 1.0
      %v3295 = vadd.f32 %v3263, 1.0
      %v3296 = vadd.f32 %v3264, 1.0
      %v3297 = vadd.f32 %v3265, 1.0
      %v3298 = vadd.f32 %v3266, 1.0
      %v3299 = vadd.f32 %v3267, 1.0
      %v3300 = vadd.f32 %v3268, 1.0
      %v3301 = vadd.f32 %v3269, 1.0
      %v3302 = vadd.f32 %v3270, 1.0
      %v3303 = vadd.f32 %v3271, 1.0
      %v3304 = vadd.f32 %v3272, 1.0
      %v3305 = vadd.f32 %v3273, 1.0
      %v3306 = vadd.f32 %v3274, 1.0
      %v3307 = vadd.f32 %v3275, 1.0
      %v3308 = vadd.f32 %v3276, 1.0
      %v3309 = vadd.f32 %v3277, 1.0
      %v3310 = vadd.f32 %v3278, 1.0
      %v3311 = vadd.f32 %v3279, 1.0
      %v3312 = vmul.f32 %v3056, %v3280
      %v3313 = vmul.f32 %v3057, %v3281
      %v3314 = vmul.f32 %v3058, %v3282
      %v3315 = vmul.f32 %v3059, %v3283
      %v3316 = vmul.f32 %v3060, %v3284
      %v3317 = vmul.f32 %v3061, %v3285
      %v3318 = vmul.f32 %v3062, %v3286
      %v3319 = vmul.f32 %v3063, %v3287
      %v3320 = vmul.f32 %v3064, %v3288
      %v3321 = vmul.f32 %v3065, %v3289
      %v3322 = vmul.f32 %v3066, %v3290
      %v3323 = vmul.f32 %v3067, %v3291
      %v3324 = vmul.f32 %v3068, %v3292
      %v3325 = vmul.f32 %v3069, %v3293
      %v3326 = vmul.f32 %v3070, %v3294
      %v3327 = vmul.f32 %v3071, %v3295
      %v3328 = vmul.f32 %v3072, %v3296
      %v3329 = vmul.f32 %v3073, %v3297
      %v3330 = vmul.f32 %v3074, %v3298
      %v3331 = vmul.f32 %v3075, %v3299
      %v3332 = vmul.f32 %v3076, %v3300
      %v3333 = vmul.f32 %v3077, %v3301
      %v3334 = vmul.f32 %v3078, %v3302
      %v3335 = vmul.f32 %v3079, %v3303
      %v3336 = vmul.f32 %v3080, %v3304
      %v3337 = vmul.f32 %v3081, %v3305
      %v3338 = vmul.f32 %v3082, %v3306
      %v3339 = vmul.f32 %v3083, %v3307
      %v3340 = vmul.f32 %v3084, %v3308
      %v3341 = vmul.f32 %v3085, %v3309
      %v3342 = vmul.f32 %v3086, %v3310
      %v3343 = vmul.f32 %v3087, %v3311
      %v3344 = vadd.f32 %v3312, %v2074
      %v3345 = vadd.f32 %v3313, %v2075
      %v3346 = vadd.f32 %v3314, %v2076
      %v3347 = vadd.f32 %v3315, %v2077
      %v3348 = vadd.f32 %v3316, %v2078
      %v3349 = vadd.f32 %v3317, %v2079
      %v3350 = vadd.f32 %v3318, %v2080
      %v3351 = vadd.f32 %v3319, %v2081
      %v3352 = vadd.f32 %v3320, %v2082
      %v3353 = vadd.f32 %v3321, %v2083
      %v3354 = vadd.f32 %v3322, %v2084
      %v3355 = vadd.f32 %v3323, %v2085
      %v3356 = vadd.f32 %v3324, %v2086
      %v3357 = vadd.f32 %v3325, %v2087
      %v3358 = vadd.f32 %v3326, %v2088
      %v3359 = vadd.f32 %v3327, %v2089
      %v3360 = vadd.f32 %v3328, %v2090
      %v3361 = vadd.f32 %v3329, %v2091
      %v3362 = vadd.f32 %v3330, %v2092
      %v3363 = vadd.f32 %v3331, %v2093
      %v3364 = vadd.f32 %v3332, %v2094
      %v3365 = vadd.f32 %v3333, %v2095
      %v3366 = vadd.f32 %v3334, %v2096
      %v3367 = vadd.f32 %v3335, %v2097
      %v3368 = vadd.f32 %v3336, %v2098
      %v3369 = vadd.f32 %v3337, %v2099
      %v3370 = vadd.f32 %v3338, %v2100
      %v3371 = vadd.f32 %v3339, %v2101
      %v3372 = vadd.f32 %v3340, %v2102
      %v3373 = vadd.f32 %v3341, %v2103
      %v3374 = vadd.f32 %v3342, %v2104
      %v3375 = vadd.f32 %v3343, %v2105
      %v3376 = vld [vmem:[%s9] sm:$0x1]
      %v3378 = vperm.slane %v3376, 0
      %v3380 = vmul.f32 %v3344, %v3378
      %v3381 = vmul.f32 %v3345, %v3378
      %v3382 = vmul.f32 %v3346, %v3378
      %v3383 = vmul.f32 %v3347, %v3378
      %v3384 = vmul.f32 %v3348, %v3378
      %v3385 = vmul.f32 %v3349, %v3378
      %v3386 = vmul.f32 %v3350, %v3378
      %v3387 = vmul.f32 %v3351, %v3378
      %v3388 = vmul.f32 %v3352, %v3378
      %v3389 = vmul.f32 %v3353, %v3378
      %v3390 = vmul.f32 %v3354, %v3378
      %v3391 = vmul.f32 %v3355, %v3378
      %v3392 = vmul.f32 %v3356, %v3378
      %v3393 = vmul.f32 %v3357, %v3378
      %v3394 = vmul.f32 %v3358, %v3378
      %v3395 = vmul.f32 %v3359, %v3378
      %v3396 = vmul.f32 %v3360, %v3378
      %v3397 = vmul.f32 %v3361, %v3378
      %v3398 = vmul.f32 %v3362, %v3378
      %v3399 = vmul.f32 %v3363, %v3378
      %v3400 = vmul.f32 %v3364, %v3378
      %v3401 = vmul.f32 %v3365, %v3378
      %v3402 = vmul.f32 %v3366, %v3378
      %v3403 = vmul.f32 %v3367, %v3378
      %v3404 = vmul.f32 %v3368, %v3378
      %v3405 = vmul.f32 %v3369, %v3378
      %v3406 = vmul.f32 %v3370, %v3378
      %v3407 = vmul.f32 %v3371, %v3378
      %v3408 = vmul.f32 %v3372, %v3378
      %v3409 = vmul.f32 %v3373, %v3378
      %v3410 = vmul.f32 %v3374, %v3378
      %v3411 = vmul.f32 %v3375, %v3378
      %v3412 = vld [vmem:[%s10] sm:$0x1]
      %v3414 = vperm.slane %v3412, 0
      %v3416 = vadd.f32 %v3380, %v3414
      %v3417 = vadd.f32 %v3381, %v3414
      %v3418 = vadd.f32 %v3382, %v3414
      %v3419 = vadd.f32 %v3383, %v3414
      %v3420 = vadd.f32 %v3384, %v3414
      %v3421 = vadd.f32 %v3385, %v3414
      %v3422 = vadd.f32 %v3386, %v3414
      %v3423 = vadd.f32 %v3387, %v3414
      %v3424 = vadd.f32 %v3388, %v3414
      %v3425 = vadd.f32 %v3389, %v3414
      %v3426 = vadd.f32 %v3390, %v3414
      %v3427 = vadd.f32 %v3391, %v3414
      %v3428 = vadd.f32 %v3392, %v3414
      %v3429 = vadd.f32 %v3393, %v3414
      %v3430 = vadd.f32 %v3394, %v3414
      %v3431 = vadd.f32 %v3395, %v3414
      %v3432 = vadd.f32 %v3396, %v3414
      %v3433 = vadd.f32 %v3397, %v3414
      %v3434 = vadd.f32 %v3398, %v3414
      %v3435 = vadd.f32 %v3399, %v3414
      %v3436 = vadd.f32 %v3400, %v3414
      %v3437 = vadd.f32 %v3401, %v3414
      %v3438 = vadd.f32 %v3402, %v3414
      %v3439 = vadd.f32 %v3403, %v3414
      %v3440 = vadd.f32 %v3404, %v3414
      %v3441 = vadd.f32 %v3405, %v3414
      %v3442 = vadd.f32 %v3406, %v3414
      %v3443 = vadd.f32 %v3407, %v3414
      %v3444 = vadd.f32 %v3408, %v3414
      %v3445 = vadd.f32 %v3409, %v3414
      %v3446 = vadd.f32 %v3410, %v3414
      %v3447 = vadd.f32 %v3411, %v3414
      %v3448 = vpack.c.bf16 %v3417, %v3416
      %v3449 = vpack.c.bf16 %v3419, %v3418
      %v3450 = vpack.c.bf16 %v3421, %v3420
      %v3451 = vpack.c.bf16 %v3423, %v3422
      %v3452 = vpack.c.bf16 %v3425, %v3424
      %v3453 = vpack.c.bf16 %v3427, %v3426
      %v3454 = vpack.c.bf16 %v3429, %v3428
      %v3455 = vpack.c.bf16 %v3431, %v3430
      %v3456 = vpack.c.bf16 %v3433, %v3432
      %v3457 = vpack.c.bf16 %v3435, %v3434
      %v3458 = vpack.c.bf16 %v3437, %v3436
      %v3459 = vpack.c.bf16 %v3439, %v3438
      %v3460 = vpack.c.bf16 %v3441, %v3440
      %v3461 = vpack.c.bf16 %v3443, %v3442
      %v3462 = vpack.c.bf16 %v3445, %v3444
      %v3463 = vpack.c.bf16 %v3447, %v3446
      %v3464 = vld [vmem:[%s11] sm:$0xf]
      %v3465 = vld [vmem:[%s11 + $0x4] sm:$0xf]
      %v3466 = vld [vmem:[%s11 + $0x8] sm:$0x3]
      %v3470 = vunpack.c.l.b16 %v3464
      %v3471 = vunpack.c.l.b16 %v3465
      %v3472 = vunpack.c.l.b16 %v3466
      %v3473 = vpack.c.b16 %v3471, %v3470
      %v3474 = vpack.c.b16 %v3472, %v3472
      %v3477 = vsel %vm1322, %v3448, 0
      %v3480 = vsel %vm1322, %v3449, 0
      %v3483 = vsel %vm1322, %v3450, 0
      %v3486 = vsel %vm1322, %v3451, 0
      %v3489 = vsel %vm1322, %v3452, 0
      %v3492 = vsel %vm1322, %v3453, 0
      %v3495 = vsel %vm1322, %v3454, 0
      %v3498 = vsel %vm1322, %v3455, 0
      %v3501 = vsel %vm1322, %v3456, 0
      %v3504 = vsel %vm1322, %v3457, 0
      %v3507 = vsel %vm1322, %v3458, 0
      %v3510 = vsel %vm1322, %v3459, 0
      %v3513 = vsel %vm1322, %v3460, 0
      %v3516 = vsel %vm1322, %v3461, 0
      %v3519 = vsel %vm1322, %v3462, 0
      %v3522 = vsel %vm1322, %v3463, 0
      %v3525 = vsel %vm788, %v3474, 0
      %3527 = vmatpush.bf16.msra.mxu0 0
      %3528 = vmatpush.bf16.msra.mxu0 0
      %3529 = vmatpush.bf16.msra.mxu0 0
      %3530 = vmatpush.bf16.msra.mxu0 0
      %3531 = vmatpush.bf16.msra.mxu0 0
      %3532 = vmatpush.bf16.msra.mxu0 0
      %3533 = vmatpush.bf16.msra.mxu0 %v3525
      %3534 = vmatpush.bf16.msra.mxu0 %v3473
      %3535 = vmatmul.bf16.gmra.mxu0 %v3477
      %v3536 = vpop.f32.mrf.mxu0
      %v3537 = vadd.f32 0.0, %v3536
      %v3538 = vpop.f32.mrf.mxu0
      %v3539 = vadd.f32 0.0, %v3538
      %3540 = vmatmul.bf16.gmra.mxu0 %v3480
      %v3541 = vpop.f32.mrf.mxu0
      %v3542 = vadd.f32 0.0, %v3541
      %v3543 = vpop.f32.mrf.mxu0
      %v3544 = vadd.f32 0.0, %v3543
      %3545 = vmatmul.bf16.gmra.mxu0 %v3483
      %v3546 = vpop.f32.mrf.mxu0
      %v3547 = vadd.f32 0.0, %v3546
      %v3548 = vpop.f32.mrf.mxu0
      %v3549 = vadd.f32 0.0, %v3548
      %3550 = vmatmul.bf16.gmra.mxu0 %v3486
      %v3551 = vpop.f32.mrf.mxu0
      %v3552 = vadd.f32 0.0, %v3551
      %v3553 = vpop.f32.mrf.mxu0
      %v3554 = vadd.f32 0.0, %v3553
      %3555 = vmatmul.bf16.gmra.mxu0 %v3489
      %v3556 = vpop.f32.mrf.mxu0
      %v3557 = vadd.f32 0.0, %v3556
      %v3558 = vpop.f32.mrf.mxu0
      %v3559 = vadd.f32 0.0, %v3558
      %3560 = vmatmul.bf16.gmra.mxu0 %v3492
      %v3561 = vpop.f32.mrf.mxu0
      %v3562 = vadd.f32 0.0, %v3561
      %v3563 = vpop.f32.mrf.mxu0
      %v3564 = vadd.f32 0.0, %v3563
      %3565 = vmatmul.bf16.gmra.mxu0 %v3495
      %v3566 = vpop.f32.mrf.mxu0
      %v3567 = vadd.f32 0.0, %v3566
      %v3568 = vpop.f32.mrf.mxu0
      %v3569 = vadd.f32 0.0, %v3568
      %3570 = vmatmul.bf16.gmra.mxu0 %v3498
      %v3571 = vpop.f32.mrf.mxu0
      %v3572 = vadd.f32 0.0, %v3571
      %v3573 = vpop.f32.mrf.mxu0
      %v3574 = vadd.f32 0.0, %v3573
      %3575 = vmatmul.bf16.gmra.mxu0 %v3501
      %v3576 = vpop.f32.mrf.mxu0
      %v3577 = vadd.f32 0.0, %v3576
      %v3578 = vpop.f32.mrf.mxu0
      %v3579 = vadd.f32 0.0, %v3578
      %3580 = vmatmul.bf16.gmra.mxu0 %v3504
      %v3581 = vpop.f32.mrf.mxu0
      %v3582 = vadd.f32 0.0, %v3581
      %v3583 = vpop.f32.mrf.mxu0
      %v3584 = vadd.f32 0.0, %v3583
      %3585 = vmatmul.bf16.gmra.mxu0 %v3507
      %v3586 = vpop.f32.mrf.mxu0
      %v3587 = vadd.f32 0.0, %v3586
      %v3588 = vpop.f32.mrf.mxu0
      %v3589 = vadd.f32 0.0, %v3588
      %3590 = vmatmul.bf16.gmra.mxu0 %v3510
      %v3591 = vpop.f32.mrf.mxu0
      %v3592 = vadd.f32 0.0, %v3591
      %v3593 = vpop.f32.mrf.mxu0
      %v3594 = vadd.f32 0.0, %v3593
      %3595 = vmatmul.bf16.gmra.mxu0 %v3513
      %v3596 = vpop.f32.mrf.mxu0
      %v3597 = vadd.f32 0.0, %v3596
      %v3598 = vpop.f32.mrf.mxu0
      %v3599 = vadd.f32 0.0, %v3598
      %3600 = vmatmul.bf16.gmra.mxu0 %v3516
      %v3601 = vpop.f32.mrf.mxu0
      %v3602 = vadd.f32 0.0, %v3601
      %v3603 = vpop.f32.mrf.mxu0
      %v3604 = vadd.f32 0.0, %v3603
      %3605 = vmatmul.bf16.gmra.mxu0 %v3519
      %v3606 = vpop.f32.mrf.mxu0
      %v3607 = vadd.f32 0.0, %v3606
      %v3608 = vpop.f32.mrf.mxu0
      %v3609 = vadd.f32 0.0, %v3608
      %3610 = vmatmul.bf16.gmra.mxu0 %v3522
      %v3611 = vpop.f32.mrf.mxu0
      %v3612 = vadd.f32 0.0, %v3611
      %v3613 = vpop.f32.mrf.mxu0
      %v3614 = vadd.f32 0.0, %v3613
      %3615 = vdwg.mxu0
      %v3616 = vmul.f32 %v3537, 0.5
      %v3617 = vmul.f32 %v3539, 0.5
      %v3618 = vmul.f32 %v3542, 0.5
      %v3619 = vmul.f32 %v3544, 0.5
      %v3620 = vmul.f32 %v3547, 0.5
      %v3621 = vmul.f32 %v3549, 0.5
      %v3622 = vmul.f32 %v3552, 0.5
      %v3623 = vmul.f32 %v3554, 0.5
      %v3624 = vmul.f32 %v3557, 0.5
      %v3625 = vmul.f32 %v3559, 0.5
      %v3626 = vmul.f32 %v3562, 0.5
      %v3627 = vmul.f32 %v3564, 0.5
      %v3628 = vmul.f32 %v3567, 0.5
      %v3629 = vmul.f32 %v3569, 0.5
      %v3630 = vmul.f32 %v3572, 0.5
      %v3631 = vmul.f32 %v3574, 0.5
      %v3632 = vmul.f32 %v3577, 0.5
      %v3633 = vmul.f32 %v3579, 0.5
      %v3634 = vmul.f32 %v3582, 0.5
      %v3635 = vmul.f32 %v3584, 0.5
      %v3636 = vmul.f32 %v3587, 0.5
      %v3637 = vmul.f32 %v3589, 0.5
      %v3638 = vmul.f32 %v3592, 0.5
      %v3639 = vmul.f32 %v3594, 0.5
      %v3640 = vmul.f32 %v3597, 0.5
      %v3641 = vmul.f32 %v3599, 0.5
      %v3642 = vmul.f32 %v3602, 0.5
      %v3643 = vmul.f32 %v3604, 0.5
      %v3644 = vmul.f32 %v3607, 0.5
      %v3645 = vmul.f32 %v3609, 0.5
      %v3646 = vmul.f32 %v3612, 0.5
      %v3647 = vmul.f32 %v3614, 0.5
      %v3648 = vmul.f32 %v3537, 0.044715
      %v3649 = vmul.f32 %v3539, 0.044715
      %v3650 = vmul.f32 %v3542, 0.044715
      %v3651 = vmul.f32 %v3544, 0.044715
      %v3652 = vmul.f32 %v3547, 0.044715
      %v3653 = vmul.f32 %v3549, 0.044715
      %v3654 = vmul.f32 %v3552, 0.044715
      %v3655 = vmul.f32 %v3554, 0.044715
      %v3656 = vmul.f32 %v3557, 0.044715
      %v3657 = vmul.f32 %v3559, 0.044715
      %v3658 = vmul.f32 %v3562, 0.044715
      %v3659 = vmul.f32 %v3564, 0.044715
      %v3660 = vmul.f32 %v3567, 0.044715
      %v3661 = vmul.f32 %v3569, 0.044715
      %v3662 = vmul.f32 %v3572, 0.044715
      %v3663 = vmul.f32 %v3574, 0.044715
      %v3664 = vmul.f32 %v3577, 0.044715
      %v3665 = vmul.f32 %v3579, 0.044715
      %v3666 = vmul.f32 %v3582, 0.044715
      %v3667 = vmul.f32 %v3584, 0.044715
      %v3668 = vmul.f32 %v3587, 0.044715
      %v3669 = vmul.f32 %v3589, 0.044715
      %v3670 = vmul.f32 %v3592, 0.044715
      %v3671 = vmul.f32 %v3594, 0.044715
      %v3672 = vmul.f32 %v3597, 0.044715
      %v3673 = vmul.f32 %v3599, 0.044715
      %v3674 = vmul.f32 %v3602, 0.044715
      %v3675 = vmul.f32 %v3604, 0.044715
      %v3676 = vmul.f32 %v3607, 0.044715
      %v3677 = vmul.f32 %v3609, 0.044715
      %v3678 = vmul.f32 %v3612, 0.044715
      %v3679 = vmul.f32 %v3614, 0.044715
      %v3680 = vmul.f32 %v3648, %v3537
      %v3681 = vmul.f32 %v3649, %v3539
      %v3682 = vmul.f32 %v3650, %v3542
      %v3683 = vmul.f32 %v3651, %v3544
      %v3684 = vmul.f32 %v3652, %v3547
      %v3685 = vmul.f32 %v3653, %v3549
      %v3686 = vmul.f32 %v3654, %v3552
      %v3687 = vmul.f32 %v3655, %v3554
      %v3688 = vmul.f32 %v3656, %v3557
      %v3689 = vmul.f32 %v3657, %v3559
      %v3690 = vmul.f32 %v3658, %v3562
      %v3691 = vmul.f32 %v3659, %v3564
      %v3692 = vmul.f32 %v3660, %v3567
      %v3693 = vmul.f32 %v3661, %v3569
      %v3694 = vmul.f32 %v3662, %v3572
      %v3695 = vmul.f32 %v3663, %v3574
      %v3696 = vmul.f32 %v3664, %v3577
      %v3697 = vmul.f32 %v3665, %v3579
      %v3698 = vmul.f32 %v3666, %v3582
      %v3699 = vmul.f32 %v3667, %v3584
      %v3700 = vmul.f32 %v3668, %v3587
      %v3701 = vmul.f32 %v3669, %v3589
      %v3702 = vmul.f32 %v3670, %v3592
      %v3703 = vmul.f32 %v3671, %v3594
      %v3704 = vmul.f32 %v3672, %v3597
      %v3705 = vmul.f32 %v3673, %v3599
      %v3706 = vmul.f32 %v3674, %v3602
      %v3707 = vmul.f32 %v3675, %v3604
      %v3708 = vmul.f32 %v3676, %v3607
      %v3709 = vmul.f32 %v3677, %v3609
      %v3710 = vmul.f32 %v3678, %v3612
      %v3711 = vmul.f32 %v3679, %v3614
      %v3712 = vmul.f32 %v3680, %v3537
      %v3713 = vmul.f32 %v3681, %v3539
      %v3714 = vmul.f32 %v3682, %v3542
      %v3715 = vmul.f32 %v3683, %v3544
      %v3716 = vmul.f32 %v3684, %v3547
      %v3717 = vmul.f32 %v3685, %v3549
      %v3718 = vmul.f32 %v3686, %v3552
      %v3719 = vmul.f32 %v3687, %v3554
      %v3720 = vmul.f32 %v3688, %v3557
      %v3721 = vmul.f32 %v3689, %v3559
      %v3722 = vmul.f32 %v3690, %v3562
      %v3723 = vmul.f32 %v3691, %v3564
      %v3724 = vmul.f32 %v3692, %v3567
      %v3725 = vmul.f32 %v3693, %v3569
      %v3726 = vmul.f32 %v3694, %v3572
      %v3727 = vmul.f32 %v3695, %v3574
      %v3728 = vmul.f32 %v3696, %v3577
      %v3729 = vmul.f32 %v3697, %v3579
      %v3730 = vmul.f32 %v3698, %v3582
      %v3731 = vmul.f32 %v3699, %v3584
      %v3732 = vmul.f32 %v3700, %v3587
      %v3733 = vmul.f32 %v3701, %v3589
      %v3734 = vmul.f32 %v3702, %v3592
      %v3735 = vmul.f32 %v3703, %v3594
      %v3736 = vmul.f32 %v3704, %v3597
      %v3737 = vmul.f32 %v3705, %v3599
      %v3738 = vmul.f32 %v3706, %v3602
      %v3739 = vmul.f32 %v3707, %v3604
      %v3740 = vmul.f32 %v3708, %v3607
      %v3741 = vmul.f32 %v3709, %v3609
      %v3742 = vmul.f32 %v3710, %v3612
      %v3743 = vmul.f32 %v3711, %v3614
      %v3744 = vadd.f32 %v3537, %v3712
      %v3745 = vadd.f32 %v3539, %v3713
      %v3746 = vadd.f32 %v3542, %v3714
      %v3747 = vadd.f32 %v3544, %v3715
      %v3748 = vadd.f32 %v3547, %v3716
      %v3749 = vadd.f32 %v3549, %v3717
      %v3750 = vadd.f32 %v3552, %v3718
      %v3751 = vadd.f32 %v3554, %v3719
      %v3752 = vadd.f32 %v3557, %v3720
      %v3753 = vadd.f32 %v3559, %v3721
      %v3754 = vadd.f32 %v3562, %v3722
      %v3755 = vadd.f32 %v3564, %v3723
      %v3756 = vadd.f32 %v3567, %v3724
      %v3757 = vadd.f32 %v3569, %v3725
      %v3758 = vadd.f32 %v3572, %v3726
      %v3759 = vadd.f32 %v3574, %v3727
      %v3760 = vadd.f32 %v3577, %v3728
      %v3761 = vadd.f32 %v3579, %v3729
      %v3762 = vadd.f32 %v3582, %v3730
      %v3763 = vadd.f32 %v3584, %v3731
      %v3764 = vadd.f32 %v3587, %v3732
      %v3765 = vadd.f32 %v3589, %v3733
      %v3766 = vadd.f32 %v3592, %v3734
      %v3767 = vadd.f32 %v3594, %v3735
      %v3768 = vadd.f32 %v3597, %v3736
      %v3769 = vadd.f32 %v3599, %v3737
      %v3770 = vadd.f32 %v3602, %v3738
      %v3771 = vadd.f32 %v3604, %v3739
      %v3772 = vadd.f32 %v3607, %v3740
      %v3773 = vadd.f32 %v3609, %v3741
      %v3774 = vadd.f32 %v3612, %v3742
      %v3775 = vadd.f32 %v3614, %v3743
      %v3776 = vmul.f32 %v3744, 0.7978846
      %v3777 = vmul.f32 %v3745, 0.7978846
      %v3778 = vmul.f32 %v3746, 0.7978846
      %v3779 = vmul.f32 %v3747, 0.7978846
      %v3780 = vmul.f32 %v3748, 0.7978846
      %v3781 = vmul.f32 %v3749, 0.7978846
      %v3782 = vmul.f32 %v3750, 0.7978846
      %v3783 = vmul.f32 %v3751, 0.7978846
      %v3784 = vmul.f32 %v3752, 0.7978846
      %v3785 = vmul.f32 %v3753, 0.7978846
      %v3786 = vmul.f32 %v3754, 0.7978846
      %v3787 = vmul.f32 %v3755, 0.7978846
      %v3788 = vmul.f32 %v3756, 0.7978846
      %v3789 = vmul.f32 %v3757, 0.7978846
      %v3790 = vmul.f32 %v3758, 0.7978846
      %v3791 = vmul.f32 %v3759, 0.7978846
      %v3792 = vmul.f32 %v3760, 0.7978846
      %v3793 = vmul.f32 %v3761, 0.7978846
      %v3794 = vmul.f32 %v3762, 0.7978846
      %v3795 = vmul.f32 %v3763, 0.7978846
      %v3796 = vmul.f32 %v3764, 0.7978846
      %v3797 = vmul.f32 %v3765, 0.7978846
      %v3798 = vmul.f32 %v3766, 0.7978846
      %v3799 = vmul.f32 %v3767, 0.7978846
      %v3800 = vmul.f32 %v3768, 0.7978846
      %v3801 = vmul.f32 %v3769, 0.7978846
      %v3802 = vmul.f32 %v3770, 0.7978846
      %v3803 = vmul.f32 %v3771, 0.7978846
      %v3804 = vmul.f32 %v3772, 0.7978846
      %v3805 = vmul.f32 %v3773, 0.7978846
      %v3806 = vmul.f32 %v3774, 0.7978846
      %v3807 = vmul.f32 %v3775, 0.7978846
      %v3808 = vtanh.pop %v3776
      %v3809 = vtanh.pop %v3777
      %v3810 = vtanh.pop %v3778
      %v3811 = vtanh.pop %v3779
      %v3812 = vtanh.pop %v3780
      %v3813 = vtanh.pop %v3781
      %v3814 = vtanh.pop %v3782
      %v3815 = vtanh.pop %v3783
      %v3816 = vtanh.pop %v3784
      %v3817 = vtanh.pop %v3785
      %v3818 = vtanh.pop %v3786
      %v3819 = vtanh.pop %v3787
      %v3820 = vtanh.pop %v3788
      %v3821 = vtanh.pop %v3789
      %v3822 = vtanh.pop %v3790
      %v3823 = vtanh.pop %v3791
      %v3824 = vtanh.pop %v3792
      %v3825 = vtanh.pop %v3793
      %v3826 = vtanh.pop %v3794
      %v3827 = vtanh.pop %v3795
      %v3828 = vtanh.pop %v3796
      %v3829 = vtanh.pop %v3797
      %v3830 = vtanh.pop %v3798
      %v3831 = vtanh.pop %v3799
      %v3832 = vtanh.pop %v3800
      %v3833 = vtanh.pop %v3801
      %v3834 = vtanh.pop %v3802
      %v3835 = vtanh.pop %v3803
      %v3836 = vtanh.pop %v3804
      %v3837 = vtanh.pop %v3805
      %v3838 = vtanh.pop %v3806
      %v3839 = vtanh.pop %v3807
      %v3840 = vadd.f32 %v3808, 1.0
      %v3841 = vadd.f32 %v3809, 1.0
      %v3842 = vadd.f32 %v3810, 1.0
      %v3843 = vadd.f32 %v3811, 1.0
      %v3844 = vadd.f32 %v3812, 1.0
      %v3845 = vadd.f32 %v3813, 1.0
      %v3846 = vadd.f32 %v3814, 1.0
      %v3847 = vadd.f32 %v3815, 1.0
      %v3848 = vadd.f32 %v3816, 1.0
      %v3849 = vadd.f32 %v3817, 1.0
      %v3850 = vadd.f32 %v3818, 1.0
      %v3851 = vadd.f32 %v3819, 1.0
      %v3852 = vadd.f32 %v3820, 1.0
      %v3853 = vadd.f32 %v3821, 1.0
      %v3854 = vadd.f32 %v3822, 1.0
      %v3855 = vadd.f32 %v3823, 1.0
      %v3856 = vadd.f32 %v3824, 1.0
      %v3857 = vadd.f32 %v3825, 1.0
      %v3858 = vadd.f32 %v3826, 1.0
      %v3859 = vadd.f32 %v3827, 1.0
      %v3860 = vadd.f32 %v3828, 1.0
      %v3861 = vadd.f32 %v3829, 1.0
      %v3862 = vadd.f32 %v3830, 1.0
      %v3863 = vadd.f32 %v3831, 1.0
      %v3864 = vadd.f32 %v3832, 1.0
      %v3865 = vadd.f32 %v3833, 1.0
      %v3866 = vadd.f32 %v3834, 1.0
      %v3867 = vadd.f32 %v3835, 1.0
      %v3868 = vadd.f32 %v3836, 1.0
      %v3869 = vadd.f32 %v3837, 1.0
      %v3870 = vadd.f32 %v3838, 1.0
      %v3871 = vadd.f32 %v3839, 1.0
      %v3872 = vmul.f32 %v3616, %v3840
      %v3873 = vmul.f32 %v3617, %v3841
      %v3874 = vmul.f32 %v3618, %v3842
      %v3875 = vmul.f32 %v3619, %v3843
      %v3876 = vmul.f32 %v3620, %v3844
      %v3877 = vmul.f32 %v3621, %v3845
      %v3878 = vmul.f32 %v3622, %v3846
      %v3879 = vmul.f32 %v3623, %v3847
      %v3880 = vmul.f32 %v3624, %v3848
      %v3881 = vmul.f32 %v3625, %v3849
      %v3882 = vmul.f32 %v3626, %v3850
      %v3883 = vmul.f32 %v3627, %v3851
      %v3884 = vmul.f32 %v3628, %v3852
      %v3885 = vmul.f32 %v3629, %v3853
      %v3886 = vmul.f32 %v3630, %v3854
      %v3887 = vmul.f32 %v3631, %v3855
      %v3888 = vmul.f32 %v3632, %v3856
      %v3889 = vmul.f32 %v3633, %v3857
      %v3890 = vmul.f32 %v3634, %v3858
      %v3891 = vmul.f32 %v3635, %v3859
      %v3892 = vmul.f32 %v3636, %v3860
      %v3893 = vmul.f32 %v3637, %v3861
      %v3894 = vmul.f32 %v3638, %v3862
      %v3895 = vmul.f32 %v3639, %v3863
      %v3896 = vmul.f32 %v3640, %v3864
      %v3897 = vmul.f32 %v3641, %v3865
      %v3898 = vmul.f32 %v3642, %v3866
      %v3899 = vmul.f32 %v3643, %v3867
      %v3900 = vmul.f32 %v3644, %v3868
      %v3901 = vmul.f32 %v3645, %v3869
      %v3902 = vmul.f32 %v3646, %v3870
      %v3903 = vmul.f32 %v3647, %v3871
      %v3904 = vpack.c.bf16 %v3873, %v3872
      %v3905 = vpack.c.bf16 %v3875, %v3874
      %v3906 = vpack.c.bf16 %v3877, %v3876
      %v3907 = vpack.c.bf16 %v3879, %v3878
      %v3908 = vpack.c.bf16 %v3881, %v3880
      %v3909 = vpack.c.bf16 %v3883, %v3882
      %v3910 = vpack.c.bf16 %v3885, %v3884
      %v3911 = vpack.c.bf16 %v3887, %v3886
      %v3912 = vpack.c.bf16 %v3889, %v3888
      %v3913 = vpack.c.bf16 %v3891, %v3890
      %v3914 = vpack.c.bf16 %v3893, %v3892
      %v3915 = vpack.c.bf16 %v3895, %v3894
      %v3916 = vpack.c.bf16 %v3897, %v3896
      %v3917 = vpack.c.bf16 %v3899, %v3898
      %v3918 = vpack.c.bf16 %v3901, %v3900
      %v3919 = vpack.c.bf16 %v3903, %v3902
      %v3920 = vld [vmem:[%s12] sm:$0xf]
      %v3921 = vld [vmem:[%s12 + $0x4] sm:$0xf]
      %v3922 = vld [vmem:[%s12 + $0x8] sm:$0xf]
      %v3923 = vld [vmem:[%s12 + $0xc] sm:$0xf]
      %v3924 = vld [vmem:[%s12 + $0x10] sm:$0xf]
      %v3925 = vld [vmem:[%s12 + $0x14] sm:$0xf]
      %v3926 = vld [vmem:[%s12 + $0x18] sm:$0xf]
      %v3927 = vld [vmem:[%s12 + $0x1c] sm:$0xf]
      %v3928 = vld [vmem:[%s12 + $0x20] sm:$0xf]
      %v3929 = vld [vmem:[%s12 + $0x24] sm:$0xf]
      %v3930 = vld [vmem:[%s13] sm:$0x1]
      %v3932 = vperm.slane %v3930, 0
      %v3944 = vunpack.c.l.b16 %v3920
      %v3945 = vunpack.c.l.b16 %v3921
      %v3946 = vunpack.c.l.b16 %v3922
      %v3947 = vunpack.c.l.b16 %v3923
      %v3948 = vunpack.c.l.b16 %v3924
      %v3949 = vunpack.c.l.b16 %v3925
      %v3950 = vunpack.c.l.b16 %v3926
      %v3951 = vunpack.c.l.b16 %v3927
      %v3952 = vunpack.c.l.b16 %v3928
      %v3953 = vunpack.c.l.b16 %v3929
      %v3954 = vpack.c.b16 %v3945, %v3944
      %v3955 = vpack.c.b16 %v3947, %v3946
      %v3956 = vpack.c.b16 %v3949, %v3948
      %v3957 = vpack.c.b16 %v3951, %v3950
      %v3958 = vpack.c.b16 %v3953, %v3952
      %vm3964 = vcmask 654336
      %v3966 = vsel %vm3964, %v3904, 0
      %v3969 = vsel %vm3964, %v3905, 0
      %v3972 = vsel %vm3964, %v3906, 0
      %v3975 = vsel %vm3964, %v3907, 0
      %v3978 = vsel %vm3964, %v3908, 0
      %v3981 = vsel %vm3964, %v3909, 0
      %v3984 = vsel %vm3964, %v3910, 0
      %v3987 = vsel %vm3964, %v3911, 0
      %v3990 = vsel %vm3964, %v3912, 0
      %v3993 = vsel %vm3964, %v3913, 0
      %v3996 = vsel %vm3964, %v3914, 0
      %v3999 = vsel %vm3964, %v3915, 0
      %v4002 = vsel %vm3964, %v3916, 0
      %v4005 = vsel %vm3964, %v3917, 0
      %v4008 = vsel %vm3964, %v3918, 0
      %v4011 = vsel %vm3964, %v3919, 0
      %4013 = vmatpush.bf16.msra.mxu0 0
      %4014 = vmatpush.bf16.msra.mxu0 0
      %4015 = vmatpush.bf16.msra.mxu0 0
      %4016 = vmatpush.bf16.msra.mxu0 %v3958
      %4017 = vmatpush.bf16.msra.mxu0 %v3957
      %4018 = vmatpush.bf16.msra.mxu0 %v3956
      %4019 = vmatpush.bf16.msra.mxu0 %v3955
      %4020 = vmatpush.bf16.msra.mxu0 %v3954
      %4021 = vmatmul.bf16.gmra.mxu0 %v3966
      %v4022 = vpop.f32.mrf.mxu0
      %v4023 = vadd.f32 %v3932, %v4022
      %v4024 = vpop.f32.mrf.mxu0
      %v4025 = vadd.f32 %v3932, %v4024
      %4026 = vmatmul.bf16.gmra.mxu0 %v3969
      %v4027 = vpop.f32.mrf.mxu0
      %v4028 = vadd.f32 %v3932, %v4027
      %v4029 = vpop.f32.mrf.mxu0
      %v4030 = vadd.f32 %v3932, %v4029
      %4031 = vmatmul.bf16.gmra.mxu0 %v3972
      %v4032 = vpop.f32.mrf.mxu0
      %v4033 = vadd.f32 %v3932, %v4032
      %v4034 = vpop.f32.mrf.mxu0
      %v4035 = vadd.f32 %v3932, %v4034
      %4036 = vmatmul.bf16.gmra.mxu0 %v3975
      %v4037 = vpop.f32.mrf.mxu0
      %v4038 = vadd.f32 %v3932, %v4037
      %v4039 = vpop.f32.mrf.mxu0
      %v4040 = vadd.f32 %v3932, %v4039
      %4041 = vmatmul.bf16.gmra.mxu0 %v3978
      %v4042 = vpop.f32.mrf.mxu0
      %v4043 = vadd.f32 %v3932, %v4042
      %v4044 = vpop.f32.mrf.mxu0
      %v4045 = vadd.f32 %v3932, %v4044
      %4046 = vmatmul.bf16.gmra.mxu0 %v3981
      %v4047 = vpop.f32.mrf.mxu0
      %v4048 = vadd.f32 %v3932, %v4047
      %v4049 = vpop.f32.mrf.mxu0
      %v4050 = vadd.f32 %v3932, %v4049
      %4051 = vmatmul.bf16.gmra.mxu0 %v3984
      %v4052 = vpop.f32.mrf.mxu0
      %v4053 = vadd.f32 %v3932, %v4052
      %v4054 = vpop.f32.mrf.mxu0
      %v4055 = vadd.f32 %v3932, %v4054
      %4056 = vmatmul.bf16.gmra.mxu0 %v3987
      %v4057 = vpop.f32.mrf.mxu0
      %v4058 = vadd.f32 %v3932, %v4057
      %v4059 = vpop.f32.mrf.mxu0
      %v4060 = vadd.f32 %v3932, %v4059
      %4061 = vmatmul.bf16.gmra.mxu0 %v3990
      %v4062 = vpop.f32.mrf.mxu0
      %v4063 = vadd.f32 %v3932, %v4062
      %v4064 = vpop.f32.mrf.mxu0
      %v4065 = vadd.f32 %v3932, %v4064
      %4066 = vmatmul.bf16.gmra.mxu0 %v3993
      %v4067 = vpop.f32.mrf.mxu0
      %v4068 = vadd.f32 %v3932, %v4067
      %v4069 = vpop.f32.mrf.mxu0
      %v4070 = vadd.f32 %v3932, %v4069
      %4071 = vmatmul.bf16.gmra.mxu0 %v3996
      %v4072 = vpop.f32.mrf.mxu0
      %v4073 = vadd.f32 %v3932, %v4072
      %v4074 = vpop.f32.mrf.mxu0
      %v4075 = vadd.f32 %v3932, %v4074
      %4076 = vmatmul.bf16.gmra.mxu0 %v3999
      %v4077 = vpop.f32.mrf.mxu0
      %v4078 = vadd.f32 %v3932, %v4077
      %v4079 = vpop.f32.mrf.mxu0
      %v4080 = vadd.f32 %v3932, %v4079
      %4081 = vmatmul.bf16.gmra.mxu0 %v4002
      %v4082 = vpop.f32.mrf.mxu0
      %v4083 = vadd.f32 %v3932, %v4082
      %v4084 = vpop.f32.mrf.mxu0
      %v4085 = vadd.f32 %v3932, %v4084
      %4086 = vmatmul.bf16.gmra.mxu0 %v4005
      %v4087 = vpop.f32.mrf.mxu0
      %v4088 = vadd.f32 %v3932, %v4087
      %v4089 = vpop.f32.mrf.mxu0
      %v4090 = vadd.f32 %v3932, %v4089
      %4091 = vmatmul.bf16.gmra.mxu0 %v4008
      %v4092 = vpop.f32.mrf.mxu0
      %v4093 = vadd.f32 %v3932, %v4092
      %v4094 = vpop.f32.mrf.mxu0
      %v4095 = vadd.f32 %v3932, %v4094
      %4096 = vmatmul.bf16.gmra.mxu0 %v4011
      %v4097 = vpop.f32.mrf.mxu0
      %v4098 = vadd.f32 %v3932, %v4097
      %v4099 = vpop.f32.mrf.mxu0
      %v4100 = vadd.f32 %v3932, %v4099
      %4101 = vdwg.mxu0
      %v4102 = vld [vmem:[%s522] sm:$0xf]
      %v4103 = vld [vmem:[%s522 + $0x4] sm:$0xf]
      %v4104 = vld [vmem:[%s522 + $0x8] sm:$0xf]
      %v4105 = vld [vmem:[%s522 + $0xc] sm:$0xf]
      %v4106 = vld [vmem:[%s522 + $0x10] sm:$0xf]
      %v4107 = vld [vmem:[%s522 + $0x14] sm:$0xf]
      %v4108 = vld [vmem:[%s522 + $0x18] sm:$0xf]
      %v4109 = vld [vmem:[%s522 + $0x1c] sm:$0xf]
      %v4110 = vld [vmem:[%s522 + $0x20] sm:$0xf]
      %v4111 = vld [vmem:[%s522 + $0x24] sm:$0xf]
      %v4112 = vld [vmem:[%s522 + $0x28] sm:$0xf]
      %v4113 = vld [vmem:[%s522 + $0x2c] sm:$0xf]
      %v4114 = vld [vmem:[%s522 + $0x30] sm:$0xf]
      %v4115 = vld [vmem:[%s522 + $0x34] sm:$0xf]
      %v4116 = vld [vmem:[%s522 + $0x38] sm:$0xf]
      %v4117 = vld [vmem:[%s522 + $0x3c] sm:$0xf]
      %v4118 = vld [vmem:[%s522 + $0x40] sm:$0xf]
      %v4119 = vld [vmem:[%s522 + $0x44] sm:$0xf]
      %v4120 = vld [vmem:[%s522 + $0x48] sm:$0xf]
      %v4121 = vld [vmem:[%s522 + $0x4c] sm:$0xf]
      %v4122 = vld [vmem:[%s522 + $0x50] sm:$0xf]
      %v4123 = vld [vmem:[%s522 + $0x54] sm:$0xf]
      %v4124 = vld [vmem:[%s522 + $0x58] sm:$0xf]
      %v4125 = vld [vmem:[%s522 + $0x5c] sm:$0xf]
      %v4126 = vld [vmem:[%s522 + $0x60] sm:$0xf]
      %v4127 = vld [vmem:[%s522 + $0x64] sm:$0xf]
      %v4128 = vld [vmem:[%s522 + $0x68] sm:$0xf]
      %v4129 = vld [vmem:[%s522 + $0x6c] sm:$0xf]
      %v4130 = vld [vmem:[%s522 + $0x70] sm:$0xf]
      %v4131 = vld [vmem:[%s522 + $0x74] sm:$0xf]
      %v4132 = vld [vmem:[%s522 + $0x78] sm:$0xf]
      %v4133 = vld [vmem:[%s522 + $0x7c] sm:$0xf]
      %v4134 = vunpack.c.l.bf16 %v4102
      %v4135 = vunpack.c.l.bf16 %v4103
      %v4136 = vunpack.c.l.bf16 %v4104
      %v4137 = vunpack.c.l.bf16 %v4105
      %v4138 = vunpack.c.l.bf16 %v4106
      %v4139 = vunpack.c.l.bf16 %v4107
      %v4140 = vunpack.c.l.bf16 %v4108
      %v4141 = vunpack.c.l.bf16 %v4109
      %v4142 = vunpack.c.l.bf16 %v4110
      %v4143 = vunpack.c.l.bf16 %v4111
      %v4144 = vunpack.c.l.bf16 %v4112
      %v4145 = vunpack.c.l.bf16 %v4113
      %v4146 = vunpack.c.l.bf16 %v4114
      %v4147 = vunpack.c.l.bf16 %v4115
      %v4148 = vunpack.c.l.bf16 %v4116
      %v4149 = vunpack.c.l.bf16 %v4117
      %v4150 = vunpack.c.l.bf16 %v4118
      %v4151 = vunpack.c.l.bf16 %v4119
      %v4152 = vunpack.c.l.bf16 %v4120
      %v4153 = vunpack.c.l.bf16 %v4121
      %v4154 = vunpack.c.l.bf16 %v4122
      %v4155 = vunpack.c.l.bf16 %v4123
      %v4156 = vunpack.c.l.bf16 %v4124
      %v4157 = vunpack.c.l.bf16 %v4125
      %v4158 = vunpack.c.l.bf16 %v4126
      %v4159 = vunpack.c.l.bf16 %v4127
      %v4160 = vunpack.c.l.bf16 %v4128
      %v4161 = vunpack.c.l.bf16 %v4129
      %v4162 = vunpack.c.l.bf16 %v4130
      %v4163 = vunpack.c.l.bf16 %v4131
      %v4164 = vunpack.c.l.bf16 %v4132
      %v4165 = vunpack.c.l.bf16 %v4133
      %v4166 = vadd.f32 %v4023, %v4134
      %v4167 = vadd.f32 %v4025, %v4135
      %v4168 = vadd.f32 %v4028, %v4136
      %v4169 = vadd.f32 %v4030, %v4137
      %v4170 = vadd.f32 %v4033, %v4138
      %v4171 = vadd.f32 %v4035, %v4139
      %v4172 = vadd.f32 %v4038, %v4140
      %v4173 = vadd.f32 %v4040, %v4141
      %v4174 = vadd.f32 %v4043, %v4142
      %v4175 = vadd.f32 %v4045, %v4143
      %v4176 = vadd.f32 %v4048, %v4144
      %v4177 = vadd.f32 %v4050, %v4145
      %v4178 = vadd.f32 %v4053, %v4146
      %v4179 = vadd.f32 %v4055, %v4147
      %v4180 = vadd.f32 %v4058, %v4148
      %v4181 = vadd.f32 %v4060, %v4149
      %v4182 = vadd.f32 %v4063, %v4150
      %v4183 = vadd.f32 %v4065, %v4151
      %v4184 = vadd.f32 %v4068, %v4152
      %v4185 = vadd.f32 %v4070, %v4153
      %v4186 = vadd.f32 %v4073, %v4154
      %v4187 = vadd.f32 %v4075, %v4155
      %v4188 = vadd.f32 %v4078, %v4156
      %v4189 = vadd.f32 %v4080, %v4157
      %v4190 = vadd.f32 %v4083, %v4158
      %v4191 = vadd.f32 %v4085, %v4159
      %v4192 = vadd.f32 %v4088, %v4160
      %v4193 = vadd.f32 %v4090, %v4161
      %v4194 = vadd.f32 %v4093, %v4162
      %v4195 = vadd.f32 %v4095, %v4163
      %v4196 = vadd.f32 %v4098, %v4164
      %v4197 = vadd.f32 %v4100, %v4165
      %4198 = vst.msk [vmem:[%s527] sm:$0xff] %vm593, %v4166
      %4199 = vst.msk [vmem:[%s527 + $0x8] sm:$0xff] %vm593, %v4167
      %4200 = vst.msk [vmem:[%s527 + $0x10] sm:$0xff] %vm593, %v4168
      %4201 = vst.msk [vmem:[%s527 + $0x18] sm:$0xff] %vm593, %v4169
      %4202 = vst.msk [vmem:[%s527 + $0x20] sm:$0xff] %vm593, %v4170
      %4203 = vst.msk [vmem:[%s527 + $0x28] sm:$0xff] %vm593, %v4171
      %4204 = vst.msk [vmem:[%s527 + $0x30] sm:$0xff] %vm593, %v4172
      %4205 = vst.msk [vmem:[%s527 + $0x38] sm:$0xff] %vm593, %v4173
      %4206 = vst.msk [vmem:[%s527 + $0x40] sm:$0xff] %vm593, %v4174
      %4207 = vst.msk [vmem:[%s527 + $0x48] sm:$0xff] %vm593, %v4175
      %4208 = vst.msk [vmem:[%s527 + $0x50] sm:$0xff] %vm593, %v4176
      %4209 = vst.msk [vmem:[%s527 + $0x58] sm:$0xff] %vm593, %v4177
      %4210 = vst.msk [vmem:[%s527 + $0x60] sm:$0xff] %vm593, %v4178
      %4211 = vst.msk [vmem:[%s527 + $0x68] sm:$0xff] %vm593, %v4179
      %4212 = vst.msk [vmem:[%s527 + $0x70] sm:$0xff] %vm593, %v4180
      %4213 = vst.msk [vmem:[%s527 + $0x78] sm:$0xff] %vm593, %v4181
      %4214 = vst.msk [vmem:[%s527 + $0x80] sm:$0xff] %vm593, %v4182
      %4215 = vst.msk [vmem:[%s527 + $0x88] sm:$0xff] %vm593, %v4183
      %4216 = vst.msk [vmem:[%s527 + $0x90] sm:$0xff] %vm593, %v4184
      %4217 = vst.msk [vmem:[%s527 + $0x98] sm:$0xff] %vm593, %v4185
      %4218 = vst.msk [vmem:[%s527 + $0xa0] sm:$0xff] %vm593, %v4186
      %4219 = vst.msk [vmem:[%s527 + $0xa8] sm:$0xff] %vm593, %v4187
      %4220 = vst.msk [vmem:[%s527 + $0xb0] sm:$0xff] %vm593, %v4188
      %4221 = vst.msk [vmem:[%s527 + $0xb8] sm:$0xff] %vm593, %v4189
      %4222 = vst.msk [vmem:[%s527 + $0xc0] sm:$0xff] %vm593, %v4190
      %4223 = vst.msk [vmem:[%s527 + $0xc8] sm:$0xff] %vm593, %v4191
      %4224 = vst.msk [vmem:[%s527 + $0xd0] sm:$0xff] %vm593, %v4192
      %4225 = vst.msk [vmem:[%s527 + $0xd8] sm:$0xff] %vm593, %v4193
      %4226 = vst.msk [vmem:[%s527 + $0xe0] sm:$0xff] %vm593, %v4194
      %4227 = vst.msk [vmem:[%s527 + $0xe8] sm:$0xff] %vm593, %v4195
      %4228 = vst.msk [vmem:[%s527 + $0xf0] sm:$0xff] %vm593, %v4196
      %4229 = vst.msk [vmem:[%s527 + $0xf8] sm:$0xff] %vm593, %v4197
      %p4230 = scmp.lt.s32.totalorder %s25, 1
      %s4231 = scalar_select %p4230, %s25, 1
      %s4232 = smul.addr %s4231, 32
      %s4233 = smul.addr %s4232, 8
      %s4234 = scalar_lea.vmem %s14, %s4233
      // Predicated region
      $region77: #{hifuse_block_forward.7} parent=75 // pred_check
        %p4235 = pneg %p357
      $region78: #{hifuse_block_forward.7} parent=75 // pred_check_branch
        %4237 = sbr.rel (%p4235) target = $region80
      $region79: #{hifuse_block_forward.7} parent=75 // pred_region
        _
      $region80: #{hifuse_block_forward.7} parent=75 // pred_fallthru
        _
    $region76: #{hifuse_block_forward.7} parent=5 // pred_fallthru
      _
    %p4238 = scmp.le.s32.totalorder 2, %s20
    // Predicated region
    $region81: #{hifuse_block_forward.7} parent=5 // pred_check
      %p4239 = pneg %p4238
    $region82: #{hifuse_block_forward.7} parent=5 // pred_check_branch
      %4241 = sbr.rel (%p4239) target = $region84
    $region83: #{hifuse_block_forward.7} parent=5 // pred_region
      %s4242 = ssub.s32 %s20, 2
      // Predicated region
      $region85: #{hifuse_block_forward.7} parent=83 // pred_check
        %p4243 = pneg %p363
      $region86: #{hifuse_block_forward.7} parent=83 // pred_check_branch
        %4245 = sbr.rel (%p4243) target = $region88
      $region87: #{hifuse_block_forward.7} parent=83 // pred_region
        %p4246 = scmp.lt.s32.totalorder %s26, 1
        %s4247 = scalar_select %p4246, %s26, 1
        %s4248 = smul.addr %s4247, 32
        %s4249 = smul.addr %s4248, 8
        %s4250 = scalar_lea.vmem %s14, %s4249
      $region88: #{hifuse_block_forward.7} parent=83 // pred_fallthru
        _
    $region84: #{hifuse_block_forward.7} parent=5 // pred_fallthru
      _
  $region6: #{hifuse_block_forward.7} parent=0 // loop_footer
    %s24 = sadd.s32 1, %s20
  $region7: #{hifuse_block_forward.7} parent=0 // loop_footer_branch
    %19 = sbr.rel target = $region3
  $region8: #{hifuse_block_forward.7} parent=0 // loop_exit
    _

</llo_original>
